<compile_context>
chip_gen: v7x
topology: tpu7x:2x2x1
jax: 0.10.0
libtpu: 0.0.40
codegen_flags: <defaults>
</compile_context>

<pallas_src>
import jax
import jax.numpy as jnp
from jax.experimental import pallas as pl
from jax.experimental.pallas import tpu as pltpu


# ----------------------------------------------------------------------------
# Fused kernel: 3 x LSTM layer (wavefront) + Linear(128,64) -> ReLU -> Linear(64,3)
# ----------------------------------------------------------------------------
def _make_fused_kernel(T, B, D, H, L):
    def kernel(*refs):
        x_ref = refs[0]                                   # (B, T*D) batch-first
        w0i_ref, w0h_ref, b0_ref = refs[1:4]              # layer 0 (D,4H),(H,4H),(1,4H)
        cat_refs = refs[4:4 + 2 * (L - 1)]                # per layer>=1: (2H,4H),(1,4H)
        fc_off = 4 + 2 * (L - 1)
        fw1_ref, fb1_ref, fw2_ref, fb2_ref = refs[fc_off:fc_off + 4]
        out_ref = refs[fc_off + 4]                        # (B, O)

        def cell(gates, c_prev):
            # i/f/o gate columns were pre-scaled by 0.5 in prepare_params, so
            # one tanh over the whole (B, 4H) block + VPU fixups implements
            # sigmoid(z) = 0.5*(tanh(z/2)+1); halves EUP pushes per step.
            tg = jnp.tanh(gates)
            i_g = 0.5 * tg[:, 0 * H:1 * H] + 0.5
            f_g = 0.5 * tg[:, 1 * H:2 * H] + 0.5
            g_g = tg[:, 2 * H:3 * H]
            o_g = 0.5 * tg[:, 3 * H:4 * H] + 0.5
            c_new = f_g * c_prev + i_g * g_g
            h_new = o_g * jnp.tanh(c_new)
            return h_new, c_new

        zero = jnp.zeros((B, H), jnp.float32)
        h = [zero] * L
        c = [zero] * L
        feed = [None] * L          # feed[l]: h of layer l at its latest timestep
        h_final = None

        # Wavefront schedule: at wavefront index w, layer l processes t = w - l.
        # Active cells within a wavefront are independent -> MXU pipelining.
        for w in range(T + L - 1):
            feed_prev = list(feed)                 # reads see wavefront w-1 outputs
            for l in range(L):
                t = w - l
                if t < 0 or t >= T:
                    continue
                if l == 0:
                    # Per-step input slice (x is one vreg); the x-projection does
                    # not depend on the recurrence so it schedules off the chain.
                    x_t = x_ref[:, t * D:(t + 1) * D]                     # (B, D)
                    gates = (jnp.dot(x_t, w0i_ref[...],
                                     preferred_element_type=jnp.float32)
                             + b0_ref[...]
                             + jnp.dot(h[0], w0h_ref[...],
                                       preferred_element_type=jnp.float32))
                else:
                    # Fused input+recurrent matmul: K = 2H = 256 exactly fills
                    # the 256-deep MXU on v6e/v7x (single pass per step).
                    inp = jnp.concatenate([feed_prev[l - 1], h[l]], axis=1)  # (B, 2H)
                    gates = (jnp.dot(inp, cat_refs[2 * (l - 1)][...],
                                     preferred_element_type=jnp.float32)
                             + cat_refs[2 * (l - 1) + 1][...])
                # TODO(synk): inter-layer LSTM dropout(0.2) is an inference-mode identity.
                h_new, c_new = cell(gates, c[l])
                h[l], c[l], feed[l] = h_new, c_new, h_new
                if l == L - 1 and t == T - 1:
                    h_final = h_new

        # FC head on the last timestep's top-layer hidden state.
        z = (jnp.dot(h_final, fw1_ref[...], preferred_element_type=jnp.float32)
             + fb1_ref[...])
        z = jnp.maximum(z, 0.0)
        # TODO(synk): Dropout(0.3) in the FC head is an inference-mode identity.
        y = (jnp.dot(z, fw2_ref[...], preferred_element_type=jnp.float32)
             + fb2_ref[...])
        out_ref[...] = y.astype(out_ref.dtype)             # (B, O); tiny masked store

    return kernel


# ----------------------------------------------------------------------------
# Parameter prep (done once, outside the jitted forward)
# ----------------------------------------------------------------------------
def prepare_params(lstm_params, fc_params):
    """Pre-transpose to (in, out) layout, combine LSTM biases, fuse the
    input+recurrent weights of layers >= 1 along K, and pre-scale the i/f/o
    gate columns by 0.5 (single-tanh sigmoid trick)."""
    H = lstm_params[0][1].shape[1]
    col_scale = jnp.concatenate([
        jnp.full((H,), 0.5, jnp.float32),   # i
        jnp.full((H,), 0.5, jnp.float32),   # f
        jnp.ones((H,), jnp.float32),        # g  (stays a plain tanh)
        jnp.full((H,), 0.5, jnp.float32),   # o
    ])
    flat = []
    for layer, (w_ih, w_hh, b_ih, b_hh) in enumerate(lstm_params):
        w_ih_t = jnp.transpose(w_ih) * col_scale                  # (Din, 4H)
        w_hh_t = jnp.transpose(w_hh) * col_scale                  # (H, 4H)
        b = ((b_ih + b_hh) * col_scale).reshape(1, -1)            # (1, 4H)
        if layer == 0:
            flat += [w_ih_t, w_hh_t, b]
        else:
            # [W_ih^T; W_hh^T] stacked along K -> one (2H, 4H) matmul per step.
            flat += [jnp.concatenate([w_ih_t, w_hh_t], axis=0), b]
    w1, b1, w2, b2 = fc_params
    flat += [jnp.transpose(w1), b1.reshape(1, -1),
             jnp.transpose(w2), b2.reshape(1, -1)]
    return tuple(flat)


# ----------------------------------------------------------------------------
# Full model wrapper: one pallas_call, no grid, everything resident in VMEM.
# ----------------------------------------------------------------------------
def _forward_impl(x, prepared_params):
    """x: (B, T, input_size) batch-first, like the PyTorch module."""
    B, T, D = x.shape
    L = 1 + (len(prepared_params) - 7) // 2
    H = prepared_params[1].shape[0]                 # w_hh0_t: (H, 4H)
    O = prepared_params[-2].shape[1]                # fc w2_t: (64, O)
    # Free (copy-less) reshape; no standalone transpose op in the wrapper.
    x_flat = x.reshape(B, T * D)
    vmem = pl.BlockSpec(memory_space=pltpu.MemorySpace.VMEM)
    return pl.pallas_call(
        _make_fused_kernel(T, B, D, H, L),
        out_shape=jax.ShapeDtypeStruct((B, O), jnp.float32),
        in_specs=[vmem] * (1 + len(prepared_params)),
        out_specs=vmem,
    )(x_flat, *prepared_params)


stock_predictor_forward = jax.jit(_forward_impl)


# ----------------------------------------------------------------------------
# Pure-JAX reference (for correctness check), high-precision matmuls
# ----------------------------------------------------------------------------
def reference_forward(x, lstm_params, fc_params):
    with jax.default_matmul_precision("float32"):
        h_seq = x                                    # (B, T, D)
        for (w_ih, w_hh, b_ih, b_hh) in lstm_params:
            B = h_seq.shape[0]
            H = w_hh.shape[1]

            def step(carry, x_t, w_ih=w_ih, w_hh=w_hh, b_ih=b_ih, b_hh=b_hh, H=H):
                h, c = carry
                gates = x_t @ w_ih.T + h @ w_hh.T + b_ih + b_hh
                i = jax.nn.sigmoid(gates[:, :H])
                f = jax.nn.sigmoid(gates[:, H:2 * H])
                g = jnp.tanh(gates[:, 2 * H:3 * H])
                o = jax.nn.sigmoid(gates[:, 3 * H:])
                c = f * c + i * g
                h = o * jnp.tanh(c)
                return (h, c), h

            h0 = jnp.zeros((B, H), jnp.float32)
            c0 = jnp.zeros((B, H), jnp.float32)
            _, hs = jax.lax.scan(step, (h0, c0), jnp.swapaxes(h_seq, 0, 1))
            h_seq = jnp.swapaxes(hs, 0, 1)
        w1, b1, w2, b2 = fc_params
        z = jnp.maximum(h_seq[:, -1, :] @ w1.T + b1, 0.0)
        return z @ w2.T + b2


# ----------------------------------------------------------------------------
# Deterministic parameter init (PyTorch-style uniform(-1/sqrt(H), 1/sqrt(H)))
# ----------------------------------------------------------------------------
def init_params(key, input_size, hidden_size, num_layers, fc_hidden, output_size):
    k = 1.0 / jnp.sqrt(hidden_size)
    lstm_params = []
    for layer in range(num_layers):
        d_in = input_size if layer == 0 else hidden_size
        key, k1, k2, k3, k4 = jax.random.split(key, 5)
        w_ih = jax.random.uniform(k1, (4 * hidden_size, d_in), jnp.float32, -k, k)
        w_hh = jax.random.uniform(k2, (4 * hidden_size, hidden_size), jnp.float32, -k, k)
        b_ih = jax.random.uniform(k3, (4 * hidden_size,), jnp.float32, -k, k)
        b_hh = jax.random.uniform(k4, (4 * hidden_size,), jnp.float32, -k, k)
        lstm_params.append((w_ih, w_hh, b_ih, b_hh))

    key, k1, k2, k3, k4 = jax.random.split(key, 5)
    kf1 = 1.0 / jnp.sqrt(hidden_size)
    kf2 = 1.0 / jnp.sqrt(fc_hidden)
    w1 = jax.random.uniform(k1, (fc_hidden, hidden_size), jnp.float32, -kf1, kf1)
    b1 = jax.random.uniform(k2, (fc_hidden,), jnp.float32, -kf1, kf1)
    w2 = jax.random.uniform(k3, (output_size, fc_hidden), jnp.float32, -kf2, kf2)
    b2 = jax.random.uniform(k4, (output_size,), jnp.float32, -kf2, kf2)
    fc_params = (w1, b1, w2, b2)
    return lstm_params, fc_params


if __name__ == "__main__":
    INPUT_SIZE = 15
    HIDDEN_SIZE = 128
    NUM_LAYERS = 3
    FC_HIDDEN = 64
    OUTPUT_SIZE = 3
    B, T = 8, 8

    key = jax.random.PRNGKey(0)
    key, xkey = jax.random.split(key)
    x = jax.random.normal(xkey, (B, T, INPUT_SIZE), jnp.float32)

    lstm_params, fc_params = init_params(
        key, INPUT_SIZE, HIDDEN_SIZE, NUM_LAYERS, FC_HIDDEN, OUTPUT_SIZE)

    # Weight layout prep happens once, outside the jitted forward.
    prepared = prepare_params(lstm_params, fc_params)

    out = jax.block_until_ready(stock_predictor_forward(x, prepared))
    ref = jax.block_until_ready(reference_forward(x, lstm_params, fc_params))

    assert out.shape == (B, OUTPUT_SIZE), out.shape
    max_err = float(jnp.max(jnp.abs(out - ref)))
    assert jnp.allclose(out, ref, rtol=1e-3, atol=1e-3), ("mismatch vs reference", max_err)

    print("KERNEL_OK")
</pallas_src>

<mosaic_0001>
module attributes {stable_mosaic.version = 11 : i64} {
  func.func @kernel(%arg0: memref<8x120xf32, #tpu.memory_space<vmem>>, %arg1: memref<15x512xf32, #tpu.memory_space<vmem>>, %arg2: memref<128x512xf32, #tpu.memory_space<vmem>>, %arg3: memref<1x512xf32, #tpu.memory_space<vmem>>, %arg4: memref<256x512xf32, #tpu.memory_space<vmem>>, %arg5: memref<1x512xf32, #tpu.memory_space<vmem>>, %arg6: memref<256x512xf32, #tpu.memory_space<vmem>>, %arg7: memref<1x512xf32, #tpu.memory_space<vmem>>, %arg8: memref<128x64xf32, #tpu.memory_space<vmem>>, %arg9: memref<1x64xf32, #tpu.memory_space<vmem>>, %arg10: memref<64x3xf32, #tpu.memory_space<vmem>>, %arg11: memref<1x3xf32, #tpu.memory_space<vmem>>, %arg12: memref<8x3xf32, #tpu.memory_space<vmem>>) attributes {dimension_semantics = [], scalar_prefetch = 0 : i64, scratch_operands = 0 : i64, tpu.core_type = #tpu.core_type<tc>} {
    %cst = arith.constant 0.000000e+00 : f32
    %0 = vector.broadcast %cst : f32 to vector<8x128xf32>
    %c0 = arith.constant 0 : index
    %c0_0 = arith.constant 0 : index
    %1 = vector.load %arg0[%c0, %c0_0] : memref<8x120xf32, #tpu.memory_space<vmem>>, vector<8x15xf32>
    %c0_1 = arith.constant 0 : index
    %c0_2 = arith.constant 0 : index
    %2 = vector.load %arg1[%c0_1, %c0_2] : memref<15x512xf32, #tpu.memory_space<vmem>>, vector<15x512xf32>
    %cst_3 = arith.constant dense<0.000000e+00> : vector<8x512xf32>
    %3 = tpu.matmul %1, %2, %cst_3 {dimension_numbers = #tpu.dot_dimension_numbers<[1], [0], [0], [1], [0, 0, 1, 1], [], []>} : vector<8x15xf32>, vector<15x512xf32>, vector<8x512xf32> -> vector<8x512xf32>
    %c0_4 = arith.constant 0 : index
    %c0_5 = arith.constant 0 : index
    %4 = vector.load %arg3[%c0_4, %c0_5] : memref<1x512xf32, #tpu.memory_space<vmem>>, vector<1x512xf32>
    %5 = vector.broadcast %4 : vector<1x512xf32> to vector<8x512xf32>
    %6 = arith.addf %3, %5 : vector<8x512xf32>
    %c0_6 = arith.constant 0 : index
    %c0_7 = arith.constant 0 : index
    %7 = vector.load %arg2[%c0_6, %c0_7] : memref<128x512xf32, #tpu.memory_space<vmem>>, vector<128x512xf32>
    %cst_8 = arith.constant dense<0.000000e+00> : vector<8x512xf32>
    %8 = tpu.matmul %0, %7, %cst_8 {dimension_numbers = #tpu.dot_dimension_numbers<[1], [0], [0], [1], [0, 0, 1, 1], [], []>} : vector<8x128xf32>, vector<128x512xf32>, vector<8x512xf32> -> vector<8x512xf32>
    %9 = arith.addf %6, %8 : vector<8x512xf32>
    %10 = math.tanh %9 : vector<8x512xf32>
    %11 = vector.extract_strided_slice %10 {offsets = [0, 0], sizes = [8, 128], strides = [1, 1]} : vector<8x512xf32> to vector<8x128xf32>
    %cst_9 = arith.constant 5.000000e-01 : f32
    %12 = vector.broadcast %cst_9 : f32 to vector<8x128xf32>
    %13 = arith.mulf %12, %11 : vector<8x128xf32>
    %cst_10 = arith.constant 5.000000e-01 : f32
    %14 = vector.broadcast %cst_10 : f32 to vector<8x128xf32>
    %15 = arith.addf %13, %14 : vector<8x128xf32>
    %16 = vector.extract_strided_slice %10 {offsets = [0, 128], sizes = [8, 128], strides = [1, 1]} : vector<8x512xf32> to vector<8x128xf32>
    %cst_11 = arith.constant 5.000000e-01 : f32
    %17 = vector.broadcast %cst_11 : f32 to vector<8x128xf32>
    %18 = arith.mulf %17, %16 : vector<8x128xf32>
    %cst_12 = arith.constant 5.000000e-01 : f32
    %19 = vector.broadcast %cst_12 : f32 to vector<8x128xf32>
    %20 = arith.addf %18, %19 : vector<8x128xf32>
    %21 = vector.extract_strided_slice %10 {offsets = [0, 256], sizes = [8, 128], strides = [1, 1]} : vector<8x512xf32> to vector<8x128xf32>
    %22 = vector.extract_strided_slice %10 {offsets = [0, 384], sizes = [8, 128], strides = [1, 1]} : vector<8x512xf32> to vector<8x128xf32>
    %cst_13 = arith.constant 5.000000e-01 : f32
    %23 = vector.broadcast %cst_13 : f32 to vector<8x128xf32>
    %24 = arith.mulf %23, %22 : vector<8x128xf32>
    %cst_14 = arith.constant 5.000000e-01 : f32
    %25 = vector.broadcast %cst_14 : f32 to vector<8x128xf32>
    %26 = arith.addf %24, %25 : vector<8x128xf32>
    %27 = arith.mulf %20, %0 : vector<8x128xf32>
    %28 = arith.mulf %15, %21 : vector<8x128xf32>
    %29 = arith.addf %27, %28 : vector<8x128xf32>
    %30 = math.tanh %29 : vector<8x128xf32>
    %31 = arith.mulf %26, %30 : vector<8x128xf32>
    %c0_15 = arith.constant 0 : index
    %c15 = arith.constant 15 : index
    %32 = vector.load %arg0[%c0_15, %c15] : memref<8x120xf32, #tpu.memory_space<vmem>>, vector<8x15xf32>
    %c0_16 = arith.constant 0 : index
    %c0_17 = arith.constant 0 : index
    %33 = vector.load %arg1[%c0_16, %c0_17] : memref<15x512xf32, #tpu.memory_space<vmem>>, vector<15x512xf32>
    %cst_18 = arith.constant dense<0.000000e+00> : vector<8x512xf32>
    %34 = tpu.matmul %32, %33, %cst_18 {dimension_numbers = #tpu.dot_dimension_numbers<[1], [0], [0], [1], [0, 0, 1, 1], [], []>} : vector<8x15xf32>, vector<15x512xf32>, vector<8x512xf32> -> vector<8x512xf32>
    %c0_19 = arith.constant 0 : index
    %c0_20 = arith.constant 0 : index
    %35 = vector.load %arg3[%c0_19, %c0_20] : memref<1x512xf32, #tpu.memory_space<vmem>>, vector<1x512xf32>
    %36 = vector.broadcast %35 : vector<1x512xf32> to vector<8x512xf32>
    %37 = arith.addf %34, %36 : vector<8x512xf32>
    %c0_21 = arith.constant 0 : index
    %c0_22 = arith.constant 0 : index
    %38 = vector.load %arg2[%c0_21, %c0_22] : memref<128x512xf32, #tpu.memory_space<vmem>>, vector<128x512xf32>
    %cst_23 = arith.constant dense<0.000000e+00> : vector<8x512xf32>
    %39 = tpu.matmul %31, %38, %cst_23 {dimension_numbers = #tpu.dot_dimension_numbers<[1], [0], [0], [1], [0, 0, 1, 1], [], []>} : vector<8x128xf32>, vector<128x512xf32>, vector<8x512xf32> -> vector<8x512xf32>
    %40 = arith.addf %37, %39 : vector<8x512xf32>
    %41 = math.tanh %40 : vector<8x512xf32>
    %42 = vector.extract_strided_slice %41 {offsets = [0, 0], sizes = [8, 128], strides = [1, 1]} : vector<8x512xf32> to vector<8x128xf32>
    %cst_24 = arith.constant 5.000000e-01 : f32
    %43 = vector.broadcast %cst_24 : f32 to vector<8x128xf32>
    %44 = arith.mulf %43, %42 : vector<8x128xf32>
    %cst_25 = arith.constant 5.000000e-01 : f32
    %45 = vector.broadcast %cst_25 : f32 to vector<8x128xf32>
    %46 = arith.addf %44, %45 : vector<8x128xf32>
    %47 = vector.extract_strided_slice %41 {offsets = [0, 128], sizes = [8, 128], strides = [1, 1]} : vector<8x512xf32> to vector<8x128xf32>
    %cst_26 = arith.constant 5.000000e-01 : f32
    %48 = vector.broadcast %cst_26 : f32 to vector<8x128xf32>
    %49 = arith.mulf %48, %47 : vector<8x128xf32>
    %cst_27 = arith.constant 5.000000e-01 : f32
    %50 = vector.broadcast %cst_27 : f32 to vector<8x128xf32>
    %51 = arith.addf %49, %50 : vector<8x128xf32>
    %52 = vector.extract_strided_slice %41 {offsets = [0, 256], sizes = [8, 128], strides = [1, 1]} : vector<8x512xf32> to vector<8x128xf32>
    %53 = vector.extract_strided_slice %41 {offsets = [0, 384], sizes = [8, 128], strides = [1, 1]} : vector<8x512xf32> to vector<8x128xf32>
    %cst_28 = arith.constant 5.000000e-01 : f32
    %54 = vector.broadcast %cst_28 : f32 to vector<8x128xf32>
    %55 = arith.mulf %54, %53 : vector<8x128xf32>
    %cst_29 = arith.constant 5.000000e-01 : f32
    %56 = vector.broadcast %cst_29 : f32 to vector<8x128xf32>
    %57 = arith.addf %55, %56 : vector<8x128xf32>
    %58 = arith.mulf %51, %29 : vector<8x128xf32>
    %59 = arith.mulf %46, %52 : vector<8x128xf32>
    %60 = arith.addf %58, %59 : vector<8x128xf32>
    %61 = math.tanh %60 : vector<8x128xf32>
    %62 = arith.mulf %57, %61 : vector<8x128xf32>
    %63 = tpu.concatenate %31, %0 in 1 : vector<8x128xf32>, vector<8x128xf32> -> vector<8x256xf32>
    %c0_30 = arith.constant 0 : index
    %c0_31 = arith.constant 0 : index
    %64 = vector.load %arg4[%c0_30, %c0_31] : memref<256x512xf32, #tpu.memory_space<vmem>>, vector<256x512xf32>
    %cst_32 = arith.constant dense<0.000000e+00> : vector<8x512xf32>
    %65 = tpu.matmul %63, %64, %cst_32 {dimension_numbers = #tpu.dot_dimension_numbers<[1], [0], [0], [1], [0, 0, 1, 1], [], []>} : vector<8x256xf32>, vector<256x512xf32>, vector<8x512xf32> -> vector<8x512xf32>
    %c0_33 = arith.constant 0 : index
    %c0_34 = arith.constant 0 : index
    %66 = vector.load %arg5[%c0_33, %c0_34] : memref<1x512xf32, #tpu.memory_space<vmem>>, vector<1x512xf32>
    %67 = vector.broadcast %66 : vector<1x512xf32> to vector<8x512xf32>
    %68 = arith.addf %65, %67 : vector<8x512xf32>
    %69 = math.tanh %68 : vector<8x512xf32>
    %70 = vector.extract_strided_slice %69 {offsets = [0, 0], sizes = [8, 128], strides = [1, 1]} : vector<8x512xf32> to vector<8x128xf32>
    %cst_35 = arith.constant 5.000000e-01 : f32
    %71 = vector.broadcast %cst_35 : f32 to vector<8x128xf32>
    %72 = arith.mulf %71, %70 : vector<8x128xf32>
    %cst_36 = arith.constant 5.000000e-01 : f32
    %73 = vector.broadcast %cst_36 : f32 to vector<8x128xf32>
    %74 = arith.addf %72, %73 : vector<8x128xf32>
    %75 = vector.extract_strided_slice %69 {offsets = [0, 128], sizes = [8, 128], strides = [1, 1]} : vector<8x512xf32> to vector<8x128xf32>
    %cst_37 = arith.constant 5.000000e-01 : f32
    %76 = vector.broadcast %cst_37 : f32 to vector<8x128xf32>
    %77 = arith.mulf %76, %75 : vector<8x128xf32>
    %cst_38 = arith.constant 5.000000e-01 : f32
    %78 = vector.broadcast %cst_38 : f32 to vector<8x128xf32>
    %79 = arith.addf %77, %78 : vector<8x128xf32>
    %80 = vector.extract_strided_slice %69 {offsets = [0, 256], sizes = [8, 128], strides = [1, 1]} : vector<8x512xf32> to vector<8x128xf32>
    %81 = vector.extract_strided_slice %69 {offsets = [0, 384], sizes = [8, 128], strides = [1, 1]} : vector<8x512xf32> to vector<8x128xf32>
    %cst_39 = arith.constant 5.000000e-01 : f32
    %82 = vector.broadcast %cst_39 : f32 to vector<8x128xf32>
    %83 = arith.mulf %82, %81 : vector<8x128xf32>
    %cst_40 = arith.constant 5.000000e-01 : f32
    %84 = vector.broadcast %cst_40 : f32 to vector<8x128xf32>
    %85 = arith.addf %83, %84 : vector<8x128xf32>
    %86 = arith.mulf %79, %0 : vector<8x128xf32>
    %87 = arith.mulf %74, %80 : vector<8x128xf32>
    %88 = arith.addf %86, %87 : vector<8x128xf32>
    %89 = math.tanh %88 : vector<8x128xf32>
    %90 = arith.mulf %85, %89 : vector<8x128xf32>
    %c0_41 = arith.constant 0 : index
    %c30 = arith.constant 30 : index
    %91 = vector.load %arg0[%c0_41, %c30] : memref<8x120xf32, #tpu.memory_space<vmem>>, vector<8x15xf32>
    %c0_42 = arith.constant 0 : index
    %c0_43 = arith.constant 0 : index
    %92 = vector.load %arg1[%c0_42, %c0_43] : memref<15x512xf32, #tpu.memory_space<vmem>>, vector<15x512xf32>
    %cst_44 = arith.constant dense<0.000000e+00> : vector<8x512xf32>
    %93 = tpu.matmul %91, %92, %cst_44 {dimension_numbers = #tpu.dot_dimension_numbers<[1], [0], [0], [1], [0, 0, 1, 1], [], []>} : vector<8x15xf32>, vector<15x512xf32>, vector<8x512xf32> -> vector<8x512xf32>
    %c0_45 = arith.constant 0 : index
    %c0_46 = arith.constant 0 : index
    %94 = vector.load %arg3[%c0_45, %c0_46] : memref<1x512xf32, #tpu.memory_space<vmem>>, vector<1x512xf32>
    %95 = vector.broadcast %94 : vector<1x512xf32> to vector<8x512xf32>
    %96 = arith.addf %93, %95 : vector<8x512xf32>
    %c0_47 = arith.constant 0 : index
    %c0_48 = arith.constant 0 : index
    %97 = vector.load %arg2[%c0_47, %c0_48] : memref<128x512xf32, #tpu.memory_space<vmem>>, vector<128x512xf32>
    %cst_49 = arith.constant dense<0.000000e+00> : vector<8x512xf32>
    %98 = tpu.matmul %62, %97, %cst_49 {dimension_numbers = #tpu.dot_dimension_numbers<[1], [0], [0], [1], [0, 0, 1, 1], [], []>} : vector<8x128xf32>, vector<128x512xf32>, vector<8x512xf32> -> vector<8x512xf32>
    %99 = arith.addf %96, %98 : vector<8x512xf32>
    %100 = math.tanh %99 : vector<8x512xf32>
    %101 = vector.extract_strided_slice %100 {offsets = [0, 0], sizes = [8, 128], strides = [1, 1]} : vector<8x512xf32> to vector<8x128xf32>
    %cst_50 = arith.constant 5.000000e-01 : f32
    %102 = vector.broadcast %cst_50 : f32 to vector<8x128xf32>
    %103 = arith.mulf %102, %101 : vector<8x128xf32>
    %cst_51 = arith.constant 5.000000e-01 : f32
    %104 = vector.broadcast %cst_51 : f32 to vector<8x128xf32>
    %105 = arith.addf %103, %104 : vector<8x128xf32>
    %106 = vector.extract_strided_slice %100 {offsets = [0, 128], sizes = [8, 128], strides = [1, 1]} : vector<8x512xf32> to vector<8x128xf32>
    %cst_52 = arith.constant 5.000000e-01 : f32
    %107 = vector.broadcast %cst_52 : f32 to vector<8x128xf32>
    %108 = arith.mulf %107, %106 : vector<8x128xf32>
    %cst_53 = arith.constant 5.000000e-01 : f32
    %109 = vector.broadcast %cst_53 : f32 to vector<8x128xf32>
    %110 = arith.addf %108, %109 : vector<8x128xf32>
    %111 = vector.extract_strided_slice %100 {offsets = [0, 256], sizes = [8, 128], strides = [1, 1]} : vector<8x512xf32> to vector<8x128xf32>
    %112 = vector.extract_strided_slice %100 {offsets = [0, 384], sizes = [8, 128], strides = [1, 1]} : vector<8x512xf32> to vector<8x128xf32>
    %cst_54 = arith.constant 5.000000e-01 : f32
    %113 = vector.broadcast %cst_54 : f32 to vector<8x128xf32>
    %114 = arith.mulf %113, %112 : vector<8x128xf32>
    %cst_55 = arith.constant 5.000000e-01 : f32
    %115 = vector.broadcast %cst_55 : f32 to vector<8x128xf32>
    %116 = arith.addf %114, %115 : vector<8x128xf32>
    %117 = arith.mulf %110, %60 : vector<8x128xf32>
    %118 = arith.mulf %105, %111 : vector<8x128xf32>
    %119 = arith.addf %117, %118 : vector<8x128xf32>
    %120 = math.tanh %119 : vector<8x128xf32>
    %121 = arith.mulf %116, %120 : vector<8x128xf32>
    %122 = tpu.concatenate %62, %90 in 1 : vector<8x128xf32>, vector<8x128xf32> -> vector<8x256xf32>
    %c0_56 = arith.constant 0 : index
    %c0_57 = arith.constant 0 : index
    %123 = vector.load %arg4[%c0_56, %c0_57] : memref<256x512xf32, #tpu.memory_space<vmem>>, vector<256x512xf32>
    %cst_58 = arith.constant dense<0.000000e+00> : vector<8x512xf32>
    %124 = tpu.matmul %122, %123, %cst_58 {dimension_numbers = #tpu.dot_dimension_numbers<[1], [0], [0], [1], [0, 0, 1, 1], [], []>} : vector<8x256xf32>, vector<256x512xf32>, vector<8x512xf32> -> vector<8x512xf32>
    %c0_59 = arith.constant 0 : index
    %c0_60 = arith.constant 0 : index
    %125 = vector.load %arg5[%c0_59, %c0_60] : memref<1x512xf32, #tpu.memory_space<vmem>>, vector<1x512xf32>
    %126 = vector.broadcast %125 : vector<1x512xf32> to vector<8x512xf32>
    %127 = arith.addf %124, %126 : vector<8x512xf32>
    %128 = math.tanh %127 : vector<8x512xf32>
    %129 = vector.extract_strided_slice %128 {offsets = [0, 0], sizes = [8, 128], strides = [1, 1]} : vector<8x512xf32> to vector<8x128xf32>
    %cst_61 = arith.constant 5.000000e-01 : f32
    %130 = vector.broadcast %cst_61 : f32 to vector<8x128xf32>
    %131 = arith.mulf %130, %129 : vector<8x128xf32>
    %cst_62 = arith.constant 5.000000e-01 : f32
    %132 = vector.broadcast %cst_62 : f32 to vector<8x128xf32>
    %133 = arith.addf %131, %132 : vector<8x128xf32>
    %134 = vector.extract_strided_slice %128 {offsets = [0, 128], sizes = [8, 128], strides = [1, 1]} : vector<8x512xf32> to vector<8x128xf32>
    %cst_63 = arith.constant 5.000000e-01 : f32
    %135 = vector.broadcast %cst_63 : f32 to vector<8x128xf32>
    %136 = arith.mulf %135, %134 : vector<8x128xf32>
    %cst_64 = arith.constant 5.000000e-01 : f32
    %137 = vector.broadcast %cst_64 : f32 to vector<8x128xf32>
    %138 = arith.addf %136, %137 : vector<8x128xf32>
    %139 = vector.extract_strided_slice %128 {offsets = [0, 256], sizes = [8, 128], strides = [1, 1]} : vector<8x512xf32> to vector<8x128xf32>
    %140 = vector.extract_strided_slice %128 {offsets = [0, 384], sizes = [8, 128], strides = [1, 1]} : vector<8x512xf32> to vector<8x128xf32>
    %cst_65 = arith.constant 5.000000e-01 : f32
    %141 = vector.broadcast %cst_65 : f32 to vector<8x128xf32>
    %142 = arith.mulf %141, %140 : vector<8x128xf32>
    %cst_66 = arith.constant 5.000000e-01 : f32
    %143 = vector.broadcast %cst_66 : f32 to vector<8x128xf32>
    %144 = arith.addf %142, %143 : vector<8x128xf32>
    %145 = arith.mulf %138, %88 : vector<8x128xf32>
    %146 = arith.mulf %133, %139 : vector<8x128xf32>
    %147 = arith.addf %145, %146 : vector<8x128xf32>
    %148 = math.tanh %147 : vector<8x128xf32>
    %149 = arith.mulf %144, %148 : vector<8x128xf32>
    %150 = tpu.concatenate %90, %0 in 1 : vector<8x128xf32>, vector<8x128xf32> -> vector<8x256xf32>
    %c0_67 = arith.constant 0 : index
    %c0_68 = arith.constant 0 : index
    %151 = vector.load %arg6[%c0_67, %c0_68] : memref<256x512xf32, #tpu.memory_space<vmem>>, vector<256x512xf32>
    %cst_69 = arith.constant dense<0.000000e+00> : vector<8x512xf32>
    %152 = tpu.matmul %150, %151, %cst_69 {dimension_numbers = #tpu.dot_dimension_numbers<[1], [0], [0], [1], [0, 0, 1, 1], [], []>} : vector<8x256xf32>, vector<256x512xf32>, vector<8x512xf32> -> vector<8x512xf32>
    %c0_70 = arith.constant 0 : index
    %c0_71 = arith.constant 0 : index
    %153 = vector.load %arg7[%c0_70, %c0_71] : memref<1x512xf32, #tpu.memory_space<vmem>>, vector<1x512xf32>
    %154 = vector.broadcast %153 : vector<1x512xf32> to vector<8x512xf32>
    %155 = arith.addf %152, %154 : vector<8x512xf32>
    %156 = math.tanh %155 : vector<8x512xf32>
    %157 = vector.extract_strided_slice %156 {offsets = [0, 0], sizes = [8, 128], strides = [1, 1]} : vector<8x512xf32> to vector<8x128xf32>
    %cst_72 = arith.constant 5.000000e-01 : f32
    %158 = vector.broadcast %cst_72 : f32 to vector<8x128xf32>
    %159 = arith.mulf %158, %157 : vector<8x128xf32>
    %cst_73 = arith.constant 5.000000e-01 : f32
    %160 = vector.broadcast %cst_73 : f32 to vector<8x128xf32>
    %161 = arith.addf %159, %160 : vector<8x128xf32>
    %162 = vector.extract_strided_slice %156 {offsets = [0, 128], sizes = [8, 128], strides = [1, 1]} : vector<8x512xf32> to vector<8x128xf32>
    %cst_74 = arith.constant 5.000000e-01 : f32
    %163 = vector.broadcast %cst_74 : f32 to vector<8x128xf32>
    %164 = arith.mulf %163, %162 : vector<8x128xf32>
    %cst_75 = arith.constant 5.000000e-01 : f32
    %165 = vector.broadcast %cst_75 : f32 to vector<8x128xf32>
    %166 = arith.addf %164, %165 : vector<8x128xf32>
    %167 = vector.extract_strided_slice %156 {offsets = [0, 256], sizes = [8, 128], strides = [1, 1]} : vector<8x512xf32> to vector<8x128xf32>
    %168 = vector.extract_strided_slice %156 {offsets = [0, 384], sizes = [8, 128], strides = [1, 1]} : vector<8x512xf32> to vector<8x128xf32>
    %cst_76 = arith.constant 5.000000e-01 : f32
    %169 = vector.broadcast %cst_76 : f32 to vector<8x128xf32>
    %170 = arith.mulf %169, %168 : vector<8x128xf32>
    %cst_77 = arith.constant 5.000000e-01 : f32
    %171 = vector.broadcast %cst_77 : f32 to vector<8x128xf32>
    %172 = arith.addf %170, %171 : vector<8x128xf32>
    %173 = arith.mulf %166, %0 : vector<8x128xf32>
    %174 = arith.mulf %161, %167 : vector<8x128xf32>
    %175 = arith.addf %173, %174 : vector<8x128xf32>
    %176 = math.tanh %175 : vector<8x128xf32>
    %177 = arith.mulf %172, %176 : vector<8x128xf32>
    %c0_78 = arith.constant 0 : index
    %c45 = arith.constant 45 : index
    %178 = vector.load %arg0[%c0_78, %c45] : memref<8x120xf32, #tpu.memory_space<vmem>>, vector<8x15xf32>
    %c0_79 = arith.constant 0 : index
    %c0_80 = arith.constant 0 : index
    %179 = vector.load %arg1[%c0_79, %c0_80] : memref<15x512xf32, #tpu.memory_space<vmem>>, vector<15x512xf32>
    %cst_81 = arith.constant dense<0.000000e+00> : vector<8x512xf32>
    %180 = tpu.matmul %178, %179, %cst_81 {dimension_numbers = #tpu.dot_dimension_numbers<[1], [0], [0], [1], [0, 0, 1, 1], [], []>} : vector<8x15xf32>, vector<15x512xf32>, vector<8x512xf32> -> vector<8x512xf32>
    %c0_82 = arith.constant 0 : index
    %c0_83 = arith.constant 0 : index
    %181 = vector.load %arg3[%c0_82, %c0_83] : memref<1x512xf32, #tpu.memory_space<vmem>>, vector<1x512xf32>
    %182 = vector.broadcast %181 : vector<1x512xf32> to vector<8x512xf32>
    %183 = arith.addf %180, %182 : vector<8x512xf32>
    %c0_84 = arith.constant 0 : index
    %c0_85 = arith.constant 0 : index
    %184 = vector.load %arg2[%c0_84, %c0_85] : memref<128x512xf32, #tpu.memory_space<vmem>>, vector<128x512xf32>
    %cst_86 = arith.constant dense<0.000000e+00> : vector<8x512xf32>
    %185 = tpu.matmul %121, %184, %cst_86 {dimension_numbers = #tpu.dot_dimension_numbers<[1], [0], [0], [1], [0, 0, 1, 1], [], []>} : vector<8x128xf32>, vector<128x512xf32>, vector<8x512xf32> -> vector<8x512xf32>
    %186 = arith.addf %183, %185 : vector<8x512xf32>
    %187 = math.tanh %186 : vector<8x512xf32>
    %188 = vector.extract_strided_slice %187 {offsets = [0, 0], sizes = [8, 128], strides = [1, 1]} : vector<8x512xf32> to vector<8x128xf32>
    %cst_87 = arith.constant 5.000000e-01 : f32
    %189 = vector.broadcast %cst_87 : f32 to vector<8x128xf32>
    %190 = arith.mulf %189, %188 : vector<8x128xf32>
    %cst_88 = arith.constant 5.000000e-01 : f32
    %191 = vector.broadcast %cst_88 : f32 to vector<8x128xf32>
    %192 = arith.addf %190, %191 : vector<8x128xf32>
    %193 = vector.extract_strided_slice %187 {offsets = [0, 128], sizes = [8, 128], strides = [1, 1]} : vector<8x512xf32> to vector<8x128xf32>
    %cst_89 = arith.constant 5.000000e-01 : f32
    %194 = vector.broadcast %cst_89 : f32 to vector<8x128xf32>
    %195 = arith.mulf %194, %193 : vector<8x128xf32>
    %cst_90 = arith.constant 5.000000e-01 : f32
    %196 = vector.broadcast %cst_90 : f32 to vector<8x128xf32>
    %197 = arith.addf %195, %196 : vector<8x128xf32>
    %198 = vector.extract_strided_slice %187 {offsets = [0, 256], sizes = [8, 128], strides = [1, 1]} : vector<8x512xf32> to vector<8x128xf32>
    %199 = vector.extract_strided_slice %187 {offsets = [0, 384], sizes = [8, 128], strides = [1, 1]} : vector<8x512xf32> to vector<8x128xf32>
    %cst_91 = arith.constant 5.000000e-01 : f32
    %200 = vector.broadcast %cst_91 : f32 to vector<8x128xf32>
    %201 = arith.mulf %200, %199 : vector<8x128xf32>
    %cst_92 = arith.constant 5.000000e-01 : f32
    %202 = vector.broadcast %cst_92 : f32 to vector<8x128xf32>
    %203 = arith.addf %201, %202 : vector<8x128xf32>
    %204 = arith.mulf %197, %119 : vector<8x128xf32>
    %205 = arith.mulf %192, %198 : vector<8x128xf32>
    %206 = arith.addf %204, %205 : vector<8x128xf32>
    %207 = math.tanh %206 : vector<8x128xf32>
    %208 = arith.mulf %203, %207 : vector<8x128xf32>
    %209 = tpu.concatenate %121, %149 in 1 : vector<8x128xf32>, vector<8x128xf32> -> vector<8x256xf32>
    %c0_93 = arith.constant 0 : index
    %c0_94 = arith.constant 0 : index
    %210 = vector.load %arg4[%c0_93, %c0_94] : memref<256x512xf32, #tpu.memory_space<vmem>>, vector<256x512xf32>
    %cst_95 = arith.constant dense<0.000000e+00> : vector<8x512xf32>
    %211 = tpu.matmul %209, %210, %cst_95 {dimension_numbers = #tpu.dot_dimension_numbers<[1], [0], [0], [1], [0, 0, 1, 1], [], []>} : vector<8x256xf32>, vector<256x512xf32>, vector<8x512xf32> -> vector<8x512xf32>
    %c0_96 = arith.constant 0 : index
    %c0_97 = arith.constant 0 : index
    %212 = vector.load %arg5[%c0_96, %c0_97] : memref<1x512xf32, #tpu.memory_space<vmem>>, vector<1x512xf32>
    %213 = vector.broadcast %212 : vector<1x512xf32> to vector<8x512xf32>
    %214 = arith.addf %211, %213 : vector<8x512xf32>
    %215 = math.tanh %214 : vector<8x512xf32>
    %216 = vector.extract_strided_slice %215 {offsets = [0, 0], sizes = [8, 128], strides = [1, 1]} : vector<8x512xf32> to vector<8x128xf32>
    %cst_98 = arith.constant 5.000000e-01 : f32
    %217 = vector.broadcast %cst_98 : f32 to vector<8x128xf32>
    %218 = arith.mulf %217, %216 : vector<8x128xf32>
    %cst_99 = arith.constant 5.000000e-01 : f32
    %219 = vector.broadcast %cst_99 : f32 to vector<8x128xf32>
    %220 = arith.addf %218, %219 : vector<8x128xf32>
    %221 = vector.extract_strided_slice %215 {offsets = [0, 128], sizes = [8, 128], strides = [1, 1]} : vector<8x512xf32> to vector<8x128xf32>
    %cst_100 = arith.constant 5.000000e-01 : f32
    %222 = vector.broadcast %cst_100 : f32 to vector<8x128xf32>
    %223 = arith.mulf %222, %221 : vector<8x128xf32>
    %cst_101 = arith.constant 5.000000e-01 : f32
    %224 = vector.broadcast %cst_101 : f32 to vector<8x128xf32>
    %225 = arith.addf %223, %224 : vector<8x128xf32>
    %226 = vector.extract_strided_slice %215 {offsets = [0, 256], sizes = [8, 128], strides = [1, 1]} : vector<8x512xf32> to vector<8x128xf32>
    %227 = vector.extract_strided_slice %215 {offsets = [0, 384], sizes = [8, 128], strides = [1, 1]} : vector<8x512xf32> to vector<8x128xf32>
    %cst_102 = arith.constant 5.000000e-01 : f32
    %228 = vector.broadcast %cst_102 : f32 to vector<8x128xf32>
    %229 = arith.mulf %228, %227 : vector<8x128xf32>
    %cst_103 = arith.constant 5.000000e-01 : f32
    %230 = vector.broadcast %cst_103 : f32 to vector<8x128xf32>
    %231 = arith.addf %229, %230 : vector<8x128xf32>
    %232 = arith.mulf %225, %147 : vector<8x128xf32>
    %233 = arith.mulf %220, %226 : vector<8x128xf32>
    %234 = arith.addf %232, %233 : vector<8x128xf32>
    %235 = math.tanh %234 : vector<8x128xf32>
    %236 = arith.mulf %231, %235 : vector<8x128xf32>
    %237 = tpu.concatenate %149, %177 in 1 : vector<8x128xf32>, vector<8x128xf32> -> vector<8x256xf32>
    %c0_104 = arith.constant 0 : index
    %c0_105 = arith.constant 0 : index
    %238 = vector.load %arg6[%c0_104, %c0_105] : memref<256x512xf32, #tpu.memory_space<vmem>>, vector<256x512xf32>
    %cst_106 = arith.constant dense<0.000000e+00> : vector<8x512xf32>
    %239 = tpu.matmul %237, %238, %cst_106 {dimension_numbers = #tpu.dot_dimension_numbers<[1], [0], [0], [1], [0, 0, 1, 1], [], []>} : vector<8x256xf32>, vector<256x512xf32>, vector<8x512xf32> -> vector<8x512xf32>
    %c0_107 = arith.constant 0 : index
    %c0_108 = arith.constant 0 : index
    %240 = vector.load %arg7[%c0_107, %c0_108] : memref<1x512xf32, #tpu.memory_space<vmem>>, vector<1x512xf32>
    %241 = vector.broadcast %240 : vector<1x512xf32> to vector<8x512xf32>
    %242 = arith.addf %239, %241 : vector<8x512xf32>
    %243 = math.tanh %242 : vector<8x512xf32>
    %244 = vector.extract_strided_slice %243 {offsets = [0, 0], sizes = [8, 128], strides = [1, 1]} : vector<8x512xf32> to vector<8x128xf32>
    %cst_109 = arith.constant 5.000000e-01 : f32
    %245 = vector.broadcast %cst_109 : f32 to vector<8x128xf32>
    %246 = arith.mulf %245, %244 : vector<8x128xf32>
    %cst_110 = arith.constant 5.000000e-01 : f32
    %247 = vector.broadcast %cst_110 : f32 to vector<8x128xf32>
    %248 = arith.addf %246, %247 : vector<8x128xf32>
    %249 = vector.extract_strided_slice %243 {offsets = [0, 128], sizes = [8, 128], strides = [1, 1]} : vector<8x512xf32> to vector<8x128xf32>
    %cst_111 = arith.constant 5.000000e-01 : f32
    %250 = vector.broadcast %cst_111 : f32 to vector<8x128xf32>
    %251 = arith.mulf %250, %249 : vector<8x128xf32>
    %cst_112 = arith.constant 5.000000e-01 : f32
    %252 = vector.broadcast %cst_112 : f32 to vector<8x128xf32>
    %253 = arith.addf %251, %252 : vector<8x128xf32>
    %254 = vector.extract_strided_slice %243 {offsets = [0, 256], sizes = [8, 128], strides = [1, 1]} : vector<8x512xf32> to vector<8x128xf32>
    %255 = vector.extract_strided_slice %243 {offsets = [0, 384], sizes = [8, 128], strides = [1, 1]} : vector<8x512xf32> to vector<8x128xf32>
    %cst_113 = arith.constant 5.000000e-01 : f32
    %256 = vector.broadcast %cst_113 : f32 to vector<8x128xf32>
    %257 = arith.mulf %256, %255 : vector<8x128xf32>
    %cst_114 = arith.constant 5.000000e-01 : f32
    %258 = vector.broadcast %cst_114 : f32 to vector<8x128xf32>
    %259 = arith.addf %257, %258 : vector<8x128xf32>
    %260 = arith.mulf %253, %175 : vector<8x128xf32>
    %261 = arith.mulf %248, %254 : vector<8x128xf32>
    %262 = arith.addf %260, %261 : vector<8x128xf32>
    %263 = math.tanh %262 : vector<8x128xf32>
    %264 = arith.mulf %259, %263 : vector<8x128xf32>
    %c0_115 = arith.constant 0 : index
    %c60 = arith.constant 60 : index
    %265 = vector.load %arg0[%c0_115, %c60] : memref<8x120xf32, #tpu.memory_space<vmem>>, vector<8x15xf32>
    %c0_116 = arith.constant 0 : index
    %c0_117 = arith.constant 0 : index
    %266 = vector.load %arg1[%c0_116, %c0_117] : memref<15x512xf32, #tpu.memory_space<vmem>>, vector<15x512xf32>
    %cst_118 = arith.constant dense<0.000000e+00> : vector<8x512xf32>
    %267 = tpu.matmul %265, %266, %cst_118 {dimension_numbers = #tpu.dot_dimension_numbers<[1], [0], [0], [1], [0, 0, 1, 1], [], []>} : vector<8x15xf32>, vector<15x512xf32>, vector<8x512xf32> -> vector<8x512xf32>
    %c0_119 = arith.constant 0 : index
    %c0_120 = arith.constant 0 : index
    %268 = vector.load %arg3[%c0_119, %c0_120] : memref<1x512xf32, #tpu.memory_space<vmem>>, vector<1x512xf32>
    %269 = vector.broadcast %268 : vector<1x512xf32> to vector<8x512xf32>
    %270 = arith.addf %267, %269 : vector<8x512xf32>
    %c0_121 = arith.constant 0 : index
    %c0_122 = arith.constant 0 : index
    %271 = vector.load %arg2[%c0_121, %c0_122] : memref<128x512xf32, #tpu.memory_space<vmem>>, vector<128x512xf32>
    %cst_123 = arith.constant dense<0.000000e+00> : vector<8x512xf32>
    %272 = tpu.matmul %208, %271, %cst_123 {dimension_numbers = #tpu.dot_dimension_numbers<[1], [0], [0], [1], [0, 0, 1, 1], [], []>} : vector<8x128xf32>, vector<128x512xf32>, vector<8x512xf32> -> vector<8x512xf32>
    %273 = arith.addf %270, %272 : vector<8x512xf32>
    %274 = math.tanh %273 : vector<8x512xf32>
    %275 = vector.extract_strided_slice %274 {offsets = [0, 0], sizes = [8, 128], strides = [1, 1]} : vector<8x512xf32> to vector<8x128xf32>
    %cst_124 = arith.constant 5.000000e-01 : f32
    %276 = vector.broadcast %cst_124 : f32 to vector<8x128xf32>
    %277 = arith.mulf %276, %275 : vector<8x128xf32>
    %cst_125 = arith.constant 5.000000e-01 : f32
    %278 = vector.broadcast %cst_125 : f32 to vector<8x128xf32>
    %279 = arith.addf %277, %278 : vector<8x128xf32>
    %280 = vector.extract_strided_slice %274 {offsets = [0, 128], sizes = [8, 128], strides = [1, 1]} : vector<8x512xf32> to vector<8x128xf32>
    %cst_126 = arith.constant 5.000000e-01 : f32
    %281 = vector.broadcast %cst_126 : f32 to vector<8x128xf32>
    %282 = arith.mulf %281, %280 : vector<8x128xf32>
    %cst_127 = arith.constant 5.000000e-01 : f32
    %283 = vector.broadcast %cst_127 : f32 to vector<8x128xf32>
    %284 = arith.addf %282, %283 : vector<8x128xf32>
    %285 = vector.extract_strided_slice %274 {offsets = [0, 256], sizes = [8, 128], strides = [1, 1]} : vector<8x512xf32> to vector<8x128xf32>
    %286 = vector.extract_strided_slice %274 {offsets = [0, 384], sizes = [8, 128], strides = [1, 1]} : vector<8x512xf32> to vector<8x128xf32>
    %cst_128 = arith.constant 5.000000e-01 : f32
    %287 = vector.broadcast %cst_128 : f32 to vector<8x128xf32>
    %288 = arith.mulf %287, %286 : vector<8x128xf32>
    %cst_129 = arith.constant 5.000000e-01 : f32
    %289 = vector.broadcast %cst_129 : f32 to vector<8x128xf32>
    %290 = arith.addf %288, %289 : vector<8x128xf32>
    %291 = arith.mulf %284, %206 : vector<8x128xf32>
    %292 = arith.mulf %279, %285 : vector<8x128xf32>
    %293 = arith.addf %291, %292 : vector<8x128xf32>
    %294 = math.tanh %293 : vector<8x128xf32>
    %295 = arith.mulf %290, %294 : vector<8x128xf32>
    %296 = tpu.concatenate %208, %236 in 1 : vector<8x128xf32>, vector<8x128xf32> -> vector<8x256xf32>
    %c0_130 = arith.constant 0 : index
    %c0_131 = arith.constant 0 : index
    %297 = vector.load %arg4[%c0_130, %c0_131] : memref<256x512xf32, #tpu.memory_space<vmem>>, vector<256x512xf32>
    %cst_132 = arith.constant dense<0.000000e+00> : vector<8x512xf32>
    %298 = tpu.matmul %296, %297, %cst_132 {dimension_numbers = #tpu.dot_dimension_numbers<[1], [0], [0], [1], [0, 0, 1, 1], [], []>} : vector<8x256xf32>, vector<256x512xf32>, vector<8x512xf32> -> vector<8x512xf32>
    %c0_133 = arith.constant 0 : index
    %c0_134 = arith.constant 0 : index
    %299 = vector.load %arg5[%c0_133, %c0_134] : memref<1x512xf32, #tpu.memory_space<vmem>>, vector<1x512xf32>
    %300 = vector.broadcast %299 : vector<1x512xf32> to vector<8x512xf32>
    %301 = arith.addf %298, %300 : vector<8x512xf32>
    %302 = math.tanh %301 : vector<8x512xf32>
    %303 = vector.extract_strided_slice %302 {offsets = [0, 0], sizes = [8, 128], strides = [1, 1]} : vector<8x512xf32> to vector<8x128xf32>
    %cst_135 = arith.constant 5.000000e-01 : f32
    %304 = vector.broadcast %cst_135 : f32 to vector<8x128xf32>
    %305 = arith.mulf %304, %303 : vector<8x128xf32>
    %cst_136 = arith.constant 5.000000e-01 : f32
    %306 = vector.broadcast %cst_136 : f32 to vector<8x128xf32>
    %307 = arith.addf %305, %306 : vector<8x128xf32>
    %308 = vector.extract_strided_slice %302 {offsets = [0, 128], sizes = [8, 128], strides = [1, 1]} : vector<8x512xf32> to vector<8x128xf32>
    %cst_137 = arith.constant 5.000000e-01 : f32
    %309 = vector.broadcast %cst_137 : f32 to vector<8x128xf32>
    %310 = arith.mulf %309, %308 : vector<8x128xf32>
    %cst_138 = arith.constant 5.000000e-01 : f32
    %311 = vector.broadcast %cst_138 : f32 to vector<8x128xf32>
    %312 = arith.addf %310, %311 : vector<8x128xf32>
    %313 = vector.extract_strided_slice %302 {offsets = [0, 256], sizes = [8, 128], strides = [1, 1]} : vector<8x512xf32> to vector<8x128xf32>
    %314 = vector.extract_strided_slice %302 {offsets = [0, 384], sizes = [8, 128], strides = [1, 1]} : vector<8x512xf32> to vector<8x128xf32>
    %cst_139 = arith.constant 5.000000e-01 : f32
    %315 = vector.broadcast %cst_139 : f32 to vector<8x128xf32>
    %316 = arith.mulf %315, %314 : vector<8x128xf32>
    %cst_140 = arith.constant 5.000000e-01 : f32
    %317 = vector.broadcast %cst_140 : f32 to vector<8x128xf32>
    %318 = arith.addf %316, %317 : vector<8x128xf32>
    %319 = arith.mulf %312, %234 : vector<8x128xf32>
    %320 = arith.mulf %307, %313 : vector<8x128xf32>
    %321 = arith.addf %319, %320 : vector<8x128xf32>
    %322 = math.tanh %321 : vector<8x128xf32>
    %323 = arith.mulf %318, %322 : vector<8x128xf32>
    %324 = tpu.concatenate %236, %264 in 1 : vector<8x128xf32>, vector<8x128xf32> -> vector<8x256xf32>
    %c0_141 = arith.constant 0 : index
    %c0_142 = arith.constant 0 : index
    %325 = vector.load %arg6[%c0_141, %c0_142] : memref<256x512xf32, #tpu.memory_space<vmem>>, vector<256x512xf32>
    %cst_143 = arith.constant dense<0.000000e+00> : vector<8x512xf32>
    %326 = tpu.matmul %324, %325, %cst_143 {dimension_numbers = #tpu.dot_dimension_numbers<[1], [0], [0], [1], [0, 0, 1, 1], [], []>} : vector<8x256xf32>, vector<256x512xf32>, vector<8x512xf32> -> vector<8x512xf32>
    %c0_144 = arith.constant 0 : index
    %c0_145 = arith.constant 0 : index
    %327 = vector.load %arg7[%c0_144, %c0_145] : memref<1x512xf32, #tpu.memory_space<vmem>>, vector<1x512xf32>
    %328 = vector.broadcast %327 : vector<1x512xf32> to vector<8x512xf32>
    %329 = arith.addf %326, %328 : vector<8x512xf32>
    %330 = math.tanh %329 : vector<8x512xf32>
    %331 = vector.extract_strided_slice %330 {offsets = [0, 0], sizes = [8, 128], strides = [1, 1]} : vector<8x512xf32> to vector<8x128xf32>
    %cst_146 = arith.constant 5.000000e-01 : f32
    %332 = vector.broadcast %cst_146 : f32 to vector<8x128xf32>
    %333 = arith.mulf %332, %331 : vector<8x128xf32>
    %cst_147 = arith.constant 5.000000e-01 : f32
    %334 = vector.broadcast %cst_147 : f32 to vector<8x128xf32>
    %335 = arith.addf %333, %334 : vector<8x128xf32>
    %336 = vector.extract_strided_slice %330 {offsets = [0, 128], sizes = [8, 128], strides = [1, 1]} : vector<8x512xf32> to vector<8x128xf32>
    %cst_148 = arith.constant 5.000000e-01 : f32
    %337 = vector.broadcast %cst_148 : f32 to vector<8x128xf32>
    %338 = arith.mulf %337, %336 : vector<8x128xf32>
    %cst_149 = arith.constant 5.000000e-01 : f32
    %339 = vector.broadcast %cst_149 : f32 to vector<8x128xf32>
    %340 = arith.addf %338, %339 : vector<8x128xf32>
    %341 = vector.extract_strided_slice %330 {offsets = [0, 256], sizes = [8, 128], strides = [1, 1]} : vector<8x512xf32> to vector<8x128xf32>
    %342 = vector.extract_strided_slice %330 {offsets = [0, 384], sizes = [8, 128], strides = [1, 1]} : vector<8x512xf32> to vector<8x128xf32>
    %cst_150 = arith.constant 5.000000e-01 : f32
    %343 = vector.broadcast %cst_150 : f32 to vector<8x128xf32>
    %344 = arith.mulf %343, %342 : vector<8x128xf32>
    %cst_151 = arith.constant 5.000000e-01 : f32
    %345 = vector.broadcast %cst_151 : f32 to vector<8x128xf32>
    %346 = arith.addf %344, %345 : vector<8x128xf32>
    %347 = arith.mulf %340, %262 : vector<8x128xf32>
    %348 = arith.mulf %335, %341 : vector<8x128xf32>
    %349 = arith.addf %347, %348 : vector<8x128xf32>
    %350 = math.tanh %349 : vector<8x128xf32>
    %351 = arith.mulf %346, %350 : vector<8x128xf32>
    %c0_152 = arith.constant 0 : index
    %c75 = arith.constant 75 : index
    %352 = vector.load %arg0[%c0_152, %c75] : memref<8x120xf32, #tpu.memory_space<vmem>>, vector<8x15xf32>
    %c0_153 = arith.constant 0 : index
    %c0_154 = arith.constant 0 : index
    %353 = vector.load %arg1[%c0_153, %c0_154] : memref<15x512xf32, #tpu.memory_space<vmem>>, vector<15x512xf32>
    %cst_155 = arith.constant dense<0.000000e+00> : vector<8x512xf32>
    %354 = tpu.matmul %352, %353, %cst_155 {dimension_numbers = #tpu.dot_dimension_numbers<[1], [0], [0], [1], [0, 0, 1, 1], [], []>} : vector<8x15xf32>, vector<15x512xf32>, vector<8x512xf32> -> vector<8x512xf32>
    %c0_156 = arith.constant 0 : index
    %c0_157 = arith.constant 0 : index
    %355 = vector.load %arg3[%c0_156, %c0_157] : memref<1x512xf32, #tpu.memory_space<vmem>>, vector<1x512xf32>
    %356 = vector.broadcast %355 : vector<1x512xf32> to vector<8x512xf32>
    %357 = arith.addf %354, %356 : vector<8x512xf32>
    %c0_158 = arith.constant 0 : index
    %c0_159 = arith.constant 0 : index
    %358 = vector.load %arg2[%c0_158, %c0_159] : memref<128x512xf32, #tpu.memory_space<vmem>>, vector<128x512xf32>
    %cst_160 = arith.constant dense<0.000000e+00> : vector<8x512xf32>
    %359 = tpu.matmul %295, %358, %cst_160 {dimension_numbers = #tpu.dot_dimension_numbers<[1], [0], [0], [1], [0, 0, 1, 1], [], []>} : vector<8x128xf32>, vector<128x512xf32>, vector<8x512xf32> -> vector<8x512xf32>
    %360 = arith.addf %357, %359 : vector<8x512xf32>
    %361 = math.tanh %360 : vector<8x512xf32>
    %362 = vector.extract_strided_slice %361 {offsets = [0, 0], sizes = [8, 128], strides = [1, 1]} : vector<8x512xf32> to vector<8x128xf32>
    %cst_161 = arith.constant 5.000000e-01 : f32
    %363 = vector.broadcast %cst_161 : f32 to vector<8x128xf32>
    %364 = arith.mulf %363, %362 : vector<8x128xf32>
    %cst_162 = arith.constant 5.000000e-01 : f32
    %365 = vector.broadcast %cst_162 : f32 to vector<8x128xf32>
    %366 = arith.addf %364, %365 : vector<8x128xf32>
    %367 = vector.extract_strided_slice %361 {offsets = [0, 128], sizes = [8, 128], strides = [1, 1]} : vector<8x512xf32> to vector<8x128xf32>
    %cst_163 = arith.constant 5.000000e-01 : f32
    %368 = vector.broadcast %cst_163 : f32 to vector<8x128xf32>
    %369 = arith.mulf %368, %367 : vector<8x128xf32>
    %cst_164 = arith.constant 5.000000e-01 : f32
    %370 = vector.broadcast %cst_164 : f32 to vector<8x128xf32>
    %371 = arith.addf %369, %370 : vector<8x128xf32>
    %372 = vector.extract_strided_slice %361 {offsets = [0, 256], sizes = [8, 128], strides = [1, 1]} : vector<8x512xf32> to vector<8x128xf32>
    %373 = vector.extract_strided_slice %361 {offsets = [0, 384], sizes = [8, 128], strides = [1, 1]} : vector<8x512xf32> to vector<8x128xf32>
    %cst_165 = arith.constant 5.000000e-01 : f32
    %374 = vector.broadcast %cst_165 : f32 to vector<8x128xf32>
    %375 = arith.mulf %374, %373 : vector<8x128xf32>
    %cst_166 = arith.constant 5.000000e-01 : f32
    %376 = vector.broadcast %cst_166 : f32 to vector<8x128xf32>
    %377 = arith.addf %375, %376 : vector<8x128xf32>
    %378 = arith.mulf %371, %293 : vector<8x128xf32>
    %379 = arith.mulf %366, %372 : vector<8x128xf32>
    %380 = arith.addf %378, %379 : vector<8x128xf32>
    %381 = math.tanh %380 : vector<8x128xf32>
    %382 = arith.mulf %377, %381 : vector<8x128xf32>
    %383 = tpu.concatenate %295, %323 in 1 : vector<8x128xf32>, vector<8x128xf32> -> vector<8x256xf32>
    %c0_167 = arith.constant 0 : index
    %c0_168 = arith.constant 0 : index
    %384 = vector.load %arg4[%c0_167, %c0_168] : memref<256x512xf32, #tpu.memory_space<vmem>>, vector<256x512xf32>
    %cst_169 = arith.constant dense<0.000000e+00> : vector<8x512xf32>
    %385 = tpu.matmul %383, %384, %cst_169 {dimension_numbers = #tpu.dot_dimension_numbers<[1], [0], [0], [1], [0, 0, 1, 1], [], []>} : vector<8x256xf32>, vector<256x512xf32>, vector<8x512xf32> -> vector<8x512xf32>
    %c0_170 = arith.constant 0 : index
    %c0_171 = arith.constant 0 : index
    %386 = vector.load %arg5[%c0_170, %c0_171] : memref<1x512xf32, #tpu.memory_space<vmem>>, vector<1x512xf32>
    %387 = vector.broadcast %386 : vector<1x512xf32> to vector<8x512xf32>
    %388 = arith.addf %385, %387 : vector<8x512xf32>
    %389 = math.tanh %388 : vector<8x512xf32>
    %390 = vector.extract_strided_slice %389 {offsets = [0, 0], sizes = [8, 128], strides = [1, 1]} : vector<8x512xf32> to vector<8x128xf32>
    %cst_172 = arith.constant 5.000000e-01 : f32
    %391 = vector.broadcast %cst_172 : f32 to vector<8x128xf32>
    %392 = arith.mulf %391, %390 : vector<8x128xf32>
    %cst_173 = arith.constant 5.000000e-01 : f32
    %393 = vector.broadcast %cst_173 : f32 to vector<8x128xf32>
    %394 = arith.addf %392, %393 : vector<8x128xf32>
    %395 = vector.extract_strided_slice %389 {offsets = [0, 128], sizes = [8, 128], strides = [1, 1]} : vector<8x512xf32> to vector<8x128xf32>
    %cst_174 = arith.constant 5.000000e-01 : f32
    %396 = vector.broadcast %cst_174 : f32 to vector<8x128xf32>
    %397 = arith.mulf %396, %395 : vector<8x128xf32>
    %cst_175 = arith.constant 5.000000e-01 : f32
    %398 = vector.broadcast %cst_175 : f32 to vector<8x128xf32>
    %399 = arith.addf %397, %398 : vector<8x128xf32>
    %400 = vector.extract_strided_slice %389 {offsets = [0, 256], sizes = [8, 128], strides = [1, 1]} : vector<8x512xf32> to vector<8x128xf32>
    %401 = vector.extract_strided_slice %389 {offsets = [0, 384], sizes = [8, 128], strides = [1, 1]} : vector<8x512xf32> to vector<8x128xf32>
    %cst_176 = arith.constant 5.000000e-01 : f32
    %402 = vector.broadcast %cst_176 : f32 to vector<8x128xf32>
    %403 = arith.mulf %402, %401 : vector<8x128xf32>
    %cst_177 = arith.constant 5.000000e-01 : f32
    %404 = vector.broadcast %cst_177 : f32 to vector<8x128xf32>
    %405 = arith.addf %403, %404 : vector<8x128xf32>
    %406 = arith.mulf %399, %321 : vector<8x128xf32>
    %407 = arith.mulf %394, %400 : vector<8x128xf32>
    %408 = arith.addf %406, %407 : vector<8x128xf32>
    %409 = math.tanh %408 : vector<8x128xf32>
    %410 = arith.mulf %405, %409 : vector<8x128xf32>
    %411 = tpu.concatenate %323, %351 in 1 : vector<8x128xf32>, vector<8x128xf32> -> vector<8x256xf32>
    %c0_178 = arith.constant 0 : index
    %c0_179 = arith.constant 0 : index
    %412 = vector.load %arg6[%c0_178, %c0_179] : memref<256x512xf32, #tpu.memory_space<vmem>>, vector<256x512xf32>
    %cst_180 = arith.constant dense<0.000000e+00> : vector<8x512xf32>
    %413 = tpu.matmul %411, %412, %cst_180 {dimension_numbers = #tpu.dot_dimension_numbers<[1], [0], [0], [1], [0, 0, 1, 1], [], []>} : vector<8x256xf32>, vector<256x512xf32>, vector<8x512xf32> -> vector<8x512xf32>
    %c0_181 = arith.constant 0 : index
    %c0_182 = arith.constant 0 : index
    %414 = vector.load %arg7[%c0_181, %c0_182] : memref<1x512xf32, #tpu.memory_space<vmem>>, vector<1x512xf32>
    %415 = vector.broadcast %414 : vector<1x512xf32> to vector<8x512xf32>
    %416 = arith.addf %413, %415 : vector<8x512xf32>
    %417 = math.tanh %416 : vector<8x512xf32>
    %418 = vector.extract_strided_slice %417 {offsets = [0, 0], sizes = [8, 128], strides = [1, 1]} : vector<8x512xf32> to vector<8x128xf32>
    %cst_183 = arith.constant 5.000000e-01 : f32
    %419 = vector.broadcast %cst_183 : f32 to vector<8x128xf32>
    %420 = arith.mulf %419, %418 : vector<8x128xf32>
    %cst_184 = arith.constant 5.000000e-01 : f32
    %421 = vector.broadcast %cst_184 : f32 to vector<8x128xf32>
    %422 = arith.addf %420, %421 : vector<8x128xf32>
    %423 = vector.extract_strided_slice %417 {offsets = [0, 128], sizes = [8, 128], strides = [1, 1]} : vector<8x512xf32> to vector<8x128xf32>
    %cst_185 = arith.constant 5.000000e-01 : f32
    %424 = vector.broadcast %cst_185 : f32 to vector<8x128xf32>
    %425 = arith.mulf %424, %423 : vector<8x128xf32>
    %cst_186 = arith.constant 5.000000e-01 : f32
    %426 = vector.broadcast %cst_186 : f32 to vector<8x128xf32>
    %427 = arith.addf %425, %426 : vector<8x128xf32>
    %428 = vector.extract_strided_slice %417 {offsets = [0, 256], sizes = [8, 128], strides = [1, 1]} : vector<8x512xf32> to vector<8x128xf32>
    %429 = vector.extract_strided_slice %417 {offsets = [0, 384], sizes = [8, 128], strides = [1, 1]} : vector<8x512xf32> to vector<8x128xf32>
    %cst_187 = arith.constant 5.000000e-01 : f32
    %430 = vector.broadcast %cst_187 : f32 to vector<8x128xf32>
    %431 = arith.mulf %430, %429 : vector<8x128xf32>
    %cst_188 = arith.constant 5.000000e-01 : f32
    %432 = vector.broadcast %cst_188 : f32 to vector<8x128xf32>
    %433 = arith.addf %431, %432 : vector<8x128xf32>
    %434 = arith.mulf %427, %349 : vector<8x128xf32>
    %435 = arith.mulf %422, %428 : vector<8x128xf32>
    %436 = arith.addf %434, %435 : vector<8x128xf32>
    %437 = math.tanh %436 : vector<8x128xf32>
    %438 = arith.mulf %433, %437 : vector<8x128xf32>
    %c0_189 = arith.constant 0 : index
    %c90 = arith.constant 90 : index
    %439 = vector.load %arg0[%c0_189, %c90] : memref<8x120xf32, #tpu.memory_space<vmem>>, vector<8x15xf32>
    %c0_190 = arith.constant 0 : index
    %c0_191 = arith.constant 0 : index
    %440 = vector.load %arg1[%c0_190, %c0_191] : memref<15x512xf32, #tpu.memory_space<vmem>>, vector<15x512xf32>
    %cst_192 = arith.constant dense<0.000000e+00> : vector<8x512xf32>
    %441 = tpu.matmul %439, %440, %cst_192 {dimension_numbers = #tpu.dot_dimension_numbers<[1], [0], [0], [1], [0, 0, 1, 1], [], []>} : vector<8x15xf32>, vector<15x512xf32>, vector<8x512xf32> -> vector<8x512xf32>
    %c0_193 = arith.constant 0 : index
    %c0_194 = arith.constant 0 : index
    %442 = vector.load %arg3[%c0_193, %c0_194] : memref<1x512xf32, #tpu.memory_space<vmem>>, vector<1x512xf32>
    %443 = vector.broadcast %442 : vector<1x512xf32> to vector<8x512xf32>
    %444 = arith.addf %441, %443 : vector<8x512xf32>
    %c0_195 = arith.constant 0 : index
    %c0_196 = arith.constant 0 : index
    %445 = vector.load %arg2[%c0_195, %c0_196] : memref<128x512xf32, #tpu.memory_space<vmem>>, vector<128x512xf32>
    %cst_197 = arith.constant dense<0.000000e+00> : vector<8x512xf32>
    %446 = tpu.matmul %382, %445, %cst_197 {dimension_numbers = #tpu.dot_dimension_numbers<[1], [0], [0], [1], [0, 0, 1, 1], [], []>} : vector<8x128xf32>, vector<128x512xf32>, vector<8x512xf32> -> vector<8x512xf32>
    %447 = arith.addf %444, %446 : vector<8x512xf32>
    %448 = math.tanh %447 : vector<8x512xf32>
    %449 = vector.extract_strided_slice %448 {offsets = [0, 0], sizes = [8, 128], strides = [1, 1]} : vector<8x512xf32> to vector<8x128xf32>
    %cst_198 = arith.constant 5.000000e-01 : f32
    %450 = vector.broadcast %cst_198 : f32 to vector<8x128xf32>
    %451 = arith.mulf %450, %449 : vector<8x128xf32>
    %cst_199 = arith.constant 5.000000e-01 : f32
    %452 = vector.broadcast %cst_199 : f32 to vector<8x128xf32>
    %453 = arith.addf %451, %452 : vector<8x128xf32>
    %454 = vector.extract_strided_slice %448 {offsets = [0, 128], sizes = [8, 128], strides = [1, 1]} : vector<8x512xf32> to vector<8x128xf32>
    %cst_200 = arith.constant 5.000000e-01 : f32
    %455 = vector.broadcast %cst_200 : f32 to vector<8x128xf32>
    %456 = arith.mulf %455, %454 : vector<8x128xf32>
    %cst_201 = arith.constant 5.000000e-01 : f32
    %457 = vector.broadcast %cst_201 : f32 to vector<8x128xf32>
    %458 = arith.addf %456, %457 : vector<8x128xf32>
    %459 = vector.extract_strided_slice %448 {offsets = [0, 256], sizes = [8, 128], strides = [1, 1]} : vector<8x512xf32> to vector<8x128xf32>
    %460 = vector.extract_strided_slice %448 {offsets = [0, 384], sizes = [8, 128], strides = [1, 1]} : vector<8x512xf32> to vector<8x128xf32>
    %cst_202 = arith.constant 5.000000e-01 : f32
    %461 = vector.broadcast %cst_202 : f32 to vector<8x128xf32>
    %462 = arith.mulf %461, %460 : vector<8x128xf32>
    %cst_203 = arith.constant 5.000000e-01 : f32
    %463 = vector.broadcast %cst_203 : f32 to vector<8x128xf32>
    %464 = arith.addf %462, %463 : vector<8x128xf32>
    %465 = arith.mulf %458, %380 : vector<8x128xf32>
    %466 = arith.mulf %453, %459 : vector<8x128xf32>
    %467 = arith.addf %465, %466 : vector<8x128xf32>
    %468 = math.tanh %467 : vector<8x128xf32>
    %469 = arith.mulf %464, %468 : vector<8x128xf32>
    %470 = tpu.concatenate %382, %410 in 1 : vector<8x128xf32>, vector<8x128xf32> -> vector<8x256xf32>
    %c0_204 = arith.constant 0 : index
    %c0_205 = arith.constant 0 : index
    %471 = vector.load %arg4[%c0_204, %c0_205] : memref<256x512xf32, #tpu.memory_space<vmem>>, vector<256x512xf32>
    %cst_206 = arith.constant dense<0.000000e+00> : vector<8x512xf32>
    %472 = tpu.matmul %470, %471, %cst_206 {dimension_numbers = #tpu.dot_dimension_numbers<[1], [0], [0], [1], [0, 0, 1, 1], [], []>} : vector<8x256xf32>, vector<256x512xf32>, vector<8x512xf32> -> vector<8x512xf32>
    %c0_207 = arith.constant 0 : index
    %c0_208 = arith.constant 0 : index
    %473 = vector.load %arg5[%c0_207, %c0_208] : memref<1x512xf32, #tpu.memory_space<vmem>>, vector<1x512xf32>
    %474 = vector.broadcast %473 : vector<1x512xf32> to vector<8x512xf32>
    %475 = arith.addf %472, %474 : vector<8x512xf32>
    %476 = math.tanh %475 : vector<8x512xf32>
    %477 = vector.extract_strided_slice %476 {offsets = [0, 0], sizes = [8, 128], strides = [1, 1]} : vector<8x512xf32> to vector<8x128xf32>
    %cst_209 = arith.constant 5.000000e-01 : f32
    %478 = vector.broadcast %cst_209 : f32 to vector<8x128xf32>
    %479 = arith.mulf %478, %477 : vector<8x128xf32>
    %cst_210 = arith.constant 5.000000e-01 : f32
    %480 = vector.broadcast %cst_210 : f32 to vector<8x128xf32>
    %481 = arith.addf %479, %480 : vector<8x128xf32>
    %482 = vector.extract_strided_slice %476 {offsets = [0, 128], sizes = [8, 128], strides = [1, 1]} : vector<8x512xf32> to vector<8x128xf32>
    %cst_211 = arith.constant 5.000000e-01 : f32
    %483 = vector.broadcast %cst_211 : f32 to vector<8x128xf32>
    %484 = arith.mulf %483, %482 : vector<8x128xf32>
    %cst_212 = arith.constant 5.000000e-01 : f32
    %485 = vector.broadcast %cst_212 : f32 to vector<8x128xf32>
    %486 = arith.addf %484, %485 : vector<8x128xf32>
    %487 = vector.extract_strided_slice %476 {offsets = [0, 256], sizes = [8, 128], strides = [1, 1]} : vector<8x512xf32> to vector<8x128xf32>
    %488 = vector.extract_strided_slice %476 {offsets = [0, 384], sizes = [8, 128], strides = [1, 1]} : vector<8x512xf32> to vector<8x128xf32>
    %cst_213 = arith.constant 5.000000e-01 : f32
    %489 = vector.broadcast %cst_213 : f32 to vector<8x128xf32>
    %490 = arith.mulf %489, %488 : vector<8x128xf32>
    %cst_214 = arith.constant 5.000000e-01 : f32
    %491 = vector.broadcast %cst_214 : f32 to vector<8x128xf32>
    %492 = arith.addf %490, %491 : vector<8x128xf32>
    %493 = arith.mulf %486, %408 : vector<8x128xf32>
    %494 = arith.mulf %481, %487 : vector<8x128xf32>
    %495 = arith.addf %493, %494 : vector<8x128xf32>
    %496 = math.tanh %495 : vector<8x128xf32>
    %497 = arith.mulf %492, %496 : vector<8x128xf32>
    %498 = tpu.concatenate %410, %438 in 1 : vector<8x128xf32>, vector<8x128xf32> -> vector<8x256xf32>
    %c0_215 = arith.constant 0 : index
    %c0_216 = arith.constant 0 : index
    %499 = vector.load %arg6[%c0_215, %c0_216] : memref<256x512xf32, #tpu.memory_space<vmem>>, vector<256x512xf32>
    %cst_217 = arith.constant dense<0.000000e+00> : vector<8x512xf32>
    %500 = tpu.matmul %498, %499, %cst_217 {dimension_numbers = #tpu.dot_dimension_numbers<[1], [0], [0], [1], [0, 0, 1, 1], [], []>} : vector<8x256xf32>, vector<256x512xf32>, vector<8x512xf32> -> vector<8x512xf32>
    %c0_218 = arith.constant 0 : index
    %c0_219 = arith.constant 0 : index
    %501 = vector.load %arg7[%c0_218, %c0_219] : memref<1x512xf32, #tpu.memory_space<vmem>>, vector<1x512xf32>
    %502 = vector.broadcast %501 : vector<1x512xf32> to vector<8x512xf32>
    %503 = arith.addf %500, %502 : vector<8x512xf32>
    %504 = math.tanh %503 : vector<8x512xf32>
    %505 = vector.extract_strided_slice %504 {offsets = [0, 0], sizes = [8, 128], strides = [1, 1]} : vector<8x512xf32> to vector<8x128xf32>
    %cst_220 = arith.constant 5.000000e-01 : f32
    %506 = vector.broadcast %cst_220 : f32 to vector<8x128xf32>
    %507 = arith.mulf %506, %505 : vector<8x128xf32>
    %cst_221 = arith.constant 5.000000e-01 : f32
    %508 = vector.broadcast %cst_221 : f32 to vector<8x128xf32>
    %509 = arith.addf %507, %508 : vector<8x128xf32>
    %510 = vector.extract_strided_slice %504 {offsets = [0, 128], sizes = [8, 128], strides = [1, 1]} : vector<8x512xf32> to vector<8x128xf32>
    %cst_222 = arith.constant 5.000000e-01 : f32
    %511 = vector.broadcast %cst_222 : f32 to vector<8x128xf32>
    %512 = arith.mulf %511, %510 : vector<8x128xf32>
    %cst_223 = arith.constant 5.000000e-01 : f32
    %513 = vector.broadcast %cst_223 : f32 to vector<8x128xf32>
    %514 = arith.addf %512, %513 : vector<8x128xf32>
    %515 = vector.extract_strided_slice %504 {offsets = [0, 256], sizes = [8, 128], strides = [1, 1]} : vector<8x512xf32> to vector<8x128xf32>
    %516 = vector.extract_strided_slice %504 {offsets = [0, 384], sizes = [8, 128], strides = [1, 1]} : vector<8x512xf32> to vector<8x128xf32>
    %cst_224 = arith.constant 5.000000e-01 : f32
    %517 = vector.broadcast %cst_224 : f32 to vector<8x128xf32>
    %518 = arith.mulf %517, %516 : vector<8x128xf32>
    %cst_225 = arith.constant 5.000000e-01 : f32
    %519 = vector.broadcast %cst_225 : f32 to vector<8x128xf32>
    %520 = arith.addf %518, %519 : vector<8x128xf32>
    %521 = arith.mulf %514, %436 : vector<8x128xf32>
    %522 = arith.mulf %509, %515 : vector<8x128xf32>
    %523 = arith.addf %521, %522 : vector<8x128xf32>
    %524 = math.tanh %523 : vector<8x128xf32>
    %525 = arith.mulf %520, %524 : vector<8x128xf32>
    %c0_226 = arith.constant 0 : index
    %c105 = arith.constant 105 : index
    %526 = vector.load %arg0[%c0_226, %c105] : memref<8x120xf32, #tpu.memory_space<vmem>>, vector<8x15xf32>
    %c0_227 = arith.constant 0 : index
    %c0_228 = arith.constant 0 : index
    %527 = vector.load %arg1[%c0_227, %c0_228] : memref<15x512xf32, #tpu.memory_space<vmem>>, vector<15x512xf32>
    %cst_229 = arith.constant dense<0.000000e+00> : vector<8x512xf32>
    %528 = tpu.matmul %526, %527, %cst_229 {dimension_numbers = #tpu.dot_dimension_numbers<[1], [0], [0], [1], [0, 0, 1, 1], [], []>} : vector<8x15xf32>, vector<15x512xf32>, vector<8x512xf32> -> vector<8x512xf32>
    %c0_230 = arith.constant 0 : index
    %c0_231 = arith.constant 0 : index
    %529 = vector.load %arg3[%c0_230, %c0_231] : memref<1x512xf32, #tpu.memory_space<vmem>>, vector<1x512xf32>
    %530 = vector.broadcast %529 : vector<1x512xf32> to vector<8x512xf32>
    %531 = arith.addf %528, %530 : vector<8x512xf32>
    %c0_232 = arith.constant 0 : index
    %c0_233 = arith.constant 0 : index
    %532 = vector.load %arg2[%c0_232, %c0_233] : memref<128x512xf32, #tpu.memory_space<vmem>>, vector<128x512xf32>
    %cst_234 = arith.constant dense<0.000000e+00> : vector<8x512xf32>
    %533 = tpu.matmul %469, %532, %cst_234 {dimension_numbers = #tpu.dot_dimension_numbers<[1], [0], [0], [1], [0, 0, 1, 1], [], []>} : vector<8x128xf32>, vector<128x512xf32>, vector<8x512xf32> -> vector<8x512xf32>
    %534 = arith.addf %531, %533 : vector<8x512xf32>
    %535 = math.tanh %534 : vector<8x512xf32>
    %536 = vector.extract_strided_slice %535 {offsets = [0, 0], sizes = [8, 128], strides = [1, 1]} : vector<8x512xf32> to vector<8x128xf32>
    %cst_235 = arith.constant 5.000000e-01 : f32
    %537 = vector.broadcast %cst_235 : f32 to vector<8x128xf32>
    %538 = arith.mulf %537, %536 : vector<8x128xf32>
    %cst_236 = arith.constant 5.000000e-01 : f32
    %539 = vector.broadcast %cst_236 : f32 to vector<8x128xf32>
    %540 = arith.addf %538, %539 : vector<8x128xf32>
    %541 = vector.extract_strided_slice %535 {offsets = [0, 128], sizes = [8, 128], strides = [1, 1]} : vector<8x512xf32> to vector<8x128xf32>
    %cst_237 = arith.constant 5.000000e-01 : f32
    %542 = vector.broadcast %cst_237 : f32 to vector<8x128xf32>
    %543 = arith.mulf %542, %541 : vector<8x128xf32>
    %cst_238 = arith.constant 5.000000e-01 : f32
    %544 = vector.broadcast %cst_238 : f32 to vector<8x128xf32>
    %545 = arith.addf %543, %544 : vector<8x128xf32>
    %546 = vector.extract_strided_slice %535 {offsets = [0, 256], sizes = [8, 128], strides = [1, 1]} : vector<8x512xf32> to vector<8x128xf32>
    %547 = vector.extract_strided_slice %535 {offsets = [0, 384], sizes = [8, 128], strides = [1, 1]} : vector<8x512xf32> to vector<8x128xf32>
    %cst_239 = arith.constant 5.000000e-01 : f32
    %548 = vector.broadcast %cst_239 : f32 to vector<8x128xf32>
    %549 = arith.mulf %548, %547 : vector<8x128xf32>
    %cst_240 = arith.constant 5.000000e-01 : f32
    %550 = vector.broadcast %cst_240 : f32 to vector<8x128xf32>
    %551 = arith.addf %549, %550 : vector<8x128xf32>
    %552 = arith.mulf %545, %467 : vector<8x128xf32>
    %553 = arith.mulf %540, %546 : vector<8x128xf32>
    %554 = arith.addf %552, %553 : vector<8x128xf32>
    %555 = math.tanh %554 : vector<8x128xf32>
    %556 = arith.mulf %551, %555 : vector<8x128xf32>
    %557 = tpu.concatenate %469, %497 in 1 : vector<8x128xf32>, vector<8x128xf32> -> vector<8x256xf32>
    %c0_241 = arith.constant 0 : index
    %c0_242 = arith.constant 0 : index
    %558 = vector.load %arg4[%c0_241, %c0_242] : memref<256x512xf32, #tpu.memory_space<vmem>>, vector<256x512xf32>
    %cst_243 = arith.constant dense<0.000000e+00> : vector<8x512xf32>
    %559 = tpu.matmul %557, %558, %cst_243 {dimension_numbers = #tpu.dot_dimension_numbers<[1], [0], [0], [1], [0, 0, 1, 1], [], []>} : vector<8x256xf32>, vector<256x512xf32>, vector<8x512xf32> -> vector<8x512xf32>
    %c0_244 = arith.constant 0 : index
    %c0_245 = arith.constant 0 : index
    %560 = vector.load %arg5[%c0_244, %c0_245] : memref<1x512xf32, #tpu.memory_space<vmem>>, vector<1x512xf32>
    %561 = vector.broadcast %560 : vector<1x512xf32> to vector<8x512xf32>
    %562 = arith.addf %559, %561 : vector<8x512xf32>
    %563 = math.tanh %562 : vector<8x512xf32>
    %564 = vector.extract_strided_slice %563 {offsets = [0, 0], sizes = [8, 128], strides = [1, 1]} : vector<8x512xf32> to vector<8x128xf32>
    %cst_246 = arith.constant 5.000000e-01 : f32
    %565 = vector.broadcast %cst_246 : f32 to vector<8x128xf32>
    %566 = arith.mulf %565, %564 : vector<8x128xf32>
    %cst_247 = arith.constant 5.000000e-01 : f32
    %567 = vector.broadcast %cst_247 : f32 to vector<8x128xf32>
    %568 = arith.addf %566, %567 : vector<8x128xf32>
    %569 = vector.extract_strided_slice %563 {offsets = [0, 128], sizes = [8, 128], strides = [1, 1]} : vector<8x512xf32> to vector<8x128xf32>
    %cst_248 = arith.constant 5.000000e-01 : f32
    %570 = vector.broadcast %cst_248 : f32 to vector<8x128xf32>
    %571 = arith.mulf %570, %569 : vector<8x128xf32>
    %cst_249 = arith.constant 5.000000e-01 : f32
    %572 = vector.broadcast %cst_249 : f32 to vector<8x128xf32>
    %573 = arith.addf %571, %572 : vector<8x128xf32>
    %574 = vector.extract_strided_slice %563 {offsets = [0, 256], sizes = [8, 128], strides = [1, 1]} : vector<8x512xf32> to vector<8x128xf32>
    %575 = vector.extract_strided_slice %563 {offsets = [0, 384], sizes = [8, 128], strides = [1, 1]} : vector<8x512xf32> to vector<8x128xf32>
    %cst_250 = arith.constant 5.000000e-01 : f32
    %576 = vector.broadcast %cst_250 : f32 to vector<8x128xf32>
    %577 = arith.mulf %576, %575 : vector<8x128xf32>
    %cst_251 = arith.constant 5.000000e-01 : f32
    %578 = vector.broadcast %cst_251 : f32 to vector<8x128xf32>
    %579 = arith.addf %577, %578 : vector<8x128xf32>
    %580 = arith.mulf %573, %495 : vector<8x128xf32>
    %581 = arith.mulf %568, %574 : vector<8x128xf32>
    %582 = arith.addf %580, %581 : vector<8x128xf32>
    %583 = math.tanh %582 : vector<8x128xf32>
    %584 = arith.mulf %579, %583 : vector<8x128xf32>
    %585 = tpu.concatenate %497, %525 in 1 : vector<8x128xf32>, vector<8x128xf32> -> vector<8x256xf32>
    %c0_252 = arith.constant 0 : index
    %c0_253 = arith.constant 0 : index
    %586 = vector.load %arg6[%c0_252, %c0_253] : memref<256x512xf32, #tpu.memory_space<vmem>>, vector<256x512xf32>
    %cst_254 = arith.constant dense<0.000000e+00> : vector<8x512xf32>
    %587 = tpu.matmul %585, %586, %cst_254 {dimension_numbers = #tpu.dot_dimension_numbers<[1], [0], [0], [1], [0, 0, 1, 1], [], []>} : vector<8x256xf32>, vector<256x512xf32>, vector<8x512xf32> -> vector<8x512xf32>
    %c0_255 = arith.constant 0 : index
    %c0_256 = arith.constant 0 : index
    %588 = vector.load %arg7[%c0_255, %c0_256] : memref<1x512xf32, #tpu.memory_space<vmem>>, vector<1x512xf32>
    %589 = vector.broadcast %588 : vector<1x512xf32> to vector<8x512xf32>
    %590 = arith.addf %587, %589 : vector<8x512xf32>
    %591 = math.tanh %590 : vector<8x512xf32>
    %592 = vector.extract_strided_slice %591 {offsets = [0, 0], sizes = [8, 128], strides = [1, 1]} : vector<8x512xf32> to vector<8x128xf32>
    %cst_257 = arith.constant 5.000000e-01 : f32
    %593 = vector.broadcast %cst_257 : f32 to vector<8x128xf32>
    %594 = arith.mulf %593, %592 : vector<8x128xf32>
    %cst_258 = arith.constant 5.000000e-01 : f32
    %595 = vector.broadcast %cst_258 : f32 to vector<8x128xf32>
    %596 = arith.addf %594, %595 : vector<8x128xf32>
    %597 = vector.extract_strided_slice %591 {offsets = [0, 128], sizes = [8, 128], strides = [1, 1]} : vector<8x512xf32> to vector<8x128xf32>
    %cst_259 = arith.constant 5.000000e-01 : f32
    %598 = vector.broadcast %cst_259 : f32 to vector<8x128xf32>
    %599 = arith.mulf %598, %597 : vector<8x128xf32>
    %cst_260 = arith.constant 5.000000e-01 : f32
    %600 = vector.broadcast %cst_260 : f32 to vector<8x128xf32>
    %601 = arith.addf %599, %600 : vector<8x128xf32>
    %602 = vector.extract_strided_slice %591 {offsets = [0, 256], sizes = [8, 128], strides = [1, 1]} : vector<8x512xf32> to vector<8x128xf32>
    %603 = vector.extract_strided_slice %591 {offsets = [0, 384], sizes = [8, 128], strides = [1, 1]} : vector<8x512xf32> to vector<8x128xf32>
    %cst_261 = arith.constant 5.000000e-01 : f32
    %604 = vector.broadcast %cst_261 : f32 to vector<8x128xf32>
    %605 = arith.mulf %604, %603 : vector<8x128xf32>
    %cst_262 = arith.constant 5.000000e-01 : f32
    %606 = vector.broadcast %cst_262 : f32 to vector<8x128xf32>
    %607 = arith.addf %605, %606 : vector<8x128xf32>
    %608 = arith.mulf %601, %523 : vector<8x128xf32>
    %609 = arith.mulf %596, %602 : vector<8x128xf32>
    %610 = arith.addf %608, %609 : vector<8x128xf32>
    %611 = math.tanh %610 : vector<8x128xf32>
    %612 = arith.mulf %607, %611 : vector<8x128xf32>
    %613 = tpu.concatenate %556, %584 in 1 : vector<8x128xf32>, vector<8x128xf32> -> vector<8x256xf32>
    %c0_263 = arith.constant 0 : index
    %c0_264 = arith.constant 0 : index
    %614 = vector.load %arg4[%c0_263, %c0_264] : memref<256x512xf32, #tpu.memory_space<vmem>>, vector<256x512xf32>
    %cst_265 = arith.constant dense<0.000000e+00> : vector<8x512xf32>
    %615 = tpu.matmul %613, %614, %cst_265 {dimension_numbers = #tpu.dot_dimension_numbers<[1], [0], [0], [1], [0, 0, 1, 1], [], []>} : vector<8x256xf32>, vector<256x512xf32>, vector<8x512xf32> -> vector<8x512xf32>
    %c0_266 = arith.constant 0 : index
    %c0_267 = arith.constant 0 : index
    %616 = vector.load %arg5[%c0_266, %c0_267] : memref<1x512xf32, #tpu.memory_space<vmem>>, vector<1x512xf32>
    %617 = vector.broadcast %616 : vector<1x512xf32> to vector<8x512xf32>
    %618 = arith.addf %615, %617 : vector<8x512xf32>
    %619 = math.tanh %618 : vector<8x512xf32>
    %620 = vector.extract_strided_slice %619 {offsets = [0, 0], sizes = [8, 128], strides = [1, 1]} : vector<8x512xf32> to vector<8x128xf32>
    %cst_268 = arith.constant 5.000000e-01 : f32
    %621 = vector.broadcast %cst_268 : f32 to vector<8x128xf32>
    %622 = arith.mulf %621, %620 : vector<8x128xf32>
    %cst_269 = arith.constant 5.000000e-01 : f32
    %623 = vector.broadcast %cst_269 : f32 to vector<8x128xf32>
    %624 = arith.addf %622, %623 : vector<8x128xf32>
    %625 = vector.extract_strided_slice %619 {offsets = [0, 128], sizes = [8, 128], strides = [1, 1]} : vector<8x512xf32> to vector<8x128xf32>
    %cst_270 = arith.constant 5.000000e-01 : f32
    %626 = vector.broadcast %cst_270 : f32 to vector<8x128xf32>
    %627 = arith.mulf %626, %625 : vector<8x128xf32>
    %cst_271 = arith.constant 5.000000e-01 : f32
    %628 = vector.broadcast %cst_271 : f32 to vector<8x128xf32>
    %629 = arith.addf %627, %628 : vector<8x128xf32>
    %630 = vector.extract_strided_slice %619 {offsets = [0, 256], sizes = [8, 128], strides = [1, 1]} : vector<8x512xf32> to vector<8x128xf32>
    %631 = vector.extract_strided_slice %619 {offsets = [0, 384], sizes = [8, 128], strides = [1, 1]} : vector<8x512xf32> to vector<8x128xf32>
    %cst_272 = arith.constant 5.000000e-01 : f32
    %632 = vector.broadcast %cst_272 : f32 to vector<8x128xf32>
    %633 = arith.mulf %632, %631 : vector<8x128xf32>
    %cst_273 = arith.constant 5.000000e-01 : f32
    %634 = vector.broadcast %cst_273 : f32 to vector<8x128xf32>
    %635 = arith.addf %633, %634 : vector<8x128xf32>
    %636 = arith.mulf %629, %582 : vector<8x128xf32>
    %637 = arith.mulf %624, %630 : vector<8x128xf32>
    %638 = arith.addf %636, %637 : vector<8x128xf32>
    %639 = math.tanh %638 : vector<8x128xf32>
    %640 = arith.mulf %635, %639 : vector<8x128xf32>
    %641 = tpu.concatenate %584, %612 in 1 : vector<8x128xf32>, vector<8x128xf32> -> vector<8x256xf32>
    %c0_274 = arith.constant 0 : index
    %c0_275 = arith.constant 0 : index
    %642 = vector.load %arg6[%c0_274, %c0_275] : memref<256x512xf32, #tpu.memory_space<vmem>>, vector<256x512xf32>
    %cst_276 = arith.constant dense<0.000000e+00> : vector<8x512xf32>
    %643 = tpu.matmul %641, %642, %cst_276 {dimension_numbers = #tpu.dot_dimension_numbers<[1], [0], [0], [1], [0, 0, 1, 1], [], []>} : vector<8x256xf32>, vector<256x512xf32>, vector<8x512xf32> -> vector<8x512xf32>
    %c0_277 = arith.constant 0 : index
    %c0_278 = arith.constant 0 : index
    %644 = vector.load %arg7[%c0_277, %c0_278] : memref<1x512xf32, #tpu.memory_space<vmem>>, vector<1x512xf32>
    %645 = vector.broadcast %644 : vector<1x512xf32> to vector<8x512xf32>
    %646 = arith.addf %643, %645 : vector<8x512xf32>
    %647 = math.tanh %646 : vector<8x512xf32>
    %648 = vector.extract_strided_slice %647 {offsets = [0, 0], sizes = [8, 128], strides = [1, 1]} : vector<8x512xf32> to vector<8x128xf32>
    %cst_279 = arith.constant 5.000000e-01 : f32
    %649 = vector.broadcast %cst_279 : f32 to vector<8x128xf32>
    %650 = arith.mulf %649, %648 : vector<8x128xf32>
    %cst_280 = arith.constant 5.000000e-01 : f32
    %651 = vector.broadcast %cst_280 : f32 to vector<8x128xf32>
    %652 = arith.addf %650, %651 : vector<8x128xf32>
    %653 = vector.extract_strided_slice %647 {offsets = [0, 128], sizes = [8, 128], strides = [1, 1]} : vector<8x512xf32> to vector<8x128xf32>
    %cst_281 = arith.constant 5.000000e-01 : f32
    %654 = vector.broadcast %cst_281 : f32 to vector<8x128xf32>
    %655 = arith.mulf %654, %653 : vector<8x128xf32>
    %cst_282 = arith.constant 5.000000e-01 : f32
    %656 = vector.broadcast %cst_282 : f32 to vector<8x128xf32>
    %657 = arith.addf %655, %656 : vector<8x128xf32>
    %658 = vector.extract_strided_slice %647 {offsets = [0, 256], sizes = [8, 128], strides = [1, 1]} : vector<8x512xf32> to vector<8x128xf32>
    %659 = vector.extract_strided_slice %647 {offsets = [0, 384], sizes = [8, 128], strides = [1, 1]} : vector<8x512xf32> to vector<8x128xf32>
    %cst_283 = arith.constant 5.000000e-01 : f32
    %660 = vector.broadcast %cst_283 : f32 to vector<8x128xf32>
    %661 = arith.mulf %660, %659 : vector<8x128xf32>
    %cst_284 = arith.constant 5.000000e-01 : f32
    %662 = vector.broadcast %cst_284 : f32 to vector<8x128xf32>
    %663 = arith.addf %661, %662 : vector<8x128xf32>
    %664 = arith.mulf %657, %610 : vector<8x128xf32>
    %665 = arith.mulf %652, %658 : vector<8x128xf32>
    %666 = arith.addf %664, %665 : vector<8x128xf32>
    %667 = math.tanh %666 : vector<8x128xf32>
    %668 = arith.mulf %663, %667 : vector<8x128xf32>
    %669 = tpu.concatenate %640, %668 in 1 : vector<8x128xf32>, vector<8x128xf32> -> vector<8x256xf32>
    %c0_285 = arith.constant 0 : index
    %c0_286 = arith.constant 0 : index
    %670 = vector.load %arg6[%c0_285, %c0_286] : memref<256x512xf32, #tpu.memory_space<vmem>>, vector<256x512xf32>
    %cst_287 = arith.constant dense<0.000000e+00> : vector<8x512xf32>
    %671 = tpu.matmul %669, %670, %cst_287 {dimension_numbers = #tpu.dot_dimension_numbers<[1], [0], [0], [1], [0, 0, 1, 1], [], []>} : vector<8x256xf32>, vector<256x512xf32>, vector<8x512xf32> -> vector<8x512xf32>
    %c0_288 = arith.constant 0 : index
    %c0_289 = arith.constant 0 : index
    %672 = vector.load %arg7[%c0_288, %c0_289] : memref<1x512xf32, #tpu.memory_space<vmem>>, vector<1x512xf32>
    %673 = vector.broadcast %672 : vector<1x512xf32> to vector<8x512xf32>
    %674 = arith.addf %671, %673 : vector<8x512xf32>
    %675 = math.tanh %674 : vector<8x512xf32>
    %676 = vector.extract_strided_slice %675 {offsets = [0, 0], sizes = [8, 128], strides = [1, 1]} : vector<8x512xf32> to vector<8x128xf32>
    %cst_290 = arith.constant 5.000000e-01 : f32
    %677 = vector.broadcast %cst_290 : f32 to vector<8x128xf32>
    %678 = arith.mulf %677, %676 : vector<8x128xf32>
    %cst_291 = arith.constant 5.000000e-01 : f32
    %679 = vector.broadcast %cst_291 : f32 to vector<8x128xf32>
    %680 = arith.addf %678, %679 : vector<8x128xf32>
    %681 = vector.extract_strided_slice %675 {offsets = [0, 128], sizes = [8, 128], strides = [1, 1]} : vector<8x512xf32> to vector<8x128xf32>
    %cst_292 = arith.constant 5.000000e-01 : f32
    %682 = vector.broadcast %cst_292 : f32 to vector<8x128xf32>
    %683 = arith.mulf %682, %681 : vector<8x128xf32>
    %cst_293 = arith.constant 5.000000e-01 : f32
    %684 = vector.broadcast %cst_293 : f32 to vector<8x128xf32>
    %685 = arith.addf %683, %684 : vector<8x128xf32>
    %686 = vector.extract_strided_slice %675 {offsets = [0, 256], sizes = [8, 128], strides = [1, 1]} : vector<8x512xf32> to vector<8x128xf32>
    %687 = vector.extract_strided_slice %675 {offsets = [0, 384], sizes = [8, 128], strides = [1, 1]} : vector<8x512xf32> to vector<8x128xf32>
    %cst_294 = arith.constant 5.000000e-01 : f32
    %688 = vector.broadcast %cst_294 : f32 to vector<8x128xf32>
    %689 = arith.mulf %688, %687 : vector<8x128xf32>
    %cst_295 = arith.constant 5.000000e-01 : f32
    %690 = vector.broadcast %cst_295 : f32 to vector<8x128xf32>
    %691 = arith.addf %689, %690 : vector<8x128xf32>
    %692 = arith.mulf %685, %666 : vector<8x128xf32>
    %693 = arith.mulf %680, %686 : vector<8x128xf32>
    %694 = arith.addf %692, %693 : vector<8x128xf32>
    %695 = math.tanh %694 : vector<8x128xf32>
    %696 = arith.mulf %691, %695 : vector<8x128xf32>
    %c0_296 = arith.constant 0 : index
    %c0_297 = arith.constant 0 : index
    %697 = vector.load %arg8[%c0_296, %c0_297] : memref<128x64xf32, #tpu.memory_space<vmem>>, vector<128x64xf32>
    %cst_298 = arith.constant dense<0.000000e+00> : vector<8x64xf32>
    %698 = tpu.matmul %696, %697, %cst_298 {dimension_numbers = #tpu.dot_dimension_numbers<[1], [0], [0], [1], [0, 0, 1, 1], [], []>} : vector<8x128xf32>, vector<128x64xf32>, vector<8x64xf32> -> vector<8x64xf32>
    %c0_299 = arith.constant 0 : index
    %c0_300 = arith.constant 0 : index
    %699 = vector.load %arg9[%c0_299, %c0_300] : memref<1x64xf32, #tpu.memory_space<vmem>>, vector<1x64xf32>
    %700 = vector.broadcast %699 : vector<1x64xf32> to vector<8x64xf32>
    %701 = arith.addf %698, %700 : vector<8x64xf32>
    %cst_301 = arith.constant 0.000000e+00 : f32
    %702 = vector.broadcast %cst_301 : f32 to vector<8x64xf32>
    %703 = arith.maximumf %701, %702 : vector<8x64xf32>
    %c0_302 = arith.constant 0 : index
    %c0_303 = arith.constant 0 : index
    %704 = vector.load %arg10[%c0_302, %c0_303] : memref<64x3xf32, #tpu.memory_space<vmem>>, vector<64x3xf32>
    %cst_304 = arith.constant dense<0.000000e+00> : vector<8x3xf32>
    %705 = tpu.matmul %703, %704, %cst_304 {dimension_numbers = #tpu.dot_dimension_numbers<[1], [0], [0], [1], [0, 0, 1, 1], [], []>} : vector<8x64xf32>, vector<64x3xf32>, vector<8x3xf32> -> vector<8x3xf32>
    %c0_305 = arith.constant 0 : index
    %c0_306 = arith.constant 0 : index
    %706 = vector.load %arg11[%c0_305, %c0_306] : memref<1x3xf32, #tpu.memory_space<vmem>>, vector<1x3xf32>
    %707 = vector.broadcast %706 : vector<1x3xf32> to vector<8x3xf32>
    %708 = arith.addf %705, %707 : vector<8x3xf32>
    %c0_307 = arith.constant 0 : index
    %c0_308 = arith.constant 0 : index
    %709 = vector.load %arg12[%c0_307, %c0_308] : memref<8x3xf32, #tpu.memory_space<vmem>>, vector<8x3xf32>
    tpu.vector_store %arg12[%c0_307, %c0_308], %708 {strides = array<i32>} : memref<8x3xf32, #tpu.memory_space<vmem>>, vector<8x3xf32>,
    return
  }
}

</mosaic_0001>

<llo_original>
// kernel: _forward_impl.1
$region0: #{_forward_impl.1}
  #allocation0 [shape = 'u32[]', space=smem, size = 0x4, offset = 0x4, fixed_abs, tag = 'smem constant byte address 0x4 - core index']
  #allocation1 [shape = 'u32[144,128]{1,0:T(1,128)}', space=vmem, size = 0x12000, scoped, tag = 'internal scratch']
  %s0 = inlined_call_operand.vmem [shape: f32[8,120], index: 0, kind: input, shape index: {}]
  %s1 = inlined_call_operand.vmem [shape: f32[15,512], index: 1, kind: input, shape index: {}]
  %s2 = inlined_call_operand.hbm [shape: f32[128,512], index: 2, kind: input, shape index: {}]
  %s3 = inlined_call_operand.vmem [shape: f32[1,512], index: 3, kind: input, shape index: {}]
  %s4 = inlined_call_operand.hbm [shape: f32[256,512], index: 4, kind: input, shape index: {}]
  %s5 = inlined_call_operand.vmem [shape: f32[1,512], index: 5, kind: input, shape index: {}]
  %s6 = inlined_call_operand.hbm [shape: f32[256,512], index: 6, kind: input, shape index: {}]
  %s7 = inlined_call_operand.vmem [shape: f32[1,512], index: 7, kind: input, shape index: {}]
  %s8 = inlined_call_operand.vmem [shape: f32[128,64], index: 8, kind: input, shape index: {}]
  %s9 = inlined_call_operand.vmem [shape: f32[1,64], index: 9, kind: input, shape index: {}]
  %s10 = inlined_call_operand.vmem [shape: f32[64,3], index: 10, kind: input, shape index: {}]
  %s11 = inlined_call_operand.vmem [shape: f32[1,3], index: 11, kind: input, shape index: {}]
  %s12 = inlined_call_operand.vmem [shape: f32[8,3], index: 12, kind: output, shape index: {}]
  %s13 = sld [smem:[#allocation0]]
  $region70: #{_forward_impl.1} parent=0
    _
  %s15 = ssub.s32 1, %s13
  %s16 = scalar_select 0, %s15, %s13
  $region1: #{_forward_impl.1} parent=0
    #allocation2 [shape = 'u8[262144]{0}', space=vmem, size = 0x40000, scoped, tag = 'input window, operand 2, single buffered']
    #allocation3 [shape = 's32[1]{0}', space=sflag, size = 0x4, scoped, tag = 'scoped memory for _forward_impl.1']
    #allocation4 [shape = 'u8[524288]{0}', space=vmem, size = 0x80000, scoped, tag = 'input window, operand 4, single buffered']
    #allocation5 [shape = 's32[1]{0}', space=sflag, size = 0x4, scoped, tag = 'scoped memory for _forward_impl.1']
    #allocation6 [shape = 'u8[524288]{0}', space=vmem, size = 0x80000, scoped, tag = 'input window, operand 6, single buffered']
    %17 = vsyncpa [#allocation3], 0
    %18 = vsyncpa [#allocation5], 0
    // Predicated region
    $region2: #{_forward_impl.1} parent=1 // pred_check
      _
    $region3: #{_forward_impl.1} parent=1 // pred_check_branch
      %20 = sbr.rel (0) target = $region5
    $region4: #{_forward_impl.1} parent=1 // pred_region
      _
    $region5: #{_forward_impl.1} parent=1 // pred_fallthru
      _
    // Predicated region
    $region6: #{_forward_impl.1} parent=1 // pred_check
      _
    $region7: #{_forward_impl.1} parent=1 // pred_check_branch
      %22 = sbr.rel (0) target = $region9
    $region8: #{_forward_impl.1} parent=1 // pred_region
      _
    $region9: #{_forward_impl.1} parent=1 // pred_fallthru
      _
    // Predicated region
    $region10: #{_forward_impl.1} parent=1 // pred_check
      _
    $region11: #{_forward_impl.1} parent=1 // pred_check_branch
      %24 = sbr.rel (0) target = $region13
    $region12: #{_forward_impl.1} parent=1 // pred_region
      %s26 = ssub.s32 8192, 8192
      %27 = vsyncadd [#allocation3], %s26
      %s28 = sshll.u32 [#allocation2], 4
      %s29 = int_to_ptr.vmem [resolvable:$true] %s28
      %34 = dma.hbm_to_vmem [thread:$0]  %s2, 8192, %s29, [#allocation3], 512, 512, 32
    $region13: #{_forward_impl.1} parent=1 // pred_fallthru
      _
    // Predicated region
    $region14: #{_forward_impl.1} parent=1 // pred_check
      _
    $region15: #{_forward_impl.1} parent=1 // pred_check_branch
      %36 = sbr.rel (0) target = $region17
    $region16: #{_forward_impl.1} parent=1 // pred_region
      _
    $region17: #{_forward_impl.1} parent=1 // pred_fallthru
      _
    // Predicated region
    $region18: #{_forward_impl.1} parent=1 // pred_check
      _
    $region19: #{_forward_impl.1} parent=1 // pred_check_branch
      %38 = sbr.rel (0) target = $region21
    $region20: #{_forward_impl.1} parent=1 // pred_region
      %s40 = ssub.s32 16384, 16384
      %41 = vsyncadd [#allocation5], %s40
      %s42 = sshll.u32 [#allocation4], 4
      %s43 = int_to_ptr.vmem [resolvable:$true] %s42
      %48 = dma.hbm_to_vmem [thread:$0]  %s4, 16384, %s43, [#allocation5], 512, 512, 32
    $region21: #{_forward_impl.1} parent=1 // pred_fallthru
      _
    // Predicated region
    $region22: #{_forward_impl.1} parent=1 // pred_check
      _
    $region23: #{_forward_impl.1} parent=1 // pred_check_branch
      %50 = sbr.rel (0) target = $region25
    $region24: #{_forward_impl.1} parent=1 // pred_region
      _
    $region25: #{_forward_impl.1} parent=1 // pred_fallthru
      _
    // Predicated region
    $region26: #{_forward_impl.1} parent=1 // pred_check
      _
    $region27: #{_forward_impl.1} parent=1 // pred_check_branch
      %52 = sbr.rel (0) target = $region29
    $region28: #{_forward_impl.1} parent=1 // pred_region
      %s54 = ssub.s32 16384, 16384
      %55 = vsyncadd [#allocation5], %s54
      %s56 = sshll.u32 [#allocation6], 4
      %s57 = int_to_ptr.vmem [resolvable:$true] %s56
      %62 = dma.hbm_to_vmem [thread:$0]  %s6, 16384, %s57, [#allocation5], 512, 512, 32
    $region29: #{_forward_impl.1} parent=1 // pred_fallthru
      _
    // Predicated region
    $region30: #{_forward_impl.1} parent=1 // pred_check
      _
    $region31: #{_forward_impl.1} parent=1 // pred_check_branch
      %64 = sbr.rel (0) target = $region33
    $region32: #{_forward_impl.1} parent=1 // pred_region
      _
    $region33: #{_forward_impl.1} parent=1 // pred_fallthru
      _
    // Predicated region
    $region34: #{_forward_impl.1} parent=1 // pred_check
      _
    $region35: #{_forward_impl.1} parent=1 // pred_check_branch
      %66 = sbr.rel (0) target = $region37
    $region36: #{_forward_impl.1} parent=1 // pred_region
      _
    $region37: #{_forward_impl.1} parent=1 // pred_fallthru
      _
    // Predicated region
    $region38: #{_forward_impl.1} parent=1 // pred_check
      _
    $region39: #{_forward_impl.1} parent=1 // pred_check_branch
      %68 = sbr.rel (0) target = $region41
    $region40: #{_forward_impl.1} parent=1 // pred_region
      _
    $region41: #{_forward_impl.1} parent=1 // pred_fallthru
      _
    // Predicated region
    $region42: #{_forward_impl.1} parent=1 // pred_check
      _
    $region43: #{_forward_impl.1} parent=1 // pred_check_branch
      %70 = sbr.rel (0) target = $region45
    $region44: #{_forward_impl.1} parent=1 // pred_region
      _
    $region45: #{_forward_impl.1} parent=1 // pred_fallthru
      _
    // Predicated region
    $region46: #{_forward_impl.1} parent=1 // pred_check
      _
    $region47: #{_forward_impl.1} parent=1 // pred_check_branch
      %72 = sbr.rel (0) target = $region49
    $region48: #{_forward_impl.1} parent=1 // pred_region
      _
    $region49: #{_forward_impl.1} parent=1 // pred_fallthru
      _
    // Predicated region
    $region50: #{_forward_impl.1} parent=1 // pred_check
      _
    $region51: #{_forward_impl.1} parent=1 // pred_check_branch
      %74 = sbr.rel (0) target = $region53
    $region52: #{_forward_impl.1} parent=1 // pred_region
      %75 = dma.done [#allocation3], 8192
    $region53: #{_forward_impl.1} parent=1 // pred_fallthru
      _
    // Predicated region
    $region54: #{_forward_impl.1} parent=1 // pred_check
      _
    $region55: #{_forward_impl.1} parent=1 // pred_check_branch
      %77 = sbr.rel (0) target = $region57
    $region56: #{_forward_impl.1} parent=1 // pred_region
      %78 = dma.done [#allocation5], 16384
    $region57: #{_forward_impl.1} parent=1 // pred_fallthru
      _
    // Predicated region
    $region58: #{_forward_impl.1} parent=1 // pred_check
      _
    $region59: #{_forward_impl.1} parent=1 // pred_check_branch
      %80 = sbr.rel (0) target = $region61
    $region60: #{_forward_impl.1} parent=1 // pred_region
      %81 = dma.done [#allocation5], 16384
    $region61: #{_forward_impl.1} parent=1 // pred_fallthru
      _
    %v82 = vld [vmem:[%s0] sm:$0xff]
    %v83 = vld [vmem:[%s1] sm:$0xff]
    %v84 = vld [vmem:[%s1 + $0x8] sm:$0xff]
    %v85 = vld [vmem:[%s1 + $0x10] sm:$0xff]
    %v86 = vld [vmem:[%s1 + $0x18] sm:$0xff]
    %v87 = vld [vmem:[%s1 + $0x20] sm:$0x7f]
    %v88 = vld [vmem:[%s1 + $0x28] sm:$0x7f]
    %v89 = vld [vmem:[%s1 + $0x30] sm:$0x7f]
    %v90 = vld [vmem:[%s1 + $0x38] sm:$0x7f]
    %v91 = vld [vmem:[%s3] sm:$0xf]
    %v93 = vlaneseq
    %v94 = vshrl.u32 %v93, 7
    %v95 = vsub.s32 0, %v94
    %v96 = vrot.slane %v91, %v95
    %v97 = vlaneseq
    %v98 = vshrl.u32 %v97, 7
    %v99 = vsub.s32 1, %v98
    %v100 = vrot.slane %v91, %v99
    %v101 = vlaneseq
    %v102 = vshrl.u32 %v101, 7
    %v103 = vsub.s32 2, %v102
    %v104 = vrot.slane %v91, %v103
    %v105 = vlaneseq
    %v106 = vshrl.u32 %v105, 7
    %v107 = vsub.s32 3, %v106
    %v108 = vrot.slane %v91, %v107
    %vm113 = vcmask 121856
    %v115 = vsel %vm113, %v82, 0
    %vm117 = vcmask 1046528
    %v119 = vsel %vm117, %v87, 0
    %v122 = vsel %vm117, %v88, 0
    %v125 = vsel %vm117, %v89, 0
    %v128 = vsel %vm117, %v90, 0
    %130 = vmatprep.subr.mxu0 %v84
    %131 = vmatpush1.msra.mxu0 %v83
    %132 = vmatprep.subr.mxu0 %v122
    %133 = vmatpush1.msra.mxu0 %v119
    %134 = vmatprep.subr.mxu0 0.0
    %135 = vmatpush1.msra.mxu0 0.0
    %136 = vmatprep.subr.mxu0 0.0
    %137 = vmatpush1.msra.mxu0 0.0
    %138 = vmatprep.subr.mxu0 0.0
    %139 = vmatpush1.msra.mxu0 0.0
    %140 = vmatprep.subr.mxu0 0.0
    %141 = vmatpush1.msra.mxu0 0.0
    %142 = vmatprep.subr.mxu0 0.0
    %143 = vmatpush1.msra.mxu0 0.0
    %144 = vmatprep.subr.mxu0 0.0
    %145 = vmatpush1.msra.mxu0 0.0
    %146 = vmatprep.subr.mxu0 0.0
    %147 = vmatpush1.msra.mxu0 0.0
    %148 = vmatprep.subr.mxu0 0.0
    %149 = vmatpush1.msra.mxu0 0.0
    %150 = vmatprep.subr.mxu0 0.0
    %151 = vmatpush1.msra.mxu0 0.0
    %152 = vmatprep.subr.mxu0 0.0
    %153 = vmatpush1.msra.mxu0 0.0
    %154 = vmatprep.subr.mxu0 0.0
    %155 = vmatpush1.msra.mxu0 0.0
    %156 = vmatprep.subr.mxu0 0.0
    %157 = vmatpush1.msra.mxu0 0.0
    %158 = vmatprep.subr.mxu0 0.0
    %159 = vmatpush1.msra.mxu0 0.0
    %160 = vmatprep.subr.mxu0 0.0
    %161 = vmatpush1.msra.mxu0 0.0
    %162 = vmatprep.subr.mxu0 0.0
    %163 = vmatpush1.msra.mxu0 0.0
    %164 = vmatprep.subr.mxu0 0.0
    %165 = vmatpush1.msra.mxu0 0.0
    %166 = vmatprep.subr.mxu0 0.0
    %167 = vmatpush1.msra.mxu0 0.0
    %168 = vmatprep.subr.mxu0 0.0
    %169 = vmatpush1.msra.mxu0 0.0
    %170 = vmatprep.subr.mxu0 0.0
    %171 = vmatpush1.msra.mxu0 0.0
    %172 = vmatprep.subr.mxu0 0.0
    %173 = vmatpush1.msra.mxu0 0.0
    %174 = vmatprep.subr.mxu0 0.0
    %175 = vmatpush1.msra.mxu0 0.0
    %176 = vmatprep.subr.mxu0 0.0
    %177 = vmatpush1.msra.mxu0 0.0
    %178 = vmatprep.subr.mxu0 0.0
    %179 = vmatpush1.msra.mxu0 0.0
    %180 = vmatprep.subr.mxu0 0.0
    %181 = vmatpush1.msra.mxu0 0.0
    %182 = vmatprep.subr.mxu0 0.0
    %183 = vmatpush1.msra.mxu0 0.0
    %184 = vmatprep.subr.mxu0 0.0
    %185 = vmatpush1.msra.mxu0 0.0
    %186 = vmatprep.subr.mxu0 0.0
    %187 = vmatpush1.msra.mxu0 0.0
    %188 = vmatprep.subr.mxu0 0.0
    %189 = vmatpush1.msra.mxu0 0.0
    %190 = vmatprep.subr.mxu0 0.0
    %191 = vmatpush1.msra.mxu0 0.0
    %192 = vmatprep.subr.mxu0 0.0
    %193 = vmatpush1.msra.mxu0 0.0
    %194 = vmatprep.mubr.f32.mxu0 0.0
    %195 = vmatmul.mubr.f32.gmra.mrb[0].mxu0 %v115
    %v196 = vpop.f32.mrb[0].mxu0
    %v197 = vadd.f32 %v96, %v196
    %v198 = vpop.f32.mrb[0].mxu0
    %v199 = vadd.f32 %v100, %v198
    %200 = vdwg.mxu0
    %201 = vmatprep.subr.mxu0 %v86
    %202 = vmatpush1.msra.mxu0 %v85
    %203 = vmatprep.subr.mxu0 %v128
    %204 = vmatpush1.msra.mxu0 %v125
    %205 = vmatprep.subr.mxu0 0.0
    %206 = vmatpush1.msra.mxu0 0.0
    %207 = vmatprep.subr.mxu0 0.0
    %208 = vmatpush1.msra.mxu0 0.0
    %209 = vmatprep.subr.mxu0 0.0
    %210 = vmatpush1.msra.mxu0 0.0
    %211 = vmatprep.subr.mxu0 0.0
    %212 = vmatpush1.msra.mxu0 0.0
    %213 = vmatprep.subr.mxu0 0.0
    %214 = vmatpush1.msra.mxu0 0.0
    %215 = vmatprep.subr.mxu0 0.0
    %216 = vmatpush1.msra.mxu0 0.0
    %217 = vmatprep.subr.mxu0 0.0
    %218 = vmatpush1.msra.mxu0 0.0
    %219 = vmatprep.subr.mxu0 0.0
    %220 = vmatpush1.msra.mxu0 0.0
    %221 = vmatprep.subr.mxu0 0.0
    %222 = vmatpush1.msra.mxu0 0.0
    %223 = vmatprep.subr.mxu0 0.0
    %224 = vmatpush1.msra.mxu0 0.0
    %225 = vmatprep.subr.mxu0 0.0
    %226 = vmatpush1.msra.mxu0 0.0
    %227 = vmatprep.subr.mxu0 0.0
    %228 = vmatpush1.msra.mxu0 0.0
    %229 = vmatprep.subr.mxu0 0.0
    %230 = vmatpush1.msra.mxu0 0.0
    %231 = vmatprep.subr.mxu0 0.0
    %232 = vmatpush1.msra.mxu0 0.0
    %233 = vmatprep.subr.mxu0 0.0
    %234 = vmatpush1.msra.mxu0 0.0
    %235 = vmatprep.subr.mxu0 0.0
    %236 = vmatpush1.msra.mxu0 0.0
    %237 = vmatprep.subr.mxu0 0.0
    %238 = vmatpush1.msra.mxu0 0.0
    %239 = vmatprep.subr.mxu0 0.0
    %240 = vmatpush1.msra.mxu0 0.0
    %241 = vmatprep.subr.mxu0 0.0
    %242 = vmatpush1.msra.mxu0 0.0
    %243 = vmatprep.subr.mxu0 0.0
    %244 = vmatpush1.msra.mxu0 0.0
    %245 = vmatprep.subr.mxu0 0.0
    %246 = vmatpush1.msra.mxu0 0.0
    %247 = vmatprep.subr.mxu0 0.0
    %248 = vmatpush1.msra.mxu0 0.0
    %249 = vmatprep.subr.mxu0 0.0
    %250 = vmatpush1.msra.mxu0 0.0
    %251 = vmatprep.subr.mxu0 0.0
    %252 = vmatpush1.msra.mxu0 0.0
    %253 = vmatprep.subr.mxu0 0.0
    %254 = vmatpush1.msra.mxu0 0.0
    %255 = vmatprep.subr.mxu0 0.0
    %256 = vmatpush1.msra.mxu0 0.0
    %257 = vmatprep.subr.mxu0 0.0
    %258 = vmatpush1.msra.mxu0 0.0
    %259 = vmatprep.subr.mxu0 0.0
    %260 = vmatpush1.msra.mxu0 0.0
    %261 = vmatprep.subr.mxu0 0.0
    %262 = vmatpush1.msra.mxu0 0.0
    %263 = vmatprep.subr.mxu0 0.0
    %264 = vmatpush1.msra.mxu0 0.0
    %265 = vmatprep.mubr.f32.mxu0 0.0
    %266 = vmatmul.mubr.f32.gmra.mrb[0].mxu0 %v115
    %v267 = vpop.f32.mrb[0].mxu0
    %v268 = vadd.f32 %v104, %v267
    %v269 = vpop.f32.mrb[0].mxu0
    %v270 = vadd.f32 %v108, %v269
    %271 = vdwg.mxu0
    %v272 = vld [vmem:[#allocation2] sm:$0xff]
    %v273 = vld [vmem:[#allocation2 + $0x8] sm:$0xff]
    %v274 = vld [vmem:[#allocation2 + $0x10] sm:$0xff]
    %v275 = vld [vmem:[#allocation2 + $0x18] sm:$0xff]
    %v276 = vld [vmem:[#allocation2 + $0x20] sm:$0xff]
    %v277 = vld [vmem:[#allocation2 + $0x28] sm:$0xff]
    %v278 = vld [vmem:[#allocation2 + $0x30] sm:$0xff]
    %v279 = vld [vmem:[#allocation2 + $0x38] sm:$0xff]
    %v280 = vld [vmem:[#allocation2 + $0x40] sm:$0xff]
    %v281 = vld [vmem:[#allocation2 + $0x48] sm:$0xff]
    %v282 = vld [vmem:[#allocation2 + $0x50] sm:$0xff]
    %v283 = vld [vmem:[#allocation2 + $0x58] sm:$0xff]
    %v284 = vld [vmem:[#allocation2 + $0x60] sm:$0xff]
    %v285 = vld [vmem:[#allocation2 + $0x68] sm:$0xff]
    %v286 = vld [vmem:[#allocation2 + $0x70] sm:$0xff]
    %v287 = vld [vmem:[#allocation2 + $0x78] sm:$0xff]
    %v288 = vld [vmem:[#allocation2 + $0x80] sm:$0xff]
    %v289 = vld [vmem:[#allocation2 + $0x88] sm:$0xff]
    %v290 = vld [vmem:[#allocation2 + $0x90] sm:$0xff]
    %v291 = vld [vmem:[#allocation2 + $0x98] sm:$0xff]
    %v292 = vld [vmem:[#allocation2 + $0xa0] sm:$0xff]
    %v293 = vld [vmem:[#allocation2 + $0xa8] sm:$0xff]
    %v294 = vld [vmem:[#allocation2 + $0xb0] sm:$0xff]
    %v295 = vld [vmem:[#allocation2 + $0xb8] sm:$0xff]
    %v296 = vld [vmem:[#allocation2 + $0xc0] sm:$0xff]
    %v297 = vld [vmem:[#allocation2 + $0xc8] sm:$0xff]
    %v298 = vld [vmem:[#allocation2 + $0xd0] sm:$0xff]
    %v299 = vld [vmem:[#allocation2 + $0xd8] sm:$0xff]
    %v300 = vld [vmem:[#allocation2 + $0xe0] sm:$0xff]
    %v301 = vld [vmem:[#allocation2 + $0xe8] sm:$0xff]
    %v302 = vld [vmem:[#allocation2 + $0xf0] sm:$0xff]
    %v303 = vld [vmem:[#allocation2 + $0xf8] sm:$0xff]
    %v304 = vld [vmem:[#allocation2 + $0x100] sm:$0xff]
    %v305 = vld [vmem:[#allocation2 + $0x108] sm:$0xff]
    %v306 = vld [vmem:[#allocation2 + $0x110] sm:$0xff]
    %v307 = vld [vmem:[#allocation2 + $0x118] sm:$0xff]
    %v308 = vld [vmem:[#allocation2 + $0x120] sm:$0xff]
    %v309 = vld [vmem:[#allocation2 + $0x128] sm:$0xff]
    %v310 = vld [vmem:[#allocation2 + $0x130] sm:$0xff]
    %v311 = vld [vmem:[#allocation2 + $0x138] sm:$0xff]
    %v312 = vld [vmem:[#allocation2 + $0x140] sm:$0xff]
    %v313 = vld [vmem:[#allocation2 + $0x148] sm:$0xff]
    %v314 = vld [vmem:[#allocation2 + $0x150] sm:$0xff]
    %v315 = vld [vmem:[#allocation2 + $0x158] sm:$0xff]
    %v316 = vld [vmem:[#allocation2 + $0x160] sm:$0xff]
    %v317 = vld [vmem:[#allocation2 + $0x168] sm:$0xff]
    %v318 = vld [vmem:[#allocation2 + $0x170] sm:$0xff]
    %v319 = vld [vmem:[#allocation2 + $0x178] sm:$0xff]
    %v320 = vld [vmem:[#allocation2 + $0x180] sm:$0xff]
    %v321 = vld [vmem:[#allocation2 + $0x188] sm:$0xff]
    %v322 = vld [vmem:[#allocation2 + $0x190] sm:$0xff]
    %v323 = vld [vmem:[#allocation2 + $0x198] sm:$0xff]
    %v324 = vld [vmem:[#allocation2 + $0x1a0] sm:$0xff]
    %v325 = vld [vmem:[#allocation2 + $0x1a8] sm:$0xff]
    %v326 = vld [vmem:[#allocation2 + $0x1b0] sm:$0xff]
    %v327 = vld [vmem:[#allocation2 + $0x1b8] sm:$0xff]
    %v328 = vld [vmem:[#allocation2 + $0x1c0] sm:$0xff]
    %v329 = vld [vmem:[#allocation2 + $0x1c8] sm:$0xff]
    %v330 = vld [vmem:[#allocation2 + $0x1d0] sm:$0xff]
    %v331 = vld [vmem:[#allocation2 + $0x1d8] sm:$0xff]
    %v332 = vld [vmem:[#allocation2 + $0x1e0] sm:$0xff]
    %v333 = vld [vmem:[#allocation2 + $0x1e8] sm:$0xff]
    %v334 = vld [vmem:[#allocation2 + $0x1f0] sm:$0xff]
    %v335 = vld [vmem:[#allocation2 + $0x1f8] sm:$0xff]
    %336 = vmatprep.subr.mxu0 %v273
    %337 = vmatpush1.msra.mxu0 %v272
    %338 = vmatprep.subr.mxu0 %v277
    %339 = vmatpush1.msra.mxu0 %v276
    %340 = vmatprep.subr.mxu0 %v281
    %341 = vmatpush1.msra.mxu0 %v280
    %342 = vmatprep.subr.mxu0 %v285
    %343 = vmatpush1.msra.mxu0 %v284
    %344 = vmatprep.subr.mxu0 %v289
    %345 = vmatpush1.msra.mxu0 %v288
    %346 = vmatprep.subr.mxu0 %v293
    %347 = vmatpush1.msra.mxu0 %v292
    %348 = vmatprep.subr.mxu0 %v297
    %349 = vmatpush1.msra.mxu0 %v296
    %350 = vmatprep.subr.mxu0 %v301
    %351 = vmatpush1.msra.mxu0 %v300
    %352 = vmatprep.subr.mxu0 %v305
    %353 = vmatpush1.msra.mxu0 %v304
    %354 = vmatprep.subr.mxu0 %v309
    %355 = vmatpush1.msra.mxu0 %v308
    %356 = vmatprep.subr.mxu0 %v313
    %357 = vmatpush1.msra.mxu0 %v312
    %358 = vmatprep.subr.mxu0 %v317
    %359 = vmatpush1.msra.mxu0 %v316
    %360 = vmatprep.subr.mxu0 %v321
    %361 = vmatpush1.msra.mxu0 %v320
    %362 = vmatprep.subr.mxu0 %v325
    %363 = vmatpush1.msra.mxu0 %v324
    %364 = vmatprep.subr.mxu0 %v329
    %365 = vmatpush1.msra.mxu0 %v328
    %366 = vmatprep.subr.mxu0 %v333
    %367 = vmatpush1.msra.mxu0 %v332
    %368 = vmatprep.subr.mxu0 0.0
    %369 = vmatpush1.msra.mxu0 0.0
    %370 = vmatprep.subr.mxu0 0.0
    %371 = vmatpush1.msra.mxu0 0.0
    %372 = vmatprep.subr.mxu0 0.0
    %373 = vmatpush1.msra.mxu0 0.0
    %374 = vmatprep.subr.mxu0 0.0
    %375 = vmatpush1.msra.mxu0 0.0
    %376 = vmatprep.subr.mxu0 0.0
    %377 = vmatpush1.msra.mxu0 0.0
    %378 = vmatprep.subr.mxu0 0.0
    %379 = vmatpush1.msra.mxu0 0.0
    %380 = vmatprep.subr.mxu0 0.0
    %381 = vmatpush1.msra.mxu0 0.0
    %382 = vmatprep.subr.mxu0 0.0
    %383 = vmatpush1.msra.mxu0 0.0
    %384 = vmatprep.subr.mxu0 0.0
    %385 = vmatpush1.msra.mxu0 0.0
    %386 = vmatprep.subr.mxu0 0.0
    %387 = vmatpush1.msra.mxu0 0.0
    %388 = vmatprep.subr.mxu0 0.0
    %389 = vmatpush1.msra.mxu0 0.0
    %390 = vmatprep.subr.mxu0 0.0
    %391 = vmatpush1.msra.mxu0 0.0
    %392 = vmatprep.subr.mxu0 0.0
    %393 = vmatpush1.msra.mxu0 0.0
    %394 = vmatprep.subr.mxu0 0.0
    %395 = vmatpush1.msra.mxu0 0.0
    %396 = vmatprep.subr.mxu0 0.0
    %397 = vmatpush1.msra.mxu0 0.0
    %398 = vmatprep.subr.mxu0 0.0
    %399 = vmatpush1.msra.mxu0 0.0
    %400 = vmatprep.mubr.f32.mxu0 0.0
    %401 = vmatmul.mubr.f32.gmra.mrb[0].mxu0 0.0
    %v402 = vpop.f32.mrb[0].mxu0
    %v403 = vadd.f32 0.0, %v402
    %v404 = vpop.f32.mrb[0].mxu0
    %v405 = vadd.f32 0.0, %v404
    %406 = vdwg.mxu0
    %407 = vmatprep.subr.mxu0 %v275
    %408 = vmatpush1.msra.mxu0 %v274
    %409 = vmatprep.subr.mxu0 %v279
    %410 = vmatpush1.msra.mxu0 %v278
    %411 = vmatprep.subr.mxu0 %v283
    %412 = vmatpush1.msra.mxu0 %v282
    %413 = vmatprep.subr.mxu0 %v287
    %414 = vmatpush1.msra.mxu0 %v286
    %415 = vmatprep.subr.mxu0 %v291
    %416 = vmatpush1.msra.mxu0 %v290
    %417 = vmatprep.subr.mxu0 %v295
    %418 = vmatpush1.msra.mxu0 %v294
    %419 = vmatprep.subr.mxu0 %v299
    %420 = vmatpush1.msra.mxu0 %v298
    %421 = vmatprep.subr.mxu0 %v303
    %422 = vmatpush1.msra.mxu0 %v302
    %423 = vmatprep.subr.mxu0 %v307
    %424 = vmatpush1.msra.mxu0 %v306
    %425 = vmatprep.subr.mxu0 %v311
    %426 = vmatpush1.msra.mxu0 %v310
    %427 = vmatprep.subr.mxu0 %v315
    %428 = vmatpush1.msra.mxu0 %v314
    %429 = vmatprep.subr.mxu0 %v319
    %430 = vmatpush1.msra.mxu0 %v318
    %431 = vmatprep.subr.mxu0 %v323
    %432 = vmatpush1.msra.mxu0 %v322
    %433 = vmatprep.subr.mxu0 %v327
    %434 = vmatpush1.msra.mxu0 %v326
    %435 = vmatprep.subr.mxu0 %v331
    %436 = vmatpush1.msra.mxu0 %v330
    %437 = vmatprep.subr.mxu0 %v335
    %438 = vmatpush1.msra.mxu0 %v334
    %439 = vmatprep.subr.mxu0 0.0
    %440 = vmatpush1.msra.mxu0 0.0
    %441 = vmatprep.subr.mxu0 0.0
    %442 = vmatpush1.msra.mxu0 0.0
    %443 = vmatprep.subr.mxu0 0.0
    %444 = vmatpush1.msra.mxu0 0.0
    %445 = vmatprep.subr.mxu0 0.0
    %446 = vmatpush1.msra.mxu0 0.0
    %447 = vmatprep.subr.mxu0 0.0
    %448 = vmatpush1.msra.mxu0 0.0
    %449 = vmatprep.subr.mxu0 0.0
    %450 = vmatpush1.msra.mxu0 0.0
    %451 = vmatprep.subr.mxu0 0.0
    %452 = vmatpush1.msra.mxu0 0.0
    %453 = vmatprep.subr.mxu0 0.0
    %454 = vmatpush1.msra.mxu0 0.0
    %455 = vmatprep.subr.mxu0 0.0
    %456 = vmatpush1.msra.mxu0 0.0
    %457 = vmatprep.subr.mxu0 0.0
    %458 = vmatpush1.msra.mxu0 0.0
    %459 = vmatprep.subr.mxu0 0.0
    %460 = vmatpush1.msra.mxu0 0.0
    %461 = vmatprep.subr.mxu0 0.0
    %462 = vmatpush1.msra.mxu0 0.0
    %463 = vmatprep.subr.mxu0 0.0
    %464 = vmatpush1.msra.mxu0 0.0
    %465 = vmatprep.subr.mxu0 0.0
    %466 = vmatpush1.msra.mxu0 0.0
    %467 = vmatprep.subr.mxu0 0.0
    %468 = vmatpush1.msra.mxu0 0.0
    %469 = vmatprep.subr.mxu0 0.0
    %470 = vmatpush1.msra.mxu0 0.0
    %471 = vmatprep.mubr.f32.mxu0 0.0
    %472 = vmatmul.mubr.f32.gmra.mrb[0].mxu0 0.0
    %v473 = vpop.f32.mrb[0].mxu0
    %v474 = vadd.f32 0.0, %v473
    %v475 = vpop.f32.mrb[0].mxu0
    %v476 = vadd.f32 0.0, %v475
    %477 = vdwg.mxu0
    %v478 = vadd.f32 %v197, %v403
    %v479 = vadd.f32 %v199, %v405
    %v480 = vadd.f32 %v268, %v474
    %v481 = vadd.f32 %v270, %v476
    %v482 = vtanh.pop %v478
    %v483 = vtanh.pop %v479
    %v484 = vtanh.pop %v480
    %v485 = vtanh.pop %v481
    %v486 = vmul.f32 %v482, 0.5
    %v487 = vadd.f32 %v486, 0.5
    %v488 = vmul.f32 %v483, 0.5
    %v489 = vadd.f32 %v488, 0.5
    %v490 = vmul.f32 %v485, 0.5
    %v491 = vadd.f32 %v490, 0.5
    %v492 = vmul.f32 %v489, 0.0
    %v493 = vmul.f32 %v487, %v484
    %v494 = vadd.f32 %v492, %v493
    %v495 = vtanh.pop %v494
    %v496 = vmul.f32 %v491, %v495
    %497 = vrot.lane.b32.xlu0 %v82, 113
    %v498 = vpop.permute.xlu0 %497
    %v499 = vsel %vm113, %v498, 0
    %501 = vmatprep.subr.mxu0 %v84
    %502 = vmatpush1.msra.mxu0 %v83
    %503 = vmatprep.subr.mxu0 %v122
    %504 = vmatpush1.msra.mxu0 %v119
    %505 = vmatprep.subr.mxu0 0.0
    %506 = vmatpush1.msra.mxu0 0.0
    %507 = vmatprep.subr.mxu0 0.0
    %508 = vmatpush1.msra.mxu0 0.0
    %509 = vmatprep.subr.mxu0 0.0
    %510 = vmatpush1.msra.mxu0 0.0
    %511 = vmatprep.subr.mxu0 0.0
    %512 = vmatpush1.msra.mxu0 0.0
    %513 = vmatprep.subr.mxu0 0.0
    %514 = vmatpush1.msra.mxu0 0.0
    %515 = vmatprep.subr.mxu0 0.0
    %516 = vmatpush1.msra.mxu0 0.0
    %517 = vmatprep.subr.mxu0 0.0
    %518 = vmatpush1.msra.mxu0 0.0
    %519 = vmatprep.subr.mxu0 0.0
    %520 = vmatpush1.msra.mxu0 0.0
    %521 = vmatprep.subr.mxu0 0.0
    %522 = vmatpush1.msra.mxu0 0.0
    %523 = vmatprep.subr.mxu0 0.0
    %524 = vmatpush1.msra.mxu0 0.0
    %525 = vmatprep.subr.mxu0 0.0
    %526 = vmatpush1.msra.mxu0 0.0
    %527 = vmatprep.subr.mxu0 0.0
    %528 = vmatpush1.msra.mxu0 0.0
    %529 = vmatprep.subr.mxu0 0.0
    %530 = vmatpush1.msra.mxu0 0.0
    %531 = vmatprep.subr.mxu0 0.0
    %532 = vmatpush1.msra.mxu0 0.0
    %533 = vmatprep.subr.mxu0 0.0
    %534 = vmatpush1.msra.mxu0 0.0
    %535 = vmatprep.subr.mxu0 0.0
    %536 = vmatpush1.msra.mxu0 0.0
    %537 = vmatprep.subr.mxu0 0.0
    %538 = vmatpush1.msra.mxu0 0.0
    %539 = vmatprep.subr.mxu0 0.0
    %540 = vmatpush1.msra.mxu0 0.0
    %541 = vmatprep.subr.mxu0 0.0
    %542 = vmatpush1.msra.mxu0 0.0
    %543 = vmatprep.subr.mxu0 0.0
    %544 = vmatpush1.msra.mxu0 0.0
    %545 = vmatprep.subr.mxu0 0.0
    %546 = vmatpush1.msra.mxu0 0.0
    %547 = vmatprep.subr.mxu0 0.0
    %548 = vmatpush1.msra.mxu0 0.0
    %549 = vmatprep.subr.mxu0 0.0
    %550 = vmatpush1.msra.mxu0 0.0
    %551 = vmatprep.subr.mxu0 0.0
    %552 = vmatpush1.msra.mxu0 0.0
    %553 = vmatprep.subr.mxu0 0.0
    %554 = vmatpush1.msra.mxu0 0.0
    %555 = vmatprep.subr.mxu0 0.0
    %556 = vmatpush1.msra.mxu0 0.0
    %557 = vmatprep.subr.mxu0 0.0
    %558 = vmatpush1.msra.mxu0 0.0
    %559 = vmatprep.subr.mxu0 0.0
    %560 = vmatpush1.msra.mxu0 0.0
    %561 = vmatprep.subr.mxu0 0.0
    %562 = vmatpush1.msra.mxu0 0.0
    %563 = vmatprep.subr.mxu0 0.0
    %564 = vmatpush1.msra.mxu0 0.0
    %565 = vmatprep.mubr.f32.mxu0 0.0
    %566 = vmatmul.mubr.f32.gmra.mrb[0].mxu0 %v499
    %v567 = vpop.f32.mrb[0].mxu0
    %v568 = vadd.f32 %v96, %v567
    %v569 = vpop.f32.mrb[0].mxu0
    %v570 = vadd.f32 %v100, %v569
    %571 = vdwg.mxu0
    %572 = vmatprep.subr.mxu0 %v86
    %573 = vmatpush1.msra.mxu0 %v85
    %574 = vmatprep.subr.mxu0 %v128
    %575 = vmatpush1.msra.mxu0 %v125
    %576 = vmatprep.subr.mxu0 0.0
    %577 = vmatpush1.msra.mxu0 0.0
    %578 = vmatprep.subr.mxu0 0.0
    %579 = vmatpush1.msra.mxu0 0.0
    %580 = vmatprep.subr.mxu0 0.0
    %581 = vmatpush1.msra.mxu0 0.0
    %582 = vmatprep.subr.mxu0 0.0
    %583 = vmatpush1.msra.mxu0 0.0
    %584 = vmatprep.subr.mxu0 0.0
    %585 = vmatpush1.msra.mxu0 0.0
    %586 = vmatprep.subr.mxu0 0.0
    %587 = vmatpush1.msra.mxu0 0.0
    %588 = vmatprep.subr.mxu0 0.0
    %589 = vmatpush1.msra.mxu0 0.0
    %590 = vmatprep.subr.mxu0 0.0
    %591 = vmatpush1.msra.mxu0 0.0
    %592 = vmatprep.subr.mxu0 0.0
    %593 = vmatpush1.msra.mxu0 0.0
    %594 = vmatprep.subr.mxu0 0.0
    %595 = vmatpush1.msra.mxu0 0.0
    %596 = vmatprep.subr.mxu0 0.0
    %597 = vmatpush1.msra.mxu0 0.0
    %598 = vmatprep.subr.mxu0 0.0
    %599 = vmatpush1.msra.mxu0 0.0
    %600 = vmatprep.subr.mxu0 0.0
    %601 = vmatpush1.msra.mxu0 0.0
    %602 = vmatprep.subr.mxu0 0.0
    %603 = vmatpush1.msra.mxu0 0.0
    %604 = vmatprep.subr.mxu0 0.0
    %605 = vmatpush1.msra.mxu0 0.0
    %606 = vmatprep.subr.mxu0 0.0
    %607 = vmatpush1.msra.mxu0 0.0
    %608 = vmatprep.subr.mxu0 0.0
    %609 = vmatpush1.msra.mxu0 0.0
    %610 = vmatprep.subr.mxu0 0.0
    %611 = vmatpush1.msra.mxu0 0.0
    %612 = vmatprep.subr.mxu0 0.0
    %613 = vmatpush1.msra.mxu0 0.0
    %614 = vmatprep.subr.mxu0 0.0
    %615 = vmatpush1.msra.mxu0 0.0
    %616 = vmatprep.subr.mxu0 0.0
    %617 = vmatpush1.msra.mxu0 0.0
    %618 = vmatprep.subr.mxu0 0.0
    %619 = vmatpush1.msra.mxu0 0.0
    %620 = vmatprep.subr.mxu0 0.0
    %621 = vmatpush1.msra.mxu0 0.0
    %622 = vmatprep.subr.mxu0 0.0
    %623 = vmatpush1.msra.mxu0 0.0
    %624 = vmatprep.subr.mxu0 0.0
    %625 = vmatpush1.msra.mxu0 0.0
    %626 = vmatprep.subr.mxu0 0.0
    %627 = vmatpush1.msra.mxu0 0.0
    %628 = vmatprep.subr.mxu0 0.0
    %629 = vmatpush1.msra.mxu0 0.0
    %630 = vmatprep.subr.mxu0 0.0
    %631 = vmatpush1.msra.mxu0 0.0
    %632 = vmatprep.subr.mxu0 0.0
    %633 = vmatpush1.msra.mxu0 0.0
    %634 = vmatprep.subr.mxu0 0.0
    %635 = vmatpush1.msra.mxu0 0.0
    %636 = vmatprep.mubr.f32.mxu0 0.0
    %637 = vmatmul.mubr.f32.gmra.mrb[0].mxu0 %v499
    %v638 = vpop.f32.mrb[0].mxu0
    %v639 = vadd.f32 %v104, %v638
    %v640 = vpop.f32.mrb[0].mxu0
    %v641 = vadd.f32 %v108, %v640
    %642 = vdwg.mxu0
    %643 = vmatprep.subr.mxu0 %v273
    %644 = vmatpush1.msra.mxu0 %v272
    %645 = vmatprep.subr.mxu0 %v277
    %646 = vmatpush1.msra.mxu0 %v276
    %647 = vmatprep.subr.mxu0 %v281
    %648 = vmatpush1.msra.mxu0 %v280
    %649 = vmatprep.subr.mxu0 %v285
    %650 = vmatpush1.msra.mxu0 %v284
    %651 = vmatprep.subr.mxu0 %v289
    %652 = vmatpush1.msra.mxu0 %v288
    %653 = vmatprep.subr.mxu0 %v293
    %654 = vmatpush1.msra.mxu0 %v292
    %655 = vmatprep.subr.mxu0 %v297
    %656 = vmatpush1.msra.mxu0 %v296
    %657 = vmatprep.subr.mxu0 %v301
    %658 = vmatpush1.msra.mxu0 %v300
    %659 = vmatprep.subr.mxu0 %v305
    %660 = vmatpush1.msra.mxu0 %v304
    %661 = vmatprep.subr.mxu0 %v309
    %662 = vmatpush1.msra.mxu0 %v308
    %663 = vmatprep.subr.mxu0 %v313
    %664 = vmatpush1.msra.mxu0 %v312
    %665 = vmatprep.subr.mxu0 %v317
    %666 = vmatpush1.msra.mxu0 %v316
    %667 = vmatprep.subr.mxu0 %v321
    %668 = vmatpush1.msra.mxu0 %v320
    %669 = vmatprep.subr.mxu0 %v325
    %670 = vmatpush1.msra.mxu0 %v324
    %671 = vmatprep.subr.mxu0 %v329
    %672 = vmatpush1.msra.mxu0 %v328
    %673 = vmatprep.subr.mxu0 %v333
    %674 = vmatpush1.msra.mxu0 %v332
    %675 = vmatprep.subr.mxu0 0.0
    %676 = vmatpush1.msra.mxu0 0.0
    %677 = vmatprep.subr.mxu0 0.0
    %678 = vmatpush1.msra.mxu0 0.0
    %679 = vmatprep.subr.mxu0 0.0
    %680 = vmatpush1.msra.mxu0 0.0
    %681 = vmatprep.subr.mxu0 0.0
    %682 = vmatpush1.msra.mxu0 0.0
    %683 = vmatprep.subr.mxu0 0.0
    %684 = vmatpush1.msra.mxu0 0.0
    %685 = vmatprep.subr.mxu0 0.0
    %686 = vmatpush1.msra.mxu0 0.0
    %687 = vmatprep.subr.mxu0 0.0
    %688 = vmatpush1.msra.mxu0 0.0
    %689 = vmatprep.subr.mxu0 0.0
    %690 = vmatpush1.msra.mxu0 0.0
    %691 = vmatprep.subr.mxu0 0.0
    %692 = vmatpush1.msra.mxu0 0.0
    %693 = vmatprep.subr.mxu0 0.0
    %694 = vmatpush1.msra.mxu0 0.0
    %695 = vmatprep.subr.mxu0 0.0
    %696 = vmatpush1.msra.mxu0 0.0
    %697 = vmatprep.subr.mxu0 0.0
    %698 = vmatpush1.msra.mxu0 0.0
    %699 = vmatprep.subr.mxu0 0.0
    %700 = vmatpush1.msra.mxu0 0.0
    %701 = vmatprep.subr.mxu0 0.0
    %702 = vmatpush1.msra.mxu0 0.0
    %703 = vmatprep.subr.mxu0 0.0
    %704 = vmatpush1.msra.mxu0 0.0
    %705 = vmatprep.subr.mxu0 0.0
    %706 = vmatpush1.msra.mxu0 0.0
    %707 = vmatprep.mubr.f32.mxu0 0.0
    %708 = vmatmul.mubr.f32.gmra.mrb[0].mxu0 %v496
    %v709 = vpop.f32.mrb[0].mxu0
    %v710 = vadd.f32 0.0, %v709
    %v711 = vpop.f32.mrb[0].mxu0
    %v712 = vadd.f32 0.0, %v711
    %713 = vdwg.mxu0
    %714 = vmatprep.subr.mxu0 %v275
    %715 = vmatpush1.msra.mxu0 %v274
    %716 = vmatprep.subr.mxu0 %v279
    %717 = vmatpush1.msra.mxu0 %v278
    %718 = vmatprep.subr.mxu0 %v283
    %719 = vmatpush1.msra.mxu0 %v282
    %720 = vmatprep.subr.mxu0 %v287
    %721 = vmatpush1.msra.mxu0 %v286
    %722 = vmatprep.subr.mxu0 %v291
    %723 = vmatpush1.msra.mxu0 %v290
    %724 = vmatprep.subr.mxu0 %v295
    %725 = vmatpush1.msra.mxu0 %v294
    %726 = vmatprep.subr.mxu0 %v299
    %727 = vmatpush1.msra.mxu0 %v298
    %728 = vmatprep.subr.mxu0 %v303
    %729 = vmatpush1.msra.mxu0 %v302
    %730 = vmatprep.subr.mxu0 %v307
    %731 = vmatpush1.msra.mxu0 %v306
    %732 = vmatprep.subr.mxu0 %v311
    %733 = vmatpush1.msra.mxu0 %v310
    %734 = vmatprep.subr.mxu0 %v315
    %735 = vmatpush1.msra.mxu0 %v314
    %736 = vmatprep.subr.mxu0 %v319
    %737 = vmatpush1.msra.mxu0 %v318
    %738 = vmatprep.subr.mxu0 %v323
    %739 = vmatpush1.msra.mxu0 %v322
    %740 = vmatprep.subr.mxu0 %v327
    %741 = vmatpush1.msra.mxu0 %v326
    %742 = vmatprep.subr.mxu0 %v331
    %743 = vmatpush1.msra.mxu0 %v330
    %744 = vmatprep.subr.mxu0 %v335
    %745 = vmatpush1.msra.mxu0 %v334
    %746 = vmatprep.subr.mxu0 0.0
    %747 = vmatpush1.msra.mxu0 0.0
    %748 = vmatprep.subr.mxu0 0.0
    %749 = vmatpush1.msra.mxu0 0.0
    %750 = vmatprep.subr.mxu0 0.0
    %751 = vmatpush1.msra.mxu0 0.0
    %752 = vmatprep.subr.mxu0 0.0
    %753 = vmatpush1.msra.mxu0 0.0
    %754 = vmatprep.subr.mxu0 0.0
    %755 = vmatpush1.msra.mxu0 0.0
    %756 = vmatprep.subr.mxu0 0.0
    %757 = vmatpush1.msra.mxu0 0.0
    %758 = vmatprep.subr.mxu0 0.0
    %759 = vmatpush1.msra.mxu0 0.0
    %760 = vmatprep.subr.mxu0 0.0
    %761 = vmatpush1.msra.mxu0 0.0
    %762 = vmatprep.subr.mxu0 0.0
    %763 = vmatpush1.msra.mxu0 0.0
    %764 = vmatprep.subr.mxu0 0.0
    %765 = vmatpush1.msra.mxu0 0.0
    %766 = vmatprep.subr.mxu0 0.0
    %767 = vmatpush1.msra.mxu0 0.0
    %768 = vmatprep.subr.mxu0 0.0
    %769 = vmatpush1.msra.mxu0 0.0
    %770 = vmatprep.subr.mxu0 0.0
    %771 = vmatpush1.msra.mxu0 0.0
    %772 = vmatprep.subr.mxu0 0.0
    %773 = vmatpush1.msra.mxu0 0.0
    %774 = vmatprep.subr.mxu0 0.0
    %775 = vmatpush1.msra.mxu0 0.0
    %776 = vmatprep.subr.mxu0 0.0
    %777 = vmatpush1.msra.mxu0 0.0
    %778 = vmatprep.mubr.f32.mxu0 0.0
    %779 = vmatmul.mubr.f32.gmra.mrb[0].mxu0 %v496
    %v780 = vpop.f32.mrb[0].mxu0
    %v781 = vadd.f32 0.0, %v780
    %v782 = vpop.f32.mrb[0].mxu0
    %v783 = vadd.f32 0.0, %v782
    %784 = vdwg.mxu0
    %v785 = vadd.f32 %v568, %v710
    %v786 = vadd.f32 %v570, %v712
    %v787 = vadd.f32 %v639, %v781
    %v788 = vadd.f32 %v641, %v783
    %v789 = vtanh.pop %v785
    %v790 = vtanh.pop %v786
    %v791 = vtanh.pop %v787
    %v792 = vtanh.pop %v788
    %v793 = vmul.f32 %v789, 0.5
    %v794 = vadd.f32 %v793, 0.5
    %v795 = vmul.f32 %v790, 0.5
    %v796 = vadd.f32 %v795, 0.5
    %v797 = vmul.f32 %v792, 0.5
    %v798 = vadd.f32 %v797, 0.5
    %v799 = vmul.f32 %v796, %v494
    %v800 = vmul.f32 %v794, %v791
    %v801 = vadd.f32 %v799, %v800
    %v802 = vtanh.pop %v801
    %v803 = vmul.f32 %v798, %v802
    %v804 = vld [vmem:[#allocation4] sm:$0xff]
    %v805 = vld [vmem:[#allocation4 + $0x8] sm:$0xff]
    %v806 = vld [vmem:[#allocation4 + $0x10] sm:$0xff]
    %v807 = vld [vmem:[#allocation4 + $0x18] sm:$0xff]
    %v808 = vld [vmem:[#allocation4 + $0x20] sm:$0xff]
    %v809 = vld [vmem:[#allocation4 + $0x28] sm:$0xff]
    %v810 = vld [vmem:[#allocation4 + $0x30] sm:$0xff]
    %v811 = vld [vmem:[#allocation4 + $0x38] sm:$0xff]
    %v812 = vld [vmem:[#allocation4 + $0x40] sm:$0xff]
    %v813 = vld [vmem:[#allocation4 + $0x48] sm:$0xff]
    %v814 = vld [vmem:[#allocation4 + $0x50] sm:$0xff]
    %v815 = vld [vmem:[#allocation4 + $0x58] sm:$0xff]
    %v816 = vld [vmem:[#allocation4 + $0x60] sm:$0xff]
    %v817 = vld [vmem:[#allocation4 + $0x68] sm:$0xff]
    %v818 = vld [vmem:[#allocation4 + $0x70] sm:$0xff]
    %v819 = vld [vmem:[#allocation4 + $0x78] sm:$0xff]
    %v820 = vld [vmem:[#allocation4 + $0x80] sm:$0xff]
    %v821 = vld [vmem:[#allocation4 + $0x88] sm:$0xff]
    %v822 = vld [vmem:[#allocation4 + $0x90] sm:$0xff]
    %v823 = vld [vmem:[#allocation4 + $0x98] sm:$0xff]
    %v824 = vld [vmem:[#allocation4 + $0xa0] sm:$0xff]
    %v825 = vld [vmem:[#allocation4 + $0xa8] sm:$0xff]
    %v826 = vld [vmem:[#allocation4 + $0xb0] sm:$0xff]
    %v827 = vld [vmem:[#allocation4 + $0xb8] sm:$0xff]
    %v828 = vld [vmem:[#allocation4 + $0xc0] sm:$0xff]
    %v829 = vld [vmem:[#allocation4 + $0xc8] sm:$0xff]
    %v830 = vld [vmem:[#allocation4 + $0xd0] sm:$0xff]
    %v831 = vld [vmem:[#allocation4 + $0xd8] sm:$0xff]
    %v832 = vld [vmem:[#allocation4 + $0xe0] sm:$0xff]
    %v833 = vld [vmem:[#allocation4 + $0xe8] sm:$0xff]
    %v834 = vld [vmem:[#allocation4 + $0xf0] sm:$0xff]
    %v835 = vld [vmem:[#allocation4 + $0xf8] sm:$0xff]
    %v836 = vld [vmem:[#allocation4 + $0x100] sm:$0xff]
    %v837 = vld [vmem:[#allocation4 + $0x108] sm:$0xff]
    %v838 = vld [vmem:[#allocation4 + $0x110] sm:$0xff]
    %v839 = vld [vmem:[#allocation4 + $0x118] sm:$0xff]
    %v840 = vld [vmem:[#allocation4 + $0x120] sm:$0xff]
    %v841 = vld [vmem:[#allocation4 + $0x128] sm:$0xff]
    %v842 = vld [vmem:[#allocation4 + $0x130] sm:$0xff]
    %v843 = vld [vmem:[#allocation4 + $0x138] sm:$0xff]
    %v844 = vld [vmem:[#allocation4 + $0x140] sm:$0xff]
    %v845 = vld [vmem:[#allocation4 + $0x148] sm:$0xff]
    %v846 = vld [vmem:[#allocation4 + $0x150] sm:$0xff]
    %v847 = vld [vmem:[#allocation4 + $0x158] sm:$0xff]
    %v848 = vld [vmem:[#allocation4 + $0x160] sm:$0xff]
    %v849 = vld [vmem:[#allocation4 + $0x168] sm:$0xff]
    %v850 = vld [vmem:[#allocation4 + $0x170] sm:$0xff]
    %v851 = vld [vmem:[#allocation4 + $0x178] sm:$0xff]
    %v852 = vld [vmem:[#allocation4 + $0x180] sm:$0xff]
    %v853 = vld [vmem:[#allocation4 + $0x188] sm:$0xff]
    %v854 = vld [vmem:[#allocation4 + $0x190] sm:$0xff]
    %v855 = vld [vmem:[#allocation4 + $0x198] sm:$0xff]
    %v856 = vld [vmem:[#allocation4 + $0x1a0] sm:$0xff]
    %v857 = vld [vmem:[#allocation4 + $0x1a8] sm:$0xff]
    %v858 = vld [vmem:[#allocation4 + $0x1b0] sm:$0xff]
    %v859 = vld [vmem:[#allocation4 + $0x1b8] sm:$0xff]
    %v860 = vld [vmem:[#allocation4 + $0x1c0] sm:$0xff]
    %v861 = vld [vmem:[#allocation4 + $0x1c8] sm:$0xff]
    %v862 = vld [vmem:[#allocation4 + $0x1d0] sm:$0xff]
    %v863 = vld [vmem:[#allocation4 + $0x1d8] sm:$0xff]
    %v864 = vld [vmem:[#allocation4 + $0x1e0] sm:$0xff]
    %v865 = vld [vmem:[#allocation4 + $0x1e8] sm:$0xff]
    %v866 = vld [vmem:[#allocation4 + $0x1f0] sm:$0xff]
    %v867 = vld [vmem:[#allocation4 + $0x1f8] sm:$0xff]
    %v868 = vld [vmem:[#allocation4 + $0x200] sm:$0xff]
    %v869 = vld [vmem:[#allocation4 + $0x208] sm:$0xff]
    %v870 = vld [vmem:[#allocation4 + $0x210] sm:$0xff]
    %v871 = vld [vmem:[#allocation4 + $0x218] sm:$0xff]
    %v872 = vld [vmem:[#allocation4 + $0x220] sm:$0xff]
    %v873 = vld [vmem:[#allocation4 + $0x228] sm:$0xff]
    %v874 = vld [vmem:[#allocation4 + $0x230] sm:$0xff]
    %v875 = vld [vmem:[#allocation4 + $0x238] sm:$0xff]
    %v876 = vld [vmem:[#allocation4 + $0x240] sm:$0xff]
    %v877 = vld [vmem:[#allocation4 + $0x248] sm:$0xff]
    %v878 = vld [vmem:[#allocation4 + $0x250] sm:$0xff]
    %v879 = vld [vmem:[#allocation4 + $0x258] sm:$0xff]
    %v880 = vld [vmem:[#allocation4 + $0x260] sm:$0xff]
    %v881 = vld [vmem:[#allocation4 + $0x268] sm:$0xff]
    %v882 = vld [vmem:[#allocation4 + $0x270] sm:$0xff]
    %v883 = vld [vmem:[#allocation4 + $0x278] sm:$0xff]
    %v884 = vld [vmem:[#allocation4 + $0x280] sm:$0xff]
    %v885 = vld [vmem:[#allocation4 + $0x288] sm:$0xff]
    %v886 = vld [vmem:[#allocation4 + $0x290] sm:$0xff]
    %v887 = vld [vmem:[#allocation4 + $0x298] sm:$0xff]
    %v888 = vld [vmem:[#allocation4 + $0x2a0] sm:$0xff]
    %v889 = vld [vmem:[#allocation4 + $0x2a8] sm:$0xff]
    %v890 = vld [vmem:[#allocation4 + $0x2b0] sm:$0xff]
    %v891 = vld [vmem:[#allocation4 + $0x2b8] sm:$0xff]
    %v892 = vld [vmem:[#allocation4 + $0x2c0] sm:$0xff]
    %v893 = vld [vmem:[#allocation4 + $0x2c8] sm:$0xff]
    %v894 = vld [vmem:[#allocation4 + $0x2d0] sm:$0xff]
    %v895 = vld [vmem:[#allocation4 + $0x2d8] sm:$0xff]
    %v896 = vld [vmem:[#allocation4 + $0x2e0] sm:$0xff]
    %v897 = vld [vmem:[#allocation4 + $0x2e8] sm:$0xff]
    %v898 = vld [vmem:[#allocation4 + $0x2f0] sm:$0xff]
    %v899 = vld [vmem:[#allocation4 + $0x2f8] sm:$0xff]
    %v900 = vld [vmem:[#allocation4 + $0x300] sm:$0xff]
    %v901 = vld [vmem:[#allocation4 + $0x308] sm:$0xff]
    %v902 = vld [vmem:[#allocation4 + $0x310] sm:$0xff]
    %v903 = vld [vmem:[#allocation4 + $0x318] sm:$0xff]
    %v904 = vld [vmem:[#allocation4 + $0x320] sm:$0xff]
    %v905 = vld [vmem:[#allocation4 + $0x328] sm:$0xff]
    %v906 = vld [vmem:[#allocation4 + $0x330] sm:$0xff]
    %v907 = vld [vmem:[#allocation4 + $0x338] sm:$0xff]
    %v908 = vld [vmem:[#allocation4 + $0x340] sm:$0xff]
    %v909 = vld [vmem:[#allocation4 + $0x348] sm:$0xff]
    %v910 = vld [vmem:[#allocation4 + $0x350] sm:$0xff]
    %v911 = vld [vmem:[#allocation4 + $0x358] sm:$0xff]
    %v912 = vld [vmem:[#allocation4 + $0x360] sm:$0xff]
    %v913 = vld [vmem:[#allocation4 + $0x368] sm:$0xff]
    %v914 = vld [vmem:[#allocation4 + $0x370] sm:$0xff]
    %v915 = vld [vmem:[#allocation4 + $0x378] sm:$0xff]
    %v916 = vld [vmem:[#allocation4 + $0x380] sm:$0xff]
    %v917 = vld [vmem:[#allocation4 + $0x388] sm:$0xff]
    %v918 = vld [vmem:[#allocation4 + $0x390] sm:$0xff]
    %v919 = vld [vmem:[#allocation4 + $0x398] sm:$0xff]
    %v920 = vld [vmem:[#allocation4 + $0x3a0] sm:$0xff]
    %v921 = vld [vmem:[#allocation4 + $0x3a8] sm:$0xff]
    %v922 = vld [vmem:[#allocation4 + $0x3b0] sm:$0xff]
    %v923 = vld [vmem:[#allocation4 + $0x3b8] sm:$0xff]
    %v924 = vld [vmem:[#allocation4 + $0x3c0] sm:$0xff]
    %v925 = vld [vmem:[#allocation4 + $0x3c8] sm:$0xff]
    %v926 = vld [vmem:[#allocation4 + $0x3d0] sm:$0xff]
    %v927 = vld [vmem:[#allocation4 + $0x3d8] sm:$0xff]
    %v928 = vld [vmem:[#allocation4 + $0x3e0] sm:$0xff]
    %v929 = vld [vmem:[#allocation4 + $0x3e8] sm:$0xff]
    %v930 = vld [vmem:[#allocation4 + $0x3f0] sm:$0xff]
    %v931 = vld [vmem:[#allocation4 + $0x3f8] sm:$0xff]
    %v932 = vld [vmem:[%s5] sm:$0xf]
    %v934 = vlaneseq
    %v935 = vshrl.u32 %v934, 7
    %v936 = vsub.s32 0, %v935
    %v937 = vrot.slane %v932, %v936
    %v938 = vlaneseq
    %v939 = vshrl.u32 %v938, 7
    %v940 = vsub.s32 1, %v939
    %v941 = vrot.slane %v932, %v940
    %v942 = vlaneseq
    %v943 = vshrl.u32 %v942, 7
    %v944 = vsub.s32 2, %v943
    %v945 = vrot.slane %v932, %v944
    %v946 = vlaneseq
    %v947 = vshrl.u32 %v946, 7
    %v948 = vsub.s32 3, %v947
    %v949 = vrot.slane %v932, %v948
    %954 = vmatprep.subr.mxu0 %v805
    %955 = vmatpush1.msra.mxu0 %v804
    %956 = vmatprep.subr.mxu0 %v809
    %957 = vmatpush1.msra.mxu0 %v808
    %958 = vmatprep.subr.mxu0 %v813
    %959 = vmatpush1.msra.mxu0 %v812
    %960 = vmatprep.subr.mxu0 %v817
    %961 = vmatpush1.msra.mxu0 %v816
    %962 = vmatprep.subr.mxu0 %v821
    %963 = vmatpush1.msra.mxu0 %v820
    %964 = vmatprep.subr.mxu0 %v825
    %965 = vmatpush1.msra.mxu0 %v824
    %966 = vmatprep.subr.mxu0 %v829
    %967 = vmatpush1.msra.mxu0 %v828
    %968 = vmatprep.subr.mxu0 %v833
    %969 = vmatpush1.msra.mxu0 %v832
    %970 = vmatprep.subr.mxu0 %v837
    %971 = vmatpush1.msra.mxu0 %v836
    %972 = vmatprep.subr.mxu0 %v841
    %973 = vmatpush1.msra.mxu0 %v840
    %974 = vmatprep.subr.mxu0 %v845
    %975 = vmatpush1.msra.mxu0 %v844
    %976 = vmatprep.subr.mxu0 %v849
    %977 = vmatpush1.msra.mxu0 %v848
    %978 = vmatprep.subr.mxu0 %v853
    %979 = vmatpush1.msra.mxu0 %v852
    %980 = vmatprep.subr.mxu0 %v857
    %981 = vmatpush1.msra.mxu0 %v856
    %982 = vmatprep.subr.mxu0 %v861
    %983 = vmatpush1.msra.mxu0 %v860
    %984 = vmatprep.subr.mxu0 %v865
    %985 = vmatpush1.msra.mxu0 %v864
    %986 = vmatprep.subr.mxu0 %v869
    %987 = vmatpush1.msra.mxu0 %v868
    %988 = vmatprep.subr.mxu0 %v873
    %989 = vmatpush1.msra.mxu0 %v872
    %990 = vmatprep.subr.mxu0 %v877
    %991 = vmatpush1.msra.mxu0 %v876
    %992 = vmatprep.subr.mxu0 %v881
    %993 = vmatpush1.msra.mxu0 %v880
    %994 = vmatprep.subr.mxu0 %v885
    %995 = vmatpush1.msra.mxu0 %v884
    %996 = vmatprep.subr.mxu0 %v889
    %997 = vmatpush1.msra.mxu0 %v888
    %998 = vmatprep.subr.mxu0 %v893
    %999 = vmatpush1.msra.mxu0 %v892
    %1000 = vmatprep.subr.mxu0 %v897
    %1001 = vmatpush1.msra.mxu0 %v896
    %1002 = vmatprep.subr.mxu0 %v901
    %1003 = vmatpush1.msra.mxu0 %v900
    %1004 = vmatprep.subr.mxu0 %v905
    %1005 = vmatpush1.msra.mxu0 %v904
    %1006 = vmatprep.subr.mxu0 %v909
    %1007 = vmatpush1.msra.mxu0 %v908
    %1008 = vmatprep.subr.mxu0 %v913
    %1009 = vmatpush1.msra.mxu0 %v912
    %1010 = vmatprep.subr.mxu0 %v917
    %1011 = vmatpush1.msra.mxu0 %v916
    %1012 = vmatprep.subr.mxu0 %v921
    %1013 = vmatpush1.msra.mxu0 %v920
    %1014 = vmatprep.subr.mxu0 %v925
    %1015 = vmatpush1.msra.mxu0 %v924
    %1016 = vmatprep.subr.mxu0 %v929
    %1017 = vmatpush1.msra.mxu0 %v928
    %1018 = vmatprep.mubr.f32.mxu0 0.0
    %1019 = vmatmul.mubr.f32.gmra.mrb[0].mxu0 %v496
    %v1020 = vpop.f32.mrb[0].mxu0
    %v1021 = vadd.f32 %v937, %v1020
    %v1022 = vpop.f32.mrb[0].mxu0
    %v1023 = vadd.f32 %v941, %v1022
    %1024 = vdwg.mxu0
    %1025 = vmatprep.subr.mxu0 %v807
    %1026 = vmatpush1.msra.mxu0 %v806
    %1027 = vmatprep.subr.mxu0 %v811
    %1028 = vmatpush1.msra.mxu0 %v810
    %1029 = vmatprep.subr.mxu0 %v815
    %1030 = vmatpush1.msra.mxu0 %v814
    %1031 = vmatprep.subr.mxu0 %v819
    %1032 = vmatpush1.msra.mxu0 %v818
    %1033 = vmatprep.subr.mxu0 %v823
    %1034 = vmatpush1.msra.mxu0 %v822
    %1035 = vmatprep.subr.mxu0 %v827
    %1036 = vmatpush1.msra.mxu0 %v826
    %1037 = vmatprep.subr.mxu0 %v831
    %1038 = vmatpush1.msra.mxu0 %v830
    %1039 = vmatprep.subr.mxu0 %v835
    %1040 = vmatpush1.msra.mxu0 %v834
    %1041 = vmatprep.subr.mxu0 %v839
    %1042 = vmatpush1.msra.mxu0 %v838
    %1043 = vmatprep.subr.mxu0 %v843
    %1044 = vmatpush1.msra.mxu0 %v842
    %1045 = vmatprep.subr.mxu0 %v847
    %1046 = vmatpush1.msra.mxu0 %v846
    %1047 = vmatprep.subr.mxu0 %v851
    %1048 = vmatpush1.msra.mxu0 %v850
    %1049 = vmatprep.subr.mxu0 %v855
    %1050 = vmatpush1.msra.mxu0 %v854
    %1051 = vmatprep.subr.mxu0 %v859
    %1052 = vmatpush1.msra.mxu0 %v858
    %1053 = vmatprep.subr.mxu0 %v863
    %1054 = vmatpush1.msra.mxu0 %v862
    %1055 = vmatprep.subr.mxu0 %v867
    %1056 = vmatpush1.msra.mxu0 %v866
    %1057 = vmatprep.subr.mxu0 %v871
    %1058 = vmatpush1.msra.mxu0 %v870
    %1059 = vmatprep.subr.mxu0 %v875
    %1060 = vmatpush1.msra.mxu0 %v874
    %1061 = vmatprep.subr.mxu0 %v879
    %1062 = vmatpush1.msra.mxu0 %v878
    %1063 = vmatprep.subr.mxu0 %v883
    %1064 = vmatpush1.msra.mxu0 %v882
    %1065 = vmatprep.subr.mxu0 %v887
    %1066 = vmatpush1.msra.mxu0 %v886
    %1067 = vmatprep.subr.mxu0 %v891
    %1068 = vmatpush1.msra.mxu0 %v890
    %1069 = vmatprep.subr.mxu0 %v895
    %1070 = vmatpush1.msra.mxu0 %v894
    %1071 = vmatprep.subr.mxu0 %v899
    %1072 = vmatpush1.msra.mxu0 %v898
    %1073 = vmatprep.subr.mxu0 %v903
    %1074 = vmatpush1.msra.mxu0 %v902
    %1075 = vmatprep.subr.mxu0 %v907
    %1076 = vmatpush1.msra.mxu0 %v906
    %1077 = vmatprep.subr.mxu0 %v911
    %1078 = vmatpush1.msra.mxu0 %v910
    %1079 = vmatprep.subr.mxu0 %v915
    %1080 = vmatpush1.msra.mxu0 %v914
    %1081 = vmatprep.subr.mxu0 %v919
    %1082 = vmatpush1.msra.mxu0 %v918
    %1083 = vmatprep.subr.mxu0 %v923
    %1084 = vmatpush1.msra.mxu0 %v922
    %1085 = vmatprep.subr.mxu0 %v927
    %1086 = vmatpush1.msra.mxu0 %v926
    %1087 = vmatprep.subr.mxu0 %v931
    %1088 = vmatpush1.msra.mxu0 %v930
    %1089 = vmatprep.mubr.f32.mxu0 0.0
    %1090 = vmatmul.mubr.f32.gmra.mrb[0].mxu0 %v496
    %v1091 = vpop.f32.mrb[0].mxu0
    %v1092 = vadd.f32 %v945, %v1091
    %v1093 = vpop.f32.mrb[0].mxu0
    %v1094 = vadd.f32 %v949, %v1093
    %1095 = vdwg.mxu0
    %v1096 = vtanh.pop %v1021
    %v1097 = vtanh.pop %v1023
    %v1098 = vtanh.pop %v1092
    %v1099 = vtanh.pop %v1094
    %v1100 = vmul.f32 %v1096, 0.5
    %v1101 = vadd.f32 %v1100, 0.5
    %v1102 = vmul.f32 %v1097, 0.5
    %v1103 = vadd.f32 %v1102, 0.5
    %v1104 = vmul.f32 %v1099, 0.5
    %v1105 = vadd.f32 %v1104, 0.5
    %v1106 = vmul.f32 %v1103, 0.0
    %v1107 = vmul.f32 %v1101, %v1098
    %v1108 = vadd.f32 %v1106, %v1107
    %v1109 = vtanh.pop %v1108
    %v1110 = vmul.f32 %v1105, %v1109
    %1111 = vrot.lane.b32.xlu0 %v82, 98
    %v1112 = vpop.permute.xlu0 %1111
    %v1113 = vsel %vm113, %v1112, 0
    %1115 = vmatprep.subr.mxu0 %v84
    %1116 = vmatpush1.msra.mxu0 %v83
    %1117 = vmatprep.subr.mxu0 %v122
    %1118 = vmatpush1.msra.mxu0 %v119
    %1119 = vmatprep.subr.mxu0 0.0
    %1120 = vmatpush1.msra.mxu0 0.0
    %1121 = vmatprep.subr.mxu0 0.0
    %1122 = vmatpush1.msra.mxu0 0.0
    %1123 = vmatprep.subr.mxu0 0.0
    %1124 = vmatpush1.msra.mxu0 0.0
    %1125 = vmatprep.subr.mxu0 0.0
    %1126 = vmatpush1.msra.mxu0 0.0
    %1127 = vmatprep.subr.mxu0 0.0
    %1128 = vmatpush1.msra.mxu0 0.0
    %1129 = vmatprep.subr.mxu0 0.0
    %1130 = vmatpush1.msra.mxu0 0.0
    %1131 = vmatprep.subr.mxu0 0.0
    %1132 = vmatpush1.msra.mxu0 0.0
    %1133 = vmatprep.subr.mxu0 0.0
    %1134 = vmatpush1.msra.mxu0 0.0
    %1135 = vmatprep.subr.mxu0 0.0
    %1136 = vmatpush1.msra.mxu0 0.0
    %1137 = vmatprep.subr.mxu0 0.0
    %1138 = vmatpush1.msra.mxu0 0.0
    %1139 = vmatprep.subr.mxu0 0.0
    %1140 = vmatpush1.msra.mxu0 0.0
    %1141 = vmatprep.subr.mxu0 0.0
    %1142 = vmatpush1.msra.mxu0 0.0
    %1143 = vmatprep.subr.mxu0 0.0
    %1144 = vmatpush1.msra.mxu0 0.0
    %1145 = vmatprep.subr.mxu0 0.0
    %1146 = vmatpush1.msra.mxu0 0.0
    %1147 = vmatprep.subr.mxu0 0.0
    %1148 = vmatpush1.msra.mxu0 0.0
    %1149 = vmatprep.subr.mxu0 0.0
    %1150 = vmatpush1.msra.mxu0 0.0
    %1151 = vmatprep.subr.mxu0 0.0
    %1152 = vmatpush1.msra.mxu0 0.0
    %1153 = vmatprep.subr.mxu0 0.0
    %1154 = vmatpush1.msra.mxu0 0.0
    %1155 = vmatprep.subr.mxu0 0.0
    %1156 = vmatpush1.msra.mxu0 0.0
    %1157 = vmatprep.subr.mxu0 0.0
    %1158 = vmatpush1.msra.mxu0 0.0
    %1159 = vmatprep.subr.mxu0 0.0
    %1160 = vmatpush1.msra.mxu0 0.0
    %1161 = vmatprep.subr.mxu0 0.0
    %1162 = vmatpush1.msra.mxu0 0.0
    %1163 = vmatprep.subr.mxu0 0.0
    %1164 = vmatpush1.msra.mxu0 0.0
    %1165 = vmatprep.subr.mxu0 0.0
    %1166 = vmatpush1.msra.mxu0 0.0
    %1167 = vmatprep.subr.mxu0 0.0
    %1168 = vmatpush1.msra.mxu0 0.0
    %1169 = vmatprep.subr.mxu0 0.0
    %1170 = vmatpush1.msra.mxu0 0.0
    %1171 = vmatprep.subr.mxu0 0.0
    %1172 = vmatpush1.msra.mxu0 0.0
    %1173 = vmatprep.subr.mxu0 0.0
    %1174 = vmatpush1.msra.mxu0 0.0
    %1175 = vmatprep.subr.mxu0 0.0
    %1176 = vmatpush1.msra.mxu0 0.0
    %1177 = vmatprep.subr.mxu0 0.0
    %1178 = vmatpush1.msra.mxu0 0.0
    %1179 = vmatprep.mubr.f32.mxu0 0.0
    %1180 = vmatmul.mubr.f32.gmra.mrb[0].mxu0 %v1113
    %v1181 = vpop.f32.mrb[0].mxu0
    %v1182 = vadd.f32 %v96, %v1181
    %v1183 = vpop.f32.mrb[0].mxu0
    %v1184 = vadd.f32 %v100, %v1183
    %1185 = vdwg.mxu0
    %1186 = vmatprep.subr.mxu0 %v86
    %1187 = vmatpush1.msra.mxu0 %v85
    %1188 = vmatprep.subr.mxu0 %v128
    %1189 = vmatpush1.msra.mxu0 %v125
    %1190 = vmatprep.subr.mxu0 0.0
    %1191 = vmatpush1.msra.mxu0 0.0
    %1192 = vmatprep.subr.mxu0 0.0
    %1193 = vmatpush1.msra.mxu0 0.0
    %1194 = vmatprep.subr.mxu0 0.0
    %1195 = vmatpush1.msra.mxu0 0.0
    %1196 = vmatprep.subr.mxu0 0.0
    %1197 = vmatpush1.msra.mxu0 0.0
    %1198 = vmatprep.subr.mxu0 0.0
    %1199 = vmatpush1.msra.mxu0 0.0
    %1200 = vmatprep.subr.mxu0 0.0
    %1201 = vmatpush1.msra.mxu0 0.0
    %1202 = vmatprep.subr.mxu0 0.0
    %1203 = vmatpush1.msra.mxu0 0.0
    %1204 = vmatprep.subr.mxu0 0.0
    %1205 = vmatpush1.msra.mxu0 0.0
    %1206 = vmatprep.subr.mxu0 0.0
    %1207 = vmatpush1.msra.mxu0 0.0
    %1208 = vmatprep.subr.mxu0 0.0
    %1209 = vmatpush1.msra.mxu0 0.0
    %1210 = vmatprep.subr.mxu0 0.0
    %1211 = vmatpush1.msra.mxu0 0.0
    %1212 = vmatprep.subr.mxu0 0.0
    %1213 = vmatpush1.msra.mxu0 0.0
    %1214 = vmatprep.subr.mxu0 0.0
    %1215 = vmatpush1.msra.mxu0 0.0
    %1216 = vmatprep.subr.mxu0 0.0
    %1217 = vmatpush1.msra.mxu0 0.0
    %1218 = vmatprep.subr.mxu0 0.0
    %1219 = vmatpush1.msra.mxu0 0.0
    %1220 = vmatprep.subr.mxu0 0.0
    %1221 = vmatpush1.msra.mxu0 0.0
    %1222 = vmatprep.subr.mxu0 0.0
    %1223 = vmatpush1.msra.mxu0 0.0
    %1224 = vmatprep.subr.mxu0 0.0
    %1225 = vmatpush1.msra.mxu0 0.0
    %1226 = vmatprep.subr.mxu0 0.0
    %1227 = vmatpush1.msra.mxu0 0.0
    %1228 = vmatprep.subr.mxu0 0.0
    %1229 = vmatpush1.msra.mxu0 0.0
    %1230 = vmatprep.subr.mxu0 0.0
    %1231 = vmatpush1.msra.mxu0 0.0
    %1232 = vmatprep.subr.mxu0 0.0
    %1233 = vmatpush1.msra.mxu0 0.0
    %1234 = vmatprep.subr.mxu0 0.0
    %1235 = vmatpush1.msra.mxu0 0.0
    %1236 = vmatprep.subr.mxu0 0.0
    %1237 = vmatpush1.msra.mxu0 0.0
    %1238 = vmatprep.subr.mxu0 0.0
    %1239 = vmatpush1.msra.mxu0 0.0
    %1240 = vmatprep.subr.mxu0 0.0
    %1241 = vmatpush1.msra.mxu0 0.0
    %1242 = vmatprep.subr.mxu0 0.0
    %1243 = vmatpush1.msra.mxu0 0.0
    %1244 = vmatprep.subr.mxu0 0.0
    %1245 = vmatpush1.msra.mxu0 0.0
    %1246 = vmatprep.subr.mxu0 0.0
    %1247 = vmatpush1.msra.mxu0 0.0
    %1248 = vmatprep.subr.mxu0 0.0
    %1249 = vmatpush1.msra.mxu0 0.0
    %1250 = vmatprep.mubr.f32.mxu0 0.0
    %1251 = vmatmul.mubr.f32.gmra.mrb[0].mxu0 %v1113
    %v1252 = vpop.f32.mrb[0].mxu0
    %v1253 = vadd.f32 %v104, %v1252
    %v1254 = vpop.f32.mrb[0].mxu0
    %v1255 = vadd.f32 %v108, %v1254
    %1256 = vdwg.mxu0
    %1257 = vmatprep.subr.mxu0 %v273
    %1258 = vmatpush1.msra.mxu0 %v272
    %1259 = vmatprep.subr.mxu0 %v277
    %1260 = vmatpush1.msra.mxu0 %v276
    %1261 = vmatprep.subr.mxu0 %v281
    %1262 = vmatpush1.msra.mxu0 %v280
    %1263 = vmatprep.subr.mxu0 %v285
    %1264 = vmatpush1.msra.mxu0 %v284
    %1265 = vmatprep.subr.mxu0 %v289
    %1266 = vmatpush1.msra.mxu0 %v288
    %1267 = vmatprep.subr.mxu0 %v293
    %1268 = vmatpush1.msra.mxu0 %v292
    %1269 = vmatprep.subr.mxu0 %v297
    %1270 = vmatpush1.msra.mxu0 %v296
    %1271 = vmatprep.subr.mxu0 %v301
    %1272 = vmatpush1.msra.mxu0 %v300
    %1273 = vmatprep.subr.mxu0 %v305
    %1274 = vmatpush1.msra.mxu0 %v304
    %1275 = vmatprep.subr.mxu0 %v309
    %1276 = vmatpush1.msra.mxu0 %v308
    %1277 = vmatprep.subr.mxu0 %v313
    %1278 = vmatpush1.msra.mxu0 %v312
    %1279 = vmatprep.subr.mxu0 %v317
    %1280 = vmatpush1.msra.mxu0 %v316
    %1281 = vmatprep.subr.mxu0 %v321
    %1282 = vmatpush1.msra.mxu0 %v320
    %1283 = vmatprep.subr.mxu0 %v325
    %1284 = vmatpush1.msra.mxu0 %v324
    %1285 = vmatprep.subr.mxu0 %v329
    %1286 = vmatpush1.msra.mxu0 %v328
    %1287 = vmatprep.subr.mxu0 %v333
    %1288 = vmatpush1.msra.mxu0 %v332
    %1289 = vmatprep.subr.mxu0 0.0
    %1290 = vmatpush1.msra.mxu0 0.0
    %1291 = vmatprep.subr.mxu0 0.0
    %1292 = vmatpush1.msra.mxu0 0.0
    %1293 = vmatprep.subr.mxu0 0.0
    %1294 = vmatpush1.msra.mxu0 0.0
    %1295 = vmatprep.subr.mxu0 0.0
    %1296 = vmatpush1.msra.mxu0 0.0
    %1297 = vmatprep.subr.mxu0 0.0
    %1298 = vmatpush1.msra.mxu0 0.0
    %1299 = vmatprep.subr.mxu0 0.0
    %1300 = vmatpush1.msra.mxu0 0.0
    %1301 = vmatprep.subr.mxu0 0.0
    %1302 = vmatpush1.msra.mxu0 0.0
    %1303 = vmatprep.subr.mxu0 0.0
    %1304 = vmatpush1.msra.mxu0 0.0
    %1305 = vmatprep.subr.mxu0 0.0
    %1306 = vmatpush1.msra.mxu0 0.0
    %1307 = vmatprep.subr.mxu0 0.0
    %1308 = vmatpush1.msra.mxu0 0.0
    %1309 = vmatprep.subr.mxu0 0.0
    %1310 = vmatpush1.msra.mxu0 0.0
    %1311 = vmatprep.subr.mxu0 0.0
    %1312 = vmatpush1.msra.mxu0 0.0
    %1313 = vmatprep.subr.mxu0 0.0
    %1314 = vmatpush1.msra.mxu0 0.0
    %1315 = vmatprep.subr.mxu0 0.0
    %1316 = vmatpush1.msra.mxu0 0.0
    %1317 = vmatprep.subr.mxu0 0.0
    %1318 = vmatpush1.msra.mxu0 0.0
    %1319 = vmatprep.subr.mxu0 0.0
    %1320 = vmatpush1.msra.mxu0 0.0
    %1321 = vmatprep.mubr.f32.mxu0 0.0
    %1322 = vmatmul.mubr.f32.gmra.mrb[0].mxu0 %v803
    %v1323 = vpop.f32.mrb[0].mxu0
    %v1324 = vadd.f32 0.0, %v1323
    %v1325 = vpop.f32.mrb[0].mxu0
    %v1326 = vadd.f32 0.0, %v1325
    %1327 = vdwg.mxu0
    %1328 = vmatprep.subr.mxu0 %v275
    %1329 = vmatpush1.msra.mxu0 %v274
    %1330 = vmatprep.subr.mxu0 %v279
    %1331 = vmatpush1.msra.mxu0 %v278
    %1332 = vmatprep.subr.mxu0 %v283
    %1333 = vmatpush1.msra.mxu0 %v282
    %1334 = vmatprep.subr.mxu0 %v287
    %1335 = vmatpush1.msra.mxu0 %v286
    %1336 = vmatprep.subr.mxu0 %v291
    %1337 = vmatpush1.msra.mxu0 %v290
    %1338 = vmatprep.subr.mxu0 %v295
    %1339 = vmatpush1.msra.mxu0 %v294
    %1340 = vmatprep.subr.mxu0 %v299
    %1341 = vmatpush1.msra.mxu0 %v298
    %1342 = vmatprep.subr.mxu0 %v303
    %1343 = vmatpush1.msra.mxu0 %v302
    %1344 = vmatprep.subr.mxu0 %v307
    %1345 = vmatpush1.msra.mxu0 %v306
    %1346 = vmatprep.subr.mxu0 %v311
    %1347 = vmatpush1.msra.mxu0 %v310
    %1348 = vmatprep.subr.mxu0 %v315
    %1349 = vmatpush1.msra.mxu0 %v314
    %1350 = vmatprep.subr.mxu0 %v319
    %1351 = vmatpush1.msra.mxu0 %v318
    %1352 = vmatprep.subr.mxu0 %v323
    %1353 = vmatpush1.msra.mxu0 %v322
    %1354 = vmatprep.subr.mxu0 %v327
    %1355 = vmatpush1.msra.mxu0 %v326
    %1356 = vmatprep.subr.mxu0 %v331
    %1357 = vmatpush1.msra.mxu0 %v330
    %1358 = vmatprep.subr.mxu0 %v335
    %1359 = vmatpush1.msra.mxu0 %v334
    %1360 = vmatprep.subr.mxu0 0.0
    %1361 = vmatpush1.msra.mxu0 0.0
    %1362 = vmatprep.subr.mxu0 0.0
    %1363 = vmatpush1.msra.mxu0 0.0
    %1364 = vmatprep.subr.mxu0 0.0
    %1365 = vmatpush1.msra.mxu0 0.0
    %1366 = vmatprep.subr.mxu0 0.0
    %1367 = vmatpush1.msra.mxu0 0.0
    %1368 = vmatprep.subr.mxu0 0.0
    %1369 = vmatpush1.msra.mxu0 0.0
    %1370 = vmatprep.subr.mxu0 0.0
    %1371 = vmatpush1.msra.mxu0 0.0
    %1372 = vmatprep.subr.mxu0 0.0
    %1373 = vmatpush1.msra.mxu0 0.0
    %1374 = vmatprep.subr.mxu0 0.0
    %1375 = vmatpush1.msra.mxu0 0.0
    %1376 = vmatprep.subr.mxu0 0.0
    %1377 = vmatpush1.msra.mxu0 0.0
    %1378 = vmatprep.subr.mxu0 0.0
    %1379 = vmatpush1.msra.mxu0 0.0
    %1380 = vmatprep.subr.mxu0 0.0
    %1381 = vmatpush1.msra.mxu0 0.0
    %1382 = vmatprep.subr.mxu0 0.0
    %1383 = vmatpush1.msra.mxu0 0.0
    %1384 = vmatprep.subr.mxu0 0.0
    %1385 = vmatpush1.msra.mxu0 0.0
    %1386 = vmatprep.subr.mxu0 0.0
    %1387 = vmatpush1.msra.mxu0 0.0
    %1388 = vmatprep.subr.mxu0 0.0
    %1389 = vmatpush1.msra.mxu0 0.0
    %1390 = vmatprep.subr.mxu0 0.0
    %1391 = vmatpush1.msra.mxu0 0.0
    %1392 = vmatprep.mubr.f32.mxu0 0.0
    %1393 = vmatmul.mubr.f32.gmra.mrb[0].mxu0 %v803
    %v1394 = vpop.f32.mrb[0].mxu0
    %v1395 = vadd.f32 0.0, %v1394
    %v1396 = vpop.f32.mrb[0].mxu0
    %v1397 = vadd.f32 0.0, %v1396
    %1398 = vdwg.mxu0
    %v1399 = vadd.f32 %v1182, %v1324
    %v1400 = vadd.f32 %v1184, %v1326
    %v1401 = vadd.f32 %v1253, %v1395
    %v1402 = vadd.f32 %v1255, %v1397
    %v1403 = vtanh.pop %v1399
    %v1404 = vtanh.pop %v1400
    %v1405 = vtanh.pop %v1401
    %v1406 = vtanh.pop %v1402
    %v1407 = vmul.f32 %v1403, 0.5
    %v1408 = vadd.f32 %v1407, 0.5
    %v1409 = vmul.f32 %v1404, 0.5
    %v1410 = vadd.f32 %v1409, 0.5
    %v1411 = vmul.f32 %v1406, 0.5
    %v1412 = vadd.f32 %v1411, 0.5
    %v1413 = vmul.f32 %v1410, %v801
    %v1414 = vmul.f32 %v1408, %v1405
    %v1415 = vadd.f32 %v1413, %v1414
    %v1416 = vtanh.pop %v1415
    %v1417 = vmul.f32 %v1412, %v1416
    %1418 = vmatprep.subr.mxu0 %v805
    %1419 = vmatpush1.msra.mxu0 %v804
    %1420 = vmatprep.subr.mxu0 %v809
    %1421 = vmatpush1.msra.mxu0 %v808
    %1422 = vmatprep.subr.mxu0 %v813
    %1423 = vmatpush1.msra.mxu0 %v812
    %1424 = vmatprep.subr.mxu0 %v817
    %1425 = vmatpush1.msra.mxu0 %v816
    %1426 = vmatprep.subr.mxu0 %v821
    %1427 = vmatpush1.msra.mxu0 %v820
    %1428 = vmatprep.subr.mxu0 %v825
    %1429 = vmatpush1.msra.mxu0 %v824
    %1430 = vmatprep.subr.mxu0 %v829
    %1431 = vmatpush1.msra.mxu0 %v828
    %1432 = vmatprep.subr.mxu0 %v833
    %1433 = vmatpush1.msra.mxu0 %v832
    %1434 = vmatprep.subr.mxu0 %v837
    %1435 = vmatpush1.msra.mxu0 %v836
    %1436 = vmatprep.subr.mxu0 %v841
    %1437 = vmatpush1.msra.mxu0 %v840
    %1438 = vmatprep.subr.mxu0 %v845
    %1439 = vmatpush1.msra.mxu0 %v844
    %1440 = vmatprep.subr.mxu0 %v849
    %1441 = vmatpush1.msra.mxu0 %v848
    %1442 = vmatprep.subr.mxu0 %v853
    %1443 = vmatpush1.msra.mxu0 %v852
    %1444 = vmatprep.subr.mxu0 %v857
    %1445 = vmatpush1.msra.mxu0 %v856
    %1446 = vmatprep.subr.mxu0 %v861
    %1447 = vmatpush1.msra.mxu0 %v860
    %1448 = vmatprep.subr.mxu0 %v865
    %1449 = vmatpush1.msra.mxu0 %v864
    %1450 = vmatprep.subr.mxu0 %v869
    %1451 = vmatpush1.msra.mxu0 %v868
    %1452 = vmatprep.subr.mxu0 %v873
    %1453 = vmatpush1.msra.mxu0 %v872
    %1454 = vmatprep.subr.mxu0 %v877
    %1455 = vmatpush1.msra.mxu0 %v876
    %1456 = vmatprep.subr.mxu0 %v881
    %1457 = vmatpush1.msra.mxu0 %v880
    %1458 = vmatprep.subr.mxu0 %v885
    %1459 = vmatpush1.msra.mxu0 %v884
    %1460 = vmatprep.subr.mxu0 %v889
    %1461 = vmatpush1.msra.mxu0 %v888
    %1462 = vmatprep.subr.mxu0 %v893
    %1463 = vmatpush1.msra.mxu0 %v892
    %1464 = vmatprep.subr.mxu0 %v897
    %1465 = vmatpush1.msra.mxu0 %v896
    %1466 = vmatprep.subr.mxu0 %v901
    %1467 = vmatpush1.msra.mxu0 %v900
    %1468 = vmatprep.subr.mxu0 %v905
    %1469 = vmatpush1.msra.mxu0 %v904
    %1470 = vmatprep.subr.mxu0 %v909
    %1471 = vmatpush1.msra.mxu0 %v908
    %1472 = vmatprep.subr.mxu0 %v913
    %1473 = vmatpush1.msra.mxu0 %v912
    %1474 = vmatprep.subr.mxu0 %v917
    %1475 = vmatpush1.msra.mxu0 %v916
    %1476 = vmatprep.subr.mxu0 %v921
    %1477 = vmatpush1.msra.mxu0 %v920
    %1478 = vmatprep.subr.mxu0 %v925
    %1479 = vmatpush1.msra.mxu0 %v924
    %1480 = vmatprep.subr.mxu0 %v929
    %1481 = vmatpush1.msra.mxu0 %v928
    %1482 = vmatprep.mubr.f32.mxu0 %v1110
    %1483 = vmatmul.mubr.f32.gmra.mrb[0].mxu0 %v803
    %v1484 = vpop.f32.mrb[0].mxu0
    %v1485 = vadd.f32 %v937, %v1484
    %v1486 = vpop.f32.mrb[0].mxu0
    %v1487 = vadd.f32 %v941, %v1486
    %1488 = vdwg.mxu0
    %1489 = vmatprep.subr.mxu0 %v807
    %1490 = vmatpush1.msra.mxu0 %v806
    %1491 = vmatprep.subr.mxu0 %v811
    %1492 = vmatpush1.msra.mxu0 %v810
    %1493 = vmatprep.subr.mxu0 %v815
    %1494 = vmatpush1.msra.mxu0 %v814
    %1495 = vmatprep.subr.mxu0 %v819
    %1496 = vmatpush1.msra.mxu0 %v818
    %1497 = vmatprep.subr.mxu0 %v823
    %1498 = vmatpush1.msra.mxu0 %v822
    %1499 = vmatprep.subr.mxu0 %v827
    %1500 = vmatpush1.msra.mxu0 %v826
    %1501 = vmatprep.subr.mxu0 %v831
    %1502 = vmatpush1.msra.mxu0 %v830
    %1503 = vmatprep.subr.mxu0 %v835
    %1504 = vmatpush1.msra.mxu0 %v834
    %1505 = vmatprep.subr.mxu0 %v839
    %1506 = vmatpush1.msra.mxu0 %v838
    %1507 = vmatprep.subr.mxu0 %v843
    %1508 = vmatpush1.msra.mxu0 %v842
    %1509 = vmatprep.subr.mxu0 %v847
    %1510 = vmatpush1.msra.mxu0 %v846
    %1511 = vmatprep.subr.mxu0 %v851
    %1512 = vmatpush1.msra.mxu0 %v850
    %1513 = vmatprep.subr.mxu0 %v855
    %1514 = vmatpush1.msra.mxu0 %v854
    %1515 = vmatprep.subr.mxu0 %v859
    %1516 = vmatpush1.msra.mxu0 %v858
    %1517 = vmatprep.subr.mxu0 %v863
    %1518 = vmatpush1.msra.mxu0 %v862
    %1519 = vmatprep.subr.mxu0 %v867
    %1520 = vmatpush1.msra.mxu0 %v866
    %1521 = vmatprep.subr.mxu0 %v871
    %1522 = vmatpush1.msra.mxu0 %v870
    %1523 = vmatprep.subr.mxu0 %v875
    %1524 = vmatpush1.msra.mxu0 %v874
    %1525 = vmatprep.subr.mxu0 %v879
    %1526 = vmatpush1.msra.mxu0 %v878
    %1527 = vmatprep.subr.mxu0 %v883
    %1528 = vmatpush1.msra.mxu0 %v882
    %1529 = vmatprep.subr.mxu0 %v887
    %1530 = vmatpush1.msra.mxu0 %v886
    %1531 = vmatprep.subr.mxu0 %v891
    %1532 = vmatpush1.msra.mxu0 %v890
    %1533 = vmatprep.subr.mxu0 %v895
    %1534 = vmatpush1.msra.mxu0 %v894
    %1535 = vmatprep.subr.mxu0 %v899
    %1536 = vmatpush1.msra.mxu0 %v898
    %1537 = vmatprep.subr.mxu0 %v903
    %1538 = vmatpush1.msra.mxu0 %v902
    %1539 = vmatprep.subr.mxu0 %v907
    %1540 = vmatpush1.msra.mxu0 %v906
    %1541 = vmatprep.subr.mxu0 %v911
    %1542 = vmatpush1.msra.mxu0 %v910
    %1543 = vmatprep.subr.mxu0 %v915
    %1544 = vmatpush1.msra.mxu0 %v914
    %1545 = vmatprep.subr.mxu0 %v919
    %1546 = vmatpush1.msra.mxu0 %v918
    %1547 = vmatprep.subr.mxu0 %v923
    %1548 = vmatpush1.msra.mxu0 %v922
    %1549 = vmatprep.subr.mxu0 %v927
    %1550 = vmatpush1.msra.mxu0 %v926
    %1551 = vmatprep.subr.mxu0 %v931
    %1552 = vmatpush1.msra.mxu0 %v930
    %1553 = vmatprep.mubr.f32.mxu0 %v1110
    %1554 = vmatmul.mubr.f32.gmra.mrb[0].mxu0 %v803
    %v1555 = vpop.f32.mrb[0].mxu0
    %v1556 = vadd.f32 %v945, %v1555
    %v1557 = vpop.f32.mrb[0].mxu0
    %v1558 = vadd.f32 %v949, %v1557
    %1559 = vdwg.mxu0
    %v1560 = vtanh.pop %v1485
    %v1561 = vtanh.pop %v1487
    %v1562 = vtanh.pop %v1556
    %v1563 = vtanh.pop %v1558
    %v1564 = vmul.f32 %v1560, 0.5
    %v1565 = vadd.f32 %v1564, 0.5
    %v1566 = vmul.f32 %v1561, 0.5
    %v1567 = vadd.f32 %v1566, 0.5
    %v1568 = vmul.f32 %v1563, 0.5
    %v1569 = vadd.f32 %v1568, 0.5
    %v1570 = vmul.f32 %v1567, %v1108
    %v1571 = vmul.f32 %v1565, %v1562
    %v1572 = vadd.f32 %v1570, %v1571
    %v1573 = vtanh.pop %v1572
    %v1574 = vmul.f32 %v1569, %v1573
    %v1575 = vld [vmem:[#allocation6] sm:$0xff]
    %v1576 = vld [vmem:[#allocation6 + $0x8] sm:$0xff]
    %v1577 = vld [vmem:[#allocation6 + $0x10] sm:$0xff]
    %v1578 = vld [vmem:[#allocation6 + $0x18] sm:$0xff]
    %v1579 = vld [vmem:[#allocation6 + $0x20] sm:$0xff]
    %v1580 = vld [vmem:[#allocation6 + $0x28] sm:$0xff]
    %v1581 = vld [vmem:[#allocation6 + $0x30] sm:$0xff]
    %v1582 = vld [vmem:[#allocation6 + $0x38] sm:$0xff]
    %v1583 = vld [vmem:[#allocation6 + $0x40] sm:$0xff]
    %v1584 = vld [vmem:[#allocation6 + $0x48] sm:$0xff]
    %v1585 = vld [vmem:[#allocation6 + $0x50] sm:$0xff]
    %v1586 = vld [vmem:[#allocation6 + $0x58] sm:$0xff]
    %v1587 = vld [vmem:[#allocation6 + $0x60] sm:$0xff]
    %v1588 = vld [vmem:[#allocation6 + $0x68] sm:$0xff]
    %v1589 = vld [vmem:[#allocation6 + $0x70] sm:$0xff]
    %v1590 = vld [vmem:[#allocation6 + $0x78] sm:$0xff]
    %v1591 = vld [vmem:[#allocation6 + $0x80] sm:$0xff]
    %v1592 = vld [vmem:[#allocation6 + $0x88] sm:$0xff]
    %v1593 = vld [vmem:[#allocation6 + $0x90] sm:$0xff]
    %v1594 = vld [vmem:[#allocation6 + $0x98] sm:$0xff]
    %v1595 = vld [vmem:[#allocation6 + $0xa0] sm:$0xff]
    %v1596 = vld [vmem:[#allocation6 + $0xa8] sm:$0xff]
    %v1597 = vld [vmem:[#allocation6 + $0xb0] sm:$0xff]
    %v1598 = vld [vmem:[#allocation6 + $0xb8] sm:$0xff]
    %v1599 = vld [vmem:[#allocation6 + $0xc0] sm:$0xff]
    %v1600 = vld [vmem:[#allocation6 + $0xc8] sm:$0xff]
    %v1601 = vld [vmem:[#allocation6 + $0xd0] sm:$0xff]
    %v1602 = vld [vmem:[#allocation6 + $0xd8] sm:$0xff]
    %v1603 = vld [vmem:[#allocation6 + $0xe0] sm:$0xff]
    %v1604 = vld [vmem:[#allocation6 + $0xe8] sm:$0xff]
    %v1605 = vld [vmem:[#allocation6 + $0xf0] sm:$0xff]
    %v1606 = vld [vmem:[#allocation6 + $0xf8] sm:$0xff]
    %v1607 = vld [vmem:[#allocation6 + $0x100] sm:$0xff]
    %v1608 = vld [vmem:[#allocation6 + $0x108] sm:$0xff]
    %v1609 = vld [vmem:[#allocation6 + $0x110] sm:$0xff]
    %v1610 = vld [vmem:[#allocation6 + $0x118] sm:$0xff]
    %v1611 = vld [vmem:[#allocation6 + $0x120] sm:$0xff]
    %v1612 = vld [vmem:[#allocation6 + $0x128] sm:$0xff]
    %v1613 = vld [vmem:[#allocation6 + $0x130] sm:$0xff]
    %v1614 = vld [vmem:[#allocation6 + $0x138] sm:$0xff]
    %v1615 = vld [vmem:[#allocation6 + $0x140] sm:$0xff]
    %v1616 = vld [vmem:[#allocation6 + $0x148] sm:$0xff]
    %v1617 = vld [vmem:[#allocation6 + $0x150] sm:$0xff]
    %v1618 = vld [vmem:[#allocation6 + $0x158] sm:$0xff]
    %v1619 = vld [vmem:[#allocation6 + $0x160] sm:$0xff]
    %v1620 = vld [vmem:[#allocation6 + $0x168] sm:$0xff]
    %v1621 = vld [vmem:[#allocation6 + $0x170] sm:$0xff]
    %v1622 = vld [vmem:[#allocation6 + $0x178] sm:$0xff]
    %v1623 = vld [vmem:[#allocation6 + $0x180] sm:$0xff]
    %v1624 = vld [vmem:[#allocation6 + $0x188] sm:$0xff]
    %v1625 = vld [vmem:[#allocation6 + $0x190] sm:$0xff]
    %v1626 = vld [vmem:[#allocation6 + $0x198] sm:$0xff]
    %v1627 = vld [vmem:[#allocation6 + $0x1a0] sm:$0xff]
    %v1628 = vld [vmem:[#allocation6 + $0x1a8] sm:$0xff]
    %v1629 = vld [vmem:[#allocation6 + $0x1b0] sm:$0xff]
    %v1630 = vld [vmem:[#allocation6 + $0x1b8] sm:$0xff]
    %v1631 = vld [vmem:[#allocation6 + $0x1c0] sm:$0xff]
    %v1632 = vld [vmem:[#allocation6 + $0x1c8] sm:$0xff]
    %v1633 = vld [vmem:[#allocation6 + $0x1d0] sm:$0xff]
    %v1634 = vld [vmem:[#allocation6 + $0x1d8] sm:$0xff]
    %v1635 = vld [vmem:[#allocation6 + $0x1e0] sm:$0xff]
    %v1636 = vld [vmem:[#allocation6 + $0x1e8] sm:$0xff]
    %v1637 = vld [vmem:[#allocation6 + $0x1f0] sm:$0xff]
    %v1638 = vld [vmem:[#allocation6 + $0x1f8] sm:$0xff]
    %v1639 = vld [vmem:[#allocation6 + $0x200] sm:$0xff]
    %v1640 = vld [vmem:[#allocation6 + $0x208] sm:$0xff]
    %v1641 = vld [vmem:[#allocation6 + $0x210] sm:$0xff]
    %v1642 = vld [vmem:[#allocation6 + $0x218] sm:$0xff]
    %v1643 = vld [vmem:[#allocation6 + $0x220] sm:$0xff]
    %v1644 = vld [vmem:[#allocation6 + $0x228] sm:$0xff]
    %v1645 = vld [vmem:[#allocation6 + $0x230] sm:$0xff]
    %v1646 = vld [vmem:[#allocation6 + $0x238] sm:$0xff]
    %v1647 = vld [vmem:[#allocation6 + $0x240] sm:$0xff]
    %v1648 = vld [vmem:[#allocation6 + $0x248] sm:$0xff]
    %v1649 = vld [vmem:[#allocation6 + $0x250] sm:$0xff]
    %v1650 = vld [vmem:[#allocation6 + $0x258] sm:$0xff]
    %v1651 = vld [vmem:[#allocation6 + $0x260] sm:$0xff]
    %v1652 = vld [vmem:[#allocation6 + $0x268] sm:$0xff]
    %v1653 = vld [vmem:[#allocation6 + $0x270] sm:$0xff]
    %v1654 = vld [vmem:[#allocation6 + $0x278] sm:$0xff]
    %v1655 = vld [vmem:[#allocation6 + $0x280] sm:$0xff]
    %v1656 = vld [vmem:[#allocation6 + $0x288] sm:$0xff]
    %v1657 = vld [vmem:[#allocation6 + $0x290] sm:$0xff]
    %v1658 = vld [vmem:[#allocation6 + $0x298] sm:$0xff]
    %v1659 = vld [vmem:[#allocation6 + $0x2a0] sm:$0xff]
    %v1660 = vld [vmem:[#allocation6 + $0x2a8] sm:$0xff]
    %v1661 = vld [vmem:[#allocation6 + $0x2b0] sm:$0xff]
    %v1662 = vld [vmem:[#allocation6 + $0x2b8] sm:$0xff]
    %v1663 = vld [vmem:[#allocation6 + $0x2c0] sm:$0xff]
    %v1664 = vld [vmem:[#allocation6 + $0x2c8] sm:$0xff]
    %v1665 = vld [vmem:[#allocation6 + $0x2d0] sm:$0xff]
    %v1666 = vld [vmem:[#allocation6 + $0x2d8] sm:$0xff]
    %v1667 = vld [vmem:[#allocation6 + $0x2e0] sm:$0xff]
    %v1668 = vld [vmem:[#allocation6 + $0x2e8] sm:$0xff]
    %v1669 = vld [vmem:[#allocation6 + $0x2f0] sm:$0xff]
    %v1670 = vld [vmem:[#allocation6 + $0x2f8] sm:$0xff]
    %v1671 = vld [vmem:[#allocation6 + $0x300] sm:$0xff]
    %v1672 = vld [vmem:[#allocation6 + $0x308] sm:$0xff]
    %v1673 = vld [vmem:[#allocation6 + $0x310] sm:$0xff]
    %v1674 = vld [vmem:[#allocation6 + $0x318] sm:$0xff]
    %v1675 = vld [vmem:[#allocation6 + $0x320] sm:$0xff]
    %v1676 = vld [vmem:[#allocation6 + $0x328] sm:$0xff]
    %v1677 = vld [vmem:[#allocation6 + $0x330] sm:$0xff]
    %v1678 = vld [vmem:[#allocation6 + $0x338] sm:$0xff]
    %v1679 = vld [vmem:[#allocation6 + $0x340] sm:$0xff]
    %v1680 = vld [vmem:[#allocation6 + $0x348] sm:$0xff]
    %v1681 = vld [vmem:[#allocation6 + $0x350] sm:$0xff]
    %v1682 = vld [vmem:[#allocation6 + $0x358] sm:$0xff]
    %v1683 = vld [vmem:[#allocation6 + $0x360] sm:$0xff]
    %v1684 = vld [vmem:[#allocation6 + $0x368] sm:$0xff]
    %v1685 = vld [vmem:[#allocation6 + $0x370] sm:$0xff]
    %v1686 = vld [vmem:[#allocation6 + $0x378] sm:$0xff]
    %v1687 = vld [vmem:[#allocation6 + $0x380] sm:$0xff]
    %v1688 = vld [vmem:[#allocation6 + $0x388] sm:$0xff]
    %v1689 = vld [vmem:[#allocation6 + $0x390] sm:$0xff]
    %v1690 = vld [vmem:[#allocation6 + $0x398] sm:$0xff]
    %v1691 = vld [vmem:[#allocation6 + $0x3a0] sm:$0xff]
    %v1692 = vld [vmem:[#allocation6 + $0x3a8] sm:$0xff]
    %v1693 = vld [vmem:[#allocation6 + $0x3b0] sm:$0xff]
    %v1694 = vld [vmem:[#allocation6 + $0x3b8] sm:$0xff]
    %v1695 = vld [vmem:[#allocation6 + $0x3c0] sm:$0xff]
    %v1696 = vld [vmem:[#allocation6 + $0x3c8] sm:$0xff]
    %v1697 = vld [vmem:[#allocation6 + $0x3d0] sm:$0xff]
    %v1698 = vld [vmem:[#allocation6 + $0x3d8] sm:$0xff]
    %v1699 = vld [vmem:[#allocation6 + $0x3e0] sm:$0xff]
    %v1700 = vld [vmem:[#allocation6 + $0x3e8] sm:$0xff]
    %v1701 = vld [vmem:[#allocation6 + $0x3f0] sm:$0xff]
    %v1702 = vld [vmem:[#allocation6 + $0x3f8] sm:$0xff]
    %v1703 = vld [vmem:[%s7] sm:$0xf]
    %v1705 = vlaneseq
    %v1706 = vshrl.u32 %v1705, 7
    %v1707 = vsub.s32 0, %v1706
    %v1708 = vrot.slane %v1703, %v1707
    %v1709 = vlaneseq
    %v1710 = vshrl.u32 %v1709, 7
    %v1711 = vsub.s32 1, %v1710
    %v1712 = vrot.slane %v1703, %v1711
    %v1713 = vlaneseq
    %v1714 = vshrl.u32 %v1713, 7
    %v1715 = vsub.s32 2, %v1714
    %v1716 = vrot.slane %v1703, %v1715
    %v1717 = vlaneseq
    %v1718 = vshrl.u32 %v1717, 7
    %v1719 = vsub.s32 3, %v1718
    %v1720 = vrot.slane %v1703, %v1719
    %1725 = vmatprep.subr.mxu0 %v1576
    %1726 = vmatpush1.msra.mxu0 %v1575
    %1727 = vmatprep.subr.mxu0 %v1580
    %1728 = vmatpush1.msra.mxu0 %v1579
    %1729 = vmatprep.subr.mxu0 %v1584
    %1730 = vmatpush1.msra.mxu0 %v1583
    %1731 = vmatprep.subr.mxu0 %v1588
    %1732 = vmatpush1.msra.mxu0 %v1587
    %1733 = vmatprep.subr.mxu0 %v1592
    %1734 = vmatpush1.msra.mxu0 %v1591
    %1735 = vmatprep.subr.mxu0 %v1596
    %1736 = vmatpush1.msra.mxu0 %v1595
    %1737 = vmatprep.subr.mxu0 %v1600
    %1738 = vmatpush1.msra.mxu0 %v1599
    %1739 = vmatprep.subr.mxu0 %v1604
    %1740 = vmatpush1.msra.mxu0 %v1603
    %1741 = vmatprep.subr.mxu0 %v1608
    %1742 = vmatpush1.msra.mxu0 %v1607
    %1743 = vmatprep.subr.mxu0 %v1612
    %1744 = vmatpush1.msra.mxu0 %v1611
    %1745 = vmatprep.subr.mxu0 %v1616
    %1746 = vmatpush1.msra.mxu0 %v1615
    %1747 = vmatprep.subr.mxu0 %v1620
    %1748 = vmatpush1.msra.mxu0 %v1619
    %1749 = vmatprep.subr.mxu0 %v1624
    %1750 = vmatpush1.msra.mxu0 %v1623
    %1751 = vmatprep.subr.mxu0 %v1628
    %1752 = vmatpush1.msra.mxu0 %v1627
    %1753 = vmatprep.subr.mxu0 %v1632
    %1754 = vmatpush1.msra.mxu0 %v1631
    %1755 = vmatprep.subr.mxu0 %v1636
    %1756 = vmatpush1.msra.mxu0 %v1635
    %1757 = vmatprep.subr.mxu0 %v1640
    %1758 = vmatpush1.msra.mxu0 %v1639
    %1759 = vmatprep.subr.mxu0 %v1644
    %1760 = vmatpush1.msra.mxu0 %v1643
    %1761 = vmatprep.subr.mxu0 %v1648
    %1762 = vmatpush1.msra.mxu0 %v1647
    %1763 = vmatprep.subr.mxu0 %v1652
    %1764 = vmatpush1.msra.mxu0 %v1651
    %1765 = vmatprep.subr.mxu0 %v1656
    %1766 = vmatpush1.msra.mxu0 %v1655
    %1767 = vmatprep.subr.mxu0 %v1660
    %1768 = vmatpush1.msra.mxu0 %v1659
    %1769 = vmatprep.subr.mxu0 %v1664
    %1770 = vmatpush1.msra.mxu0 %v1663
    %1771 = vmatprep.subr.mxu0 %v1668
    %1772 = vmatpush1.msra.mxu0 %v1667
    %1773 = vmatprep.subr.mxu0 %v1672
    %1774 = vmatpush1.msra.mxu0 %v1671
    %1775 = vmatprep.subr.mxu0 %v1676
    %1776 = vmatpush1.msra.mxu0 %v1675
    %1777 = vmatprep.subr.mxu0 %v1680
    %1778 = vmatpush1.msra.mxu0 %v1679
    %1779 = vmatprep.subr.mxu0 %v1684
    %1780 = vmatpush1.msra.mxu0 %v1683
    %1781 = vmatprep.subr.mxu0 %v1688
    %1782 = vmatpush1.msra.mxu0 %v1687
    %1783 = vmatprep.subr.mxu0 %v1692
    %1784 = vmatpush1.msra.mxu0 %v1691
    %1785 = vmatprep.subr.mxu0 %v1696
    %1786 = vmatpush1.msra.mxu0 %v1695
    %1787 = vmatprep.subr.mxu0 %v1700
    %1788 = vmatpush1.msra.mxu0 %v1699
    %1789 = vmatprep.mubr.f32.mxu0 0.0
    %1790 = vmatmul.mubr.f32.gmra.mrb[0].mxu0 %v1110
    %v1791 = vpop.f32.mrb[0].mxu0
    %v1792 = vadd.f32 %v1708, %v1791
    %v1793 = vpop.f32.mrb[0].mxu0
    %v1794 = vadd.f32 %v1712, %v1793
    %1795 = vdwg.mxu0
    %1796 = vmatprep.subr.mxu0 %v1578
    %1797 = vmatpush1.msra.mxu0 %v1577
    %1798 = vmatprep.subr.mxu0 %v1582
    %1799 = vmatpush1.msra.mxu0 %v1581
    %1800 = vmatprep.subr.mxu0 %v1586
    %1801 = vmatpush1.msra.mxu0 %v1585
    %1802 = vmatprep.subr.mxu0 %v1590
    %1803 = vmatpush1.msra.mxu0 %v1589
    %1804 = vmatprep.subr.mxu0 %v1594
    %1805 = vmatpush1.msra.mxu0 %v1593
    %1806 = vmatprep.subr.mxu0 %v1598
    %1807 = vmatpush1.msra.mxu0 %v1597
    %1808 = vmatprep.subr.mxu0 %v1602
    %1809 = vmatpush1.msra.mxu0 %v1601
    %1810 = vmatprep.subr.mxu0 %v1606
    %1811 = vmatpush1.msra.mxu0 %v1605
    %1812 = vmatprep.subr.mxu0 %v1610
    %1813 = vmatpush1.msra.mxu0 %v1609
    %1814 = vmatprep.subr.mxu0 %v1614
    %1815 = vmatpush1.msra.mxu0 %v1613
    %1816 = vmatprep.subr.mxu0 %v1618
    %1817 = vmatpush1.msra.mxu0 %v1617
    %1818 = vmatprep.subr.mxu0 %v1622
    %1819 = vmatpush1.msra.mxu0 %v1621
    %1820 = vmatprep.subr.mxu0 %v1626
    %1821 = vmatpush1.msra.mxu0 %v1625
    %1822 = vmatprep.subr.mxu0 %v1630
    %1823 = vmatpush1.msra.mxu0 %v1629
    %1824 = vmatprep.subr.mxu0 %v1634
    %1825 = vmatpush1.msra.mxu0 %v1633
    %1826 = vmatprep.subr.mxu0 %v1638
    %1827 = vmatpush1.msra.mxu0 %v1637
    %1828 = vmatprep.subr.mxu0 %v1642
    %1829 = vmatpush1.msra.mxu0 %v1641
    %1830 = vmatprep.subr.mxu0 %v1646
    %1831 = vmatpush1.msra.mxu0 %v1645
    %1832 = vmatprep.subr.mxu0 %v1650
    %1833 = vmatpush1.msra.mxu0 %v1649
    %1834 = vmatprep.subr.mxu0 %v1654
    %1835 = vmatpush1.msra.mxu0 %v1653
    %1836 = vmatprep.subr.mxu0 %v1658
    %1837 = vmatpush1.msra.mxu0 %v1657
    %1838 = vmatprep.subr.mxu0 %v1662
    %1839 = vmatpush1.msra.mxu0 %v1661
    %1840 = vmatprep.subr.mxu0 %v1666
    %1841 = vmatpush1.msra.mxu0 %v1665
    %1842 = vmatprep.subr.mxu0 %v1670
    %1843 = vmatpush1.msra.mxu0 %v1669
    %1844 = vmatprep.subr.mxu0 %v1674
    %1845 = vmatpush1.msra.mxu0 %v1673
    %1846 = vmatprep.subr.mxu0 %v1678
    %1847 = vmatpush1.msra.mxu0 %v1677
    %1848 = vmatprep.subr.mxu0 %v1682
    %1849 = vmatpush1.msra.mxu0 %v1681
    %1850 = vmatprep.subr.mxu0 %v1686
    %1851 = vmatpush1.msra.mxu0 %v1685
    %1852 = vmatprep.subr.mxu0 %v1690
    %1853 = vmatpush1.msra.mxu0 %v1689
    %1854 = vmatprep.subr.mxu0 %v1694
    %1855 = vmatpush1.msra.mxu0 %v1693
    %1856 = vmatprep.subr.mxu0 %v1698
    %1857 = vmatpush1.msra.mxu0 %v1697
    %1858 = vmatprep.subr.mxu0 %v1702
    %1859 = vmatpush1.msra.mxu0 %v1701
    %1860 = vmatprep.mubr.f32.mxu0 0.0
    %1861 = vmatmul.mubr.f32.gmra.mrb[0].mxu0 %v1110
    %v1862 = vpop.f32.mrb[0].mxu0
    %v1863 = vadd.f32 %v1716, %v1862
    %v1864 = vpop.f32.mrb[0].mxu0
    %v1865 = vadd.f32 %v1720, %v1864
    %1866 = vdwg.mxu0
    %v1867 = vtanh.pop %v1792
    %v1868 = vtanh.pop %v1794
    %v1869 = vtanh.pop %v1863
    %v1870 = vtanh.pop %v1865
    %v1871 = vmul.f32 %v1867, 0.5
    %v1872 = vadd.f32 %v1871, 0.5
    %v1873 = vmul.f32 %v1868, 0.5
    %v1874 = vadd.f32 %v1873, 0.5
    %v1875 = vmul.f32 %v1870, 0.5
    %v1876 = vadd.f32 %v1875, 0.5
    %v1877 = vmul.f32 %v1874, 0.0
    %v1878 = vmul.f32 %v1872, %v1869
    %v1879 = vadd.f32 %v1877, %v1878
    %v1880 = vtanh.pop %v1879
    %v1881 = vmul.f32 %v1876, %v1880
    %1882 = vrot.lane.b32.xlu0 %v82, 83
    %v1883 = vpop.permute.xlu0 %1882
    %v1884 = vsel %vm113, %v1883, 0
    %1886 = vmatprep.subr.mxu0 %v84
    %1887 = vmatpush1.msra.mxu0 %v83
    %1888 = vmatprep.subr.mxu0 %v122
    %1889 = vmatpush1.msra.mxu0 %v119
    %1890 = vmatprep.subr.mxu0 0.0
    %1891 = vmatpush1.msra.mxu0 0.0
    %1892 = vmatprep.subr.mxu0 0.0
    %1893 = vmatpush1.msra.mxu0 0.0
    %1894 = vmatprep.subr.mxu0 0.0
    %1895 = vmatpush1.msra.mxu0 0.0
    %1896 = vmatprep.subr.mxu0 0.0
    %1897 = vmatpush1.msra.mxu0 0.0
    %1898 = vmatprep.subr.mxu0 0.0
    %1899 = vmatpush1.msra.mxu0 0.0
    %1900 = vmatprep.subr.mxu0 0.0
    %1901 = vmatpush1.msra.mxu0 0.0
    %1902 = vmatprep.subr.mxu0 0.0
    %1903 = vmatpush1.msra.mxu0 0.0
    %1904 = vmatprep.subr.mxu0 0.0
    %1905 = vmatpush1.msra.mxu0 0.0
    %1906 = vmatprep.subr.mxu0 0.0
    %1907 = vmatpush1.msra.mxu0 0.0
    %1908 = vmatprep.subr.mxu0 0.0
    %1909 = vmatpush1.msra.mxu0 0.0
    %1910 = vmatprep.subr.mxu0 0.0
    %1911 = vmatpush1.msra.mxu0 0.0
    %1912 = vmatprep.subr.mxu0 0.0
    %1913 = vmatpush1.msra.mxu0 0.0
    %1914 = vmatprep.subr.mxu0 0.0
    %1915 = vmatpush1.msra.mxu0 0.0
    %1916 = vmatprep.subr.mxu0 0.0
    %1917 = vmatpush1.msra.mxu0 0.0
    %1918 = vmatprep.subr.mxu0 0.0
    %1919 = vmatpush1.msra.mxu0 0.0
    %1920 = vmatprep.subr.mxu0 0.0
    %1921 = vmatpush1.msra.mxu0 0.0
    %1922 = vmatprep.subr.mxu0 0.0
    %1923 = vmatpush1.msra.mxu0 0.0
    %1924 = vmatprep.subr.mxu0 0.0
    %1925 = vmatpush1.msra.mxu0 0.0
    %1926 = vmatprep.subr.mxu0 0.0
    %1927 = vmatpush1.msra.mxu0 0.0
    %1928 = vmatprep.subr.mxu0 0.0
    %1929 = vmatpush1.msra.mxu0 0.0
    %1930 = vmatprep.subr.mxu0 0.0
    %1931 = vmatpush1.msra.mxu0 0.0
    %1932 = vmatprep.subr.mxu0 0.0
    %1933 = vmatpush1.msra.mxu0 0.0
    %1934 = vmatprep.subr.mxu0 0.0
    %1935 = vmatpush1.msra.mxu0 0.0
    %1936 = vmatprep.subr.mxu0 0.0
    %1937 = vmatpush1.msra.mxu0 0.0
    %1938 = vmatprep.subr.mxu0 0.0
    %1939 = vmatpush1.msra.mxu0 0.0
    %1940 = vmatprep.subr.mxu0 0.0
    %1941 = vmatpush1.msra.mxu0 0.0
    %1942 = vmatprep.subr.mxu0 0.0
    %1943 = vmatpush1.msra.mxu0 0.0
    %1944 = vmatprep.subr.mxu0 0.0
    %1945 = vmatpush1.msra.mxu0 0.0
    %1946 = vmatprep.subr.mxu0 0.0
    %1947 = vmatpush1.msra.mxu0 0.0
    %1948 = vmatprep.subr.mxu0 0.0
    %1949 = vmatpush1.msra.mxu0 0.0
    %1950 = vmatprep.mubr.f32.mxu0 0.0
    %1951 = vmatmul.mubr.f32.gmra.mrb[0].mxu0 %v1884
    %v1952 = vpop.f32.mrb[0].mxu0
    %v1953 = vadd.f32 %v96, %v1952
    %v1954 = vpop.f32.mrb[0].mxu0
    %v1955 = vadd.f32 %v100, %v1954
    %1956 = vdwg.mxu0
    %1957 = vmatprep.subr.mxu0 %v86
    %1958 = vmatpush1.msra.mxu0 %v85
    %1959 = vmatprep.subr.mxu0 %v128
    %1960 = vmatpush1.msra.mxu0 %v125
    %1961 = vmatprep.subr.mxu0 0.0
    %1962 = vmatpush1.msra.mxu0 0.0
    %1963 = vmatprep.subr.mxu0 0.0
    %1964 = vmatpush1.msra.mxu0 0.0
    %1965 = vmatprep.subr.mxu0 0.0
    %1966 = vmatpush1.msra.mxu0 0.0
    %1967 = vmatprep.subr.mxu0 0.0
    %1968 = vmatpush1.msra.mxu0 0.0
    %1969 = vmatprep.subr.mxu0 0.0
    %1970 = vmatpush1.msra.mxu0 0.0
    %1971 = vmatprep.subr.mxu0 0.0
    %1972 = vmatpush1.msra.mxu0 0.0
    %1973 = vmatprep.subr.mxu0 0.0
    %1974 = vmatpush1.msra.mxu0 0.0
    %1975 = vmatprep.subr.mxu0 0.0
    %1976 = vmatpush1.msra.mxu0 0.0
    %1977 = vmatprep.subr.mxu0 0.0
    %1978 = vmatpush1.msra.mxu0 0.0
    %1979 = vmatprep.subr.mxu0 0.0
    %1980 = vmatpush1.msra.mxu0 0.0
    %1981 = vmatprep.subr.mxu0 0.0
    %1982 = vmatpush1.msra.mxu0 0.0
    %1983 = vmatprep.subr.mxu0 0.0
    %1984 = vmatpush1.msra.mxu0 0.0
    %1985 = vmatprep.subr.mxu0 0.0
    %1986 = vmatpush1.msra.mxu0 0.0
    %1987 = vmatprep.subr.mxu0 0.0
    %1988 = vmatpush1.msra.mxu0 0.0
    %1989 = vmatprep.subr.mxu0 0.0
    %1990 = vmatpush1.msra.mxu0 0.0
    %1991 = vmatprep.subr.mxu0 0.0
    %1992 = vmatpush1.msra.mxu0 0.0
    %1993 = vmatprep.subr.mxu0 0.0
    %1994 = vmatpush1.msra.mxu0 0.0
    %1995 = vmatprep.subr.mxu0 0.0
    %1996 = vmatpush1.msra.mxu0 0.0
    %1997 = vmatprep.subr.mxu0 0.0
    %1998 = vmatpush1.msra.mxu0 0.0
    %1999 = vmatprep.subr.mxu0 0.0
    %2000 = vmatpush1.msra.mxu0 0.0
    %2001 = vmatprep.subr.mxu0 0.0
    %2002 = vmatpush1.msra.mxu0 0.0
    %2003 = vmatprep.subr.mxu0 0.0
    %2004 = vmatpush1.msra.mxu0 0.0
    %2005 = vmatprep.subr.mxu0 0.0
    %2006 = vmatpush1.msra.mxu0 0.0
    %2007 = vmatprep.subr.mxu0 0.0
    %2008 = vmatpush1.msra.mxu0 0.0
    %2009 = vmatprep.subr.mxu0 0.0
    %2010 = vmatpush1.msra.mxu0 0.0
    %2011 = vmatprep.subr.mxu0 0.0
    %2012 = vmatpush1.msra.mxu0 0.0
    %2013 = vmatprep.subr.mxu0 0.0
    %2014 = vmatpush1.msra.mxu0 0.0
    %2015 = vmatprep.subr.mxu0 0.0
    %2016 = vmatpush1.msra.mxu0 0.0
    %2017 = vmatprep.subr.mxu0 0.0
    %2018 = vmatpush1.msra.mxu0 0.0
    %2019 = vmatprep.subr.mxu0 0.0
    %2020 = vmatpush1.msra.mxu0 0.0
    %2021 = vmatprep.mubr.f32.mxu0 0.0
    %2022 = vmatmul.mubr.f32.gmra.mrb[0].mxu0 %v1884
    %v2023 = vpop.f32.mrb[0].mxu0
    %v2024 = vadd.f32 %v104, %v2023
    %v2025 = vpop.f32.mrb[0].mxu0
    %v2026 = vadd.f32 %v108, %v2025
    %2027 = vdwg.mxu0
    %2028 = vmatprep.subr.mxu0 %v273
    %2029 = vmatpush1.msra.mxu0 %v272
    %2030 = vmatprep.subr.mxu0 %v277
    %2031 = vmatpush1.msra.mxu0 %v276
    %2032 = vmatprep.subr.mxu0 %v281
    %2033 = vmatpush1.msra.mxu0 %v280
    %2034 = vmatprep.subr.mxu0 %v285
    %2035 = vmatpush1.msra.mxu0 %v284
    %2036 = vmatprep.subr.mxu0 %v289
    %2037 = vmatpush1.msra.mxu0 %v288
    %2038 = vmatprep.subr.mxu0 %v293
    %2039 = vmatpush1.msra.mxu0 %v292
    %2040 = vmatprep.subr.mxu0 %v297
    %2041 = vmatpush1.msra.mxu0 %v296
    %2042 = vmatprep.subr.mxu0 %v301
    %2043 = vmatpush1.msra.mxu0 %v300
    %2044 = vmatprep.subr.mxu0 %v305
    %2045 = vmatpush1.msra.mxu0 %v304
    %2046 = vmatprep.subr.mxu0 %v309
    %2047 = vmatpush1.msra.mxu0 %v308
    %2048 = vmatprep.subr.mxu0 %v313
    %2049 = vmatpush1.msra.mxu0 %v312
    %2050 = vmatprep.subr.mxu0 %v317
    %2051 = vmatpush1.msra.mxu0 %v316
    %2052 = vmatprep.subr.mxu0 %v321
    %2053 = vmatpush1.msra.mxu0 %v320
    %2054 = vmatprep.subr.mxu0 %v325
    %2055 = vmatpush1.msra.mxu0 %v324
    %2056 = vmatprep.subr.mxu0 %v329
    %2057 = vmatpush1.msra.mxu0 %v328
    %2058 = vmatprep.subr.mxu0 %v333
    %2059 = vmatpush1.msra.mxu0 %v332
    %2060 = vmatprep.subr.mxu0 0.0
    %2061 = vmatpush1.msra.mxu0 0.0
    %2062 = vmatprep.subr.mxu0 0.0
    %2063 = vmatpush1.msra.mxu0 0.0
    %2064 = vmatprep.subr.mxu0 0.0
    %2065 = vmatpush1.msra.mxu0 0.0
    %2066 = vmatprep.subr.mxu0 0.0
    %2067 = vmatpush1.msra.mxu0 0.0
    %2068 = vmatprep.subr.mxu0 0.0
    %2069 = vmatpush1.msra.mxu0 0.0
    %2070 = vmatprep.subr.mxu0 0.0
    %2071 = vmatpush1.msra.mxu0 0.0
    %2072 = vmatprep.subr.mxu0 0.0
    %2073 = vmatpush1.msra.mxu0 0.0
    %2074 = vmatprep.subr.mxu0 0.0
    %2075 = vmatpush1.msra.mxu0 0.0
    %2076 = vmatprep.subr.mxu0 0.0
    %2077 = vmatpush1.msra.mxu0 0.0
    %2078 = vmatprep.subr.mxu0 0.0
    %2079 = vmatpush1.msra.mxu0 0.0
    %2080 = vmatprep.subr.mxu0 0.0
    %2081 = vmatpush1.msra.mxu0 0.0
    %2082 = vmatprep.subr.mxu0 0.0
    %2083 = vmatpush1.msra.mxu0 0.0
    %2084 = vmatprep.subr.mxu0 0.0
    %2085 = vmatpush1.msra.mxu0 0.0
    %2086 = vmatprep.subr.mxu0 0.0
    %2087 = vmatpush1.msra.mxu0 0.0
    %2088 = vmatprep.subr.mxu0 0.0
    %2089 = vmatpush1.msra.mxu0 0.0
    %2090 = vmatprep.subr.mxu0 0.0
    %2091 = vmatpush1.msra.mxu0 0.0
    %2092 = vmatprep.mubr.f32.mxu0 0.0
    %2093 = vmatmul.mubr.f32.gmra.mrb[0].mxu0 %v1417
    %v2094 = vpop.f32.mrb[0].mxu0
    %v2095 = vadd.f32 0.0, %v2094
    %v2096 = vpop.f32.mrb[0].mxu0
    %v2097 = vadd.f32 0.0, %v2096
    %2098 = vdwg.mxu0
    %2099 = vmatprep.subr.mxu0 %v275
    %2100 = vmatpush1.msra.mxu0 %v274
    %2101 = vmatprep.subr.mxu0 %v279
    %2102 = vmatpush1.msra.mxu0 %v278
    %2103 = vmatprep.subr.mxu0 %v283
    %2104 = vmatpush1.msra.mxu0 %v282
    %2105 = vmatprep.subr.mxu0 %v287
    %2106 = vmatpush1.msra.mxu0 %v286
    %2107 = vmatprep.subr.mxu0 %v291
    %2108 = vmatpush1.msra.mxu0 %v290
    %2109 = vmatprep.subr.mxu0 %v295
    %2110 = vmatpush1.msra.mxu0 %v294
    %2111 = vmatprep.subr.mxu0 %v299
    %2112 = vmatpush1.msra.mxu0 %v298
    %2113 = vmatprep.subr.mxu0 %v303
    %2114 = vmatpush1.msra.mxu0 %v302
    %2115 = vmatprep.subr.mxu0 %v307
    %2116 = vmatpush1.msra.mxu0 %v306
    %2117 = vmatprep.subr.mxu0 %v311
    %2118 = vmatpush1.msra.mxu0 %v310
    %2119 = vmatprep.subr.mxu0 %v315
    %2120 = vmatpush1.msra.mxu0 %v314
    %2121 = vmatprep.subr.mxu0 %v319
    %2122 = vmatpush1.msra.mxu0 %v318
    %2123 = vmatprep.subr.mxu0 %v323
    %2124 = vmatpush1.msra.mxu0 %v322
    %2125 = vmatprep.subr.mxu0 %v327
    %2126 = vmatpush1.msra.mxu0 %v326
    %2127 = vmatprep.subr.mxu0 %v331
    %2128 = vmatpush1.msra.mxu0 %v330
    %2129 = vmatprep.subr.mxu0 %v335
    %2130 = vmatpush1.msra.mxu0 %v334
    %2131 = vmatprep.subr.mxu0 0.0
    %2132 = vmatpush1.msra.mxu0 0.0
    %2133 = vmatprep.subr.mxu0 0.0
    %2134 = vmatpush1.msra.mxu0 0.0
    %2135 = vmatprep.subr.mxu0 0.0
    %2136 = vmatpush1.msra.mxu0 0.0
    %2137 = vmatprep.subr.mxu0 0.0
    %2138 = vmatpush1.msra.mxu0 0.0
    %2139 = vmatprep.subr.mxu0 0.0
    %2140 = vmatpush1.msra.mxu0 0.0
    %2141 = vmatprep.subr.mxu0 0.0
    %2142 = vmatpush1.msra.mxu0 0.0
    %2143 = vmatprep.subr.mxu0 0.0
    %2144 = vmatpush1.msra.mxu0 0.0
    %2145 = vmatprep.subr.mxu0 0.0
    %2146 = vmatpush1.msra.mxu0 0.0
    %2147 = vmatprep.subr.mxu0 0.0
    %2148 = vmatpush1.msra.mxu0 0.0
    %2149 = vmatprep.subr.mxu0 0.0
    %2150 = vmatpush1.msra.mxu0 0.0
    %2151 = vmatprep.subr.mxu0 0.0
    %2152 = vmatpush1.msra.mxu0 0.0
    %2153 = vmatprep.subr.mxu0 0.0
    %2154 = vmatpush1.msra.mxu0 0.0
    %2155 = vmatprep.subr.mxu0 0.0
    %2156 = vmatpush1.msra.mxu0 0.0
    %2157 = vmatprep.subr.mxu0 0.0
    %2158 = vmatpush1.msra.mxu0 0.0
    %2159 = vmatprep.subr.mxu0 0.0
    %2160 = vmatpush1.msra.mxu0 0.0
    %2161 = vmatprep.subr.mxu0 0.0
    %2162 = vmatpush1.msra.mxu0 0.0
    %2163 = vmatprep.mubr.f32.mxu0 0.0
    %2164 = vmatmul.mubr.f32.gmra.mrb[0].mxu0 %v1417
    %v2165 = vpop.f32.mrb[0].mxu0
    %v2166 = vadd.f32 0.0, %v2165
    %v2167 = vpop.f32.mrb[0].mxu0
    %v2168 = vadd.f32 0.0, %v2167
    %2169 = vdwg.mxu0
    %v2170 = vadd.f32 %v1953, %v2095
    %v2171 = vadd.f32 %v1955, %v2097
    %v2172 = vadd.f32 %v2024, %v2166
    %v2173 = vadd.f32 %v2026, %v2168
    %v2174 = vtanh.pop %v2170
    %v2175 = vtanh.pop %v2171
    %v2176 = vtanh.pop %v2172
    %v2177 = vtanh.pop %v2173
    %v2178 = vmul.f32 %v2174, 0.5
    %v2179 = vadd.f32 %v2178, 0.5
    %v2180 = vmul.f32 %v2175, 0.5
    %v2181 = vadd.f32 %v2180, 0.5
    %v2182 = vmul.f32 %v2177, 0.5
    %v2183 = vadd.f32 %v2182, 0.5
    %v2184 = vmul.f32 %v2181, %v1415
    %v2185 = vmul.f32 %v2179, %v2176
    %v2186 = vadd.f32 %v2184, %v2185
    %v2187 = vtanh.pop %v2186
    %v2188 = vmul.f32 %v2183, %v2187
    %2189 = vmatprep.subr.mxu0 %v805
    %2190 = vmatpush1.msra.mxu0 %v804
    %2191 = vmatprep.subr.mxu0 %v809
    %2192 = vmatpush1.msra.mxu0 %v808
    %2193 = vmatprep.subr.mxu0 %v813
    %2194 = vmatpush1.msra.mxu0 %v812
    %2195 = vmatprep.subr.mxu0 %v817
    %2196 = vmatpush1.msra.mxu0 %v816
    %2197 = vmatprep.subr.mxu0 %v821
    %2198 = vmatpush1.msra.mxu0 %v820
    %2199 = vmatprep.subr.mxu0 %v825
    %2200 = vmatpush1.msra.mxu0 %v824
    %2201 = vmatprep.subr.mxu0 %v829
    %2202 = vmatpush1.msra.mxu0 %v828
    %2203 = vmatprep.subr.mxu0 %v833
    %2204 = vmatpush1.msra.mxu0 %v832
    %2205 = vmatprep.subr.mxu0 %v837
    %2206 = vmatpush1.msra.mxu0 %v836
    %2207 = vmatprep.subr.mxu0 %v841
    %2208 = vmatpush1.msra.mxu0 %v840
    %2209 = vmatprep.subr.mxu0 %v845
    %2210 = vmatpush1.msra.mxu0 %v844
    %2211 = vmatprep.subr.mxu0 %v849
    %2212 = vmatpush1.msra.mxu0 %v848
    %2213 = vmatprep.subr.mxu0 %v853
    %2214 = vmatpush1.msra.mxu0 %v852
    %2215 = vmatprep.subr.mxu0 %v857
    %2216 = vmatpush1.msra.mxu0 %v856
    %2217 = vmatprep.subr.mxu0 %v861
    %2218 = vmatpush1.msra.mxu0 %v860
    %2219 = vmatprep.subr.mxu0 %v865
    %2220 = vmatpush1.msra.mxu0 %v864
    %2221 = vmatprep.subr.mxu0 %v869
    %2222 = vmatpush1.msra.mxu0 %v868
    %2223 = vmatprep.subr.mxu0 %v873
    %2224 = vmatpush1.msra.mxu0 %v872
    %2225 = vmatprep.subr.mxu0 %v877
    %2226 = vmatpush1.msra.mxu0 %v876
    %2227 = vmatprep.subr.mxu0 %v881
    %2228 = vmatpush1.msra.mxu0 %v880
    %2229 = vmatprep.subr.mxu0 %v885
    %2230 = vmatpush1.msra.mxu0 %v884
    %2231 = vmatprep.subr.mxu0 %v889
    %2232 = vmatpush1.msra.mxu0 %v888
    %2233 = vmatprep.subr.mxu0 %v893
    %2234 = vmatpush1.msra.mxu0 %v892
    %2235 = vmatprep.subr.mxu0 %v897
    %2236 = vmatpush1.msra.mxu0 %v896
    %2237 = vmatprep.subr.mxu0 %v901
    %2238 = vmatpush1.msra.mxu0 %v900
    %2239 = vmatprep.subr.mxu0 %v905
    %2240 = vmatpush1.msra.mxu0 %v904
    %2241 = vmatprep.subr.mxu0 %v909
    %2242 = vmatpush1.msra.mxu0 %v908
    %2243 = vmatprep.subr.mxu0 %v913
    %2244 = vmatpush1.msra.mxu0 %v912
    %2245 = vmatprep.subr.mxu0 %v917
    %2246 = vmatpush1.msra.mxu0 %v916
    %2247 = vmatprep.subr.mxu0 %v921
    %2248 = vmatpush1.msra.mxu0 %v920
    %2249 = vmatprep.subr.mxu0 %v925
    %2250 = vmatpush1.msra.mxu0 %v924
    %2251 = vmatprep.subr.mxu0 %v929
    %2252 = vmatpush1.msra.mxu0 %v928
    %2253 = vmatprep.mubr.f32.mxu0 %v1574
    %2254 = vmatmul.mubr.f32.gmra.mrb[0].mxu0 %v1417
    %v2255 = vpop.f32.mrb[0].mxu0
    %v2256 = vadd.f32 %v937, %v2255
    %v2257 = vpop.f32.mrb[0].mxu0
    %v2258 = vadd.f32 %v941, %v2257
    %2259 = vdwg.mxu0
    %2260 = vmatprep.subr.mxu0 %v807
    %2261 = vmatpush1.msra.mxu0 %v806
    %2262 = vmatprep.subr.mxu0 %v811
    %2263 = vmatpush1.msra.mxu0 %v810
    %2264 = vmatprep.subr.mxu0 %v815
    %2265 = vmatpush1.msra.mxu0 %v814
    %2266 = vmatprep.subr.mxu0 %v819
    %2267 = vmatpush1.msra.mxu0 %v818
    %2268 = vmatprep.subr.mxu0 %v823
    %2269 = vmatpush1.msra.mxu0 %v822
    %2270 = vmatprep.subr.mxu0 %v827
    %2271 = vmatpush1.msra.mxu0 %v826
    %2272 = vmatprep.subr.mxu0 %v831
    %2273 = vmatpush1.msra.mxu0 %v830
    %2274 = vmatprep.subr.mxu0 %v835
    %2275 = vmatpush1.msra.mxu0 %v834
    %2276 = vmatprep.subr.mxu0 %v839
    %2277 = vmatpush1.msra.mxu0 %v838
    %2278 = vmatprep.subr.mxu0 %v843
    %2279 = vmatpush1.msra.mxu0 %v842
    %2280 = vmatprep.subr.mxu0 %v847
    %2281 = vmatpush1.msra.mxu0 %v846
    %2282 = vmatprep.subr.mxu0 %v851
    %2283 = vmatpush1.msra.mxu0 %v850
    %2284 = vmatprep.subr.mxu0 %v855
    %2285 = vmatpush1.msra.mxu0 %v854
    %2286 = vmatprep.subr.mxu0 %v859
    %2287 = vmatpush1.msra.mxu0 %v858
    %2288 = vmatprep.subr.mxu0 %v863
    %2289 = vmatpush1.msra.mxu0 %v862
    %2290 = vmatprep.subr.mxu0 %v867
    %2291 = vmatpush1.msra.mxu0 %v866
    %2292 = vmatprep.subr.mxu0 %v871
    %2293 = vmatpush1.msra.mxu0 %v870
    %2294 = vmatprep.subr.mxu0 %v875
    %2295 = vmatpush1.msra.mxu0 %v874
    %2296 = vmatprep.subr.mxu0 %v879
    %2297 = vmatpush1.msra.mxu0 %v878
    %2298 = vmatprep.subr.mxu0 %v883
    %2299 = vmatpush1.msra.mxu0 %v882
    %2300 = vmatprep.subr.mxu0 %v887
    %2301 = vmatpush1.msra.mxu0 %v886
    %2302 = vmatprep.subr.mxu0 %v891
    %2303 = vmatpush1.msra.mxu0 %v890
    %2304 = vmatprep.subr.mxu0 %v895
    %2305 = vmatpush1.msra.mxu0 %v894
    %2306 = vmatprep.subr.mxu0 %v899
    %2307 = vmatpush1.msra.mxu0 %v898
    %2308 = vmatprep.subr.mxu0 %v903
    %2309 = vmatpush1.msra.mxu0 %v902
    %2310 = vmatprep.subr.mxu0 %v907
    %2311 = vmatpush1.msra.mxu0 %v906
    %2312 = vmatprep.subr.mxu0 %v911
    %2313 = vmatpush1.msra.mxu0 %v910
    %2314 = vmatprep.subr.mxu0 %v915
    %2315 = vmatpush1.msra.mxu0 %v914
    %2316 = vmatprep.subr.mxu0 %v919
    %2317 = vmatpush1.msra.mxu0 %v918
    %2318 = vmatprep.subr.mxu0 %v923
    %2319 = vmatpush1.msra.mxu0 %v922
    %2320 = vmatprep.subr.mxu0 %v927
    %2321 = vmatpush1.msra.mxu0 %v926
    %2322 = vmatprep.subr.mxu0 %v931
    %2323 = vmatpush1.msra.mxu0 %v930
    %2324 = vmatprep.mubr.f32.mxu0 %v1574
    %2325 = vmatmul.mubr.f32.gmra.mrb[0].mxu0 %v1417
    %v2326 = vpop.f32.mrb[0].mxu0
    %v2327 = vadd.f32 %v945, %v2326
    %v2328 = vpop.f32.mrb[0].mxu0
    %v2329 = vadd.f32 %v949, %v2328
    %2330 = vdwg.mxu0
    %v2331 = vtanh.pop %v2256
    %v2332 = vtanh.pop %v2258
    %v2333 = vtanh.pop %v2327
    %v2334 = vtanh.pop %v2329
    %v2335 = vmul.f32 %v2331, 0.5
    %v2336 = vadd.f32 %v2335, 0.5
    %v2337 = vmul.f32 %v2332, 0.5
    %v2338 = vadd.f32 %v2337, 0.5
    %v2339 = vmul.f32 %v2334, 0.5
    %v2340 = vadd.f32 %v2339, 0.5
    %v2341 = vmul.f32 %v2338, %v1572
    %v2342 = vmul.f32 %v2336, %v2333
    %v2343 = vadd.f32 %v2341, %v2342
    %v2344 = vtanh.pop %v2343
    %v2345 = vmul.f32 %v2340, %v2344
    %2346 = vmatprep.subr.mxu0 %v1576
    %2347 = vmatpush1.msra.mxu0 %v1575
    %2348 = vmatprep.subr.mxu0 %v1580
    %2349 = vmatpush1.msra.mxu0 %v1579
    %2350 = vmatprep.subr.mxu0 %v1584
    %2351 = vmatpush1.msra.mxu0 %v1583
    %2352 = vmatprep.subr.mxu0 %v1588
    %2353 = vmatpush1.msra.mxu0 %v1587
    %2354 = vmatprep.subr.mxu0 %v1592
    %2355 = vmatpush1.msra.mxu0 %v1591
    %2356 = vmatprep.subr.mxu0 %v1596
    %2357 = vmatpush1.msra.mxu0 %v1595
    %2358 = vmatprep.subr.mxu0 %v1600
    %2359 = vmatpush1.msra.mxu0 %v1599
    %2360 = vmatprep.subr.mxu0 %v1604
    %2361 = vmatpush1.msra.mxu0 %v1603
    %2362 = vmatprep.subr.mxu0 %v1608
    %2363 = vmatpush1.msra.mxu0 %v1607
    %2364 = vmatprep.subr.mxu0 %v1612
    %2365 = vmatpush1.msra.mxu0 %v1611
    %2366 = vmatprep.subr.mxu0 %v1616
    %2367 = vmatpush1.msra.mxu0 %v1615
    %2368 = vmatprep.subr.mxu0 %v1620
    %2369 = vmatpush1.msra.mxu0 %v1619
    %2370 = vmatprep.subr.mxu0 %v1624
    %2371 = vmatpush1.msra.mxu0 %v1623
    %2372 = vmatprep.subr.mxu0 %v1628
    %2373 = vmatpush1.msra.mxu0 %v1627
    %2374 = vmatprep.subr.mxu0 %v1632
    %2375 = vmatpush1.msra.mxu0 %v1631
    %2376 = vmatprep.subr.mxu0 %v1636
    %2377 = vmatpush1.msra.mxu0 %v1635
    %2378 = vmatprep.subr.mxu0 %v1640
    %2379 = vmatpush1.msra.mxu0 %v1639
    %2380 = vmatprep.subr.mxu0 %v1644
    %2381 = vmatpush1.msra.mxu0 %v1643
    %2382 = vmatprep.subr.mxu0 %v1648
    %2383 = vmatpush1.msra.mxu0 %v1647
    %2384 = vmatprep.subr.mxu0 %v1652
    %2385 = vmatpush1.msra.mxu0 %v1651
    %2386 = vmatprep.subr.mxu0 %v1656
    %2387 = vmatpush1.msra.mxu0 %v1655
    %2388 = vmatprep.subr.mxu0 %v1660
    %2389 = vmatpush1.msra.mxu0 %v1659
    %2390 = vmatprep.subr.mxu0 %v1664
    %2391 = vmatpush1.msra.mxu0 %v1663
    %2392 = vmatprep.subr.mxu0 %v1668
    %2393 = vmatpush1.msra.mxu0 %v1667
    %2394 = vmatprep.subr.mxu0 %v1672
    %2395 = vmatpush1.msra.mxu0 %v1671
    %2396 = vmatprep.subr.mxu0 %v1676
    %2397 = vmatpush1.msra.mxu0 %v1675
    %2398 = vmatprep.subr.mxu0 %v1680
    %2399 = vmatpush1.msra.mxu0 %v1679
    %2400 = vmatprep.subr.mxu0 %v1684
    %2401 = vmatpush1.msra.mxu0 %v1683
    %2402 = vmatprep.subr.mxu0 %v1688
    %2403 = vmatpush1.msra.mxu0 %v1687
    %2404 = vmatprep.subr.mxu0 %v1692
    %2405 = vmatpush1.msra.mxu0 %v1691
    %2406 = vmatprep.subr.mxu0 %v1696
    %2407 = vmatpush1.msra.mxu0 %v1695
    %2408 = vmatprep.subr.mxu0 %v1700
    %2409 = vmatpush1.msra.mxu0 %v1699
    %2410 = vmatprep.mubr.f32.mxu0 %v1881
    %2411 = vmatmul.mubr.f32.gmra.mrb[0].mxu0 %v1574
    %v2412 = vpop.f32.mrb[0].mxu0
    %v2413 = vadd.f32 %v1708, %v2412
    %v2414 = vpop.f32.mrb[0].mxu0
    %v2415 = vadd.f32 %v1712, %v2414
    %2416 = vdwg.mxu0
    %2417 = vmatprep.subr.mxu0 %v1578
    %2418 = vmatpush1.msra.mxu0 %v1577
    %2419 = vmatprep.subr.mxu0 %v1582
    %2420 = vmatpush1.msra.mxu0 %v1581
    %2421 = vmatprep.subr.mxu0 %v1586
    %2422 = vmatpush1.msra.mxu0 %v1585
    %2423 = vmatprep.subr.mxu0 %v1590
    %2424 = vmatpush1.msra.mxu0 %v1589
    %2425 = vmatprep.subr.mxu0 %v1594
    %2426 = vmatpush1.msra.mxu0 %v1593
    %2427 = vmatprep.subr.mxu0 %v1598
    %2428 = vmatpush1.msra.mxu0 %v1597
    %2429 = vmatprep.subr.mxu0 %v1602
    %2430 = vmatpush1.msra.mxu0 %v1601
    %2431 = vmatprep.subr.mxu0 %v1606
    %2432 = vmatpush1.msra.mxu0 %v1605
    %2433 = vmatprep.subr.mxu0 %v1610
    %2434 = vmatpush1.msra.mxu0 %v1609
    %2435 = vmatprep.subr.mxu0 %v1614
    %2436 = vmatpush1.msra.mxu0 %v1613
    %2437 = vmatprep.subr.mxu0 %v1618
    %2438 = vmatpush1.msra.mxu0 %v1617
    %2439 = vmatprep.subr.mxu0 %v1622
    %2440 = vmatpush1.msra.mxu0 %v1621
    %2441 = vmatprep.subr.mxu0 %v1626
    %2442 = vmatpush1.msra.mxu0 %v1625
    %2443 = vmatprep.subr.mxu0 %v1630
    %2444 = vmatpush1.msra.mxu0 %v1629
    %2445 = vmatprep.subr.mxu0 %v1634
    %2446 = vmatpush1.msra.mxu0 %v1633
    %2447 = vmatprep.subr.mxu0 %v1638
    %2448 = vmatpush1.msra.mxu0 %v1637
    %2449 = vmatprep.subr.mxu0 %v1642
    %2450 = vmatpush1.msra.mxu0 %v1641
    %2451 = vmatprep.subr.mxu0 %v1646
    %2452 = vmatpush1.msra.mxu0 %v1645
    %2453 = vmatprep.subr.mxu0 %v1650
    %2454 = vmatpush1.msra.mxu0 %v1649
    %2455 = vmatprep.subr.mxu0 %v1654
    %2456 = vmatpush1.msra.mxu0 %v1653
    %2457 = vmatprep.subr.mxu0 %v1658
    %2458 = vmatpush1.msra.mxu0 %v1657
    %2459 = vmatprep.subr.mxu0 %v1662
    %2460 = vmatpush1.msra.mxu0 %v1661
    %2461 = vmatprep.subr.mxu0 %v1666
    %2462 = vmatpush1.msra.mxu0 %v1665
    %2463 = vmatprep.subr.mxu0 %v1670
    %2464 = vmatpush1.msra.mxu0 %v1669
    %2465 = vmatprep.subr.mxu0 %v1674
    %2466 = vmatpush1.msra.mxu0 %v1673
    %2467 = vmatprep.subr.mxu0 %v1678
    %2468 = vmatpush1.msra.mxu0 %v1677
    %2469 = vmatprep.subr.mxu0 %v1682
    %2470 = vmatpush1.msra.mxu0 %v1681
    %2471 = vmatprep.subr.mxu0 %v1686
    %2472 = vmatpush1.msra.mxu0 %v1685
    %2473 = vmatprep.subr.mxu0 %v1690
    %2474 = vmatpush1.msra.mxu0 %v1689
    %2475 = vmatprep.subr.mxu0 %v1694
    %2476 = vmatpush1.msra.mxu0 %v1693
    %2477 = vmatprep.subr.mxu0 %v1698
    %2478 = vmatpush1.msra.mxu0 %v1697
    %2479 = vmatprep.subr.mxu0 %v1702
    %2480 = vmatpush1.msra.mxu0 %v1701
    %2481 = vmatprep.mubr.f32.mxu0 %v1881
    %2482 = vmatmul.mubr.f32.gmra.mrb[0].mxu0 %v1574
    %v2483 = vpop.f32.mrb[0].mxu0
    %v2484 = vadd.f32 %v1716, %v2483
    %v2485 = vpop.f32.mrb[0].mxu0
    %v2486 = vadd.f32 %v1720, %v2485
    %2487 = vdwg.mxu0
    %v2488 = vtanh.pop %v2413
    %v2489 = vtanh.pop %v2415
    %v2490 = vtanh.pop %v2484
    %v2491 = vtanh.pop %v2486
    %v2492 = vmul.f32 %v2488, 0.5
    %v2493 = vadd.f32 %v2492, 0.5
    %v2494 = vmul.f32 %v2489, 0.5
    %v2495 = vadd.f32 %v2494, 0.5
    %v2496 = vmul.f32 %v2491, 0.5
    %v2497 = vadd.f32 %v2496, 0.5
    %v2498 = vmul.f32 %v2495, %v1879
    %v2499 = vmul.f32 %v2493, %v2490
    %v2500 = vadd.f32 %v2498, %v2499
    %v2501 = vtanh.pop %v2500
    %v2502 = vmul.f32 %v2497, %v2501
    %2503 = vrot.lane.b32.xlu0 %v82, 68
    %v2504 = vpop.permute.xlu0 %2503
    %v2505 = vsel %vm113, %v2504, 0
    %2507 = vmatprep.subr.mxu0 %v84
    %2508 = vmatpush1.msra.mxu0 %v83
    %2509 = vmatprep.subr.mxu0 %v122
    %2510 = vmatpush1.msra.mxu0 %v119
    %2511 = vmatprep.subr.mxu0 0.0
    %2512 = vmatpush1.msra.mxu0 0.0
    %2513 = vmatprep.subr.mxu0 0.0
    %2514 = vmatpush1.msra.mxu0 0.0
    %2515 = vmatprep.subr.mxu0 0.0
    %2516 = vmatpush1.msra.mxu0 0.0
    %2517 = vmatprep.subr.mxu0 0.0
    %2518 = vmatpush1.msra.mxu0 0.0
    %2519 = vmatprep.subr.mxu0 0.0
    %2520 = vmatpush1.msra.mxu0 0.0
    %2521 = vmatprep.subr.mxu0 0.0
    %2522 = vmatpush1.msra.mxu0 0.0
    %2523 = vmatprep.subr.mxu0 0.0
    %2524 = vmatpush1.msra.mxu0 0.0
    %2525 = vmatprep.subr.mxu0 0.0
    %2526 = vmatpush1.msra.mxu0 0.0
    %2527 = vmatprep.subr.mxu0 0.0
    %2528 = vmatpush1.msra.mxu0 0.0
    %2529 = vmatprep.subr.mxu0 0.0
    %2530 = vmatpush1.msra.mxu0 0.0
    %2531 = vmatprep.subr.mxu0 0.0
    %2532 = vmatpush1.msra.mxu0 0.0
    %2533 = vmatprep.subr.mxu0 0.0
    %2534 = vmatpush1.msra.mxu0 0.0
    %2535 = vmatprep.subr.mxu0 0.0
    %2536 = vmatpush1.msra.mxu0 0.0
    %2537 = vmatprep.subr.mxu0 0.0
    %2538 = vmatpush1.msra.mxu0 0.0
    %2539 = vmatprep.subr.mxu0 0.0
    %2540 = vmatpush1.msra.mxu0 0.0
    %2541 = vmatprep.subr.mxu0 0.0
    %2542 = vmatpush1.msra.mxu0 0.0
    %2543 = vmatprep.subr.mxu0 0.0
    %2544 = vmatpush1.msra.mxu0 0.0
    %2545 = vmatprep.subr.mxu0 0.0
    %2546 = vmatpush1.msra.mxu0 0.0
    %2547 = vmatprep.subr.mxu0 0.0
    %2548 = vmatpush1.msra.mxu0 0.0
    %2549 = vmatprep.subr.mxu0 0.0
    %2550 = vmatpush1.msra.mxu0 0.0
    %2551 = vmatprep.subr.mxu0 0.0
    %2552 = vmatpush1.msra.mxu0 0.0
    %2553 = vmatprep.subr.mxu0 0.0
    %2554 = vmatpush1.msra.mxu0 0.0
    %2555 = vmatprep.subr.mxu0 0.0
    %2556 = vmatpush1.msra.mxu0 0.0
    %2557 = vmatprep.subr.mxu0 0.0
    %2558 = vmatpush1.msra.mxu0 0.0
    %2559 = vmatprep.subr.mxu0 0.0
    %2560 = vmatpush1.msra.mxu0 0.0
    %2561 = vmatprep.subr.mxu0 0.0
    %2562 = vmatpush1.msra.mxu0 0.0
    %2563 = vmatprep.subr.mxu0 0.0
    %2564 = vmatpush1.msra.mxu0 0.0
    %2565 = vmatprep.subr.mxu0 0.0
    %2566 = vmatpush1.msra.mxu0 0.0
    %2567 = vmatprep.subr.mxu0 0.0
    %2568 = vmatpush1.msra.mxu0 0.0
    %2569 = vmatprep.subr.mxu0 0.0
    %2570 = vmatpush1.msra.mxu0 0.0
    %2571 = vmatprep.mubr.f32.mxu0 0.0
    %2572 = vmatmul.mubr.f32.gmra.mrb[0].mxu0 %v2505
    %v2573 = vpop.f32.mrb[0].mxu0
    %v2574 = vadd.f32 %v96, %v2573
    %v2575 = vpop.f32.mrb[0].mxu0
    %v2576 = vadd.f32 %v100, %v2575
    %2577 = vdwg.mxu0
    %2578 = vmatprep.subr.mxu0 %v86
    %2579 = vmatpush1.msra.mxu0 %v85
    %2580 = vmatprep.subr.mxu0 %v128
    %2581 = vmatpush1.msra.mxu0 %v125
    %2582 = vmatprep.subr.mxu0 0.0
    %2583 = vmatpush1.msra.mxu0 0.0
    %2584 = vmatprep.subr.mxu0 0.0
    %2585 = vmatpush1.msra.mxu0 0.0
    %2586 = vmatprep.subr.mxu0 0.0
    %2587 = vmatpush1.msra.mxu0 0.0
    %2588 = vmatprep.subr.mxu0 0.0
    %2589 = vmatpush1.msra.mxu0 0.0
    %2590 = vmatprep.subr.mxu0 0.0
    %2591 = vmatpush1.msra.mxu0 0.0
    %2592 = vmatprep.subr.mxu0 0.0
    %2593 = vmatpush1.msra.mxu0 0.0
    %2594 = vmatprep.subr.mxu0 0.0
    %2595 = vmatpush1.msra.mxu0 0.0
    %2596 = vmatprep.subr.mxu0 0.0
    %2597 = vmatpush1.msra.mxu0 0.0
    %2598 = vmatprep.subr.mxu0 0.0
    %2599 = vmatpush1.msra.mxu0 0.0
    %2600 = vmatprep.subr.mxu0 0.0
    %2601 = vmatpush1.msra.mxu0 0.0
    %2602 = vmatprep.subr.mxu0 0.0
    %2603 = vmatpush1.msra.mxu0 0.0
    %2604 = vmatprep.subr.mxu0 0.0
    %2605 = vmatpush1.msra.mxu0 0.0
    %2606 = vmatprep.subr.mxu0 0.0
    %2607 = vmatpush1.msra.mxu0 0.0
    %2608 = vmatprep.subr.mxu0 0.0
    %2609 = vmatpush1.msra.mxu0 0.0
    %2610 = vmatprep.subr.mxu0 0.0
    %2611 = vmatpush1.msra.mxu0 0.0
    %2612 = vmatprep.subr.mxu0 0.0
    %2613 = vmatpush1.msra.mxu0 0.0
    %2614 = vmatprep.subr.mxu0 0.0
    %2615 = vmatpush1.msra.mxu0 0.0
    %2616 = vmatprep.subr.mxu0 0.0
    %2617 = vmatpush1.msra.mxu0 0.0
    %2618 = vmatprep.subr.mxu0 0.0
    %2619 = vmatpush1.msra.mxu0 0.0
    %2620 = vmatprep.subr.mxu0 0.0
    %2621 = vmatpush1.msra.mxu0 0.0
    %2622 = vmatprep.subr.mxu0 0.0
    %2623 = vmatpush1.msra.mxu0 0.0
    %2624 = vmatprep.subr.mxu0 0.0
    %2625 = vmatpush1.msra.mxu0 0.0
    %2626 = vmatprep.subr.mxu0 0.0
    %2627 = vmatpush1.msra.mxu0 0.0
    %2628 = vmatprep.subr.mxu0 0.0
    %2629 = vmatpush1.msra.mxu0 0.0
    %2630 = vmatprep.subr.mxu0 0.0
    %2631 = vmatpush1.msra.mxu0 0.0
    %2632 = vmatprep.subr.mxu0 0.0
    %2633 = vmatpush1.msra.mxu0 0.0
    %2634 = vmatprep.subr.mxu0 0.0
    %2635 = vmatpush1.msra.mxu0 0.0
    %2636 = vmatprep.subr.mxu0 0.0
    %2637 = vmatpush1.msra.mxu0 0.0
    %2638 = vmatprep.subr.mxu0 0.0
    %2639 = vmatpush1.msra.mxu0 0.0
    %2640 = vmatprep.subr.mxu0 0.0
    %2641 = vmatpush1.msra.mxu0 0.0
    %2642 = vmatprep.mubr.f32.mxu0 0.0
    %2643 = vmatmul.mubr.f32.gmra.mrb[0].mxu0 %v2505
    %v2644 = vpop.f32.mrb[0].mxu0
    %v2645 = vadd.f32 %v104, %v2644
    %v2646 = vpop.f32.mrb[0].mxu0
    %v2647 = vadd.f32 %v108, %v2646
    %2648 = vdwg.mxu0
    %2649 = vmatprep.subr.mxu0 %v273
    %2650 = vmatpush1.msra.mxu0 %v272
    %2651 = vmatprep.subr.mxu0 %v277
    %2652 = vmatpush1.msra.mxu0 %v276
    %2653 = vmatprep.subr.mxu0 %v281
    %2654 = vmatpush1.msra.mxu0 %v280
    %2655 = vmatprep.subr.mxu0 %v285
    %2656 = vmatpush1.msra.mxu0 %v284
    %2657 = vmatprep.subr.mxu0 %v289
    %2658 = vmatpush1.msra.mxu0 %v288
    %2659 = vmatprep.subr.mxu0 %v293
    %2660 = vmatpush1.msra.mxu0 %v292
    %2661 = vmatprep.subr.mxu0 %v297
    %2662 = vmatpush1.msra.mxu0 %v296
    %2663 = vmatprep.subr.mxu0 %v301
    %2664 = vmatpush1.msra.mxu0 %v300
    %2665 = vmatprep.subr.mxu0 %v305
    %2666 = vmatpush1.msra.mxu0 %v304
    %2667 = vmatprep.subr.mxu0 %v309
    %2668 = vmatpush1.msra.mxu0 %v308
    %2669 = vmatprep.subr.mxu0 %v313
    %2670 = vmatpush1.msra.mxu0 %v312
    %2671 = vmatprep.subr.mxu0 %v317
    %2672 = vmatpush1.msra.mxu0 %v316
    %2673 = vmatprep.subr.mxu0 %v321
    %2674 = vmatpush1.msra.mxu0 %v320
    %2675 = vmatprep.subr.mxu0 %v325
    %2676 = vmatpush1.msra.mxu0 %v324
    %2677 = vmatprep.subr.mxu0 %v329
    %2678 = vmatpush1.msra.mxu0 %v328
    %2679 = vmatprep.subr.mxu0 %v333
    %2680 = vmatpush1.msra.mxu0 %v332
    %2681 = vmatprep.subr.mxu0 0.0
    %2682 = vmatpush1.msra.mxu0 0.0
    %2683 = vmatprep.subr.mxu0 0.0
    %2684 = vmatpush1.msra.mxu0 0.0
    %2685 = vmatprep.subr.mxu0 0.0
    %2686 = vmatpush1.msra.mxu0 0.0
    %2687 = vmatprep.subr.mxu0 0.0
    %2688 = vmatpush1.msra.mxu0 0.0
    %2689 = vmatprep.subr.mxu0 0.0
    %2690 = vmatpush1.msra.mxu0 0.0
    %2691 = vmatprep.subr.mxu0 0.0
    %2692 = vmatpush1.msra.mxu0 0.0
    %2693 = vmatprep.subr.mxu0 0.0
    %2694 = vmatpush1.msra.mxu0 0.0
    %2695 = vmatprep.subr.mxu0 0.0
    %2696 = vmatpush1.msra.mxu0 0.0
    %2697 = vmatprep.subr.mxu0 0.0
    %2698 = vmatpush1.msra.mxu0 0.0
    %2699 = vmatprep.subr.mxu0 0.0
    %2700 = vmatpush1.msra.mxu0 0.0
    %2701 = vmatprep.subr.mxu0 0.0
    %2702 = vmatpush1.msra.mxu0 0.0
    %2703 = vmatprep.subr.mxu0 0.0
    %2704 = vmatpush1.msra.mxu0 0.0
    %2705 = vmatprep.subr.mxu0 0.0
    %2706 = vmatpush1.msra.mxu0 0.0
    %2707 = vmatprep.subr.mxu0 0.0
    %2708 = vmatpush1.msra.mxu0 0.0
    %2709 = vmatprep.subr.mxu0 0.0
    %2710 = vmatpush1.msra.mxu0 0.0
    %2711 = vmatprep.subr.mxu0 0.0
    %2712 = vmatpush1.msra.mxu0 0.0
    %2713 = vmatprep.mubr.f32.mxu0 0.0
    %2714 = vmatmul.mubr.f32.gmra.mrb[0].mxu0 %v2188
    %v2715 = vpop.f32.mrb[0].mxu0
    %v2716 = vadd.f32 0.0, %v2715
    %v2717 = vpop.f32.mrb[0].mxu0
    %v2718 = vadd.f32 0.0, %v2717
    %2719 = vdwg.mxu0
    %2720 = vmatprep.subr.mxu0 %v275
    %2721 = vmatpush1.msra.mxu0 %v274
    %2722 = vmatprep.subr.mxu0 %v279
    %2723 = vmatpush1.msra.mxu0 %v278
    %2724 = vmatprep.subr.mxu0 %v283
    %2725 = vmatpush1.msra.mxu0 %v282
    %2726 = vmatprep.subr.mxu0 %v287
    %2727 = vmatpush1.msra.mxu0 %v286
    %2728 = vmatprep.subr.mxu0 %v291
    %2729 = vmatpush1.msra.mxu0 %v290
    %2730 = vmatprep.subr.mxu0 %v295
    %2731 = vmatpush1.msra.mxu0 %v294
    %2732 = vmatprep.subr.mxu0 %v299
    %2733 = vmatpush1.msra.mxu0 %v298
    %2734 = vmatprep.subr.mxu0 %v303
    %2735 = vmatpush1.msra.mxu0 %v302
    %2736 = vmatprep.subr.mxu0 %v307
    %2737 = vmatpush1.msra.mxu0 %v306
    %2738 = vmatprep.subr.mxu0 %v311
    %2739 = vmatpush1.msra.mxu0 %v310
    %2740 = vmatprep.subr.mxu0 %v315
    %2741 = vmatpush1.msra.mxu0 %v314
    %2742 = vmatprep.subr.mxu0 %v319
    %2743 = vmatpush1.msra.mxu0 %v318
    %2744 = vmatprep.subr.mxu0 %v323
    %2745 = vmatpush1.msra.mxu0 %v322
    %2746 = vmatprep.subr.mxu0 %v327
    %2747 = vmatpush1.msra.mxu0 %v326
    %2748 = vmatprep.subr.mxu0 %v331
    %2749 = vmatpush1.msra.mxu0 %v330
    %2750 = vmatprep.subr.mxu0 %v335
    %2751 = vmatpush1.msra.mxu0 %v334
    %2752 = vmatprep.subr.mxu0 0.0
    %2753 = vmatpush1.msra.mxu0 0.0
    %2754 = vmatprep.subr.mxu0 0.0
    %2755 = vmatpush1.msra.mxu0 0.0
    %2756 = vmatprep.subr.mxu0 0.0
    %2757 = vmatpush1.msra.mxu0 0.0
    %2758 = vmatprep.subr.mxu0 0.0
    %2759 = vmatpush1.msra.mxu0 0.0
    %2760 = vmatprep.subr.mxu0 0.0
    %2761 = vmatpush1.msra.mxu0 0.0
    %2762 = vmatprep.subr.mxu0 0.0
    %2763 = vmatpush1.msra.mxu0 0.0
    %2764 = vmatprep.subr.mxu0 0.0
    %2765 = vmatpush1.msra.mxu0 0.0
    %2766 = vmatprep.subr.mxu0 0.0
    %2767 = vmatpush1.msra.mxu0 0.0
    %2768 = vmatprep.subr.mxu0 0.0
    %2769 = vmatpush1.msra.mxu0 0.0
    %2770 = vmatprep.subr.mxu0 0.0
    %2771 = vmatpush1.msra.mxu0 0.0
    %2772 = vmatprep.subr.mxu0 0.0
    %2773 = vmatpush1.msra.mxu0 0.0
    %2774 = vmatprep.subr.mxu0 0.0
    %2775 = vmatpush1.msra.mxu0 0.0
    %2776 = vmatprep.subr.mxu0 0.0
    %2777 = vmatpush1.msra.mxu0 0.0
    %2778 = vmatprep.subr.mxu0 0.0
    %2779 = vmatpush1.msra.mxu0 0.0
    %2780 = vmatprep.subr.mxu0 0.0
    %2781 = vmatpush1.msra.mxu0 0.0
    %2782 = vmatprep.subr.mxu0 0.0
    %2783 = vmatpush1.msra.mxu0 0.0
    %2784 = vmatprep.mubr.f32.mxu0 0.0
    %2785 = vmatmul.mubr.f32.gmra.mrb[0].mxu0 %v2188
    %v2786 = vpop.f32.mrb[0].mxu0
    %v2787 = vadd.f32 0.0, %v2786
    %v2788 = vpop.f32.mrb[0].mxu0
    %v2789 = vadd.f32 0.0, %v2788
    %2790 = vdwg.mxu0
    %v2791 = vadd.f32 %v2574, %v2716
    %v2792 = vadd.f32 %v2576, %v2718
    %v2793 = vadd.f32 %v2645, %v2787
    %v2794 = vadd.f32 %v2647, %v2789
    %v2795 = vtanh.pop %v2791
    %v2796 = vtanh.pop %v2792
    %v2797 = vtanh.pop %v2793
    %v2798 = vtanh.pop %v2794
    %v2799 = vmul.f32 %v2795, 0.5
    %v2800 = vadd.f32 %v2799, 0.5
    %v2801 = vmul.f32 %v2796, 0.5
    %v2802 = vadd.f32 %v2801, 0.5
    %v2803 = vmul.f32 %v2798, 0.5
    %v2804 = vadd.f32 %v2803, 0.5
    %v2805 = vmul.f32 %v2802, %v2186
    %v2806 = vmul.f32 %v2800, %v2797
    %v2807 = vadd.f32 %v2805, %v2806
    %v2808 = vtanh.pop %v2807
    %v2809 = vmul.f32 %v2804, %v2808
    %2810 = vmatprep.subr.mxu0 %v805
    %2811 = vmatpush1.msra.mxu0 %v804
    %2812 = vmatprep.subr.mxu0 %v809
    %2813 = vmatpush1.msra.mxu0 %v808
    %2814 = vmatprep.subr.mxu0 %v813
    %2815 = vmatpush1.msra.mxu0 %v812
    %2816 = vmatprep.subr.mxu0 %v817
    %2817 = vmatpush1.msra.mxu0 %v816
    %2818 = vmatprep.subr.mxu0 %v821
    %2819 = vmatpush1.msra.mxu0 %v820
    %2820 = vmatprep.subr.mxu0 %v825
    %2821 = vmatpush1.msra.mxu0 %v824
    %2822 = vmatprep.subr.mxu0 %v829
    %2823 = vmatpush1.msra.mxu0 %v828
    %2824 = vmatprep.subr.mxu0 %v833
    %2825 = vmatpush1.msra.mxu0 %v832
    %2826 = vmatprep.subr.mxu0 %v837
    %2827 = vmatpush1.msra.mxu0 %v836
    %2828 = vmatprep.subr.mxu0 %v841
    %2829 = vmatpush1.msra.mxu0 %v840
    %2830 = vmatprep.subr.mxu0 %v845
    %2831 = vmatpush1.msra.mxu0 %v844
    %2832 = vmatprep.subr.mxu0 %v849
    %2833 = vmatpush1.msra.mxu0 %v848
    %2834 = vmatprep.subr.mxu0 %v853
    %2835 = vmatpush1.msra.mxu0 %v852
    %2836 = vmatprep.subr.mxu0 %v857
    %2837 = vmatpush1.msra.mxu0 %v856
    %2838 = vmatprep.subr.mxu0 %v861
    %2839 = vmatpush1.msra.mxu0 %v860
    %2840 = vmatprep.subr.mxu0 %v865
    %2841 = vmatpush1.msra.mxu0 %v864
    %2842 = vmatprep.subr.mxu0 %v869
    %2843 = vmatpush1.msra.mxu0 %v868
    %2844 = vmatprep.subr.mxu0 %v873
    %2845 = vmatpush1.msra.mxu0 %v872
    %2846 = vmatprep.subr.mxu0 %v877
    %2847 = vmatpush1.msra.mxu0 %v876
    %2848 = vmatprep.subr.mxu0 %v881
    %2849 = vmatpush1.msra.mxu0 %v880
    %2850 = vmatprep.subr.mxu0 %v885
    %2851 = vmatpush1.msra.mxu0 %v884
    %2852 = vmatprep.subr.mxu0 %v889
    %2853 = vmatpush1.msra.mxu0 %v888
    %2854 = vmatprep.subr.mxu0 %v893
    %2855 = vmatpush1.msra.mxu0 %v892
    %2856 = vmatprep.subr.mxu0 %v897
    %2857 = vmatpush1.msra.mxu0 %v896
    %2858 = vmatprep.subr.mxu0 %v901
    %2859 = vmatpush1.msra.mxu0 %v900
    %2860 = vmatprep.subr.mxu0 %v905
    %2861 = vmatpush1.msra.mxu0 %v904
    %2862 = vmatprep.subr.mxu0 %v909
    %2863 = vmatpush1.msra.mxu0 %v908
    %2864 = vmatprep.subr.mxu0 %v913
    %2865 = vmatpush1.msra.mxu0 %v912
    %2866 = vmatprep.subr.mxu0 %v917
    %2867 = vmatpush1.msra.mxu0 %v916
    %2868 = vmatprep.subr.mxu0 %v921
    %2869 = vmatpush1.msra.mxu0 %v920
    %2870 = vmatprep.subr.mxu0 %v925
    %2871 = vmatpush1.msra.mxu0 %v924
    %2872 = vmatprep.subr.mxu0 %v929
    %2873 = vmatpush1.msra.mxu0 %v928
    %2874 = vmatprep.mubr.f32.mxu0 %v2345
    %2875 = vmatmul.mubr.f32.gmra.mrb[0].mxu0 %v2188
    %v2876 = vpop.f32.mrb[0].mxu0
    %v2877 = vadd.f32 %v937, %v2876
    %v2878 = vpop.f32.mrb[0].mxu0
    %v2879 = vadd.f32 %v941, %v2878
    %2880 = vdwg.mxu0
    %2881 = vmatprep.subr.mxu0 %v807
    %2882 = vmatpush1.msra.mxu0 %v806
    %2883 = vmatprep.subr.mxu0 %v811
    %2884 = vmatpush1.msra.mxu0 %v810
    %2885 = vmatprep.subr.mxu0 %v815
    %2886 = vmatpush1.msra.mxu0 %v814
    %2887 = vmatprep.subr.mxu0 %v819
    %2888 = vmatpush1.msra.mxu0 %v818
    %2889 = vmatprep.subr.mxu0 %v823
    %2890 = vmatpush1.msra.mxu0 %v822
    %2891 = vmatprep.subr.mxu0 %v827
    %2892 = vmatpush1.msra.mxu0 %v826
    %2893 = vmatprep.subr.mxu0 %v831
    %2894 = vmatpush1.msra.mxu0 %v830
    %2895 = vmatprep.subr.mxu0 %v835
    %2896 = vmatpush1.msra.mxu0 %v834
    %2897 = vmatprep.subr.mxu0 %v839
    %2898 = vmatpush1.msra.mxu0 %v838
    %2899 = vmatprep.subr.mxu0 %v843
    %2900 = vmatpush1.msra.mxu0 %v842
    %2901 = vmatprep.subr.mxu0 %v847
    %2902 = vmatpush1.msra.mxu0 %v846
    %2903 = vmatprep.subr.mxu0 %v851
    %2904 = vmatpush1.msra.mxu0 %v850
    %2905 = vmatprep.subr.mxu0 %v855
    %2906 = vmatpush1.msra.mxu0 %v854
    %2907 = vmatprep.subr.mxu0 %v859
    %2908 = vmatpush1.msra.mxu0 %v858
    %2909 = vmatprep.subr.mxu0 %v863
    %2910 = vmatpush1.msra.mxu0 %v862
    %2911 = vmatprep.subr.mxu0 %v867
    %2912 = vmatpush1.msra.mxu0 %v866
    %2913 = vmatprep.subr.mxu0 %v871
    %2914 = vmatpush1.msra.mxu0 %v870
    %2915 = vmatprep.subr.mxu0 %v875
    %2916 = vmatpush1.msra.mxu0 %v874
    %2917 = vmatprep.subr.mxu0 %v879
    %2918 = vmatpush1.msra.mxu0 %v878
    %2919 = vmatprep.subr.mxu0 %v883
    %2920 = vmatpush1.msra.mxu0 %v882
    %2921 = vmatprep.subr.mxu0 %v887
    %2922 = vmatpush1.msra.mxu0 %v886
    %2923 = vmatprep.subr.mxu0 %v891
    %2924 = vmatpush1.msra.mxu0 %v890
    %2925 = vmatprep.subr.mxu0 %v895
    %2926 = vmatpush1.msra.mxu0 %v894
    %2927 = vmatprep.subr.mxu0 %v899
    %2928 = vmatpush1.msra.mxu0 %v898
    %2929 = vmatprep.subr.mxu0 %v903
    %2930 = vmatpush1.msra.mxu0 %v902
    %2931 = vmatprep.subr.mxu0 %v907
    %2932 = vmatpush1.msra.mxu0 %v906
    %2933 = vmatprep.subr.mxu0 %v911
    %2934 = vmatpush1.msra.mxu0 %v910
    %2935 = vmatprep.subr.mxu0 %v915
    %2936 = vmatpush1.msra.mxu0 %v914
    %2937 = vmatprep.subr.mxu0 %v919
    %2938 = vmatpush1.msra.mxu0 %v918
    %2939 = vmatprep.subr.mxu0 %v923
    %2940 = vmatpush1.msra.mxu0 %v922
    %2941 = vmatprep.subr.mxu0 %v927
    %2942 = vmatpush1.msra.mxu0 %v926
    %2943 = vmatprep.subr.mxu0 %v931
    %2944 = vmatpush1.msra.mxu0 %v930
    %2945 = vmatprep.mubr.f32.mxu0 %v2345
    %2946 = vmatmul.mubr.f32.gmra.mrb[0].mxu0 %v2188
    %v2947 = vpop.f32.mrb[0].mxu0
    %v2948 = vadd.f32 %v945, %v2947
    %v2949 = vpop.f32.mrb[0].mxu0
    %v2950 = vadd.f32 %v949, %v2949
    %2951 = vdwg.mxu0
    %v2952 = vtanh.pop %v2877
    %v2953 = vtanh.pop %v2879
    %v2954 = vtanh.pop %v2948
    %v2955 = vtanh.pop %v2950
    %v2956 = vmul.f32 %v2952, 0.5
    %v2957 = vadd.f32 %v2956, 0.5
    %v2958 = vmul.f32 %v2953, 0.5
    %v2959 = vadd.f32 %v2958, 0.5
    %v2960 = vmul.f32 %v2955, 0.5
    %v2961 = vadd.f32 %v2960, 0.5
    %v2962 = vmul.f32 %v2959, %v2343
    %v2963 = vmul.f32 %v2957, %v2954
    %v2964 = vadd.f32 %v2962, %v2963
    %v2965 = vtanh.pop %v2964
    %v2966 = vmul.f32 %v2961, %v2965
    %2967 = vmatprep.subr.mxu0 %v1576
    %2968 = vmatpush1.msra.mxu0 %v1575
    %2969 = vmatprep.subr.mxu0 %v1580
    %2970 = vmatpush1.msra.mxu0 %v1579
    %2971 = vmatprep.subr.mxu0 %v1584
    %2972 = vmatpush1.msra.mxu0 %v1583
    %2973 = vmatprep.subr.mxu0 %v1588
    %2974 = vmatpush1.msra.mxu0 %v1587
    %2975 = vmatprep.subr.mxu0 %v1592
    %2976 = vmatpush1.msra.mxu0 %v1591
    %2977 = vmatprep.subr.mxu0 %v1596
    %2978 = vmatpush1.msra.mxu0 %v1595
    %2979 = vmatprep.subr.mxu0 %v1600
    %2980 = vmatpush1.msra.mxu0 %v1599
    %2981 = vmatprep.subr.mxu0 %v1604
    %2982 = vmatpush1.msra.mxu0 %v1603
    %2983 = vmatprep.subr.mxu0 %v1608
    %2984 = vmatpush1.msra.mxu0 %v1607
    %2985 = vmatprep.subr.mxu0 %v1612
    %2986 = vmatpush1.msra.mxu0 %v1611
    %2987 = vmatprep.subr.mxu0 %v1616
    %2988 = vmatpush1.msra.mxu0 %v1615
    %2989 = vmatprep.subr.mxu0 %v1620
    %2990 = vmatpush1.msra.mxu0 %v1619
    %2991 = vmatprep.subr.mxu0 %v1624
    %2992 = vmatpush1.msra.mxu0 %v1623
    %2993 = vmatprep.subr.mxu0 %v1628
    %2994 = vmatpush1.msra.mxu0 %v1627
    %2995 = vmatprep.subr.mxu0 %v1632
    %2996 = vmatpush1.msra.mxu0 %v1631
    %2997 = vmatprep.subr.mxu0 %v1636
    %2998 = vmatpush1.msra.mxu0 %v1635
    %2999 = vmatprep.subr.mxu0 %v1640
    %3000 = vmatpush1.msra.mxu0 %v1639
    %3001 = vmatprep.subr.mxu0 %v1644
    %3002 = vmatpush1.msra.mxu0 %v1643
    %3003 = vmatprep.subr.mxu0 %v1648
    %3004 = vmatpush1.msra.mxu0 %v1647
    %3005 = vmatprep.subr.mxu0 %v1652
    %3006 = vmatpush1.msra.mxu0 %v1651
    %3007 = vmatprep.subr.mxu0 %v1656
    %3008 = vmatpush1.msra.mxu0 %v1655
    %3009 = vmatprep.subr.mxu0 %v1660
    %3010 = vmatpush1.msra.mxu0 %v1659
    %3011 = vmatprep.subr.mxu0 %v1664
    %3012 = vmatpush1.msra.mxu0 %v1663
    %3013 = vmatprep.subr.mxu0 %v1668
    %3014 = vmatpush1.msra.mxu0 %v1667
    %3015 = vmatprep.subr.mxu0 %v1672
    %3016 = vmatpush1.msra.mxu0 %v1671
    %3017 = vmatprep.subr.mxu0 %v1676
    %3018 = vmatpush1.msra.mxu0 %v1675
    %3019 = vmatprep.subr.mxu0 %v1680
    %3020 = vmatpush1.msra.mxu0 %v1679
    %3021 = vmatprep.subr.mxu0 %v1684
    %3022 = vmatpush1.msra.mxu0 %v1683
    %3023 = vmatprep.subr.mxu0 %v1688
    %3024 = vmatpush1.msra.mxu0 %v1687
    %3025 = vmatprep.subr.mxu0 %v1692
    %3026 = vmatpush1.msra.mxu0 %v1691
    %3027 = vmatprep.subr.mxu0 %v1696
    %3028 = vmatpush1.msra.mxu0 %v1695
    %3029 = vmatprep.subr.mxu0 %v1700
    %3030 = vmatpush1.msra.mxu0 %v1699
    %3031 = vmatprep.mubr.f32.mxu0 %v2502
    %3032 = vmatmul.mubr.f32.gmra.mrb[0].mxu0 %v2345
    %v3033 = vpop.f32.mrb[0].mxu0
    %v3034 = vadd.f32 %v1708, %v3033
    %v3035 = vpop.f32.mrb[0].mxu0
    %v3036 = vadd.f32 %v1712, %v3035
    %3037 = vdwg.mxu0
    %3038 = vmatprep.subr.mxu0 %v1578
    %3039 = vmatpush1.msra.mxu0 %v1577
    %3040 = vmatprep.subr.mxu0 %v1582
    %3041 = vmatpush1.msra.mxu0 %v1581
    %3042 = vmatprep.subr.mxu0 %v1586
    %3043 = vmatpush1.msra.mxu0 %v1585
    %3044 = vmatprep.subr.mxu0 %v1590
    %3045 = vmatpush1.msra.mxu0 %v1589
    %3046 = vmatprep.subr.mxu0 %v1594
    %3047 = vmatpush1.msra.mxu0 %v1593
    %3048 = vmatprep.subr.mxu0 %v1598
    %3049 = vmatpush1.msra.mxu0 %v1597
    %3050 = vmatprep.subr.mxu0 %v1602
    %3051 = vmatpush1.msra.mxu0 %v1601
    %3052 = vmatprep.subr.mxu0 %v1606
    %3053 = vmatpush1.msra.mxu0 %v1605
    %3054 = vmatprep.subr.mxu0 %v1610
    %3055 = vmatpush1.msra.mxu0 %v1609
    %3056 = vmatprep.subr.mxu0 %v1614
    %3057 = vmatpush1.msra.mxu0 %v1613
    %3058 = vmatprep.subr.mxu0 %v1618
    %3059 = vmatpush1.msra.mxu0 %v1617
    %3060 = vmatprep.subr.mxu0 %v1622
    %3061 = vmatpush1.msra.mxu0 %v1621
    %3062 = vmatprep.subr.mxu0 %v1626
    %3063 = vmatpush1.msra.mxu0 %v1625
    %3064 = vmatprep.subr.mxu0 %v1630
    %3065 = vmatpush1.msra.mxu0 %v1629
    %3066 = vmatprep.subr.mxu0 %v1634
    %3067 = vmatpush1.msra.mxu0 %v1633
    %3068 = vmatprep.subr.mxu0 %v1638
    %3069 = vmatpush1.msra.mxu0 %v1637
    %3070 = vmatprep.subr.mxu0 %v1642
    %3071 = vmatpush1.msra.mxu0 %v1641
    %3072 = vmatprep.subr.mxu0 %v1646
    %3073 = vmatpush1.msra.mxu0 %v1645
    %3074 = vmatprep.subr.mxu0 %v1650
    %3075 = vmatpush1.msra.mxu0 %v1649
    %3076 = vmatprep.subr.mxu0 %v1654
    %3077 = vmatpush1.msra.mxu0 %v1653
    %3078 = vmatprep.subr.mxu0 %v1658
    %3079 = vmatpush1.msra.mxu0 %v1657
    %3080 = vmatprep.subr.mxu0 %v1662
    %3081 = vmatpush1.msra.mxu0 %v1661
    %3082 = vmatprep.subr.mxu0 %v1666
    %3083 = vmatpush1.msra.mxu0 %v1665
    %3084 = vmatprep.subr.mxu0 %v1670
    %3085 = vmatpush1.msra.mxu0 %v1669
    %3086 = vmatprep.subr.mxu0 %v1674
    %3087 = vmatpush1.msra.mxu0 %v1673
    %3088 = vmatprep.subr.mxu0 %v1678
    %3089 = vmatpush1.msra.mxu0 %v1677
    %3090 = vmatprep.subr.mxu0 %v1682
    %3091 = vmatpush1.msra.mxu0 %v1681
    %3092 = vmatprep.subr.mxu0 %v1686
    %3093 = vmatpush1.msra.mxu0 %v1685
    %3094 = vmatprep.subr.mxu0 %v1690
    %3095 = vmatpush1.msra.mxu0 %v1689
    %3096 = vmatprep.subr.mxu0 %v1694
    %3097 = vmatpush1.msra.mxu0 %v1693
    %3098 = vmatprep.subr.mxu0 %v1698
    %3099 = vmatpush1.msra.mxu0 %v1697
    %3100 = vmatprep.subr.mxu0 %v1702
    %3101 = vmatpush1.msra.mxu0 %v1701
    %3102 = vmatprep.mubr.f32.mxu0 %v2502
    %3103 = vmatmul.mubr.f32.gmra.mrb[0].mxu0 %v2345
    %v3104 = vpop.f32.mrb[0].mxu0
    %v3105 = vadd.f32 %v1716, %v3104
    %v3106 = vpop.f32.mrb[0].mxu0
    %v3107 = vadd.f32 %v1720, %v3106
    %3108 = vdwg.mxu0
    %v3109 = vtanh.pop %v3034
    %v3110 = vtanh.pop %v3036
    %v3111 = vtanh.pop %v3105
    %v3112 = vtanh.pop %v3107
    %v3113 = vmul.f32 %v3109, 0.5
    %v3114 = vadd.f32 %v3113, 0.5
    %v3115 = vmul.f32 %v3110, 0.5
    %v3116 = vadd.f32 %v3115, 0.5
    %v3117 = vmul.f32 %v3112, 0.5
    %v3118 = vadd.f32 %v3117, 0.5
    %v3119 = vmul.f32 %v3116, %v2500
    %v3120 = vmul.f32 %v3114, %v3111
    %v3121 = vadd.f32 %v3119, %v3120
    %v3122 = vtanh.pop %v3121
    %v3123 = vmul.f32 %v3118, %v3122
    %3124 = vrot.lane.b32.xlu0 %v82, 53
    %v3125 = vpop.permute.xlu0 %3124
    %v3126 = vsel %vm113, %v3125, 0
    %3128 = vmatprep.subr.mxu0 %v84
    %3129 = vmatpush1.msra.mxu0 %v83
    %3130 = vmatprep.subr.mxu0 %v122
    %3131 = vmatpush1.msra.mxu0 %v119
    %3132 = vmatprep.subr.mxu0 0.0
    %3133 = vmatpush1.msra.mxu0 0.0
    %3134 = vmatprep.subr.mxu0 0.0
    %3135 = vmatpush1.msra.mxu0 0.0
    %3136 = vmatprep.subr.mxu0 0.0
    %3137 = vmatpush1.msra.mxu0 0.0
    %3138 = vmatprep.subr.mxu0 0.0
    %3139 = vmatpush1.msra.mxu0 0.0
    %3140 = vmatprep.subr.mxu0 0.0
    %3141 = vmatpush1.msra.mxu0 0.0
    %3142 = vmatprep.subr.mxu0 0.0
    %3143 = vmatpush1.msra.mxu0 0.0
    %3144 = vmatprep.subr.mxu0 0.0
    %3145 = vmatpush1.msra.mxu0 0.0
    %3146 = vmatprep.subr.mxu0 0.0
    %3147 = vmatpush1.msra.mxu0 0.0
    %3148 = vmatprep.subr.mxu0 0.0
    %3149 = vmatpush1.msra.mxu0 0.0
    %3150 = vmatprep.subr.mxu0 0.0
    %3151 = vmatpush1.msra.mxu0 0.0
    %3152 = vmatprep.subr.mxu0 0.0
    %3153 = vmatpush1.msra.mxu0 0.0
    %3154 = vmatprep.subr.mxu0 0.0
    %3155 = vmatpush1.msra.mxu0 0.0
    %3156 = vmatprep.subr.mxu0 0.0
    %3157 = vmatpush1.msra.mxu0 0.0
    %3158 = vmatprep.subr.mxu0 0.0
    %3159 = vmatpush1.msra.mxu0 0.0
    %3160 = vmatprep.subr.mxu0 0.0
    %3161 = vmatpush1.msra.mxu0 0.0
    %3162 = vmatprep.subr.mxu0 0.0
    %3163 = vmatpush1.msra.mxu0 0.0
    %3164 = vmatprep.subr.mxu0 0.0
    %3165 = vmatpush1.msra.mxu0 0.0
    %3166 = vmatprep.subr.mxu0 0.0
    %3167 = vmatpush1.msra.mxu0 0.0
    %3168 = vmatprep.subr.mxu0 0.0
    %3169 = vmatpush1.msra.mxu0 0.0
    %3170 = vmatprep.subr.mxu0 0.0
    %3171 = vmatpush1.msra.mxu0 0.0
    %3172 = vmatprep.subr.mxu0 0.0
    %3173 = vmatpush1.msra.mxu0 0.0
    %3174 = vmatprep.subr.mxu0 0.0
    %3175 = vmatpush1.msra.mxu0 0.0
    %3176 = vmatprep.subr.mxu0 0.0
    %3177 = vmatpush1.msra.mxu0 0.0
    %3178 = vmatprep.subr.mxu0 0.0
    %3179 = vmatpush1.msra.mxu0 0.0
    %3180 = vmatprep.subr.mxu0 0.0
    %3181 = vmatpush1.msra.mxu0 0.0
    %3182 = vmatprep.subr.mxu0 0.0
    %3183 = vmatpush1.msra.mxu0 0.0
    %3184 = vmatprep.subr.mxu0 0.0
    %3185 = vmatpush1.msra.mxu0 0.0
    %3186 = vmatprep.subr.mxu0 0.0
    %3187 = vmatpush1.msra.mxu0 0.0
    %3188 = vmatprep.subr.mxu0 0.0
    %3189 = vmatpush1.msra.mxu0 0.0
    %3190 = vmatprep.subr.mxu0 0.0
    %3191 = vmatpush1.msra.mxu0 0.0
    %3192 = vmatprep.mubr.f32.mxu0 0.0
    %3193 = vmatmul.mubr.f32.gmra.mrb[0].mxu0 %v3126
    %v3194 = vpop.f32.mrb[0].mxu0
    %v3195 = vadd.f32 %v96, %v3194
    %v3196 = vpop.f32.mrb[0].mxu0
    %v3197 = vadd.f32 %v100, %v3196
    %3198 = vdwg.mxu0
    %3199 = vmatprep.subr.mxu0 %v86
    %3200 = vmatpush1.msra.mxu0 %v85
    %3201 = vmatprep.subr.mxu0 %v128
    %3202 = vmatpush1.msra.mxu0 %v125
    %3203 = vmatprep.subr.mxu0 0.0
    %3204 = vmatpush1.msra.mxu0 0.0
    %3205 = vmatprep.subr.mxu0 0.0
    %3206 = vmatpush1.msra.mxu0 0.0
    %3207 = vmatprep.subr.mxu0 0.0
    %3208 = vmatpush1.msra.mxu0 0.0
    %3209 = vmatprep.subr.mxu0 0.0
    %3210 = vmatpush1.msra.mxu0 0.0
    %3211 = vmatprep.subr.mxu0 0.0
    %3212 = vmatpush1.msra.mxu0 0.0
    %3213 = vmatprep.subr.mxu0 0.0
    %3214 = vmatpush1.msra.mxu0 0.0
    %3215 = vmatprep.subr.mxu0 0.0
    %3216 = vmatpush1.msra.mxu0 0.0
    %3217 = vmatprep.subr.mxu0 0.0
    %3218 = vmatpush1.msra.mxu0 0.0
    %3219 = vmatprep.subr.mxu0 0.0
    %3220 = vmatpush1.msra.mxu0 0.0
    %3221 = vmatprep.subr.mxu0 0.0
    %3222 = vmatpush1.msra.mxu0 0.0
    %3223 = vmatprep.subr.mxu0 0.0
    %3224 = vmatpush1.msra.mxu0 0.0
    %3225 = vmatprep.subr.mxu0 0.0
    %3226 = vmatpush1.msra.mxu0 0.0
    %3227 = vmatprep.subr.mxu0 0.0
    %3228 = vmatpush1.msra.mxu0 0.0
    %3229 = vmatprep.subr.mxu0 0.0
    %3230 = vmatpush1.msra.mxu0 0.0
    %3231 = vmatprep.subr.mxu0 0.0
    %3232 = vmatpush1.msra.mxu0 0.0
    %3233 = vmatprep.subr.mxu0 0.0
    %3234 = vmatpush1.msra.mxu0 0.0
    %3235 = vmatprep.subr.mxu0 0.0
    %3236 = vmatpush1.msra.mxu0 0.0
    %3237 = vmatprep.subr.mxu0 0.0
    %3238 = vmatpush1.msra.mxu0 0.0
    %3239 = vmatprep.subr.mxu0 0.0
    %3240 = vmatpush1.msra.mxu0 0.0
    %3241 = vmatprep.subr.mxu0 0.0
    %3242 = vmatpush1.msra.mxu0 0.0
    %3243 = vmatprep.subr.mxu0 0.0
    %3244 = vmatpush1.msra.mxu0 0.0
    %3245 = vmatprep.subr.mxu0 0.0
    %3246 = vmatpush1.msra.mxu0 0.0
    %3247 = vmatprep.subr.mxu0 0.0
    %3248 = vmatpush1.msra.mxu0 0.0
    %3249 = vmatprep.subr.mxu0 0.0
    %3250 = vmatpush1.msra.mxu0 0.0
    %3251 = vmatprep.subr.mxu0 0.0
    %3252 = vmatpush1.msra.mxu0 0.0
    %3253 = vmatprep.subr.mxu0 0.0
    %3254 = vmatpush1.msra.mxu0 0.0
    %3255 = vmatprep.subr.mxu0 0.0
    %3256 = vmatpush1.msra.mxu0 0.0
    %3257 = vmatprep.subr.mxu0 0.0
    %3258 = vmatpush1.msra.mxu0 0.0
    %3259 = vmatprep.subr.mxu0 0.0
    %3260 = vmatpush1.msra.mxu0 0.0
    %3261 = vmatprep.subr.mxu0 0.0
    %3262 = vmatpush1.msra.mxu0 0.0
    %3263 = vmatprep.mubr.f32.mxu0 0.0
    %3264 = vmatmul.mubr.f32.gmra.mrb[0].mxu0 %v3126
    %v3265 = vpop.f32.mrb[0].mxu0
    %v3266 = vadd.f32 %v104, %v3265
    %v3267 = vpop.f32.mrb[0].mxu0
    %v3268 = vadd.f32 %v108, %v3267
    %3269 = vdwg.mxu0
    %3270 = vmatprep.subr.mxu0 %v273
    %3271 = vmatpush1.msra.mxu0 %v272
    %3272 = vmatprep.subr.mxu0 %v277
    %3273 = vmatpush1.msra.mxu0 %v276
    %3274 = vmatprep.subr.mxu0 %v281
    %3275 = vmatpush1.msra.mxu0 %v280
    %3276 = vmatprep.subr.mxu0 %v285
    %3277 = vmatpush1.msra.mxu0 %v284
    %3278 = vmatprep.subr.mxu0 %v289
    %3279 = vmatpush1.msra.mxu0 %v288
    %3280 = vmatprep.subr.mxu0 %v293
    %3281 = vmatpush1.msra.mxu0 %v292
    %3282 = vmatprep.subr.mxu0 %v297
    %3283 = vmatpush1.msra.mxu0 %v296
    %3284 = vmatprep.subr.mxu0 %v301
    %3285 = vmatpush1.msra.mxu0 %v300
    %3286 = vmatprep.subr.mxu0 %v305
    %3287 = vmatpush1.msra.mxu0 %v304
    %3288 = vmatprep.subr.mxu0 %v309
    %3289 = vmatpush1.msra.mxu0 %v308
    %3290 = vmatprep.subr.mxu0 %v313
    %3291 = vmatpush1.msra.mxu0 %v312
    %3292 = vmatprep.subr.mxu0 %v317
    %3293 = vmatpush1.msra.mxu0 %v316
    %3294 = vmatprep.subr.mxu0 %v321
    %3295 = vmatpush1.msra.mxu0 %v320
    %3296 = vmatprep.subr.mxu0 %v325
    %3297 = vmatpush1.msra.mxu0 %v324
    %3298 = vmatprep.subr.mxu0 %v329
    %3299 = vmatpush1.msra.mxu0 %v328
    %3300 = vmatprep.subr.mxu0 %v333
    %3301 = vmatpush1.msra.mxu0 %v332
    %3302 = vmatprep.subr.mxu0 0.0
    %3303 = vmatpush1.msra.mxu0 0.0
    %3304 = vmatprep.subr.mxu0 0.0
    %3305 = vmatpush1.msra.mxu0 0.0
    %3306 = vmatprep.subr.mxu0 0.0
    %3307 = vmatpush1.msra.mxu0 0.0
    %3308 = vmatprep.subr.mxu0 0.0
    %3309 = vmatpush1.msra.mxu0 0.0
    %3310 = vmatprep.subr.mxu0 0.0
    %3311 = vmatpush1.msra.mxu0 0.0
    %3312 = vmatprep.subr.mxu0 0.0
    %3313 = vmatpush1.msra.mxu0 0.0
    %3314 = vmatprep.subr.mxu0 0.0
    %3315 = vmatpush1.msra.mxu0 0.0
    %3316 = vmatprep.subr.mxu0 0.0
    %3317 = vmatpush1.msra.mxu0 0.0
    %3318 = vmatprep.subr.mxu0 0.0
    %3319 = vmatpush1.msra.mxu0 0.0
    %3320 = vmatprep.subr.mxu0 0.0
    %3321 = vmatpush1.msra.mxu0 0.0
    %3322 = vmatprep.subr.mxu0 0.0
    %3323 = vmatpush1.msra.mxu0 0.0
    %3324 = vmatprep.subr.mxu0 0.0
    %3325 = vmatpush1.msra.mxu0 0.0
    %3326 = vmatprep.subr.mxu0 0.0
    %3327 = vmatpush1.msra.mxu0 0.0
    %3328 = vmatprep.subr.mxu0 0.0
    %3329 = vmatpush1.msra.mxu0 0.0
    %3330 = vmatprep.subr.mxu0 0.0
    %3331 = vmatpush1.msra.mxu0 0.0
    %3332 = vmatprep.subr.mxu0 0.0
    %3333 = vmatpush1.msra.mxu0 0.0
    %3334 = vmatprep.mubr.f32.mxu0 0.0
    %3335 = vmatmul.mubr.f32.gmra.mrb[0].mxu0 %v2809
    %v3336 = vpop.f32.mrb[0].mxu0
    %v3337 = vadd.f32 0.0, %v3336
    %v3338 = vpop.f32.mrb[0].mxu0
    %v3339 = vadd.f32 0.0, %v3338
    %3340 = vdwg.mxu0
    %3341 = vmatprep.subr.mxu0 %v275
    %3342 = vmatpush1.msra.mxu0 %v274
    %3343 = vmatprep.subr.mxu0 %v279
    %3344 = vmatpush1.msra.mxu0 %v278
    %3345 = vmatprep.subr.mxu0 %v283
    %3346 = vmatpush1.msra.mxu0 %v282
    %3347 = vmatprep.subr.mxu0 %v287
    %3348 = vmatpush1.msra.mxu0 %v286
    %3349 = vmatprep.subr.mxu0 %v291
    %3350 = vmatpush1.msra.mxu0 %v290
    %3351 = vmatprep.subr.mxu0 %v295
    %3352 = vmatpush1.msra.mxu0 %v294
    %3353 = vmatprep.subr.mxu0 %v299
    %3354 = vmatpush1.msra.mxu0 %v298
    %3355 = vmatprep.subr.mxu0 %v303
    %3356 = vmatpush1.msra.mxu0 %v302
    %3357 = vmatprep.subr.mxu0 %v307
    %3358 = vmatpush1.msra.mxu0 %v306
    %3359 = vmatprep.subr.mxu0 %v311
    %3360 = vmatpush1.msra.mxu0 %v310
    %3361 = vmatprep.subr.mxu0 %v315
    %3362 = vmatpush1.msra.mxu0 %v314
    %3363 = vmatprep.subr.mxu0 %v319
    %3364 = vmatpush1.msra.mxu0 %v318
    %3365 = vmatprep.subr.mxu0 %v323
    %3366 = vmatpush1.msra.mxu0 %v322
    %3367 = vmatprep.subr.mxu0 %v327
    %3368 = vmatpush1.msra.mxu0 %v326
    %3369 = vmatprep.subr.mxu0 %v331
    %3370 = vmatpush1.msra.mxu0 %v330
    %3371 = vmatprep.subr.mxu0 %v335
    %3372 = vmatpush1.msra.mxu0 %v334
    %3373 = vmatprep.subr.mxu0 0.0
    %3374 = vmatpush1.msra.mxu0 0.0
    %3375 = vmatprep.subr.mxu0 0.0
    %3376 = vmatpush1.msra.mxu0 0.0
    %3377 = vmatprep.subr.mxu0 0.0
    %3378 = vmatpush1.msra.mxu0 0.0
    %3379 = vmatprep.subr.mxu0 0.0
    %3380 = vmatpush1.msra.mxu0 0.0
    %3381 = vmatprep.subr.mxu0 0.0
    %3382 = vmatpush1.msra.mxu0 0.0
    %3383 = vmatprep.subr.mxu0 0.0
    %3384 = vmatpush1.msra.mxu0 0.0
    %3385 = vmatprep.subr.mxu0 0.0
    %3386 = vmatpush1.msra.mxu0 0.0
    %3387 = vmatprep.subr.mxu0 0.0
    %3388 = vmatpush1.msra.mxu0 0.0
    %3389 = vmatprep.subr.mxu0 0.0
    %3390 = vmatpush1.msra.mxu0 0.0
    %3391 = vmatprep.subr.mxu0 0.0
    %3392 = vmatpush1.msra.mxu0 0.0
    %3393 = vmatprep.subr.mxu0 0.0
    %3394 = vmatpush1.msra.mxu0 0.0
    %3395 = vmatprep.subr.mxu0 0.0
    %3396 = vmatpush1.msra.mxu0 0.0
    %3397 = vmatprep.subr.mxu0 0.0
    %3398 = vmatpush1.msra.mxu0 0.0
    %3399 = vmatprep.subr.mxu0 0.0
    %3400 = vmatpush1.msra.mxu0 0.0
    %3401 = vmatprep.subr.mxu0 0.0
    %3402 = vmatpush1.msra.mxu0 0.0
    %3403 = vmatprep.subr.mxu0 0.0
    %3404 = vmatpush1.msra.mxu0 0.0
    %3405 = vmatprep.mubr.f32.mxu0 0.0
    %3406 = vmatmul.mubr.f32.gmra.mrb[0].mxu0 %v2809
    %v3407 = vpop.f32.mrb[0].mxu0
    %v3408 = vadd.f32 0.0, %v3407
    %v3409 = vpop.f32.mrb[0].mxu0
    %v3410 = vadd.f32 0.0, %v3409
    %3411 = vdwg.mxu0
    %v3412 = vadd.f32 %v3195, %v3337
    %v3413 = vadd.f32 %v3197, %v3339
    %v3414 = vadd.f32 %v3266, %v3408
    %v3415 = vadd.f32 %v3268, %v3410
    %v3416 = vtanh.pop %v3412
    %v3417 = vtanh.pop %v3413
    %v3418 = vtanh.pop %v3414
    %v3419 = vtanh.pop %v3415
    %v3420 = vmul.f32 %v3416, 0.5
    %v3421 = vadd.f32 %v3420, 0.5
    %v3422 = vmul.f32 %v3417, 0.5
    %v3423 = vadd.f32 %v3422, 0.5
    %v3424 = vmul.f32 %v3419, 0.5
    %v3425 = vadd.f32 %v3424, 0.5
    %v3426 = vmul.f32 %v3423, %v2807
    %v3427 = vmul.f32 %v3421, %v3418
    %v3428 = vadd.f32 %v3426, %v3427
    %v3429 = vtanh.pop %v3428
    %v3430 = vmul.f32 %v3425, %v3429
    %3431 = vmatprep.subr.mxu0 %v805
    %3432 = vmatpush1.msra.mxu0 %v804
    %3433 = vmatprep.subr.mxu0 %v809
    %3434 = vmatpush1.msra.mxu0 %v808
    %3435 = vmatprep.subr.mxu0 %v813
    %3436 = vmatpush1.msra.mxu0 %v812
    %3437 = vmatprep.subr.mxu0 %v817
    %3438 = vmatpush1.msra.mxu0 %v816
    %3439 = vmatprep.subr.mxu0 %v821
    %3440 = vmatpush1.msra.mxu0 %v820
    %3441 = vmatprep.subr.mxu0 %v825
    %3442 = vmatpush1.msra.mxu0 %v824
    %3443 = vmatprep.subr.mxu0 %v829
    %3444 = vmatpush1.msra.mxu0 %v828
    %3445 = vmatprep.subr.mxu0 %v833
    %3446 = vmatpush1.msra.mxu0 %v832
    %3447 = vmatprep.subr.mxu0 %v837
    %3448 = vmatpush1.msra.mxu0 %v836
    %3449 = vmatprep.subr.mxu0 %v841
    %3450 = vmatpush1.msra.mxu0 %v840
    %3451 = vmatprep.subr.mxu0 %v845
    %3452 = vmatpush1.msra.mxu0 %v844
    %3453 = vmatprep.subr.mxu0 %v849
    %3454 = vmatpush1.msra.mxu0 %v848
    %3455 = vmatprep.subr.mxu0 %v853
    %3456 = vmatpush1.msra.mxu0 %v852
    %3457 = vmatprep.subr.mxu0 %v857
    %3458 = vmatpush1.msra.mxu0 %v856
    %3459 = vmatprep.subr.mxu0 %v861
    %3460 = vmatpush1.msra.mxu0 %v860
    %3461 = vmatprep.subr.mxu0 %v865
    %3462 = vmatpush1.msra.mxu0 %v864
    %3463 = vmatprep.subr.mxu0 %v869
    %3464 = vmatpush1.msra.mxu0 %v868
    %3465 = vmatprep.subr.mxu0 %v873
    %3466 = vmatpush1.msra.mxu0 %v872
    %3467 = vmatprep.subr.mxu0 %v877
    %3468 = vmatpush1.msra.mxu0 %v876
    %3469 = vmatprep.subr.mxu0 %v881
    %3470 = vmatpush1.msra.mxu0 %v880
    %3471 = vmatprep.subr.mxu0 %v885
    %3472 = vmatpush1.msra.mxu0 %v884
    %3473 = vmatprep.subr.mxu0 %v889
    %3474 = vmatpush1.msra.mxu0 %v888
    %3475 = vmatprep.subr.mxu0 %v893
    %3476 = vmatpush1.msra.mxu0 %v892
    %3477 = vmatprep.subr.mxu0 %v897
    %3478 = vmatpush1.msra.mxu0 %v896
    %3479 = vmatprep.subr.mxu0 %v901
    %3480 = vmatpush1.msra.mxu0 %v900
    %3481 = vmatprep.subr.mxu0 %v905
    %3482 = vmatpush1.msra.mxu0 %v904
    %3483 = vmatprep.subr.mxu0 %v909
    %3484 = vmatpush1.msra.mxu0 %v908
    %3485 = vmatprep.subr.mxu0 %v913
    %3486 = vmatpush1.msra.mxu0 %v912
    %3487 = vmatprep.subr.mxu0 %v917
    %3488 = vmatpush1.msra.mxu0 %v916
    %3489 = vmatprep.subr.mxu0 %v921
    %3490 = vmatpush1.msra.mxu0 %v920
    %3491 = vmatprep.subr.mxu0 %v925
    %3492 = vmatpush1.msra.mxu0 %v924
    %3493 = vmatprep.subr.mxu0 %v929
    %3494 = vmatpush1.msra.mxu0 %v928
    %3495 = vmatprep.mubr.f32.mxu0 %v2966
    %3496 = vmatmul.mubr.f32.gmra.mrb[0].mxu0 %v2809
    %v3497 = vpop.f32.mrb[0].mxu0
    %v3498 = vadd.f32 %v937, %v3497
    %v3499 = vpop.f32.mrb[0].mxu0
    %v3500 = vadd.f32 %v941, %v3499
    %3501 = vdwg.mxu0
    %3502 = vmatprep.subr.mxu0 %v807
    %3503 = vmatpush1.msra.mxu0 %v806
    %3504 = vmatprep.subr.mxu0 %v811
    %3505 = vmatpush1.msra.mxu0 %v810
    %3506 = vmatprep.subr.mxu0 %v815
    %3507 = vmatpush1.msra.mxu0 %v814
    %3508 = vmatprep.subr.mxu0 %v819
    %3509 = vmatpush1.msra.mxu0 %v818
    %3510 = vmatprep.subr.mxu0 %v823
    %3511 = vmatpush1.msra.mxu0 %v822
    %3512 = vmatprep.subr.mxu0 %v827
    %3513 = vmatpush1.msra.mxu0 %v826
    %3514 = vmatprep.subr.mxu0 %v831
    %3515 = vmatpush1.msra.mxu0 %v830
    %3516 = vmatprep.subr.mxu0 %v835
    %3517 = vmatpush1.msra.mxu0 %v834
    %3518 = vmatprep.subr.mxu0 %v839
    %3519 = vmatpush1.msra.mxu0 %v838
    %3520 = vmatprep.subr.mxu0 %v843
    %3521 = vmatpush1.msra.mxu0 %v842
    %3522 = vmatprep.subr.mxu0 %v847
    %3523 = vmatpush1.msra.mxu0 %v846
    %3524 = vmatprep.subr.mxu0 %v851
    %3525 = vmatpush1.msra.mxu0 %v850
    %3526 = vmatprep.subr.mxu0 %v855
    %3527 = vmatpush1.msra.mxu0 %v854
    %3528 = vmatprep.subr.mxu0 %v859
    %3529 = vmatpush1.msra.mxu0 %v858
    %3530 = vmatprep.subr.mxu0 %v863
    %3531 = vmatpush1.msra.mxu0 %v862
    %3532 = vmatprep.subr.mxu0 %v867
    %3533 = vmatpush1.msra.mxu0 %v866
    %3534 = vmatprep.subr.mxu0 %v871
    %3535 = vmatpush1.msra.mxu0 %v870
    %3536 = vmatprep.subr.mxu0 %v875
    %3537 = vmatpush1.msra.mxu0 %v874
    %3538 = vmatprep.subr.mxu0 %v879
    %3539 = vmatpush1.msra.mxu0 %v878
    %3540 = vmatprep.subr.mxu0 %v883
    %3541 = vmatpush1.msra.mxu0 %v882
    %3542 = vmatprep.subr.mxu0 %v887
    %3543 = vmatpush1.msra.mxu0 %v886
    %3544 = vmatprep.subr.mxu0 %v891
    %3545 = vmatpush1.msra.mxu0 %v890
    %3546 = vmatprep.subr.mxu0 %v895
    %3547 = vmatpush1.msra.mxu0 %v894
    %3548 = vmatprep.subr.mxu0 %v899
    %3549 = vmatpush1.msra.mxu0 %v898
    %3550 = vmatprep.subr.mxu0 %v903
    %3551 = vmatpush1.msra.mxu0 %v902
    %3552 = vmatprep.subr.mxu0 %v907
    %3553 = vmatpush1.msra.mxu0 %v906
    %3554 = vmatprep.subr.mxu0 %v911
    %3555 = vmatpush1.msra.mxu0 %v910
    %3556 = vmatprep.subr.mxu0 %v915
    %3557 = vmatpush1.msra.mxu0 %v914
    %3558 = vmatprep.subr.mxu0 %v919
    %3559 = vmatpush1.msra.mxu0 %v918
    %3560 = vmatprep.subr.mxu0 %v923
    %3561 = vmatpush1.msra.mxu0 %v922
    %3562 = vmatprep.subr.mxu0 %v927
    %3563 = vmatpush1.msra.mxu0 %v926
    %3564 = vmatprep.subr.mxu0 %v931
    %3565 = vmatpush1.msra.mxu0 %v930
    %3566 = vmatprep.mubr.f32.mxu0 %v2966
    %3567 = vmatmul.mubr.f32.gmra.mrb[0].mxu0 %v2809
    %v3568 = vpop.f32.mrb[0].mxu0
    %v3569 = vadd.f32 %v945, %v3568
    %v3570 = vpop.f32.mrb[0].mxu0
    %v3571 = vadd.f32 %v949, %v3570
    %3572 = vdwg.mxu0
    %v3573 = vtanh.pop %v3498
    %v3574 = vtanh.pop %v3500
    %v3575 = vtanh.pop %v3569
    %v3576 = vtanh.pop %v3571
    %v3577 = vmul.f32 %v3573, 0.5
    %v3578 = vadd.f32 %v3577, 0.5
    %v3579 = vmul.f32 %v3574, 0.5
    %v3580 = vadd.f32 %v3579, 0.5
    %v3581 = vmul.f32 %v3576, 0.5
    %v3582 = vadd.f32 %v3581, 0.5
    %v3583 = vmul.f32 %v3580, %v2964
    %v3584 = vmul.f32 %v3578, %v3575
    %v3585 = vadd.f32 %v3583, %v3584
    %v3586 = vtanh.pop %v3585
    %v3587 = vmul.f32 %v3582, %v3586
    %3588 = vmatprep.subr.mxu0 %v1576
    %3589 = vmatpush1.msra.mxu0 %v1575
    %3590 = vmatprep.subr.mxu0 %v1580
    %3591 = vmatpush1.msra.mxu0 %v1579
    %3592 = vmatprep.subr.mxu0 %v1584
    %3593 = vmatpush1.msra.mxu0 %v1583
    %3594 = vmatprep.subr.mxu0 %v1588
    %3595 = vmatpush1.msra.mxu0 %v1587
    %3596 = vmatprep.subr.mxu0 %v1592
    %3597 = vmatpush1.msra.mxu0 %v1591
    %3598 = vmatprep.subr.mxu0 %v1596
    %3599 = vmatpush1.msra.mxu0 %v1595
    %3600 = vmatprep.subr.mxu0 %v1600
    %3601 = vmatpush1.msra.mxu0 %v1599
    %3602 = vmatprep.subr.mxu0 %v1604
    %3603 = vmatpush1.msra.mxu0 %v1603
    %3604 = vmatprep.subr.mxu0 %v1608
    %3605 = vmatpush1.msra.mxu0 %v1607
    %3606 = vmatprep.subr.mxu0 %v1612
    %3607 = vmatpush1.msra.mxu0 %v1611
    %3608 = vmatprep.subr.mxu0 %v1616
    %3609 = vmatpush1.msra.mxu0 %v1615
    %3610 = vmatprep.subr.mxu0 %v1620
    %3611 = vmatpush1.msra.mxu0 %v1619
    %3612 = vmatprep.subr.mxu0 %v1624
    %3613 = vmatpush1.msra.mxu0 %v1623
    %3614 = vmatprep.subr.mxu0 %v1628
    %3615 = vmatpush1.msra.mxu0 %v1627
    %3616 = vmatprep.subr.mxu0 %v1632
    %3617 = vmatpush1.msra.mxu0 %v1631
    %3618 = vmatprep.subr.mxu0 %v1636
    %3619 = vmatpush1.msra.mxu0 %v1635
    %3620 = vmatprep.subr.mxu0 %v1640
    %3621 = vmatpush1.msra.mxu0 %v1639
    %3622 = vmatprep.subr.mxu0 %v1644
    %3623 = vmatpush1.msra.mxu0 %v1643
    %3624 = vmatprep.subr.mxu0 %v1648
    %3625 = vmatpush1.msra.mxu0 %v1647
    %3626 = vmatprep.subr.mxu0 %v1652
    %3627 = vmatpush1.msra.mxu0 %v1651
    %3628 = vmatprep.subr.mxu0 %v1656
    %3629 = vmatpush1.msra.mxu0 %v1655
    %3630 = vmatprep.subr.mxu0 %v1660
    %3631 = vmatpush1.msra.mxu0 %v1659
    %3632 = vmatprep.subr.mxu0 %v1664
    %3633 = vmatpush1.msra.mxu0 %v1663
    %3634 = vmatprep.subr.mxu0 %v1668
    %3635 = vmatpush1.msra.mxu0 %v1667
    %3636 = vmatprep.subr.mxu0 %v1672
    %3637 = vmatpush1.msra.mxu0 %v1671
    %3638 = vmatprep.subr.mxu0 %v1676
    %3639 = vmatpush1.msra.mxu0 %v1675
    %3640 = vmatprep.subr.mxu0 %v1680
    %3641 = vmatpush1.msra.mxu0 %v1679
    %3642 = vmatprep.subr.mxu0 %v1684
    %3643 = vmatpush1.msra.mxu0 %v1683
    %3644 = vmatprep.subr.mxu0 %v1688
    %3645 = vmatpush1.msra.mxu0 %v1687
    %3646 = vmatprep.subr.mxu0 %v1692
    %3647 = vmatpush1.msra.mxu0 %v1691
    %3648 = vmatprep.subr.mxu0 %v1696
    %3649 = vmatpush1.msra.mxu0 %v1695
    %3650 = vmatprep.subr.mxu0 %v1700
    %3651 = vmatpush1.msra.mxu0 %v1699
    %3652 = vmatprep.mubr.f32.mxu0 %v3123
    %3653 = vmatmul.mubr.f32.gmra.mrb[0].mxu0 %v2966
    %v3654 = vpop.f32.mrb[0].mxu0
    %v3655 = vadd.f32 %v1708, %v3654
    %v3656 = vpop.f32.mrb[0].mxu0
    %v3657 = vadd.f32 %v1712, %v3656
    %3658 = vdwg.mxu0
    %3659 = vmatprep.subr.mxu0 %v1578
    %3660 = vmatpush1.msra.mxu0 %v1577
    %3661 = vmatprep.subr.mxu0 %v1582
    %3662 = vmatpush1.msra.mxu0 %v1581
    %3663 = vmatprep.subr.mxu0 %v1586
    %3664 = vmatpush1.msra.mxu0 %v1585
    %3665 = vmatprep.subr.mxu0 %v1590
    %3666 = vmatpush1.msra.mxu0 %v1589
    %3667 = vmatprep.subr.mxu0 %v1594
    %3668 = vmatpush1.msra.mxu0 %v1593
    %3669 = vmatprep.subr.mxu0 %v1598
    %3670 = vmatpush1.msra.mxu0 %v1597
    %3671 = vmatprep.subr.mxu0 %v1602
    %3672 = vmatpush1.msra.mxu0 %v1601
    %3673 = vmatprep.subr.mxu0 %v1606
    %3674 = vmatpush1.msra.mxu0 %v1605
    %3675 = vmatprep.subr.mxu0 %v1610
    %3676 = vmatpush1.msra.mxu0 %v1609
    %3677 = vmatprep.subr.mxu0 %v1614
    %3678 = vmatpush1.msra.mxu0 %v1613
    %3679 = vmatprep.subr.mxu0 %v1618
    %3680 = vmatpush1.msra.mxu0 %v1617
    %3681 = vmatprep.subr.mxu0 %v1622
    %3682 = vmatpush1.msra.mxu0 %v1621
    %3683 = vmatprep.subr.mxu0 %v1626
    %3684 = vmatpush1.msra.mxu0 %v1625
    %3685 = vmatprep.subr.mxu0 %v1630
    %3686 = vmatpush1.msra.mxu0 %v1629
    %3687 = vmatprep.subr.mxu0 %v1634
    %3688 = vmatpush1.msra.mxu0 %v1633
    %3689 = vmatprep.subr.mxu0 %v1638
    %3690 = vmatpush1.msra.mxu0 %v1637
    %3691 = vmatprep.subr.mxu0 %v1642
    %3692 = vmatpush1.msra.mxu0 %v1641
    %3693 = vmatprep.subr.mxu0 %v1646
    %3694 = vmatpush1.msra.mxu0 %v1645
    %3695 = vmatprep.subr.mxu0 %v1650
    %3696 = vmatpush1.msra.mxu0 %v1649
    %3697 = vmatprep.subr.mxu0 %v1654
    %3698 = vmatpush1.msra.mxu0 %v1653
    %3699 = vmatprep.subr.mxu0 %v1658
    %3700 = vmatpush1.msra.mxu0 %v1657
    %3701 = vmatprep.subr.mxu0 %v1662
    %3702 = vmatpush1.msra.mxu0 %v1661
    %3703 = vmatprep.subr.mxu0 %v1666
    %3704 = vmatpush1.msra.mxu0 %v1665
    %3705 = vmatprep.subr.mxu0 %v1670
    %3706 = vmatpush1.msra.mxu0 %v1669
    %3707 = vmatprep.subr.mxu0 %v1674
    %3708 = vmatpush1.msra.mxu0 %v1673
    %3709 = vmatprep.subr.mxu0 %v1678
    %3710 = vmatpush1.msra.mxu0 %v1677
    %3711 = vmatprep.subr.mxu0 %v1682
    %3712 = vmatpush1.msra.mxu0 %v1681
    %3713 = vmatprep.subr.mxu0 %v1686
    %3714 = vmatpush1.msra.mxu0 %v1685
    %3715 = vmatprep.subr.mxu0 %v1690
    %3716 = vmatpush1.msra.mxu0 %v1689
    %3717 = vmatprep.subr.mxu0 %v1694
    %3718 = vmatpush1.msra.mxu0 %v1693
    %3719 = vmatprep.subr.mxu0 %v1698
    %3720 = vmatpush1.msra.mxu0 %v1697
    %3721 = vmatprep.subr.mxu0 %v1702
    %3722 = vmatpush1.msra.mxu0 %v1701
    %3723 = vmatprep.mubr.f32.mxu0 %v3123
    %3724 = vmatmul.mubr.f32.gmra.mrb[0].mxu0 %v2966
    %v3725 = vpop.f32.mrb[0].mxu0
    %v3726 = vadd.f32 %v1716, %v3725
    %v3727 = vpop.f32.mrb[0].mxu0
    %v3728 = vadd.f32 %v1720, %v3727
    %3729 = vdwg.mxu0
    %v3730 = vtanh.pop %v3655
    %v3731 = vtanh.pop %v3657
    %v3732 = vtanh.pop %v3726
    %v3733 = vtanh.pop %v3728
    %v3734 = vmul.f32 %v3730, 0.5
    %v3735 = vadd.f32 %v3734, 0.5
    %v3736 = vmul.f32 %v3731, 0.5
    %v3737 = vadd.f32 %v3736, 0.5
    %v3738 = vmul.f32 %v3733, 0.5
    %v3739 = vadd.f32 %v3738, 0.5
    %v3740 = vmul.f32 %v3737, %v3121
    %v3741 = vmul.f32 %v3735, %v3732
    %v3742 = vadd.f32 %v3740, %v3741
    %v3743 = vtanh.pop %v3742
    %v3744 = vmul.f32 %v3739, %v3743
    %3745 = vrot.lane.b32.xlu0 %v82, 38
    %v3746 = vpop.permute.xlu0 %3745
    %v3747 = vsel %vm113, %v3746, 0
    %3749 = vmatprep.subr.mxu0 %v84
    %3750 = vmatpush1.msra.mxu0 %v83
    %3751 = vmatprep.subr.mxu0 %v122
    %3752 = vmatpush1.msra.mxu0 %v119
    %3753 = vmatprep.subr.mxu0 0.0
    %3754 = vmatpush1.msra.mxu0 0.0
    %3755 = vmatprep.subr.mxu0 0.0
    %3756 = vmatpush1.msra.mxu0 0.0
    %3757 = vmatprep.subr.mxu0 0.0
    %3758 = vmatpush1.msra.mxu0 0.0
    %3759 = vmatprep.subr.mxu0 0.0
    %3760 = vmatpush1.msra.mxu0 0.0
    %3761 = vmatprep.subr.mxu0 0.0
    %3762 = vmatpush1.msra.mxu0 0.0
    %3763 = vmatprep.subr.mxu0 0.0
    %3764 = vmatpush1.msra.mxu0 0.0
    %3765 = vmatprep.subr.mxu0 0.0
    %3766 = vmatpush1.msra.mxu0 0.0
    %3767 = vmatprep.subr.mxu0 0.0
    %3768 = vmatpush1.msra.mxu0 0.0
    %3769 = vmatprep.subr.mxu0 0.0
    %3770 = vmatpush1.msra.mxu0 0.0
    %3771 = vmatprep.subr.mxu0 0.0
    %3772 = vmatpush1.msra.mxu0 0.0
    %3773 = vmatprep.subr.mxu0 0.0
    %3774 = vmatpush1.msra.mxu0 0.0
    %3775 = vmatprep.subr.mxu0 0.0
    %3776 = vmatpush1.msra.mxu0 0.0
    %3777 = vmatprep.subr.mxu0 0.0
    %3778 = vmatpush1.msra.mxu0 0.0
    %3779 = vmatprep.subr.mxu0 0.0
    %3780 = vmatpush1.msra.mxu0 0.0
    %3781 = vmatprep.subr.mxu0 0.0
    %3782 = vmatpush1.msra.mxu0 0.0
    %3783 = vmatprep.subr.mxu0 0.0
    %3784 = vmatpush1.msra.mxu0 0.0
    %3785 = vmatprep.subr.mxu0 0.0
    %3786 = vmatpush1.msra.mxu0 0.0
    %3787 = vmatprep.subr.mxu0 0.0
    %3788 = vmatpush1.msra.mxu0 0.0
    %3789 = vmatprep.subr.mxu0 0.0
    %3790 = vmatpush1.msra.mxu0 0.0
    %3791 = vmatprep.subr.mxu0 0.0
    %3792 = vmatpush1.msra.mxu0 0.0
    %3793 = vmatprep.subr.mxu0 0.0
    %3794 = vmatpush1.msra.mxu0 0.0
    %3795 = vmatprep.subr.mxu0 0.0
    %3796 = vmatpush1.msra.mxu0 0.0
    %3797 = vmatprep.subr.mxu0 0.0
    %3798 = vmatpush1.msra.mxu0 0.0
    %3799 = vmatprep.subr.mxu0 0.0
    %3800 = vmatpush1.msra.mxu0 0.0
    %3801 = vmatprep.subr.mxu0 0.0
    %3802 = vmatpush1.msra.mxu0 0.0
    %3803 = vmatprep.subr.mxu0 0.0
    %3804 = vmatpush1.msra.mxu0 0.0
    %3805 = vmatprep.subr.mxu0 0.0
    %3806 = vmatpush1.msra.mxu0 0.0
    %3807 = vmatprep.subr.mxu0 0.0
    %3808 = vmatpush1.msra.mxu0 0.0
    %3809 = vmatprep.subr.mxu0 0.0
    %3810 = vmatpush1.msra.mxu0 0.0
    %3811 = vmatprep.subr.mxu0 0.0
    %3812 = vmatpush1.msra.mxu0 0.0
    %3813 = vmatprep.mubr.f32.mxu0 0.0
    %3814 = vmatmul.mubr.f32.gmra.mrb[0].mxu0 %v3747
    %v3815 = vpop.f32.mrb[0].mxu0
    %v3816 = vadd.f32 %v96, %v3815
    %v3817 = vpop.f32.mrb[0].mxu0
    %v3818 = vadd.f32 %v100, %v3817
    %3819 = vdwg.mxu0
    %3820 = vmatprep.subr.mxu0 %v86
    %3821 = vmatpush1.msra.mxu0 %v85
    %3822 = vmatprep.subr.mxu0 %v128
    %3823 = vmatpush1.msra.mxu0 %v125
    %3824 = vmatprep.subr.mxu0 0.0
    %3825 = vmatpush1.msra.mxu0 0.0
    %3826 = vmatprep.subr.mxu0 0.0
    %3827 = vmatpush1.msra.mxu0 0.0
    %3828 = vmatprep.subr.mxu0 0.0
    %3829 = vmatpush1.msra.mxu0 0.0
    %3830 = vmatprep.subr.mxu0 0.0
    %3831 = vmatpush1.msra.mxu0 0.0
    %3832 = vmatprep.subr.mxu0 0.0
    %3833 = vmatpush1.msra.mxu0 0.0
    %3834 = vmatprep.subr.mxu0 0.0
    %3835 = vmatpush1.msra.mxu0 0.0
    %3836 = vmatprep.subr.mxu0 0.0
    %3837 = vmatpush1.msra.mxu0 0.0
    %3838 = vmatprep.subr.mxu0 0.0
    %3839 = vmatpush1.msra.mxu0 0.0
    %3840 = vmatprep.subr.mxu0 0.0
    %3841 = vmatpush1.msra.mxu0 0.0
    %3842 = vmatprep.subr.mxu0 0.0
    %3843 = vmatpush1.msra.mxu0 0.0
    %3844 = vmatprep.subr.mxu0 0.0
    %3845 = vmatpush1.msra.mxu0 0.0
    %3846 = vmatprep.subr.mxu0 0.0
    %3847 = vmatpush1.msra.mxu0 0.0
    %3848 = vmatprep.subr.mxu0 0.0
    %3849 = vmatpush1.msra.mxu0 0.0
    %3850 = vmatprep.subr.mxu0 0.0
    %3851 = vmatpush1.msra.mxu0 0.0
    %3852 = vmatprep.subr.mxu0 0.0
    %3853 = vmatpush1.msra.mxu0 0.0
    %3854 = vmatprep.subr.mxu0 0.0
    %3855 = vmatpush1.msra.mxu0 0.0
    %3856 = vmatprep.subr.mxu0 0.0
    %3857 = vmatpush1.msra.mxu0 0.0
    %3858 = vmatprep.subr.mxu0 0.0
    %3859 = vmatpush1.msra.mxu0 0.0
    %3860 = vmatprep.subr.mxu0 0.0
    %3861 = vmatpush1.msra.mxu0 0.0
    %3862 = vmatprep.subr.mxu0 0.0
    %3863 = vmatpush1.msra.mxu0 0.0
    %3864 = vmatprep.subr.mxu0 0.0
    %3865 = vmatpush1.msra.mxu0 0.0
    %3866 = vmatprep.subr.mxu0 0.0
    %3867 = vmatpush1.msra.mxu0 0.0
    %3868 = vmatprep.subr.mxu0 0.0
    %3869 = vmatpush1.msra.mxu0 0.0
    %3870 = vmatprep.subr.mxu0 0.0
    %3871 = vmatpush1.msra.mxu0 0.0
    %3872 = vmatprep.subr.mxu0 0.0
    %3873 = vmatpush1.msra.mxu0 0.0
    %3874 = vmatprep.subr.mxu0 0.0
    %3875 = vmatpush1.msra.mxu0 0.0
    %3876 = vmatprep.subr.mxu0 0.0
    %3877 = vmatpush1.msra.mxu0 0.0
    %3878 = vmatprep.subr.mxu0 0.0
    %3879 = vmatpush1.msra.mxu0 0.0
    %3880 = vmatprep.subr.mxu0 0.0
    %3881 = vmatpush1.msra.mxu0 0.0
    %3882 = vmatprep.subr.mxu0 0.0
    %3883 = vmatpush1.msra.mxu0 0.0
    %3884 = vmatprep.mubr.f32.mxu0 0.0
    %3885 = vmatmul.mubr.f32.gmra.mrb[0].mxu0 %v3747
    %v3886 = vpop.f32.mrb[0].mxu0
    %v3887 = vadd.f32 %v104, %v3886
    %v3888 = vpop.f32.mrb[0].mxu0
    %v3889 = vadd.f32 %v108, %v3888
    %3890 = vdwg.mxu0
    %3891 = vmatprep.subr.mxu0 %v273
    %3892 = vmatpush1.msra.mxu0 %v272
    %3893 = vmatprep.subr.mxu0 %v277
    %3894 = vmatpush1.msra.mxu0 %v276
    %3895 = vmatprep.subr.mxu0 %v281
    %3896 = vmatpush1.msra.mxu0 %v280
    %3897 = vmatprep.subr.mxu0 %v285
    %3898 = vmatpush1.msra.mxu0 %v284
    %3899 = vmatprep.subr.mxu0 %v289
    %3900 = vmatpush1.msra.mxu0 %v288
    %3901 = vmatprep.subr.mxu0 %v293
    %3902 = vmatpush1.msra.mxu0 %v292
    %3903 = vmatprep.subr.mxu0 %v297
    %3904 = vmatpush1.msra.mxu0 %v296
    %3905 = vmatprep.subr.mxu0 %v301
    %3906 = vmatpush1.msra.mxu0 %v300
    %3907 = vmatprep.subr.mxu0 %v305
    %3908 = vmatpush1.msra.mxu0 %v304
    %3909 = vmatprep.subr.mxu0 %v309
    %3910 = vmatpush1.msra.mxu0 %v308
    %3911 = vmatprep.subr.mxu0 %v313
    %3912 = vmatpush1.msra.mxu0 %v312
    %3913 = vmatprep.subr.mxu0 %v317
    %3914 = vmatpush1.msra.mxu0 %v316
    %3915 = vmatprep.subr.mxu0 %v321
    %3916 = vmatpush1.msra.mxu0 %v320
    %3917 = vmatprep.subr.mxu0 %v325
    %3918 = vmatpush1.msra.mxu0 %v324
    %3919 = vmatprep.subr.mxu0 %v329
    %3920 = vmatpush1.msra.mxu0 %v328
    %3921 = vmatprep.subr.mxu0 %v333
    %3922 = vmatpush1.msra.mxu0 %v332
    %3923 = vmatprep.subr.mxu0 0.0
    %3924 = vmatpush1.msra.mxu0 0.0
    %3925 = vmatprep.subr.mxu0 0.0
    %3926 = vmatpush1.msra.mxu0 0.0
    %3927 = vmatprep.subr.mxu0 0.0
    %3928 = vmatpush1.msra.mxu0 0.0
    %3929 = vmatprep.subr.mxu0 0.0
    %3930 = vmatpush1.msra.mxu0 0.0
    %3931 = vmatprep.subr.mxu0 0.0
    %3932 = vmatpush1.msra.mxu0 0.0
    %3933 = vmatprep.subr.mxu0 0.0
    %3934 = vmatpush1.msra.mxu0 0.0
    %3935 = vmatprep.subr.mxu0 0.0
    %3936 = vmatpush1.msra.mxu0 0.0
    %3937 = vmatprep.subr.mxu0 0.0
    %3938 = vmatpush1.msra.mxu0 0.0
    %3939 = vmatprep.subr.mxu0 0.0
    %3940 = vmatpush1.msra.mxu0 0.0
    %3941 = vmatprep.subr.mxu0 0.0
    %3942 = vmatpush1.msra.mxu0 0.0
    %3943 = vmatprep.subr.mxu0 0.0
    %3944 = vmatpush1.msra.mxu0 0.0
    %3945 = vmatprep.subr.mxu0 0.0
    %3946 = vmatpush1.msra.mxu0 0.0
    %3947 = vmatprep.subr.mxu0 0.0
    %3948 = vmatpush1.msra.mxu0 0.0
    %3949 = vmatprep.subr.mxu0 0.0
    %3950 = vmatpush1.msra.mxu0 0.0
    %3951 = vmatprep.subr.mxu0 0.0
    %3952 = vmatpush1.msra.mxu0 0.0
    %3953 = vmatprep.subr.mxu0 0.0
    %3954 = vmatpush1.msra.mxu0 0.0
    %3955 = vmatprep.mubr.f32.mxu0 0.0
    %3956 = vmatmul.mubr.f32.gmra.mrb[0].mxu0 %v3430
    %v3957 = vpop.f32.mrb[0].mxu0
    %v3958 = vadd.f32 0.0, %v3957
    %v3959 = vpop.f32.mrb[0].mxu0
    %v3960 = vadd.f32 0.0, %v3959
    %3961 = vdwg.mxu0
    %3962 = vmatprep.subr.mxu0 %v275
    %3963 = vmatpush1.msra.mxu0 %v274
    %3964 = vmatprep.subr.mxu0 %v279
    %3965 = vmatpush1.msra.mxu0 %v278
    %3966 = vmatprep.subr.mxu0 %v283
    %3967 = vmatpush1.msra.mxu0 %v282
    %3968 = vmatprep.subr.mxu0 %v287
    %3969 = vmatpush1.msra.mxu0 %v286
    %3970 = vmatprep.subr.mxu0 %v291
    %3971 = vmatpush1.msra.mxu0 %v290
    %3972 = vmatprep.subr.mxu0 %v295
    %3973 = vmatpush1.msra.mxu0 %v294
    %3974 = vmatprep.subr.mxu0 %v299
    %3975 = vmatpush1.msra.mxu0 %v298
    %3976 = vmatprep.subr.mxu0 %v303
    %3977 = vmatpush1.msra.mxu0 %v302
    %3978 = vmatprep.subr.mxu0 %v307
    %3979 = vmatpush1.msra.mxu0 %v306
    %3980 = vmatprep.subr.mxu0 %v311
    %3981 = vmatpush1.msra.mxu0 %v310
    %3982 = vmatprep.subr.mxu0 %v315
    %3983 = vmatpush1.msra.mxu0 %v314
    %3984 = vmatprep.subr.mxu0 %v319
    %3985 = vmatpush1.msra.mxu0 %v318
    %3986 = vmatprep.subr.mxu0 %v323
    %3987 = vmatpush1.msra.mxu0 %v322
    %3988 = vmatprep.subr.mxu0 %v327
    %3989 = vmatpush1.msra.mxu0 %v326
    %3990 = vmatprep.subr.mxu0 %v331
    %3991 = vmatpush1.msra.mxu0 %v330
    %3992 = vmatprep.subr.mxu0 %v335
    %3993 = vmatpush1.msra.mxu0 %v334
    %3994 = vmatprep.subr.mxu0 0.0
    %3995 = vmatpush1.msra.mxu0 0.0
    %3996 = vmatprep.subr.mxu0 0.0
    %3997 = vmatpush1.msra.mxu0 0.0
    %3998 = vmatprep.subr.mxu0 0.0
    %3999 = vmatpush1.msra.mxu0 0.0
    %4000 = vmatprep.subr.mxu0 0.0
    %4001 = vmatpush1.msra.mxu0 0.0
    %4002 = vmatprep.subr.mxu0 0.0
    %4003 = vmatpush1.msra.mxu0 0.0
    %4004 = vmatprep.subr.mxu0 0.0
    %4005 = vmatpush1.msra.mxu0 0.0
    %4006 = vmatprep.subr.mxu0 0.0
    %4007 = vmatpush1.msra.mxu0 0.0
    %4008 = vmatprep.subr.mxu0 0.0
    %4009 = vmatpush1.msra.mxu0 0.0
    %4010 = vmatprep.subr.mxu0 0.0
    %4011 = vmatpush1.msra.mxu0 0.0
    %4012 = vmatprep.subr.mxu0 0.0
    %4013 = vmatpush1.msra.mxu0 0.0
    %4014 = vmatprep.subr.mxu0 0.0
    %4015 = vmatpush1.msra.mxu0 0.0
    %4016 = vmatprep.subr.mxu0 0.0
    %4017 = vmatpush1.msra.mxu0 0.0
    %4018 = vmatprep.subr.mxu0 0.0
    %4019 = vmatpush1.msra.mxu0 0.0
    %4020 = vmatprep.subr.mxu0 0.0
    %4021 = vmatpush1.msra.mxu0 0.0
    %4022 = vmatprep.subr.mxu0 0.0
    %4023 = vmatpush1.msra.mxu0 0.0
    %4024 = vmatprep.subr.mxu0 0.0
    %4025 = vmatpush1.msra.mxu0 0.0
    %4026 = vmatprep.mubr.f32.mxu0 0.0
    %4027 = vmatmul.mubr.f32.gmra.mrb[0].mxu0 %v3430
    %v4028 = vpop.f32.mrb[0].mxu0
    %v4029 = vadd.f32 0.0, %v4028
    %v4030 = vpop.f32.mrb[0].mxu0
    %v4031 = vadd.f32 0.0, %v4030
    %4032 = vdwg.mxu0
    %v4033 = vadd.f32 %v3816, %v3958
    %v4034 = vadd.f32 %v3818, %v3960
    %v4035 = vadd.f32 %v3887, %v4029
    %v4036 = vadd.f32 %v3889, %v4031
    %v4037 = vtanh.pop %v4033
    %v4038 = vtanh.pop %v4034
    %v4039 = vtanh.pop %v4035
    %v4040 = vtanh.pop %v4036
    %v4041 = vmul.f32 %v4037, 0.5
    %v4042 = vadd.f32 %v4041, 0.5
    %v4043 = vmul.f32 %v4038, 0.5
    %v4044 = vadd.f32 %v4043, 0.5
    %v4045 = vmul.f32 %v4040, 0.5
    %v4046 = vadd.f32 %v4045, 0.5
    %v4047 = vmul.f32 %v4044, %v3428
    %v4048 = vmul.f32 %v4042, %v4039
    %v4049 = vadd.f32 %v4047, %v4048
    %v4050 = vtanh.pop %v4049
    %v4051 = vmul.f32 %v4046, %v4050
    %4052 = vmatprep.subr.mxu0 %v805
    %4053 = vmatpush1.msra.mxu0 %v804
    %4054 = vmatprep.subr.mxu0 %v809
    %4055 = vmatpush1.msra.mxu0 %v808
    %4056 = vmatprep.subr.mxu0 %v813
    %4057 = vmatpush1.msra.mxu0 %v812
    %4058 = vmatprep.subr.mxu0 %v817
    %4059 = vmatpush1.msra.mxu0 %v816
    %4060 = vmatprep.subr.mxu0 %v821
    %4061 = vmatpush1.msra.mxu0 %v820
    %4062 = vmatprep.subr.mxu0 %v825
    %4063 = vmatpush1.msra.mxu0 %v824
    %4064 = vmatprep.subr.mxu0 %v829
    %4065 = vmatpush1.msra.mxu0 %v828
    %4066 = vmatprep.subr.mxu0 %v833
    %4067 = vmatpush1.msra.mxu0 %v832
    %4068 = vmatprep.subr.mxu0 %v837
    %4069 = vmatpush1.msra.mxu0 %v836
    %4070 = vmatprep.subr.mxu0 %v841
    %4071 = vmatpush1.msra.mxu0 %v840
    %4072 = vmatprep.subr.mxu0 %v845
    %4073 = vmatpush1.msra.mxu0 %v844
    %4074 = vmatprep.subr.mxu0 %v849
    %4075 = vmatpush1.msra.mxu0 %v848
    %4076 = vmatprep.subr.mxu0 %v853
    %4077 = vmatpush1.msra.mxu0 %v852
    %4078 = vmatprep.subr.mxu0 %v857
    %4079 = vmatpush1.msra.mxu0 %v856
    %4080 = vmatprep.subr.mxu0 %v861
    %4081 = vmatpush1.msra.mxu0 %v860
    %4082 = vmatprep.subr.mxu0 %v865
    %4083 = vmatpush1.msra.mxu0 %v864
    %4084 = vmatprep.subr.mxu0 %v869
    %4085 = vmatpush1.msra.mxu0 %v868
    %4086 = vmatprep.subr.mxu0 %v873
    %4087 = vmatpush1.msra.mxu0 %v872
    %4088 = vmatprep.subr.mxu0 %v877
    %4089 = vmatpush1.msra.mxu0 %v876
    %4090 = vmatprep.subr.mxu0 %v881
    %4091 = vmatpush1.msra.mxu0 %v880
    %4092 = vmatprep.subr.mxu0 %v885
    %4093 = vmatpush1.msra.mxu0 %v884
    %4094 = vmatprep.subr.mxu0 %v889
    %4095 = vmatpush1.msra.mxu0 %v888
    %4096 = vmatprep.subr.mxu0 %v893
    %4097 = vmatpush1.msra.mxu0 %v892
    %4098 = vmatprep.subr.mxu0 %v897
    %4099 = vmatpush1.msra.mxu0 %v896
    %4100 = vmatprep.subr.mxu0 %v901
    %4101 = vmatpush1.msra.mxu0 %v900
    %4102 = vmatprep.subr.mxu0 %v905
    %4103 = vmatpush1.msra.mxu0 %v904
    %4104 = vmatprep.subr.mxu0 %v909
    %4105 = vmatpush1.msra.mxu0 %v908
    %4106 = vmatprep.subr.mxu0 %v913
    %4107 = vmatpush1.msra.mxu0 %v912
    %4108 = vmatprep.subr.mxu0 %v917
    %4109 = vmatpush1.msra.mxu0 %v916
    %4110 = vmatprep.subr.mxu0 %v921
    %4111 = vmatpush1.msra.mxu0 %v920
    %4112 = vmatprep.subr.mxu0 %v925
    %4113 = vmatpush1.msra.mxu0 %v924
    %4114 = vmatprep.subr.mxu0 %v929
    %4115 = vmatpush1.msra.mxu0 %v928
    %4116 = vmatprep.mubr.f32.mxu0 %v3587
    %4117 = vmatmul.mubr.f32.gmra.mrb[0].mxu0 %v3430
    %v4118 = vpop.f32.mrb[0].mxu0
    %v4119 = vadd.f32 %v937, %v4118
    %v4120 = vpop.f32.mrb[0].mxu0
    %v4121 = vadd.f32 %v941, %v4120
    %4122 = vdwg.mxu0
    %4123 = vmatprep.subr.mxu0 %v807
    %4124 = vmatpush1.msra.mxu0 %v806
    %4125 = vmatprep.subr.mxu0 %v811
    %4126 = vmatpush1.msra.mxu0 %v810
    %4127 = vmatprep.subr.mxu0 %v815
    %4128 = vmatpush1.msra.mxu0 %v814
    %4129 = vmatprep.subr.mxu0 %v819
    %4130 = vmatpush1.msra.mxu0 %v818
    %4131 = vmatprep.subr.mxu0 %v823
    %4132 = vmatpush1.msra.mxu0 %v822
    %4133 = vmatprep.subr.mxu0 %v827
    %4134 = vmatpush1.msra.mxu0 %v826
    %4135 = vmatprep.subr.mxu0 %v831
    %4136 = vmatpush1.msra.mxu0 %v830
    %4137 = vmatprep.subr.mxu0 %v835
    %4138 = vmatpush1.msra.mxu0 %v834
    %4139 = vmatprep.subr.mxu0 %v839
    %4140 = vmatpush1.msra.mxu0 %v838
    %4141 = vmatprep.subr.mxu0 %v843
    %4142 = vmatpush1.msra.mxu0 %v842
    %4143 = vmatprep.subr.mxu0 %v847
    %4144 = vmatpush1.msra.mxu0 %v846
    %4145 = vmatprep.subr.mxu0 %v851
    %4146 = vmatpush1.msra.mxu0 %v850
    %4147 = vmatprep.subr.mxu0 %v855
    %4148 = vmatpush1.msra.mxu0 %v854
    %4149 = vmatprep.subr.mxu0 %v859
    %4150 = vmatpush1.msra.mxu0 %v858
    %4151 = vmatprep.subr.mxu0 %v863
    %4152 = vmatpush1.msra.mxu0 %v862
    %4153 = vmatprep.subr.mxu0 %v867
    %4154 = vmatpush1.msra.mxu0 %v866
    %4155 = vmatprep.subr.mxu0 %v871
    %4156 = vmatpush1.msra.mxu0 %v870
    %4157 = vmatprep.subr.mxu0 %v875
    %4158 = vmatpush1.msra.mxu0 %v874
    %4159 = vmatprep.subr.mxu0 %v879
    %4160 = vmatpush1.msra.mxu0 %v878
    %4161 = vmatprep.subr.mxu0 %v883
    %4162 = vmatpush1.msra.mxu0 %v882
    %4163 = vmatprep.subr.mxu0 %v887
    %4164 = vmatpush1.msra.mxu0 %v886
    %4165 = vmatprep.subr.mxu0 %v891
    %4166 = vmatpush1.msra.mxu0 %v890
    %4167 = vmatprep.subr.mxu0 %v895
    %4168 = vmatpush1.msra.mxu0 %v894
    %4169 = vmatprep.subr.mxu0 %v899
    %4170 = vmatpush1.msra.mxu0 %v898
    %4171 = vmatprep.subr.mxu0 %v903
    %4172 = vmatpush1.msra.mxu0 %v902
    %4173 = vmatprep.subr.mxu0 %v907
    %4174 = vmatpush1.msra.mxu0 %v906
    %4175 = vmatprep.subr.mxu0 %v911
    %4176 = vmatpush1.msra.mxu0 %v910
    %4177 = vmatprep.subr.mxu0 %v915
    %4178 = vmatpush1.msra.mxu0 %v914
    %4179 = vmatprep.subr.mxu0 %v919
    %4180 = vmatpush1.msra.mxu0 %v918
    %4181 = vmatprep.subr.mxu0 %v923
    %4182 = vmatpush1.msra.mxu0 %v922
    %4183 = vmatprep.subr.mxu0 %v927
    %4184 = vmatpush1.msra.mxu0 %v926
    %4185 = vmatprep.subr.mxu0 %v931
    %4186 = vmatpush1.msra.mxu0 %v930
    %4187 = vmatprep.mubr.f32.mxu0 %v3587
    %4188 = vmatmul.mubr.f32.gmra.mrb[0].mxu0 %v3430
    %v4189 = vpop.f32.mrb[0].mxu0
    %v4190 = vadd.f32 %v945, %v4189
    %v4191 = vpop.f32.mrb[0].mxu0
    %v4192 = vadd.f32 %v949, %v4191
    %4193 = vdwg.mxu0
    %v4194 = vtanh.pop %v4119
    %v4195 = vtanh.pop %v4121
    %v4196 = vtanh.pop %v4190
    %v4197 = vtanh.pop %v4192
    %v4198 = vmul.f32 %v4194, 0.5
    %v4199 = vadd.f32 %v4198, 0.5
    %v4200 = vmul.f32 %v4195, 0.5
    %v4201 = vadd.f32 %v4200, 0.5
    %v4202 = vmul.f32 %v4197, 0.5
    %v4203 = vadd.f32 %v4202, 0.5
    %v4204 = vmul.f32 %v4201, %v3585
    %v4205 = vmul.f32 %v4199, %v4196
    %v4206 = vadd.f32 %v4204, %v4205
    %v4207 = vtanh.pop %v4206
    %v4208 = vmul.f32 %v4203, %v4207
    %4209 = vmatprep.subr.mxu0 %v1576
    %4210 = vmatpush1.msra.mxu0 %v1575
    %4211 = vmatprep.subr.mxu0 %v1580
    %4212 = vmatpush1.msra.mxu0 %v1579
    %4213 = vmatprep.subr.mxu0 %v1584
    %4214 = vmatpush1.msra.mxu0 %v1583
    %4215 = vmatprep.subr.mxu0 %v1588
    %4216 = vmatpush1.msra.mxu0 %v1587
    %4217 = vmatprep.subr.mxu0 %v1592
    %4218 = vmatpush1.msra.mxu0 %v1591
    %4219 = vmatprep.subr.mxu0 %v1596
    %4220 = vmatpush1.msra.mxu0 %v1595
    %4221 = vmatprep.subr.mxu0 %v1600
    %4222 = vmatpush1.msra.mxu0 %v1599
    %4223 = vmatprep.subr.mxu0 %v1604
    %4224 = vmatpush1.msra.mxu0 %v1603
    %4225 = vmatprep.subr.mxu0 %v1608
    %4226 = vmatpush1.msra.mxu0 %v1607
    %4227 = vmatprep.subr.mxu0 %v1612
    %4228 = vmatpush1.msra.mxu0 %v1611
    %4229 = vmatprep.subr.mxu0 %v1616
    %4230 = vmatpush1.msra.mxu0 %v1615
    %4231 = vmatprep.subr.mxu0 %v1620
    %4232 = vmatpush1.msra.mxu0 %v1619
    %4233 = vmatprep.subr.mxu0 %v1624
    %4234 = vmatpush1.msra.mxu0 %v1623
    %4235 = vmatprep.subr.mxu0 %v1628
    %4236 = vmatpush1.msra.mxu0 %v1627
    %4237 = vmatprep.subr.mxu0 %v1632
    %4238 = vmatpush1.msra.mxu0 %v1631
    %4239 = vmatprep.subr.mxu0 %v1636
    %4240 = vmatpush1.msra.mxu0 %v1635
    %4241 = vmatprep.subr.mxu0 %v1640
    %4242 = vmatpush1.msra.mxu0 %v1639
    %4243 = vmatprep.subr.mxu0 %v1644
    %4244 = vmatpush1.msra.mxu0 %v1643
    %4245 = vmatprep.subr.mxu0 %v1648
    %4246 = vmatpush1.msra.mxu0 %v1647
    %4247 = vmatprep.subr.mxu0 %v1652
    %4248 = vmatpush1.msra.mxu0 %v1651
    %4249 = vmatprep.subr.mxu0 %v1656
    %4250 = vmatpush1.msra.mxu0 %v1655
    %4251 = vmatprep.subr.mxu0 %v1660
    %4252 = vmatpush1.msra.mxu0 %v1659
    %4253 = vmatprep.subr.mxu0 %v1664
    %4254 = vmatpush1.msra.mxu0 %v1663
    %4255 = vmatprep.subr.mxu0 %v1668
    %4256 = vmatpush1.msra.mxu0 %v1667
    %4257 = vmatprep.subr.mxu0 %v1672
    %4258 = vmatpush1.msra.mxu0 %v1671
    %4259 = vmatprep.subr.mxu0 %v1676
    %4260 = vmatpush1.msra.mxu0 %v1675
    %4261 = vmatprep.subr.mxu0 %v1680
    %4262 = vmatpush1.msra.mxu0 %v1679
    %4263 = vmatprep.subr.mxu0 %v1684
    %4264 = vmatpush1.msra.mxu0 %v1683
    %4265 = vmatprep.subr.mxu0 %v1688
    %4266 = vmatpush1.msra.mxu0 %v1687
    %4267 = vmatprep.subr.mxu0 %v1692
    %4268 = vmatpush1.msra.mxu0 %v1691
    %4269 = vmatprep.subr.mxu0 %v1696
    %4270 = vmatpush1.msra.mxu0 %v1695
    %4271 = vmatprep.subr.mxu0 %v1700
    %4272 = vmatpush1.msra.mxu0 %v1699
    %4273 = vmatprep.mubr.f32.mxu0 %v3744
    %4274 = vmatmul.mubr.f32.gmra.mrb[0].mxu0 %v3587
    %v4275 = vpop.f32.mrb[0].mxu0
    %v4276 = vadd.f32 %v1708, %v4275
    %v4277 = vpop.f32.mrb[0].mxu0
    %v4278 = vadd.f32 %v1712, %v4277
    %4279 = vdwg.mxu0
    %4280 = vmatprep.subr.mxu0 %v1578
    %4281 = vmatpush1.msra.mxu0 %v1577
    %4282 = vmatprep.subr.mxu0 %v1582
    %4283 = vmatpush1.msra.mxu0 %v1581
    %4284 = vmatprep.subr.mxu0 %v1586
    %4285 = vmatpush1.msra.mxu0 %v1585
    %4286 = vmatprep.subr.mxu0 %v1590
    %4287 = vmatpush1.msra.mxu0 %v1589
    %4288 = vmatprep.subr.mxu0 %v1594
    %4289 = vmatpush1.msra.mxu0 %v1593
    %4290 = vmatprep.subr.mxu0 %v1598
    %4291 = vmatpush1.msra.mxu0 %v1597
    %4292 = vmatprep.subr.mxu0 %v1602
    %4293 = vmatpush1.msra.mxu0 %v1601
    %4294 = vmatprep.subr.mxu0 %v1606
    %4295 = vmatpush1.msra.mxu0 %v1605
    %4296 = vmatprep.subr.mxu0 %v1610
    %4297 = vmatpush1.msra.mxu0 %v1609
    %4298 = vmatprep.subr.mxu0 %v1614
    %4299 = vmatpush1.msra.mxu0 %v1613
    %4300 = vmatprep.subr.mxu0 %v1618
    %4301 = vmatpush1.msra.mxu0 %v1617
    %4302 = vmatprep.subr.mxu0 %v1622
    %4303 = vmatpush1.msra.mxu0 %v1621
    %4304 = vmatprep.subr.mxu0 %v1626
    %4305 = vmatpush1.msra.mxu0 %v1625
    %4306 = vmatprep.subr.mxu0 %v1630
    %4307 = vmatpush1.msra.mxu0 %v1629
    %4308 = vmatprep.subr.mxu0 %v1634
    %4309 = vmatpush1.msra.mxu0 %v1633
    %4310 = vmatprep.subr.mxu0 %v1638
    %4311 = vmatpush1.msra.mxu0 %v1637
    %4312 = vmatprep.subr.mxu0 %v1642
    %4313 = vmatpush1.msra.mxu0 %v1641
    %4314 = vmatprep.subr.mxu0 %v1646
    %4315 = vmatpush1.msra.mxu0 %v1645
    %4316 = vmatprep.subr.mxu0 %v1650
    %4317 = vmatpush1.msra.mxu0 %v1649
    %4318 = vmatprep.subr.mxu0 %v1654
    %4319 = vmatpush1.msra.mxu0 %v1653
    %4320 = vmatprep.subr.mxu0 %v1658
    %4321 = vmatpush1.msra.mxu0 %v1657
    %4322 = vmatprep.subr.mxu0 %v1662
    %4323 = vmatpush1.msra.mxu0 %v1661
    %4324 = vmatprep.subr.mxu0 %v1666
    %4325 = vmatpush1.msra.mxu0 %v1665
    %4326 = vmatprep.subr.mxu0 %v1670
    %4327 = vmatpush1.msra.mxu0 %v1669
    %4328 = vmatprep.subr.mxu0 %v1674
    %4329 = vmatpush1.msra.mxu0 %v1673
    %4330 = vmatprep.subr.mxu0 %v1678
    %4331 = vmatpush1.msra.mxu0 %v1677
    %4332 = vmatprep.subr.mxu0 %v1682
    %4333 = vmatpush1.msra.mxu0 %v1681
    %4334 = vmatprep.subr.mxu0 %v1686
    %4335 = vmatpush1.msra.mxu0 %v1685
    %4336 = vmatprep.subr.mxu0 %v1690
    %4337 = vmatpush1.msra.mxu0 %v1689
    %4338 = vmatprep.subr.mxu0 %v1694
    %4339 = vmatpush1.msra.mxu0 %v1693
    %4340 = vmatprep.subr.mxu0 %v1698
    %4341 = vmatpush1.msra.mxu0 %v1697
    %4342 = vmatprep.subr.mxu0 %v1702
    %4343 = vmatpush1.msra.mxu0 %v1701
    %4344 = vmatprep.mubr.f32.mxu0 %v3744
    %4345 = vmatmul.mubr.f32.gmra.mrb[0].mxu0 %v3587
    %v4346 = vpop.f32.mrb[0].mxu0
    %v4347 = vadd.f32 %v1716, %v4346
    %v4348 = vpop.f32.mrb[0].mxu0
    %v4349 = vadd.f32 %v1720, %v4348
    %4350 = vdwg.mxu0
    %v4351 = vtanh.pop %v4276
    %v4352 = vtanh.pop %v4278
    %v4353 = vtanh.pop %v4347
    %v4354 = vtanh.pop %v4349
    %v4355 = vmul.f32 %v4351, 0.5
    %v4356 = vadd.f32 %v4355, 0.5
    %v4357 = vmul.f32 %v4352, 0.5
    %v4358 = vadd.f32 %v4357, 0.5
    %v4359 = vmul.f32 %v4354, 0.5
    %v4360 = vadd.f32 %v4359, 0.5
    %v4361 = vmul.f32 %v4358, %v3742
    %v4362 = vmul.f32 %v4356, %v4353
    %v4363 = vadd.f32 %v4361, %v4362
    %v4364 = vtanh.pop %v4363
    %v4365 = vmul.f32 %v4360, %v4364
    %4366 = vrot.lane.b32.xlu0 %v82, 23
    %v4367 = vpop.permute.xlu0 %4366
    %v4368 = vsel %vm113, %v4367, 0
    %4370 = vmatprep.subr.mxu0 %v84
    %4371 = vmatpush1.msra.mxu0 %v83
    %4372 = vmatprep.subr.mxu0 %v122
    %4373 = vmatpush1.msra.mxu0 %v119
    %4374 = vmatprep.subr.mxu0 0.0
    %4375 = vmatpush1.msra.mxu0 0.0
    %4376 = vmatprep.subr.mxu0 0.0
    %4377 = vmatpush1.msra.mxu0 0.0
    %4378 = vmatprep.subr.mxu0 0.0
    %4379 = vmatpush1.msra.mxu0 0.0
    %4380 = vmatprep.subr.mxu0 0.0
    %4381 = vmatpush1.msra.mxu0 0.0
    %4382 = vmatprep.subr.mxu0 0.0
    %4383 = vmatpush1.msra.mxu0 0.0
    %4384 = vmatprep.subr.mxu0 0.0
    %4385 = vmatpush1.msra.mxu0 0.0
    %4386 = vmatprep.subr.mxu0 0.0
    %4387 = vmatpush1.msra.mxu0 0.0
    %4388 = vmatprep.subr.mxu0 0.0
    %4389 = vmatpush1.msra.mxu0 0.0
    %4390 = vmatprep.subr.mxu0 0.0
    %4391 = vmatpush1.msra.mxu0 0.0
    %4392 = vmatprep.subr.mxu0 0.0
    %4393 = vmatpush1.msra.mxu0 0.0
    %4394 = vmatprep.subr.mxu0 0.0
    %4395 = vmatpush1.msra.mxu0 0.0
    %4396 = vmatprep.subr.mxu0 0.0
    %4397 = vmatpush1.msra.mxu0 0.0
    %4398 = vmatprep.subr.mxu0 0.0
    %4399 = vmatpush1.msra.mxu0 0.0
    %4400 = vmatprep.subr.mxu0 0.0
    %4401 = vmatpush1.msra.mxu0 0.0
    %4402 = vmatprep.subr.mxu0 0.0
    %4403 = vmatpush1.msra.mxu0 0.0
    %4404 = vmatprep.subr.mxu0 0.0
    %4405 = vmatpush1.msra.mxu0 0.0
    %4406 = vmatprep.subr.mxu0 0.0
    %4407 = vmatpush1.msra.mxu0 0.0
    %4408 = vmatprep.subr.mxu0 0.0
    %4409 = vmatpush1.msra.mxu0 0.0
    %4410 = vmatprep.subr.mxu0 0.0
    %4411 = vmatpush1.msra.mxu0 0.0
    %4412 = vmatprep.subr.mxu0 0.0
    %4413 = vmatpush1.msra.mxu0 0.0
    %4414 = vmatprep.subr.mxu0 0.0
    %4415 = vmatpush1.msra.mxu0 0.0
    %4416 = vmatprep.subr.mxu0 0.0
    %4417 = vmatpush1.msra.mxu0 0.0
    %4418 = vmatprep.subr.mxu0 0.0
    %4419 = vmatpush1.msra.mxu0 0.0
    %4420 = vmatprep.subr.mxu0 0.0
    %4421 = vmatpush1.msra.mxu0 0.0
    %4422 = vmatprep.subr.mxu0 0.0
    %4423 = vmatpush1.msra.mxu0 0.0
    %4424 = vmatprep.subr.mxu0 0.0
    %4425 = vmatpush1.msra.mxu0 0.0
    %4426 = vmatprep.subr.mxu0 0.0
    %4427 = vmatpush1.msra.mxu0 0.0
    %4428 = vmatprep.subr.mxu0 0.0
    %4429 = vmatpush1.msra.mxu0 0.0
    %4430 = vmatprep.subr.mxu0 0.0
    %4431 = vmatpush1.msra.mxu0 0.0
    %4432 = vmatprep.subr.mxu0 0.0
    %4433 = vmatpush1.msra.mxu0 0.0
    %4434 = vmatprep.mubr.f32.mxu0 0.0
    %4435 = vmatmul.mubr.f32.gmra.mrb[0].mxu0 %v4368
    %v4436 = vpop.f32.mrb[0].mxu0
    %v4437 = vadd.f32 %v96, %v4436
    %v4438 = vpop.f32.mrb[0].mxu0
    %v4439 = vadd.f32 %v100, %v4438
    %4440 = vdwg.mxu0
    %4441 = vmatprep.subr.mxu0 %v86
    %4442 = vmatpush1.msra.mxu0 %v85
    %4443 = vmatprep.subr.mxu0 %v128
    %4444 = vmatpush1.msra.mxu0 %v125
    %4445 = vmatprep.subr.mxu0 0.0
    %4446 = vmatpush1.msra.mxu0 0.0
    %4447 = vmatprep.subr.mxu0 0.0
    %4448 = vmatpush1.msra.mxu0 0.0
    %4449 = vmatprep.subr.mxu0 0.0
    %4450 = vmatpush1.msra.mxu0 0.0
    %4451 = vmatprep.subr.mxu0 0.0
    %4452 = vmatpush1.msra.mxu0 0.0
    %4453 = vmatprep.subr.mxu0 0.0
    %4454 = vmatpush1.msra.mxu0 0.0
    %4455 = vmatprep.subr.mxu0 0.0
    %4456 = vmatpush1.msra.mxu0 0.0
    %4457 = vmatprep.subr.mxu0 0.0
    %4458 = vmatpush1.msra.mxu0 0.0
    %4459 = vmatprep.subr.mxu0 0.0
    %4460 = vmatpush1.msra.mxu0 0.0
    %4461 = vmatprep.subr.mxu0 0.0
    %4462 = vmatpush1.msra.mxu0 0.0
    %4463 = vmatprep.subr.mxu0 0.0
    %4464 = vmatpush1.msra.mxu0 0.0
    %4465 = vmatprep.subr.mxu0 0.0
    %4466 = vmatpush1.msra.mxu0 0.0
    %4467 = vmatprep.subr.mxu0 0.0
    %4468 = vmatpush1.msra.mxu0 0.0
    %4469 = vmatprep.subr.mxu0 0.0
    %4470 = vmatpush1.msra.mxu0 0.0
    %4471 = vmatprep.subr.mxu0 0.0
    %4472 = vmatpush1.msra.mxu0 0.0
    %4473 = vmatprep.subr.mxu0 0.0
    %4474 = vmatpush1.msra.mxu0 0.0
    %4475 = vmatprep.subr.mxu0 0.0
    %4476 = vmatpush1.msra.mxu0 0.0
    %4477 = vmatprep.subr.mxu0 0.0
    %4478 = vmatpush1.msra.mxu0 0.0
    %4479 = vmatprep.subr.mxu0 0.0
    %4480 = vmatpush1.msra.mxu0 0.0
    %4481 = vmatprep.subr.mxu0 0.0
    %4482 = vmatpush1.msra.mxu0 0.0
    %4483 = vmatprep.subr.mxu0 0.0
    %4484 = vmatpush1.msra.mxu0 0.0
    %4485 = vmatprep.subr.mxu0 0.0
    %4486 = vmatpush1.msra.mxu0 0.0
    %4487 = vmatprep.subr.mxu0 0.0
    %4488 = vmatpush1.msra.mxu0 0.0
    %4489 = vmatprep.subr.mxu0 0.0
    %4490 = vmatpush1.msra.mxu0 0.0
    %4491 = vmatprep.subr.mxu0 0.0
    %4492 = vmatpush1.msra.mxu0 0.0
    %4493 = vmatprep.subr.mxu0 0.0
    %4494 = vmatpush1.msra.mxu0 0.0
    %4495 = vmatprep.subr.mxu0 0.0
    %4496 = vmatpush1.msra.mxu0 0.0
    %4497 = vmatprep.subr.mxu0 0.0
    %4498 = vmatpush1.msra.mxu0 0.0
    %4499 = vmatprep.subr.mxu0 0.0
    %4500 = vmatpush1.msra.mxu0 0.0
    %4501 = vmatprep.subr.mxu0 0.0
    %4502 = vmatpush1.msra.mxu0 0.0
    %4503 = vmatprep.subr.mxu0 0.0
    %4504 = vmatpush1.msra.mxu0 0.0
    %4505 = vmatprep.mubr.f32.mxu0 0.0
    %4506 = vmatmul.mubr.f32.gmra.mrb[0].mxu0 %v4368
    %v4507 = vpop.f32.mrb[0].mxu0
    %v4508 = vadd.f32 %v104, %v4507
    %v4509 = vpop.f32.mrb[0].mxu0
    %v4510 = vadd.f32 %v108, %v4509
    %4511 = vdwg.mxu0
    %4512 = vmatprep.subr.mxu0 %v273
    %4513 = vmatpush1.msra.mxu0 %v272
    %4514 = vmatprep.subr.mxu0 %v277
    %4515 = vmatpush1.msra.mxu0 %v276
    %4516 = vmatprep.subr.mxu0 %v281
    %4517 = vmatpush1.msra.mxu0 %v280
    %4518 = vmatprep.subr.mxu0 %v285
    %4519 = vmatpush1.msra.mxu0 %v284
    %4520 = vmatprep.subr.mxu0 %v289
    %4521 = vmatpush1.msra.mxu0 %v288
    %4522 = vmatprep.subr.mxu0 %v293
    %4523 = vmatpush1.msra.mxu0 %v292
    %4524 = vmatprep.subr.mxu0 %v297
    %4525 = vmatpush1.msra.mxu0 %v296
    %4526 = vmatprep.subr.mxu0 %v301
    %4527 = vmatpush1.msra.mxu0 %v300
    %4528 = vmatprep.subr.mxu0 %v305
    %4529 = vmatpush1.msra.mxu0 %v304
    %4530 = vmatprep.subr.mxu0 %v309
    %4531 = vmatpush1.msra.mxu0 %v308
    %4532 = vmatprep.subr.mxu0 %v313
    %4533 = vmatpush1.msra.mxu0 %v312
    %4534 = vmatprep.subr.mxu0 %v317
    %4535 = vmatpush1.msra.mxu0 %v316
    %4536 = vmatprep.subr.mxu0 %v321
    %4537 = vmatpush1.msra.mxu0 %v320
    %4538 = vmatprep.subr.mxu0 %v325
    %4539 = vmatpush1.msra.mxu0 %v324
    %4540 = vmatprep.subr.mxu0 %v329
    %4541 = vmatpush1.msra.mxu0 %v328
    %4542 = vmatprep.subr.mxu0 %v333
    %4543 = vmatpush1.msra.mxu0 %v332
    %4544 = vmatprep.subr.mxu0 0.0
    %4545 = vmatpush1.msra.mxu0 0.0
    %4546 = vmatprep.subr.mxu0 0.0
    %4547 = vmatpush1.msra.mxu0 0.0
    %4548 = vmatprep.subr.mxu0 0.0
    %4549 = vmatpush1.msra.mxu0 0.0
    %4550 = vmatprep.subr.mxu0 0.0
    %4551 = vmatpush1.msra.mxu0 0.0
    %4552 = vmatprep.subr.mxu0 0.0
    %4553 = vmatpush1.msra.mxu0 0.0
    %4554 = vmatprep.subr.mxu0 0.0
    %4555 = vmatpush1.msra.mxu0 0.0
    %4556 = vmatprep.subr.mxu0 0.0
    %4557 = vmatpush1.msra.mxu0 0.0
    %4558 = vmatprep.subr.mxu0 0.0
    %4559 = vmatpush1.msra.mxu0 0.0
    %4560 = vmatprep.subr.mxu0 0.0
    %4561 = vmatpush1.msra.mxu0 0.0
    %4562 = vmatprep.subr.mxu0 0.0
    %4563 = vmatpush1.msra.mxu0 0.0
    %4564 = vmatprep.subr.mxu0 0.0
    %4565 = vmatpush1.msra.mxu0 0.0
    %4566 = vmatprep.subr.mxu0 0.0
    %4567 = vmatpush1.msra.mxu0 0.0
    %4568 = vmatprep.subr.mxu0 0.0
    %4569 = vmatpush1.msra.mxu0 0.0
    %4570 = vmatprep.subr.mxu0 0.0
    %4571 = vmatpush1.msra.mxu0 0.0
    %4572 = vmatprep.subr.mxu0 0.0
    %4573 = vmatpush1.msra.mxu0 0.0
    %4574 = vmatprep.subr.mxu0 0.0
    %4575 = vmatpush1.msra.mxu0 0.0
    %4576 = vmatprep.mubr.f32.mxu0 0.0
    %4577 = vmatmul.mubr.f32.gmra.mrb[0].mxu0 %v4051
    %v4578 = vpop.f32.mrb[0].mxu0
    %v4579 = vadd.f32 0.0, %v4578
    %v4580 = vpop.f32.mrb[0].mxu0
    %v4581 = vadd.f32 0.0, %v4580
    %4582 = vdwg.mxu0
    %4583 = vmatprep.subr.mxu0 %v275
    %4584 = vmatpush1.msra.mxu0 %v274
    %4585 = vmatprep.subr.mxu0 %v279
    %4586 = vmatpush1.msra.mxu0 %v278
    %4587 = vmatprep.subr.mxu0 %v283
    %4588 = vmatpush1.msra.mxu0 %v282
    %4589 = vmatprep.subr.mxu0 %v287
    %4590 = vmatpush1.msra.mxu0 %v286
    %4591 = vmatprep.subr.mxu0 %v291
    %4592 = vmatpush1.msra.mxu0 %v290
    %4593 = vmatprep.subr.mxu0 %v295
    %4594 = vmatpush1.msra.mxu0 %v294
    %4595 = vmatprep.subr.mxu0 %v299
    %4596 = vmatpush1.msra.mxu0 %v298
    %4597 = vmatprep.subr.mxu0 %v303
    %4598 = vmatpush1.msra.mxu0 %v302
    %4599 = vmatprep.subr.mxu0 %v307
    %4600 = vmatpush1.msra.mxu0 %v306
    %4601 = vmatprep.subr.mxu0 %v311
    %4602 = vmatpush1.msra.mxu0 %v310
    %4603 = vmatprep.subr.mxu0 %v315
    %4604 = vmatpush1.msra.mxu0 %v314
    %4605 = vmatprep.subr.mxu0 %v319
    %4606 = vmatpush1.msra.mxu0 %v318
    %4607 = vmatprep.subr.mxu0 %v323
    %4608 = vmatpush1.msra.mxu0 %v322
    %4609 = vmatprep.subr.mxu0 %v327
    %4610 = vmatpush1.msra.mxu0 %v326
    %4611 = vmatprep.subr.mxu0 %v331
    %4612 = vmatpush1.msra.mxu0 %v330
    %4613 = vmatprep.subr.mxu0 %v335
    %4614 = vmatpush1.msra.mxu0 %v334
    %4615 = vmatprep.subr.mxu0 0.0
    %4616 = vmatpush1.msra.mxu0 0.0
    %4617 = vmatprep.subr.mxu0 0.0
    %4618 = vmatpush1.msra.mxu0 0.0
    %4619 = vmatprep.subr.mxu0 0.0
    %4620 = vmatpush1.msra.mxu0 0.0
    %4621 = vmatprep.subr.mxu0 0.0
    %4622 = vmatpush1.msra.mxu0 0.0
    %4623 = vmatprep.subr.mxu0 0.0
    %4624 = vmatpush1.msra.mxu0 0.0
    %4625 = vmatprep.subr.mxu0 0.0
    %4626 = vmatpush1.msra.mxu0 0.0
    %4627 = vmatprep.subr.mxu0 0.0
    %4628 = vmatpush1.msra.mxu0 0.0
    %4629 = vmatprep.subr.mxu0 0.0
    %4630 = vmatpush1.msra.mxu0 0.0
    %4631 = vmatprep.subr.mxu0 0.0
    %4632 = vmatpush1.msra.mxu0 0.0
    %4633 = vmatprep.subr.mxu0 0.0
    %4634 = vmatpush1.msra.mxu0 0.0
    %4635 = vmatprep.subr.mxu0 0.0
    %4636 = vmatpush1.msra.mxu0 0.0
    %4637 = vmatprep.subr.mxu0 0.0
    %4638 = vmatpush1.msra.mxu0 0.0
    %4639 = vmatprep.subr.mxu0 0.0
    %4640 = vmatpush1.msra.mxu0 0.0
    %4641 = vmatprep.subr.mxu0 0.0
    %4642 = vmatpush1.msra.mxu0 0.0
    %4643 = vmatprep.subr.mxu0 0.0
    %4644 = vmatpush1.msra.mxu0 0.0
    %4645 = vmatprep.subr.mxu0 0.0
    %4646 = vmatpush1.msra.mxu0 0.0
    %4647 = vmatprep.mubr.f32.mxu0 0.0
    %4648 = vmatmul.mubr.f32.gmra.mrb[0].mxu0 %v4051
    %v4649 = vpop.f32.mrb[0].mxu0
    %v4650 = vadd.f32 0.0, %v4649
    %v4651 = vpop.f32.mrb[0].mxu0
    %v4652 = vadd.f32 0.0, %v4651
    %4653 = vdwg.mxu0
    %v4654 = vadd.f32 %v4437, %v4579
    %v4655 = vadd.f32 %v4439, %v4581
    %v4656 = vadd.f32 %v4508, %v4650
    %v4657 = vadd.f32 %v4510, %v4652
    %v4658 = vtanh.pop %v4654
    %v4659 = vtanh.pop %v4655
    %v4660 = vtanh.pop %v4656
    %v4661 = vtanh.pop %v4657
    %v4662 = vmul.f32 %v4658, 0.5
    %v4663 = vadd.f32 %v4662, 0.5
    %v4664 = vmul.f32 %v4659, 0.5
    %v4665 = vadd.f32 %v4664, 0.5
    %v4666 = vmul.f32 %v4661, 0.5
    %v4667 = vadd.f32 %v4666, 0.5
    %v4668 = vmul.f32 %v4665, %v4049
    %v4669 = vmul.f32 %v4663, %v4660
    %v4670 = vadd.f32 %v4668, %v4669
    %v4671 = vtanh.pop %v4670
    %v4672 = vmul.f32 %v4667, %v4671
    %4673 = vmatprep.subr.mxu0 %v805
    %4674 = vmatpush1.msra.mxu0 %v804
    %4675 = vmatprep.subr.mxu0 %v809
    %4676 = vmatpush1.msra.mxu0 %v808
    %4677 = vmatprep.subr.mxu0 %v813
    %4678 = vmatpush1.msra.mxu0 %v812
    %4679 = vmatprep.subr.mxu0 %v817
    %4680 = vmatpush1.msra.mxu0 %v816
    %4681 = vmatprep.subr.mxu0 %v821
    %4682 = vmatpush1.msra.mxu0 %v820
    %4683 = vmatprep.subr.mxu0 %v825
    %4684 = vmatpush1.msra.mxu0 %v824
    %4685 = vmatprep.subr.mxu0 %v829
    %4686 = vmatpush1.msra.mxu0 %v828
    %4687 = vmatprep.subr.mxu0 %v833
    %4688 = vmatpush1.msra.mxu0 %v832
    %4689 = vmatprep.subr.mxu0 %v837
    %4690 = vmatpush1.msra.mxu0 %v836
    %4691 = vmatprep.subr.mxu0 %v841
    %4692 = vmatpush1.msra.mxu0 %v840
    %4693 = vmatprep.subr.mxu0 %v845
    %4694 = vmatpush1.msra.mxu0 %v844
    %4695 = vmatprep.subr.mxu0 %v849
    %4696 = vmatpush1.msra.mxu0 %v848
    %4697 = vmatprep.subr.mxu0 %v853
    %4698 = vmatpush1.msra.mxu0 %v852
    %4699 = vmatprep.subr.mxu0 %v857
    %4700 = vmatpush1.msra.mxu0 %v856
    %4701 = vmatprep.subr.mxu0 %v861
    %4702 = vmatpush1.msra.mxu0 %v860
    %4703 = vmatprep.subr.mxu0 %v865
    %4704 = vmatpush1.msra.mxu0 %v864
    %4705 = vmatprep.subr.mxu0 %v869
    %4706 = vmatpush1.msra.mxu0 %v868
    %4707 = vmatprep.subr.mxu0 %v873
    %4708 = vmatpush1.msra.mxu0 %v872
    %4709 = vmatprep.subr.mxu0 %v877
    %4710 = vmatpush1.msra.mxu0 %v876
    %4711 = vmatprep.subr.mxu0 %v881
    %4712 = vmatpush1.msra.mxu0 %v880
    %4713 = vmatprep.subr.mxu0 %v885
    %4714 = vmatpush1.msra.mxu0 %v884
    %4715 = vmatprep.subr.mxu0 %v889
    %4716 = vmatpush1.msra.mxu0 %v888
    %4717 = vmatprep.subr.mxu0 %v893
    %4718 = vmatpush1.msra.mxu0 %v892
    %4719 = vmatprep.subr.mxu0 %v897
    %4720 = vmatpush1.msra.mxu0 %v896
    %4721 = vmatprep.subr.mxu0 %v901
    %4722 = vmatpush1.msra.mxu0 %v900
    %4723 = vmatprep.subr.mxu0 %v905
    %4724 = vmatpush1.msra.mxu0 %v904
    %4725 = vmatprep.subr.mxu0 %v909
    %4726 = vmatpush1.msra.mxu0 %v908
    %4727 = vmatprep.subr.mxu0 %v913
    %4728 = vmatpush1.msra.mxu0 %v912
    %4729 = vmatprep.subr.mxu0 %v917
    %4730 = vmatpush1.msra.mxu0 %v916
    %4731 = vmatprep.subr.mxu0 %v921
    %4732 = vmatpush1.msra.mxu0 %v920
    %4733 = vmatprep.subr.mxu0 %v925
    %4734 = vmatpush1.msra.mxu0 %v924
    %4735 = vmatprep.subr.mxu0 %v929
    %4736 = vmatpush1.msra.mxu0 %v928
    %4737 = vmatprep.mubr.f32.mxu0 %v4208
    %4738 = vmatmul.mubr.f32.gmra.mrb[0].mxu0 %v4051
    %v4739 = vpop.f32.mrb[0].mxu0
    %v4740 = vadd.f32 %v937, %v4739
    %v4741 = vpop.f32.mrb[0].mxu0
    %v4742 = vadd.f32 %v941, %v4741
    %4743 = vdwg.mxu0
    %4744 = vmatprep.subr.mxu0 %v807
    %4745 = vmatpush1.msra.mxu0 %v806
    %4746 = vmatprep.subr.mxu0 %v811
    %4747 = vmatpush1.msra.mxu0 %v810
    %4748 = vmatprep.subr.mxu0 %v815
    %4749 = vmatpush1.msra.mxu0 %v814
    %4750 = vmatprep.subr.mxu0 %v819
    %4751 = vmatpush1.msra.mxu0 %v818
    %4752 = vmatprep.subr.mxu0 %v823
    %4753 = vmatpush1.msra.mxu0 %v822
    %4754 = vmatprep.subr.mxu0 %v827
    %4755 = vmatpush1.msra.mxu0 %v826
    %4756 = vmatprep.subr.mxu0 %v831
    %4757 = vmatpush1.msra.mxu0 %v830
    %4758 = vmatprep.subr.mxu0 %v835
    %4759 = vmatpush1.msra.mxu0 %v834
    %4760 = vmatprep.subr.mxu0 %v839
    %4761 = vmatpush1.msra.mxu0 %v838
    %4762 = vmatprep.subr.mxu0 %v843
    %4763 = vmatpush1.msra.mxu0 %v842
    %4764 = vmatprep.subr.mxu0 %v847
    %4765 = vmatpush1.msra.mxu0 %v846
    %4766 = vmatprep.subr.mxu0 %v851
    %4767 = vmatpush1.msra.mxu0 %v850
    %4768 = vmatprep.subr.mxu0 %v855
    %4769 = vmatpush1.msra.mxu0 %v854
    %4770 = vmatprep.subr.mxu0 %v859
    %4771 = vmatpush1.msra.mxu0 %v858
    %4772 = vmatprep.subr.mxu0 %v863
    %4773 = vmatpush1.msra.mxu0 %v862
    %4774 = vmatprep.subr.mxu0 %v867
    %4775 = vmatpush1.msra.mxu0 %v866
    %4776 = vmatprep.subr.mxu0 %v871
    %4777 = vmatpush1.msra.mxu0 %v870
    %4778 = vmatprep.subr.mxu0 %v875
    %4779 = vmatpush1.msra.mxu0 %v874
    %4780 = vmatprep.subr.mxu0 %v879
    %4781 = vmatpush1.msra.mxu0 %v878
    %4782 = vmatprep.subr.mxu0 %v883
    %4783 = vmatpush1.msra.mxu0 %v882
    %4784 = vmatprep.subr.mxu0 %v887
    %4785 = vmatpush1.msra.mxu0 %v886
    %4786 = vmatprep.subr.mxu0 %v891
    %4787 = vmatpush1.msra.mxu0 %v890
    %4788 = vmatprep.subr.mxu0 %v895
    %4789 = vmatpush1.msra.mxu0 %v894
    %4790 = vmatprep.subr.mxu0 %v899
    %4791 = vmatpush1.msra.mxu0 %v898
    %4792 = vmatprep.subr.mxu0 %v903
    %4793 = vmatpush1.msra.mxu0 %v902
    %4794 = vmatprep.subr.mxu0 %v907
    %4795 = vmatpush1.msra.mxu0 %v906
    %4796 = vmatprep.subr.mxu0 %v911
    %4797 = vmatpush1.msra.mxu0 %v910
    %4798 = vmatprep.subr.mxu0 %v915
    %4799 = vmatpush1.msra.mxu0 %v914
    %4800 = vmatprep.subr.mxu0 %v919
    %4801 = vmatpush1.msra.mxu0 %v918
    %4802 = vmatprep.subr.mxu0 %v923
    %4803 = vmatpush1.msra.mxu0 %v922
    %4804 = vmatprep.subr.mxu0 %v927
    %4805 = vmatpush1.msra.mxu0 %v926
    %4806 = vmatprep.subr.mxu0 %v931
    %4807 = vmatpush1.msra.mxu0 %v930
    %4808 = vmatprep.mubr.f32.mxu0 %v4208
    %4809 = vmatmul.mubr.f32.gmra.mrb[0].mxu0 %v4051
    %v4810 = vpop.f32.mrb[0].mxu0
    %v4811 = vadd.f32 %v945, %v4810
    %v4812 = vpop.f32.mrb[0].mxu0
    %v4813 = vadd.f32 %v949, %v4812
    %4814 = vdwg.mxu0
    %v4815 = vtanh.pop %v4740
    %v4816 = vtanh.pop %v4742
    %v4817 = vtanh.pop %v4811
    %v4818 = vtanh.pop %v4813
    %v4819 = vmul.f32 %v4815, 0.5
    %v4820 = vadd.f32 %v4819, 0.5
    %v4821 = vmul.f32 %v4816, 0.5
    %v4822 = vadd.f32 %v4821, 0.5
    %v4823 = vmul.f32 %v4818, 0.5
    %v4824 = vadd.f32 %v4823, 0.5
    %v4825 = vmul.f32 %v4822, %v4206
    %v4826 = vmul.f32 %v4820, %v4817
    %v4827 = vadd.f32 %v4825, %v4826
    %v4828 = vtanh.pop %v4827
    %v4829 = vmul.f32 %v4824, %v4828
    %4830 = vmatprep.subr.mxu0 %v1576
    %4831 = vmatpush1.msra.mxu0 %v1575
    %4832 = vmatprep.subr.mxu0 %v1580
    %4833 = vmatpush1.msra.mxu0 %v1579
    %4834 = vmatprep.subr.mxu0 %v1584
    %4835 = vmatpush1.msra.mxu0 %v1583
    %4836 = vmatprep.subr.mxu0 %v1588
    %4837 = vmatpush1.msra.mxu0 %v1587
    %4838 = vmatprep.subr.mxu0 %v1592
    %4839 = vmatpush1.msra.mxu0 %v1591
    %4840 = vmatprep.subr.mxu0 %v1596
    %4841 = vmatpush1.msra.mxu0 %v1595
    %4842 = vmatprep.subr.mxu0 %v1600
    %4843 = vmatpush1.msra.mxu0 %v1599
    %4844 = vmatprep.subr.mxu0 %v1604
    %4845 = vmatpush1.msra.mxu0 %v1603
    %4846 = vmatprep.subr.mxu0 %v1608
    %4847 = vmatpush1.msra.mxu0 %v1607
    %4848 = vmatprep.subr.mxu0 %v1612
    %4849 = vmatpush1.msra.mxu0 %v1611
    %4850 = vmatprep.subr.mxu0 %v1616
    %4851 = vmatpush1.msra.mxu0 %v1615
    %4852 = vmatprep.subr.mxu0 %v1620
    %4853 = vmatpush1.msra.mxu0 %v1619
    %4854 = vmatprep.subr.mxu0 %v1624
    %4855 = vmatpush1.msra.mxu0 %v1623
    %4856 = vmatprep.subr.mxu0 %v1628
    %4857 = vmatpush1.msra.mxu0 %v1627
    %4858 = vmatprep.subr.mxu0 %v1632
    %4859 = vmatpush1.msra.mxu0 %v1631
    %4860 = vmatprep.subr.mxu0 %v1636
    %4861 = vmatpush1.msra.mxu0 %v1635
    %4862 = vmatprep.subr.mxu0 %v1640
    %4863 = vmatpush1.msra.mxu0 %v1639
    %4864 = vmatprep.subr.mxu0 %v1644
    %4865 = vmatpush1.msra.mxu0 %v1643
    %4866 = vmatprep.subr.mxu0 %v1648
    %4867 = vmatpush1.msra.mxu0 %v1647
    %4868 = vmatprep.subr.mxu0 %v1652
    %4869 = vmatpush1.msra.mxu0 %v1651
    %4870 = vmatprep.subr.mxu0 %v1656
    %4871 = vmatpush1.msra.mxu0 %v1655
    %4872 = vmatprep.subr.mxu0 %v1660
    %4873 = vmatpush1.msra.mxu0 %v1659
    %4874 = vmatprep.subr.mxu0 %v1664
    %4875 = vmatpush1.msra.mxu0 %v1663
    %4876 = vmatprep.subr.mxu0 %v1668
    %4877 = vmatpush1.msra.mxu0 %v1667
    %4878 = vmatprep.subr.mxu0 %v1672
    %4879 = vmatpush1.msra.mxu0 %v1671
    %4880 = vmatprep.subr.mxu0 %v1676
    %4881 = vmatpush1.msra.mxu0 %v1675
    %4882 = vmatprep.subr.mxu0 %v1680
    %4883 = vmatpush1.msra.mxu0 %v1679
    %4884 = vmatprep.subr.mxu0 %v1684
    %4885 = vmatpush1.msra.mxu0 %v1683
    %4886 = vmatprep.subr.mxu0 %v1688
    %4887 = vmatpush1.msra.mxu0 %v1687
    %4888 = vmatprep.subr.mxu0 %v1692
    %4889 = vmatpush1.msra.mxu0 %v1691
    %4890 = vmatprep.subr.mxu0 %v1696
    %4891 = vmatpush1.msra.mxu0 %v1695
    %4892 = vmatprep.subr.mxu0 %v1700
    %4893 = vmatpush1.msra.mxu0 %v1699
    %4894 = vmatprep.mubr.f32.mxu0 %v4365
    %4895 = vmatmul.mubr.f32.gmra.mrb[0].mxu0 %v4208
    %v4896 = vpop.f32.mrb[0].mxu0
    %v4897 = vadd.f32 %v1708, %v4896
    %v4898 = vpop.f32.mrb[0].mxu0
    %v4899 = vadd.f32 %v1712, %v4898
    %4900 = vdwg.mxu0
    %4901 = vmatprep.subr.mxu0 %v1578
    %4902 = vmatpush1.msra.mxu0 %v1577
    %4903 = vmatprep.subr.mxu0 %v1582
    %4904 = vmatpush1.msra.mxu0 %v1581
    %4905 = vmatprep.subr.mxu0 %v1586
    %4906 = vmatpush1.msra.mxu0 %v1585
    %4907 = vmatprep.subr.mxu0 %v1590
    %4908 = vmatpush1.msra.mxu0 %v1589
    %4909 = vmatprep.subr.mxu0 %v1594
    %4910 = vmatpush1.msra.mxu0 %v1593
    %4911 = vmatprep.subr.mxu0 %v1598
    %4912 = vmatpush1.msra.mxu0 %v1597
    %4913 = vmatprep.subr.mxu0 %v1602
    %4914 = vmatpush1.msra.mxu0 %v1601
    %4915 = vmatprep.subr.mxu0 %v1606
    %4916 = vmatpush1.msra.mxu0 %v1605
    %4917 = vmatprep.subr.mxu0 %v1610
    %4918 = vmatpush1.msra.mxu0 %v1609
    %4919 = vmatprep.subr.mxu0 %v1614
    %4920 = vmatpush1.msra.mxu0 %v1613
    %4921 = vmatprep.subr.mxu0 %v1618
    %4922 = vmatpush1.msra.mxu0 %v1617
    %4923 = vmatprep.subr.mxu0 %v1622
    %4924 = vmatpush1.msra.mxu0 %v1621
    %4925 = vmatprep.subr.mxu0 %v1626
    %4926 = vmatpush1.msra.mxu0 %v1625
    %4927 = vmatprep.subr.mxu0 %v1630
    %4928 = vmatpush1.msra.mxu0 %v1629
    %4929 = vmatprep.subr.mxu0 %v1634
    %4930 = vmatpush1.msra.mxu0 %v1633
    %4931 = vmatprep.subr.mxu0 %v1638
    %4932 = vmatpush1.msra.mxu0 %v1637
    %4933 = vmatprep.subr.mxu0 %v1642
    %4934 = vmatpush1.msra.mxu0 %v1641
    %4935 = vmatprep.subr.mxu0 %v1646
    %4936 = vmatpush1.msra.mxu0 %v1645
    %4937 = vmatprep.subr.mxu0 %v1650
    %4938 = vmatpush1.msra.mxu0 %v1649
    %4939 = vmatprep.subr.mxu0 %v1654
    %4940 = vmatpush1.msra.mxu0 %v1653
    %4941 = vmatprep.subr.mxu0 %v1658
    %4942 = vmatpush1.msra.mxu0 %v1657
    %4943 = vmatprep.subr.mxu0 %v1662
    %4944 = vmatpush1.msra.mxu0 %v1661
    %4945 = vmatprep.subr.mxu0 %v1666
    %4946 = vmatpush1.msra.mxu0 %v1665
    %4947 = vmatprep.subr.mxu0 %v1670
    %4948 = vmatpush1.msra.mxu0 %v1669
    %4949 = vmatprep.subr.mxu0 %v1674
    %4950 = vmatpush1.msra.mxu0 %v1673
    %4951 = vmatprep.subr.mxu0 %v1678
    %4952 = vmatpush1.msra.mxu0 %v1677
    %4953 = vmatprep.subr.mxu0 %v1682
    %4954 = vmatpush1.msra.mxu0 %v1681
    %4955 = vmatprep.subr.mxu0 %v1686
    %4956 = vmatpush1.msra.mxu0 %v1685
    %4957 = vmatprep.subr.mxu0 %v1690
    %4958 = vmatpush1.msra.mxu0 %v1689
    %4959 = vmatprep.subr.mxu0 %v1694
    %4960 = vmatpush1.msra.mxu0 %v1693
    %4961 = vmatprep.subr.mxu0 %v1698
    %4962 = vmatpush1.msra.mxu0 %v1697
    %4963 = vmatprep.subr.mxu0 %v1702
    %4964 = vmatpush1.msra.mxu0 %v1701
    %4965 = vmatprep.mubr.f32.mxu0 %v4365
    %4966 = vmatmul.mubr.f32.gmra.mrb[0].mxu0 %v4208
    %v4967 = vpop.f32.mrb[0].mxu0
    %v4968 = vadd.f32 %v1716, %v4967
    %v4969 = vpop.f32.mrb[0].mxu0
    %v4970 = vadd.f32 %v1720, %v4969
    %4971 = vdwg.mxu0
    %v4972 = vtanh.pop %v4897
    %v4973 = vtanh.pop %v4899
    %v4974 = vtanh.pop %v4968
    %v4975 = vtanh.pop %v4970
    %v4976 = vmul.f32 %v4972, 0.5
    %v4977 = vadd.f32 %v4976, 0.5
    %v4978 = vmul.f32 %v4973, 0.5
    %v4979 = vadd.f32 %v4978, 0.5
    %v4980 = vmul.f32 %v4975, 0.5
    %v4981 = vadd.f32 %v4980, 0.5
    %v4982 = vmul.f32 %v4979, %v4363
    %v4983 = vmul.f32 %v4977, %v4974
    %v4984 = vadd.f32 %v4982, %v4983
    %v4985 = vtanh.pop %v4984
    %v4986 = vmul.f32 %v4981, %v4985
    %4987 = vmatprep.subr.mxu0 %v805
    %4988 = vmatpush1.msra.mxu0 %v804
    %4989 = vmatprep.subr.mxu0 %v809
    %4990 = vmatpush1.msra.mxu0 %v808
    %4991 = vmatprep.subr.mxu0 %v813
    %4992 = vmatpush1.msra.mxu0 %v812
    %4993 = vmatprep.subr.mxu0 %v817
    %4994 = vmatpush1.msra.mxu0 %v816
    %4995 = vmatprep.subr.mxu0 %v821
    %4996 = vmatpush1.msra.mxu0 %v820
    %4997 = vmatprep.subr.mxu0 %v825
    %4998 = vmatpush1.msra.mxu0 %v824
    %4999 = vmatprep.subr.mxu0 %v829
    %5000 = vmatpush1.msra.mxu0 %v828
    %5001 = vmatprep.subr.mxu0 %v833
    %5002 = vmatpush1.msra.mxu0 %v832
    %5003 = vmatprep.subr.mxu0 %v837
    %5004 = vmatpush1.msra.mxu0 %v836
    %5005 = vmatprep.subr.mxu0 %v841
    %5006 = vmatpush1.msra.mxu0 %v840
    %5007 = vmatprep.subr.mxu0 %v845
    %5008 = vmatpush1.msra.mxu0 %v844
    %5009 = vmatprep.subr.mxu0 %v849
    %5010 = vmatpush1.msra.mxu0 %v848
    %5011 = vmatprep.subr.mxu0 %v853
    %5012 = vmatpush1.msra.mxu0 %v852
    %5013 = vmatprep.subr.mxu0 %v857
    %5014 = vmatpush1.msra.mxu0 %v856
    %5015 = vmatprep.subr.mxu0 %v861
    %5016 = vmatpush1.msra.mxu0 %v860
    %5017 = vmatprep.subr.mxu0 %v865
    %5018 = vmatpush1.msra.mxu0 %v864
    %5019 = vmatprep.subr.mxu0 %v869
    %5020 = vmatpush1.msra.mxu0 %v868
    %5021 = vmatprep.subr.mxu0 %v873
    %5022 = vmatpush1.msra.mxu0 %v872
    %5023 = vmatprep.subr.mxu0 %v877
    %5024 = vmatpush1.msra.mxu0 %v876
    %5025 = vmatprep.subr.mxu0 %v881
    %5026 = vmatpush1.msra.mxu0 %v880
    %5027 = vmatprep.subr.mxu0 %v885
    %5028 = vmatpush1.msra.mxu0 %v884
    %5029 = vmatprep.subr.mxu0 %v889
    %5030 = vmatpush1.msra.mxu0 %v888
    %5031 = vmatprep.subr.mxu0 %v893
    %5032 = vmatpush1.msra.mxu0 %v892
    %5033 = vmatprep.subr.mxu0 %v897
    %5034 = vmatpush1.msra.mxu0 %v896
    %5035 = vmatprep.subr.mxu0 %v901
    %5036 = vmatpush1.msra.mxu0 %v900
    %5037 = vmatprep.subr.mxu0 %v905
    %5038 = vmatpush1.msra.mxu0 %v904
    %5039 = vmatprep.subr.mxu0 %v909
    %5040 = vmatpush1.msra.mxu0 %v908
    %5041 = vmatprep.subr.mxu0 %v913
    %5042 = vmatpush1.msra.mxu0 %v912
    %5043 = vmatprep.subr.mxu0 %v917
    %5044 = vmatpush1.msra.mxu0 %v916
    %5045 = vmatprep.subr.mxu0 %v921
    %5046 = vmatpush1.msra.mxu0 %v920
    %5047 = vmatprep.subr.mxu0 %v925
    %5048 = vmatpush1.msra.mxu0 %v924
    %5049 = vmatprep.subr.mxu0 %v929
    %5050 = vmatpush1.msra.mxu0 %v928
    %5051 = vmatprep.mubr.f32.mxu0 %v4829
    %5052 = vmatmul.mubr.f32.gmra.mrb[0].mxu0 %v4672
    %v5053 = vpop.f32.mrb[0].mxu0
    %v5054 = vadd.f32 %v937, %v5053
    %v5055 = vpop.f32.mrb[0].mxu0
    %v5056 = vadd.f32 %v941, %v5055
    %5057 = vdwg.mxu0
    %5058 = vmatprep.subr.mxu0 %v807
    %5059 = vmatpush1.msra.mxu0 %v806
    %5060 = vmatprep.subr.mxu0 %v811
    %5061 = vmatpush1.msra.mxu0 %v810
    %5062 = vmatprep.subr.mxu0 %v815
    %5063 = vmatpush1.msra.mxu0 %v814
    %5064 = vmatprep.subr.mxu0 %v819
    %5065 = vmatpush1.msra.mxu0 %v818
    %5066 = vmatprep.subr.mxu0 %v823
    %5067 = vmatpush1.msra.mxu0 %v822
    %5068 = vmatprep.subr.mxu0 %v827
    %5069 = vmatpush1.msra.mxu0 %v826
    %5070 = vmatprep.subr.mxu0 %v831
    %5071 = vmatpush1.msra.mxu0 %v830
    %5072 = vmatprep.subr.mxu0 %v835
    %5073 = vmatpush1.msra.mxu0 %v834
    %5074 = vmatprep.subr.mxu0 %v839
    %5075 = vmatpush1.msra.mxu0 %v838
    %5076 = vmatprep.subr.mxu0 %v843
    %5077 = vmatpush1.msra.mxu0 %v842
    %5078 = vmatprep.subr.mxu0 %v847
    %5079 = vmatpush1.msra.mxu0 %v846
    %5080 = vmatprep.subr.mxu0 %v851
    %5081 = vmatpush1.msra.mxu0 %v850
    %5082 = vmatprep.subr.mxu0 %v855
    %5083 = vmatpush1.msra.mxu0 %v854
    %5084 = vmatprep.subr.mxu0 %v859
    %5085 = vmatpush1.msra.mxu0 %v858
    %5086 = vmatprep.subr.mxu0 %v863
    %5087 = vmatpush1.msra.mxu0 %v862
    %5088 = vmatprep.subr.mxu0 %v867
    %5089 = vmatpush1.msra.mxu0 %v866
    %5090 = vmatprep.subr.mxu0 %v871
    %5091 = vmatpush1.msra.mxu0 %v870
    %5092 = vmatprep.subr.mxu0 %v875
    %5093 = vmatpush1.msra.mxu0 %v874
    %5094 = vmatprep.subr.mxu0 %v879
    %5095 = vmatpush1.msra.mxu0 %v878
    %5096 = vmatprep.subr.mxu0 %v883
    %5097 = vmatpush1.msra.mxu0 %v882
    %5098 = vmatprep.subr.mxu0 %v887
    %5099 = vmatpush1.msra.mxu0 %v886
    %5100 = vmatprep.subr.mxu0 %v891
    %5101 = vmatpush1.msra.mxu0 %v890
    %5102 = vmatprep.subr.mxu0 %v895
    %5103 = vmatpush1.msra.mxu0 %v894
    %5104 = vmatprep.subr.mxu0 %v899
    %5105 = vmatpush1.msra.mxu0 %v898
    %5106 = vmatprep.subr.mxu0 %v903
    %5107 = vmatpush1.msra.mxu0 %v902
    %5108 = vmatprep.subr.mxu0 %v907
    %5109 = vmatpush1.msra.mxu0 %v906
    %5110 = vmatprep.subr.mxu0 %v911
    %5111 = vmatpush1.msra.mxu0 %v910
    %5112 = vmatprep.subr.mxu0 %v915
    %5113 = vmatpush1.msra.mxu0 %v914
    %5114 = vmatprep.subr.mxu0 %v919
    %5115 = vmatpush1.msra.mxu0 %v918
    %5116 = vmatprep.subr.mxu0 %v923
    %5117 = vmatpush1.msra.mxu0 %v922
    %5118 = vmatprep.subr.mxu0 %v927
    %5119 = vmatpush1.msra.mxu0 %v926
    %5120 = vmatprep.subr.mxu0 %v931
    %5121 = vmatpush1.msra.mxu0 %v930
    %5122 = vmatprep.mubr.f32.mxu0 %v4829
    %5123 = vmatmul.mubr.f32.gmra.mrb[0].mxu0 %v4672
    %v5124 = vpop.f32.mrb[0].mxu0
    %v5125 = vadd.f32 %v945, %v5124
    %v5126 = vpop.f32.mrb[0].mxu0
    %v5127 = vadd.f32 %v949, %v5126
    %5128 = vdwg.mxu0
    %v5129 = vtanh.pop %v5054
    %v5130 = vtanh.pop %v5056
    %v5131 = vtanh.pop %v5125
    %v5132 = vtanh.pop %v5127
    %v5133 = vmul.f32 %v5129, 0.5
    %v5134 = vadd.f32 %v5133, 0.5
    %v5135 = vmul.f32 %v5130, 0.5
    %v5136 = vadd.f32 %v5135, 0.5
    %v5137 = vmul.f32 %v5132, 0.5
    %v5138 = vadd.f32 %v5137, 0.5
    %v5139 = vmul.f32 %v5136, %v4827
    %v5140 = vmul.f32 %v5134, %v5131
    %v5141 = vadd.f32 %v5139, %v5140
    %v5142 = vtanh.pop %v5141
    %v5143 = vmul.f32 %v5138, %v5142
    %5144 = vmatprep.subr.mxu0 %v1576
    %5145 = vmatpush1.msra.mxu0 %v1575
    %5146 = vmatprep.subr.mxu0 %v1580
    %5147 = vmatpush1.msra.mxu0 %v1579
    %5148 = vmatprep.subr.mxu0 %v1584
    %5149 = vmatpush1.msra.mxu0 %v1583
    %5150 = vmatprep.subr.mxu0 %v1588
    %5151 = vmatpush1.msra.mxu0 %v1587
    %5152 = vmatprep.subr.mxu0 %v1592
    %5153 = vmatpush1.msra.mxu0 %v1591
    %5154 = vmatprep.subr.mxu0 %v1596
    %5155 = vmatpush1.msra.mxu0 %v1595
    %5156 = vmatprep.subr.mxu0 %v1600
    %5157 = vmatpush1.msra.mxu0 %v1599
    %5158 = vmatprep.subr.mxu0 %v1604
    %5159 = vmatpush1.msra.mxu0 %v1603
    %5160 = vmatprep.subr.mxu0 %v1608
    %5161 = vmatpush1.msra.mxu0 %v1607
    %5162 = vmatprep.subr.mxu0 %v1612
    %5163 = vmatpush1.msra.mxu0 %v1611
    %5164 = vmatprep.subr.mxu0 %v1616
    %5165 = vmatpush1.msra.mxu0 %v1615
    %5166 = vmatprep.subr.mxu0 %v1620
    %5167 = vmatpush1.msra.mxu0 %v1619
    %5168 = vmatprep.subr.mxu0 %v1624
    %5169 = vmatpush1.msra.mxu0 %v1623
    %5170 = vmatprep.subr.mxu0 %v1628
    %5171 = vmatpush1.msra.mxu0 %v1627
    %5172 = vmatprep.subr.mxu0 %v1632
    %5173 = vmatpush1.msra.mxu0 %v1631
    %5174 = vmatprep.subr.mxu0 %v1636
    %5175 = vmatpush1.msra.mxu0 %v1635
    %5176 = vmatprep.subr.mxu0 %v1640
    %5177 = vmatpush1.msra.mxu0 %v1639
    %5178 = vmatprep.subr.mxu0 %v1644
    %5179 = vmatpush1.msra.mxu0 %v1643
    %5180 = vmatprep.subr.mxu0 %v1648
    %5181 = vmatpush1.msra.mxu0 %v1647
    %5182 = vmatprep.subr.mxu0 %v1652
    %5183 = vmatpush1.msra.mxu0 %v1651
    %5184 = vmatprep.subr.mxu0 %v1656
    %5185 = vmatpush1.msra.mxu0 %v1655
    %5186 = vmatprep.subr.mxu0 %v1660
    %5187 = vmatpush1.msra.mxu0 %v1659
    %5188 = vmatprep.subr.mxu0 %v1664
    %5189 = vmatpush1.msra.mxu0 %v1663
    %5190 = vmatprep.subr.mxu0 %v1668
    %5191 = vmatpush1.msra.mxu0 %v1667
    %5192 = vmatprep.subr.mxu0 %v1672
    %5193 = vmatpush1.msra.mxu0 %v1671
    %5194 = vmatprep.subr.mxu0 %v1676
    %5195 = vmatpush1.msra.mxu0 %v1675
    %5196 = vmatprep.subr.mxu0 %v1680
    %5197 = vmatpush1.msra.mxu0 %v1679
    %5198 = vmatprep.subr.mxu0 %v1684
    %5199 = vmatpush1.msra.mxu0 %v1683
    %5200 = vmatprep.subr.mxu0 %v1688
    %5201 = vmatpush1.msra.mxu0 %v1687
    %5202 = vmatprep.subr.mxu0 %v1692
    %5203 = vmatpush1.msra.mxu0 %v1691
    %5204 = vmatprep.subr.mxu0 %v1696
    %5205 = vmatpush1.msra.mxu0 %v1695
    %5206 = vmatprep.subr.mxu0 %v1700
    %5207 = vmatpush1.msra.mxu0 %v1699
    %5208 = vmatprep.mubr.f32.mxu0 %v4986
    %5209 = vmatmul.mubr.f32.gmra.mrb[0].mxu0 %v4829
    %v5210 = vpop.f32.mrb[0].mxu0
    %v5211 = vadd.f32 %v1708, %v5210
    %v5212 = vpop.f32.mrb[0].mxu0
    %v5213 = vadd.f32 %v1712, %v5212
    %5214 = vdwg.mxu0
    %5215 = vmatprep.subr.mxu0 %v1578
    %5216 = vmatpush1.msra.mxu0 %v1577
    %5217 = vmatprep.subr.mxu0 %v1582
    %5218 = vmatpush1.msra.mxu0 %v1581
    %5219 = vmatprep.subr.mxu0 %v1586
    %5220 = vmatpush1.msra.mxu0 %v1585
    %5221 = vmatprep.subr.mxu0 %v1590
    %5222 = vmatpush1.msra.mxu0 %v1589
    %5223 = vmatprep.subr.mxu0 %v1594
    %5224 = vmatpush1.msra.mxu0 %v1593
    %5225 = vmatprep.subr.mxu0 %v1598
    %5226 = vmatpush1.msra.mxu0 %v1597
    %5227 = vmatprep.subr.mxu0 %v1602
    %5228 = vmatpush1.msra.mxu0 %v1601
    %5229 = vmatprep.subr.mxu0 %v1606
    %5230 = vmatpush1.msra.mxu0 %v1605
    %5231 = vmatprep.subr.mxu0 %v1610
    %5232 = vmatpush1.msra.mxu0 %v1609
    %5233 = vmatprep.subr.mxu0 %v1614
    %5234 = vmatpush1.msra.mxu0 %v1613
    %5235 = vmatprep.subr.mxu0 %v1618
    %5236 = vmatpush1.msra.mxu0 %v1617
    %5237 = vmatprep.subr.mxu0 %v1622
    %5238 = vmatpush1.msra.mxu0 %v1621
    %5239 = vmatprep.subr.mxu0 %v1626
    %5240 = vmatpush1.msra.mxu0 %v1625
    %5241 = vmatprep.subr.mxu0 %v1630
    %5242 = vmatpush1.msra.mxu0 %v1629
    %5243 = vmatprep.subr.mxu0 %v1634
    %5244 = vmatpush1.msra.mxu0 %v1633
    %5245 = vmatprep.subr.mxu0 %v1638
    %5246 = vmatpush1.msra.mxu0 %v1637
    %5247 = vmatprep.subr.mxu0 %v1642
    %5248 = vmatpush1.msra.mxu0 %v1641
    %5249 = vmatprep.subr.mxu0 %v1646
    %5250 = vmatpush1.msra.mxu0 %v1645
    %5251 = vmatprep.subr.mxu0 %v1650
    %5252 = vmatpush1.msra.mxu0 %v1649
    %5253 = vmatprep.subr.mxu0 %v1654
    %5254 = vmatpush1.msra.mxu0 %v1653
    %5255 = vmatprep.subr.mxu0 %v1658
    %5256 = vmatpush1.msra.mxu0 %v1657
    %5257 = vmatprep.subr.mxu0 %v1662
    %5258 = vmatpush1.msra.mxu0 %v1661
    %5259 = vmatprep.subr.mxu0 %v1666
    %5260 = vmatpush1.msra.mxu0 %v1665
    %5261 = vmatprep.subr.mxu0 %v1670
    %5262 = vmatpush1.msra.mxu0 %v1669
    %5263 = vmatprep.subr.mxu0 %v1674
    %5264 = vmatpush1.msra.mxu0 %v1673
    %5265 = vmatprep.subr.mxu0 %v1678
    %5266 = vmatpush1.msra.mxu0 %v1677
    %5267 = vmatprep.subr.mxu0 %v1682
    %5268 = vmatpush1.msra.mxu0 %v1681
    %5269 = vmatprep.subr.mxu0 %v1686
    %5270 = vmatpush1.msra.mxu0 %v1685
    %5271 = vmatprep.subr.mxu0 %v1690
    %5272 = vmatpush1.msra.mxu0 %v1689
    %5273 = vmatprep.subr.mxu0 %v1694
    %5274 = vmatpush1.msra.mxu0 %v1693
    %5275 = vmatprep.subr.mxu0 %v1698
    %5276 = vmatpush1.msra.mxu0 %v1697
    %5277 = vmatprep.subr.mxu0 %v1702
    %5278 = vmatpush1.msra.mxu0 %v1701
    %5279 = vmatprep.mubr.f32.mxu0 %v4986
    %5280 = vmatmul.mubr.f32.gmra.mrb[0].mxu0 %v4829
    %v5281 = vpop.f32.mrb[0].mxu0
    %v5282 = vadd.f32 %v1716, %v5281
    %v5283 = vpop.f32.mrb[0].mxu0
    %v5284 = vadd.f32 %v1720, %v5283
    %5285 = vdwg.mxu0
    %v5286 = vtanh.pop %v5211
    %v5287 = vtanh.pop %v5213
    %v5288 = vtanh.pop %v5282
    %v5289 = vtanh.pop %v5284
    %v5290 = vmul.f32 %v5286, 0.5
    %v5291 = vadd.f32 %v5290, 0.5
    %v5292 = vmul.f32 %v5287, 0.5
    %v5293 = vadd.f32 %v5292, 0.5
    %v5294 = vmul.f32 %v5289, 0.5
    %v5295 = vadd.f32 %v5294, 0.5
    %v5296 = vmul.f32 %v5293, %v4984
    %v5297 = vmul.f32 %v5291, %v5288
    %v5298 = vadd.f32 %v5296, %v5297
    %v5299 = vtanh.pop %v5298
    %v5300 = vmul.f32 %v5295, %v5299
    %5301 = vmatprep.subr.mxu0 %v1576
    %5302 = vmatpush1.msra.mxu0 %v1575
    %5303 = vmatprep.subr.mxu0 %v1580
    %5304 = vmatpush1.msra.mxu0 %v1579
    %5305 = vmatprep.subr.mxu0 %v1584
    %5306 = vmatpush1.msra.mxu0 %v1583
    %5307 = vmatprep.subr.mxu0 %v1588
    %5308 = vmatpush1.msra.mxu0 %v1587
    %5309 = vmatprep.subr.mxu0 %v1592
    %5310 = vmatpush1.msra.mxu0 %v1591
    %5311 = vmatprep.subr.mxu0 %v1596
    %5312 = vmatpush1.msra.mxu0 %v1595
    %5313 = vmatprep.subr.mxu0 %v1600
    %5314 = vmatpush1.msra.mxu0 %v1599
    %5315 = vmatprep.subr.mxu0 %v1604
    %5316 = vmatpush1.msra.mxu0 %v1603
    %5317 = vmatprep.subr.mxu0 %v1608
    %5318 = vmatpush1.msra.mxu0 %v1607
    %5319 = vmatprep.subr.mxu0 %v1612
    %5320 = vmatpush1.msra.mxu0 %v1611
    %5321 = vmatprep.subr.mxu0 %v1616
    %5322 = vmatpush1.msra.mxu0 %v1615
    %5323 = vmatprep.subr.mxu0 %v1620
    %5324 = vmatpush1.msra.mxu0 %v1619
    %5325 = vmatprep.subr.mxu0 %v1624
    %5326 = vmatpush1.msra.mxu0 %v1623
    %5327 = vmatprep.subr.mxu0 %v1628
    %5328 = vmatpush1.msra.mxu0 %v1627
    %5329 = vmatprep.subr.mxu0 %v1632
    %5330 = vmatpush1.msra.mxu0 %v1631
    %5331 = vmatprep.subr.mxu0 %v1636
    %5332 = vmatpush1.msra.mxu0 %v1635
    %5333 = vmatprep.subr.mxu0 %v1640
    %5334 = vmatpush1.msra.mxu0 %v1639
    %5335 = vmatprep.subr.mxu0 %v1644
    %5336 = vmatpush1.msra.mxu0 %v1643
    %5337 = vmatprep.subr.mxu0 %v1648
    %5338 = vmatpush1.msra.mxu0 %v1647
    %5339 = vmatprep.subr.mxu0 %v1652
    %5340 = vmatpush1.msra.mxu0 %v1651
    %5341 = vmatprep.subr.mxu0 %v1656
    %5342 = vmatpush1.msra.mxu0 %v1655
    %5343 = vmatprep.subr.mxu0 %v1660
    %5344 = vmatpush1.msra.mxu0 %v1659
    %5345 = vmatprep.subr.mxu0 %v1664
    %5346 = vmatpush1.msra.mxu0 %v1663
    %5347 = vmatprep.subr.mxu0 %v1668
    %5348 = vmatpush1.msra.mxu0 %v1667
    %5349 = vmatprep.subr.mxu0 %v1672
    %5350 = vmatpush1.msra.mxu0 %v1671
    %5351 = vmatprep.subr.mxu0 %v1676
    %5352 = vmatpush1.msra.mxu0 %v1675
    %5353 = vmatprep.subr.mxu0 %v1680
    %5354 = vmatpush1.msra.mxu0 %v1679
    %5355 = vmatprep.subr.mxu0 %v1684
    %5356 = vmatpush1.msra.mxu0 %v1683
    %5357 = vmatprep.subr.mxu0 %v1688
    %5358 = vmatpush1.msra.mxu0 %v1687
    %5359 = vmatprep.subr.mxu0 %v1692
    %5360 = vmatpush1.msra.mxu0 %v1691
    %5361 = vmatprep.subr.mxu0 %v1696
    %5362 = vmatpush1.msra.mxu0 %v1695
    %5363 = vmatprep.subr.mxu0 %v1700
    %5364 = vmatpush1.msra.mxu0 %v1699
    %5365 = vmatprep.mubr.f32.mxu0 %v5300
    %5366 = vmatmul.mubr.f32.gmra.mrb[0].mxu0 %v5143
    %v5367 = vpop.f32.mrb[0].mxu0
    %v5368 = vadd.f32 %v1708, %v5367
    %v5369 = vpop.f32.mrb[0].mxu0
    %v5370 = vadd.f32 %v1712, %v5369
    %5371 = vdwg.mxu0
    %5372 = vmatprep.subr.mxu0 %v1578
    %5373 = vmatpush1.msra.mxu0 %v1577
    %5374 = vmatprep.subr.mxu0 %v1582
    %5375 = vmatpush1.msra.mxu0 %v1581
    %5376 = vmatprep.subr.mxu0 %v1586
    %5377 = vmatpush1.msra.mxu0 %v1585
    %5378 = vmatprep.subr.mxu0 %v1590
    %5379 = vmatpush1.msra.mxu0 %v1589
    %5380 = vmatprep.subr.mxu0 %v1594
    %5381 = vmatpush1.msra.mxu0 %v1593
    %5382 = vmatprep.subr.mxu0 %v1598
    %5383 = vmatpush1.msra.mxu0 %v1597
    %5384 = vmatprep.subr.mxu0 %v1602
    %5385 = vmatpush1.msra.mxu0 %v1601
    %5386 = vmatprep.subr.mxu0 %v1606
    %5387 = vmatpush1.msra.mxu0 %v1605
    %5388 = vmatprep.subr.mxu0 %v1610
    %5389 = vmatpush1.msra.mxu0 %v1609
    %5390 = vmatprep.subr.mxu0 %v1614
    %5391 = vmatpush1.msra.mxu0 %v1613
    %5392 = vmatprep.subr.mxu0 %v1618
    %5393 = vmatpush1.msra.mxu0 %v1617
    %5394 = vmatprep.subr.mxu0 %v1622
    %5395 = vmatpush1.msra.mxu0 %v1621
    %5396 = vmatprep.subr.mxu0 %v1626
    %5397 = vmatpush1.msra.mxu0 %v1625
    %5398 = vmatprep.subr.mxu0 %v1630
    %5399 = vmatpush1.msra.mxu0 %v1629
    %5400 = vmatprep.subr.mxu0 %v1634
    %5401 = vmatpush1.msra.mxu0 %v1633
    %5402 = vmatprep.subr.mxu0 %v1638
    %5403 = vmatpush1.msra.mxu0 %v1637
    %5404 = vmatprep.subr.mxu0 %v1642
    %5405 = vmatpush1.msra.mxu0 %v1641
    %5406 = vmatprep.subr.mxu0 %v1646
    %5407 = vmatpush1.msra.mxu0 %v1645
    %5408 = vmatprep.subr.mxu0 %v1650
    %5409 = vmatpush1.msra.mxu0 %v1649
    %5410 = vmatprep.subr.mxu0 %v1654
    %5411 = vmatpush1.msra.mxu0 %v1653
    %5412 = vmatprep.subr.mxu0 %v1658
    %5413 = vmatpush1.msra.mxu0 %v1657
    %5414 = vmatprep.subr.mxu0 %v1662
    %5415 = vmatpush1.msra.mxu0 %v1661
    %5416 = vmatprep.subr.mxu0 %v1666
    %5417 = vmatpush1.msra.mxu0 %v1665
    %5418 = vmatprep.subr.mxu0 %v1670
    %5419 = vmatpush1.msra.mxu0 %v1669
    %5420 = vmatprep.subr.mxu0 %v1674
    %5421 = vmatpush1.msra.mxu0 %v1673
    %5422 = vmatprep.subr.mxu0 %v1678
    %5423 = vmatpush1.msra.mxu0 %v1677
    %5424 = vmatprep.subr.mxu0 %v1682
    %5425 = vmatpush1.msra.mxu0 %v1681
    %5426 = vmatprep.subr.mxu0 %v1686
    %5427 = vmatpush1.msra.mxu0 %v1685
    %5428 = vmatprep.subr.mxu0 %v1690
    %5429 = vmatpush1.msra.mxu0 %v1689
    %5430 = vmatprep.subr.mxu0 %v1694
    %5431 = vmatpush1.msra.mxu0 %v1693
    %5432 = vmatprep.subr.mxu0 %v1698
    %5433 = vmatpush1.msra.mxu0 %v1697
    %5434 = vmatprep.subr.mxu0 %v1702
    %5435 = vmatpush1.msra.mxu0 %v1701
    %5436 = vmatprep.mubr.f32.mxu0 %v5300
    %5437 = vmatmul.mubr.f32.gmra.mrb[0].mxu0 %v5143
    %v5438 = vpop.f32.mrb[0].mxu0
    %v5439 = vadd.f32 %v1716, %v5438
    %v5440 = vpop.f32.mrb[0].mxu0
    %v5441 = vadd.f32 %v1720, %v5440
    %5442 = vdwg.mxu0
    %v5443 = vtanh.pop %v5368
    %v5444 = vtanh.pop %v5370
    %v5445 = vtanh.pop %v5439
    %v5446 = vtanh.pop %v5441
    %v5447 = vmul.f32 %v5443, 0.5
    %v5448 = vadd.f32 %v5447, 0.5
    %v5449 = vmul.f32 %v5444, 0.5
    %v5450 = vadd.f32 %v5449, 0.5
    %v5451 = vmul.f32 %v5446, 0.5
    %v5452 = vadd.f32 %v5451, 0.5
    %v5453 = vmul.f32 %v5450, %v5298
    %v5454 = vmul.f32 %v5448, %v5445
    %v5455 = vadd.f32 %v5453, %v5454
    %v5456 = vtanh.pop %v5455
    %v5457 = vmul.f32 %v5452, %v5456
    %v5458 = vld [vmem:[%s8] sm:$0xff]
    %v5459 = vld [vmem:[%s8 + $0x8] sm:$0xff]
    %v5460 = vld [vmem:[%s8 + $0x10] sm:$0xff]
    %v5461 = vld [vmem:[%s8 + $0x18] sm:$0xff]
    %v5462 = vld [vmem:[%s8 + $0x20] sm:$0xff]
    %v5463 = vld [vmem:[%s8 + $0x28] sm:$0xff]
    %v5464 = vld [vmem:[%s8 + $0x30] sm:$0xff]
    %v5465 = vld [vmem:[%s8 + $0x38] sm:$0xff]
    %v5466 = vld [vmem:[%s8 + $0x40] sm:$0xff]
    %v5467 = vld [vmem:[%s8 + $0x48] sm:$0xff]
    %v5468 = vld [vmem:[%s8 + $0x50] sm:$0xff]
    %v5469 = vld [vmem:[%s8 + $0x58] sm:$0xff]
    %v5470 = vld [vmem:[%s8 + $0x60] sm:$0xff]
    %v5471 = vld [vmem:[%s8 + $0x68] sm:$0xff]
    %v5472 = vld [vmem:[%s8 + $0x70] sm:$0xff]
    %v5473 = vld [vmem:[%s8 + $0x78] sm:$0xff]
    %v5474 = vld [vmem:[%s9] sm:$0x1]
    %v5476 = vlaneseq
    %v5477 = vshrl.u32 %v5476, 7
    %v5478 = vsub.s32 0, %v5477
    %v5479 = vrot.slane %v5474, %v5478
    %5481 = vmatprep.subr.mxu0 0.0
    %5482 = vmatpush1.msra.mxu0 %v5458
    %5483 = vmatprep.subr.mxu0 0.0
    %5484 = vmatpush1.msra.mxu0 %v5459
    %5485 = vmatprep.subr.mxu0 0.0
    %5486 = vmatpush1.msra.mxu0 %v5460
    %5487 = vmatprep.subr.mxu0 0.0
    %5488 = vmatpush1.msra.mxu0 %v5461
    %5489 = vmatprep.subr.mxu0 0.0
    %5490 = vmatpush1.msra.mxu0 %v5462
    %5491 = vmatprep.subr.mxu0 0.0
    %5492 = vmatpush1.msra.mxu0 %v5463
    %5493 = vmatprep.subr.mxu0 0.0
    %5494 = vmatpush1.msra.mxu0 %v5464
    %5495 = vmatprep.subr.mxu0 0.0
    %5496 = vmatpush1.msra.mxu0 %v5465
    %5497 = vmatprep.subr.mxu0 0.0
    %5498 = vmatpush1.msra.mxu0 %v5466
    %5499 = vmatprep.subr.mxu0 0.0
    %5500 = vmatpush1.msra.mxu0 %v5467
    %5501 = vmatprep.subr.mxu0 0.0
    %5502 = vmatpush1.msra.mxu0 %v5468
    %5503 = vmatprep.subr.mxu0 0.0
    %5504 = vmatpush1.msra.mxu0 %v5469
    %5505 = vmatprep.subr.mxu0 0.0
    %5506 = vmatpush1.msra.mxu0 %v5470
    %5507 = vmatprep.subr.mxu0 0.0
    %5508 = vmatpush1.msra.mxu0 %v5471
    %5509 = vmatprep.subr.mxu0 0.0
    %5510 = vmatpush1.msra.mxu0 %v5472
    %5511 = vmatprep.subr.mxu0 0.0
    %5512 = vmatpush1.msra.mxu0 %v5473
    %5513 = vmatprep.subr.mxu0 0.0
    %5514 = vmatpush1.msra.mxu0 0.0
    %5515 = vmatprep.subr.mxu0 0.0
    %5516 = vmatpush1.msra.mxu0 0.0
    %5517 = vmatprep.subr.mxu0 0.0
    %5518 = vmatpush1.msra.mxu0 0.0
    %5519 = vmatprep.subr.mxu0 0.0
    %5520 = vmatpush1.msra.mxu0 0.0
    %5521 = vmatprep.subr.mxu0 0.0
    %5522 = vmatpush1.msra.mxu0 0.0
    %5523 = vmatprep.subr.mxu0 0.0
    %5524 = vmatpush1.msra.mxu0 0.0
    %5525 = vmatprep.subr.mxu0 0.0
    %5526 = vmatpush1.msra.mxu0 0.0
    %5527 = vmatprep.subr.mxu0 0.0
    %5528 = vmatpush1.msra.mxu0 0.0
    %5529 = vmatprep.subr.mxu0 0.0
    %5530 = vmatpush1.msra.mxu0 0.0
    %5531 = vmatprep.subr.mxu0 0.0
    %5532 = vmatpush1.msra.mxu0 0.0
    %5533 = vmatprep.subr.mxu0 0.0
    %5534 = vmatpush1.msra.mxu0 0.0
    %5535 = vmatprep.subr.mxu0 0.0
    %5536 = vmatpush1.msra.mxu0 0.0
    %5537 = vmatprep.subr.mxu0 0.0
    %5538 = vmatpush1.msra.mxu0 0.0
    %5539 = vmatprep.subr.mxu0 0.0
    %5540 = vmatpush1.msra.mxu0 0.0
    %5541 = vmatprep.subr.mxu0 0.0
    %5542 = vmatpush1.msra.mxu0 0.0
    %5543 = vmatprep.subr.mxu0 0.0
    %5544 = vmatpush1.msra.mxu0 0.0
    %5545 = vmatprep.mubr.f32.mxu0 0.0
    %5546 = vmatmul.mubr.f32.gmra.mrb[0].mxu0 %v5457
    %v5547 = vpop.f32.mrb[0].mxu0
    %v5548 = vadd.f32 %v5479, %v5547
    %v5549 = vpop.f32.mrb[0].mxu0
    %5550 = vdwg.mxu0
    %v5551 = vmax.f32 %v5548, 0.0
    %v5552 = vld [vmem:[%s10] sm:$0xff]
    %v5553 = vld [vmem:[%s10 + $0x8] sm:$0xff]
    %v5554 = vld [vmem:[%s10 + $0x10] sm:$0xff]
    %v5555 = vld [vmem:[%s10 + $0x18] sm:$0xff]
    %v5556 = vld [vmem:[%s10 + $0x20] sm:$0xff]
    %v5557 = vld [vmem:[%s10 + $0x28] sm:$0xff]
    %v5558 = vld [vmem:[%s10 + $0x30] sm:$0xff]
    %v5559 = vld [vmem:[%s10 + $0x38] sm:$0xff]
    %v5560 = vld [vmem:[%s11] sm:$0x1]
    %v5562 = vlaneseq
    %v5563 = vshrl.u32 %v5562, 7
    %v5564 = vsub.s32 0, %v5563
    %v5565 = vrot.slane %v5560, %v5564
    %vm5567 = vcmask 523264
    %v5569 = vsel %vm5567, %v5551, 0
    %5571 = vmatprep.subr.mxu0 0.0
    %5572 = vmatpush1.msra.mxu0 %v5552
    %5573 = vmatprep.subr.mxu0 0.0
    %5574 = vmatpush1.msra.mxu0 %v5553
    %5575 = vmatprep.subr.mxu0 0.0
    %5576 = vmatpush1.msra.mxu0 %v5554
    %5577 = vmatprep.subr.mxu0 0.0
    %5578 = vmatpush1.msra.mxu0 %v5555
    %5579 = vmatprep.subr.mxu0 0.0
    %5580 = vmatpush1.msra.mxu0 %v5556
    %5581 = vmatprep.subr.mxu0 0.0
    %5582 = vmatpush1.msra.mxu0 %v5557
    %5583 = vmatprep.subr.mxu0 0.0
    %5584 = vmatpush1.msra.mxu0 %v5558
    %5585 = vmatprep.subr.mxu0 0.0
    %5586 = vmatpush1.msra.mxu0 %v5559
    %5587 = vmatprep.subr.mxu0 0.0
    %5588 = vmatpush1.msra.mxu0 0.0
    %5589 = vmatprep.subr.mxu0 0.0
    %5590 = vmatpush1.msra.mxu0 0.0
    %5591 = vmatprep.subr.mxu0 0.0
    %5592 = vmatpush1.msra.mxu0 0.0
    %5593 = vmatprep.subr.mxu0 0.0
    %5594 = vmatpush1.msra.mxu0 0.0
    %5595 = vmatprep.subr.mxu0 0.0
    %5596 = vmatpush1.msra.mxu0 0.0
    %5597 = vmatprep.subr.mxu0 0.0
    %5598 = vmatpush1.msra.mxu0 0.0
    %5599 = vmatprep.subr.mxu0 0.0
    %5600 = vmatpush1.msra.mxu0 0.0
    %5601 = vmatprep.subr.mxu0 0.0
    %5602 = vmatpush1.msra.mxu0 0.0
    %5603 = vmatprep.subr.mxu0 0.0
    %5604 = vmatpush1.msra.mxu0 0.0
    %5605 = vmatprep.subr.mxu0 0.0
    %5606 = vmatpush1.msra.mxu0 0.0
    %5607 = vmatprep.subr.mxu0 0.0
    %5608 = vmatpush1.msra.mxu0 0.0
    %5609 = vmatprep.subr.mxu0 0.0
    %5610 = vmatpush1.msra.mxu0 0.0
    %5611 = vmatprep.subr.mxu0 0.0
    %5612 = vmatpush1.msra.mxu0 0.0
    %5613 = vmatprep.subr.mxu0 0.0
    %5614 = vmatpush1.msra.mxu0 0.0
    %5615 = vmatprep.subr.mxu0 0.0
    %5616 = vmatpush1.msra.mxu0 0.0
    %5617 = vmatprep.subr.mxu0 0.0
    %5618 = vmatpush1.msra.mxu0 0.0
    %5619 = vmatprep.subr.mxu0 0.0
    %5620 = vmatpush1.msra.mxu0 0.0
    %5621 = vmatprep.subr.mxu0 0.0
    %5622 = vmatpush1.msra.mxu0 0.0
    %5623 = vmatprep.subr.mxu0 0.0
    %5624 = vmatpush1.msra.mxu0 0.0
    %5625 = vmatprep.subr.mxu0 0.0
    %5626 = vmatpush1.msra.mxu0 0.0
    %5627 = vmatprep.subr.mxu0 0.0
    %5628 = vmatpush1.msra.mxu0 0.0
    %5629 = vmatprep.subr.mxu0 0.0
    %5630 = vmatpush1.msra.mxu0 0.0
    %5631 = vmatprep.subr.mxu0 0.0
    %5632 = vmatpush1.msra.mxu0 0.0
    %5633 = vmatprep.subr.mxu0 0.0
    %5634 = vmatpush1.msra.mxu0 0.0
    %5635 = vmatprep.mubr.f32.mxu0 0.0
    %5636 = vmatmul.mubr.f32.gmra.mrb[0].mxu0 %v5569
    %v5637 = vpop.f32.mrb[0].mxu0
    %v5638 = vadd.f32 %v5565, %v5637
    %v5639 = vpop.f32.mrb[0].mxu0
    %5640 = vdwg.mxu0
    %vm5641 = vcmask 23552
    %5642 = vst.msk [vmem:[%s12] sm:$0xff] %vm5641, %v5638
    // Predicated region
    $region62: #{_forward_impl.1} parent=1 // pred_check
      _
    $region63: #{_forward_impl.1} parent=1 // pred_check_branch
      %5644 = sbr.rel (0) target = $region65
    $region64: #{_forward_impl.1} parent=1 // pred_region
      _
    $region65: #{_forward_impl.1} parent=1 // pred_fallthru
      _
    // Predicated region
    $region66: #{_forward_impl.1} parent=1 // pred_check
      _
    $region67: #{_forward_impl.1} parent=1 // pred_check_branch
      %5646 = sbr.rel (0) target = $region69
    $region68: #{_forward_impl.1} parent=1 // pred_region
      _
    $region69: #{_forward_impl.1} parent=1 // pred_fallthru
      _
    %5647 = vsyncpa [#allocation3], 1
    %5648 = vsyncpa [#allocation5], 1

</llo_original>
